<compile_context>
chip_gen: v5e
topology: v5e:2x2
jax: 0.10.0
libtpu: 0.0.40
codegen_flags: <defaults>
</compile_context>

<pallas_src>
import functools
import math

import jax
import jax.numpy as jnp
from jax.experimental import pallas as pl
from jax.experimental.pallas import tpu as pltpu

MAX_SEQ_LEN = 16   # original module uses 1024; reduced so the demo is small.
                   # Semantics identical: seq_len == MAX_SEQ_LEN, exactly as
                   # the PyTorch broadcast `emb + self.pos_enc()` requires.
NEG_INF = -1e9
LN_EPS = 1e-5

# TODO(synk): at the real MAX_SEQ_LEN=1024 the full-sequence attention inside
# the fused kernel should be split into flash-style (tq, tk) tiles and the
# per-layer weights streamed (pltpu.emit_pipeline) instead of resident; at
# demo scale everything fits comfortably in VMEM.

# Stacked-weight argument order (leading axis = layer index).
_ENC_KEYS = ("w_qkv", "b_qkv", "w_o", "b_o", "g1", "be1",
             "w1", "b1", "w2", "b2", "g2", "be2")
_DEC_KEYS = ("w_qkv", "b_qkv", "w_o", "b_o", "g1", "be1",
             "w_kv", "b_kv", "w_q", "b_q", "w_o2", "b_o2",
             "g2", "be2", "w1", "b1", "w2", "b2", "g3", "be3")


# ----------------------------------------------------------------------------
# In-kernel math helpers (operate on values already loaded from refs).
# MXU operands -> bf16 with f32 accumulation; VPU/EUP math stays in f32.
# ----------------------------------------------------------------------------
def _linear(x_f32, w_bf16, b_f32, relu=False):
    acc = jnp.dot(x_f32.astype(jnp.bfloat16), w_bf16,
                  preferred_element_type=jnp.float32)
    acc = acc + b_f32                                   # (S, N) + (1, N)
    if relu:
        acc = jnp.maximum(acc, 0.0)
    return acc


def _layer_norm(y_f32, gamma, beta):
    mean = jnp.mean(y_f32, axis=-1, keepdims=True)
    var = jnp.mean((y_f32 - mean) ** 2, axis=-1, keepdims=True)  # biased var
    return (y_f32 - mean) * jax.lax.rsqrt(var + LN_EPS) * gamma + beta


def _softmax(s_f32):
    s = s_f32 - jnp.max(s_f32, axis=-1, keepdims=True)
    p = jnp.exp(s)
    return p * pl.reciprocal(jnp.sum(p, axis=-1, keepdims=True), approx=True)


def _self_mha(x, w_qkv, b_qkv, w_o, b_o, mask, n_head):
    """Self attention; qkv packed per head as [q_h | k_h | v_h] triplets
    (same layout as the module's reshape(B,S,H,3*dh) + chunk)."""
    S, D = x.shape
    dh = D // n_head
    scale = 1.0 / math.sqrt(dh)
    qkv = _linear(x, w_qkv, b_qkv)                      # (S, 3D) f32
    heads = []
    for h in range(n_head):
        base = 3 * dh * h
        q = qkv[:, base:base + dh]
        k = qkv[:, base + dh:base + 2 * dh]
        v = qkv[:, base + 2 * dh:base + 3 * dh]
        s = jnp.dot(q.astype(jnp.bfloat16), k.T.astype(jnp.bfloat16),
                    preferred_element_type=jnp.float32) * scale
        if mask is not None:
            s = s + mask                                # additive f32 mask
        p = _softmax(s)
        heads.append(jnp.dot(p.astype(jnp.bfloat16), v.astype(jnp.bfloat16),
                             preferred_element_type=jnp.float32))
    vals = jnp.concatenate(heads, axis=-1)              # (S, D)
    return _linear(vals, w_o, b_o)


def _cross_mha(y, enc, w_q, b_q, w_kv, b_kv, w_o, b_o, n_head):
    """Cross attention (unmasked, as in the module); kv packed per head."""
    Sd, D = y.shape
    dh = D // n_head
    scale = 1.0 / math.sqrt(dh)
    q_all = _linear(y, w_q, b_q)                        # (Sd, D)
    kv = _linear(enc, w_kv, b_kv)                       # (Se, 2D)
    heads = []
    for h in range(n_head):
        q = q_all[:, h * dh:(h + 1) * dh]
        base = 2 * dh * h
        k = kv[:, base:base + dh]
        v = kv[:, base + dh:base + 2 * dh]
        s = jnp.dot(q.astype(jnp.bfloat16), k.T.astype(jnp.bfloat16),
                    preferred_element_type=jnp.float32) * scale
        p = _softmax(s)
        heads.append(jnp.dot(p.astype(jnp.bfloat16), v.astype(jnp.bfloat16),
                             preferred_element_type=jnp.float32))
    vals = jnp.concatenate(heads, axis=-1)              # (Sd, D)
    return _linear(vals, w_o, b_o)


# ----------------------------------------------------------------------------
# Single fused kernel: encoder stack -> decoder stack -> vocab projection.
# One grid step = one batch element, end to end.
# ----------------------------------------------------------------------------
def _transformer_kernel(*refs, n_head, n_layers):
    # TODO(synk): dropout layers are identity here (deterministic / eval mode).
    enc_x_ref, dec_x_ref, enc_mask_ref, dec_mask_ref = refs[:4]
    n_e, n_d = len(_ENC_KEYS), len(_DEC_KEYS)
    enc_w = refs[4:4 + n_e]
    dec_w = refs[4 + n_e:4 + n_e + n_d]
    wv_ref = refs[4 + n_e + n_d]
    bv_ref = refs[4 + n_e + n_d + 1]
    o_ref = refs[-1]

    # ---- Encoder stack ----
    x = enc_x_ref[0].astype(jnp.float32)                # (S, D)
    enc_mask = enc_mask_ref[0]                          # (S, S) additive
    (e_wqkv, e_bqkv, e_wo, e_bo, e_g1, e_be1,
     e_w1, e_b1, e_w2, e_b2, e_g2, e_be2) = enc_w
    for l in range(n_layers):                           # static unroll
        attn = _self_mha(x, e_wqkv[l], e_bqkv[l], e_wo[l], e_bo[l],
                         enc_mask, n_head)
        x = _layer_norm(attn + x, e_g1[l], e_be1[l])
        h = _linear(x, e_w1[l], e_b1[l], relu=True)
        ff = _linear(h, e_w2[l], e_b2[l])
        x = _layer_norm(ff + x, e_g2[l], e_be2[l])
    enc_out = x                                         # (S, D)

    # ---- Decoder stack ----
    y = dec_x_ref[0].astype(jnp.float32)                # (S, D)
    dec_mask = dec_mask_ref[0]                          # (S, S) additive
    (d_wqkv, d_bqkv, d_wo, d_bo, d_g1, d_be1,
     d_wkv, d_bkv, d_wq, d_bq, d_wo2, d_bo2,
     d_g2, d_be2, d_w1, d_b1, d_w2, d_b2, d_g3, d_be3) = dec_w
    for l in range(n_layers):                           # static unroll
        attn = _self_mha(y, d_wqkv[l], d_bqkv[l], d_wo[l], d_bo[l],
                         dec_mask, n_head)
        y = _layer_norm(attn + y, d_g1[l], d_be1[l])
        cross = _cross_mha(y, enc_out,
                           d_wq[l], d_bq[l], d_wkv[l], d_bkv[l],
                           d_wo2[l], d_bo2[l], n_head)
        y = _layer_norm(cross + y, d_g2[l], d_be2[l])
        h = _linear(y, d_w1[l], d_b1[l], relu=True)
        ff = _linear(h, d_w2[l], d_b2[l])
        y = _layer_norm(ff + y, d_g3[l], d_be3[l])

    # ---- Final vocab projection (lane-dense padded output) ----
    o_ref[0] = (jnp.dot(y.astype(jnp.bfloat16), wv_ref[...],
                        preferred_element_type=jnp.float32)
                + bv_ref[...]).astype(o_ref.dtype)


# ----------------------------------------------------------------------------
# Wrapper: one pallas_call for the whole transformer.
# ----------------------------------------------------------------------------
def positional_encoding(max_len, d_model):
    even_i = jnp.arange(0, d_model, 2, dtype=jnp.float32)
    denom = jnp.power(10000.0, even_i / d_model)
    pos = jnp.arange(max_len, dtype=jnp.float32).reshape(max_len, 1)
    even_pe = jnp.sin(pos / denom)
    odd_pe = jnp.cos(pos / denom)
    return jnp.stack([even_pe, odd_pe], axis=2).reshape(max_len, d_model)


def machine_translation_forward(params, enc_b, dec_b, enc_mask, dec_mask,
                                *, n_head, n_layers, hi_vocab):
    d_model = params["eng_emb"].shape[1]
    pe = positional_encoding(MAX_SEQ_LEN, d_model)            # (S, D)

    # Embedding gather + positional encoding stay in plain JAX.
    enc_x = jnp.take(params["eng_emb"], enc_b, axis=0) + pe   # (B, S, D)
    dec_x = jnp.take(params["hi_emb"], dec_b, axis=0) + pe    # (B, S, D)

    B, S, D = enc_x.shape
    Vp = params["w_vocab"].shape[1]                           # multiple of 128

    args = ([enc_x, dec_x, enc_mask, dec_mask]
            + [params["enc"][k] for k in _ENC_KEYS]
            + [params["dec"][k] for k in _DEC_KEYS]
            + [params["w_vocab"], params["b_vocab"]])

    def _const_spec(t):
        # Weights / biases / norms: constant across grid steps -> fetched once.
        nd = t.ndim
        return pl.BlockSpec(tuple(t.shape), lambda b, _nd=nd: (0,) * _nd)

    in_specs = ([pl.BlockSpec((1, S, D), lambda b: (b, 0, 0)),
                 pl.BlockSpec((1, S, D), lambda b: (b, 0, 0)),
                 pl.BlockSpec((1, S, S), lambda b: (b, 0, 0)),
                 pl.BlockSpec((1, S, S), lambda b: (b, 0, 0))]
                + [_const_spec(t) for t in args[4:]])

    out = pl.pallas_call(
        functools.partial(_transformer_kernel, n_head=n_head,
                          n_layers=n_layers),
        out_shape=jax.ShapeDtypeStruct((B, S, Vp), jnp.float32),
        grid=(B,),
        in_specs=in_specs,
        out_specs=pl.BlockSpec((1, S, Vp), lambda b: (b, 0, 0)),
        compiler_params=pltpu.CompilerParams(
            dimension_semantics=("parallel",)),
    )(*args)
    return out[:, :, :hi_vocab]


# ----------------------------------------------------------------------------
# Deterministic parameter init (weights in bf16 for the MXU; biases / norms /
# embeddings in f32). Per-layer weights are stacked along a leading layer axis.
# ----------------------------------------------------------------------------
def init_params(key, d_model, ffn_hidden, n_layers, eng_vocab, hi_vocab):
    keys = iter(jax.random.split(key, 3 + n_layers * 11))

    def lin(d_in, d_out):
        w = jax.random.normal(next(keys), (d_in, d_out), jnp.float32) * 0.02
        return w.astype(jnp.bfloat16), jnp.zeros((1, d_out), jnp.float32)

    def norm(d):
        return jnp.ones((1, d), jnp.float32), jnp.zeros((1, d), jnp.float32)

    enc_layers = []
    for _ in range(n_layers):
        wqkv, bqkv = lin(d_model, 3 * d_model)
        wo, bo = lin(d_model, d_model)
        g1, be1 = norm(d_model)
        w1, b1 = lin(d_model, ffn_hidden)
        w2, b2 = lin(ffn_hidden, d_model)
        g2, be2 = norm(d_model)
        enc_layers.append(dict(zip(_ENC_KEYS,
            (wqkv, bqkv, wo, bo, g1, be1, w1, b1, w2, b2, g2, be2))))

    dec_layers = []
    for _ in range(n_layers):
        wqkv, bqkv = lin(d_model, 3 * d_model)
        wo, bo = lin(d_model, d_model)
        g1, be1 = norm(d_model)
        wkv, bkv = lin(d_model, 2 * d_model)
        wq, bq = lin(d_model, d_model)
        wo2, bo2 = lin(d_model, d_model)
        g2, be2 = norm(d_model)
        w1, b1 = lin(d_model, ffn_hidden)
        w2, b2 = lin(ffn_hidden, d_model)
        g3, be3 = norm(d_model)
        dec_layers.append(dict(zip(_DEC_KEYS,
            (wqkv, bqkv, wo, bo, g1, be1, wkv, bkv, wq, bq, wo2, bo2,
             g2, be2, w1, b1, w2, b2, g3, be3))))

    enc = {k: jnp.stack([lp[k] for lp in enc_layers]) for k in _ENC_KEYS}
    dec = {k: jnp.stack([lp[k] for lp in dec_layers]) for k in _DEC_KEYS}

    # Final vocab projection, zero-padded to a lane-dense multiple of 128.
    v_pad = ((hi_vocab + 127) // 128) * 128
    wv = jax.random.normal(next(keys), (d_model, hi_vocab), jnp.float32) * 0.02
    wv = jnp.pad(wv, ((0, 0), (0, v_pad - hi_vocab))).astype(jnp.bfloat16)
    bv = jnp.zeros((1, v_pad), jnp.float32)

    eng_emb = jax.random.normal(next(keys), (eng_vocab, d_model),
                                jnp.float32) * 0.02
    hi_emb = jax.random.normal(next(keys), (hi_vocab, d_model),
                               jnp.float32) * 0.02

    return {"enc": enc, "dec": dec, "w_vocab": wv, "b_vocab": bv,
            "eng_emb": eng_emb, "hi_emb": hi_emb}


# ----------------------------------------------------------------------------
if __name__ == "__main__":
    # Lane-dense small config: d_model == 128 lanes, heads folded in-kernel.
    d_model, ffn_hidden, n_head, n_layers = 128, 256, 4, 2
    eng_vocab_size, hi_vocab_size = 64, 80
    B, S = 2, MAX_SEQ_LEN

    key = jax.random.PRNGKey(0)
    kp, kenc, kdec = jax.random.split(key, 3)
    params = init_params(kp, d_model, ffn_hidden, n_layers,
                         eng_vocab_size, hi_vocab_size)

    enc_b = jax.random.randint(kenc, (B, S), 0, eng_vocab_size, dtype=jnp.int32)
    dec_b = jax.random.randint(kdec, (B, S), 0, hi_vocab_size, dtype=jnp.int32)

    # encoder: no masking; decoder self-attention: causal additive mask.
    enc_mask = jnp.zeros((B, S, S), jnp.float32)
    causal = jnp.where(jnp.arange(S)[None, :] > jnp.arange(S)[:, None],
                       NEG_INF, 0.0).astype(jnp.float32)
    dec_mask = jnp.broadcast_to(causal, (B, S, S))

    fwd = jax.jit(functools.partial(machine_translation_forward,
                                    n_head=n_head, n_layers=n_layers,
                                    hi_vocab=hi_vocab_size))
    out = fwd(params, enc_b, dec_b, enc_mask, dec_mask)
    out = jax.block_until_ready(out)

    assert out.shape == (B, S, hi_vocab_size), out.shape
    assert bool(jnp.all(jnp.isfinite(out)))
    print("KERNEL_OK")
</pallas_src>

<mosaic_0001>
module attributes {stable_mosaic.version = 11 : i64} {
  func.func @_transformer_kernel(%arg0: i32, %arg1: memref<1x16x128xf32, #tpu.memory_space<vmem>>, %arg2: memref<1x16x128xf32, #tpu.memory_space<vmem>>, %arg3: memref<1x16x16xf32, #tpu.memory_space<vmem>>, %arg4: memref<1x16x16xf32, #tpu.memory_space<vmem>>, %arg5: memref<2x128x384xbf16, #tpu.memory_space<vmem>>, %arg6: memref<2x1x384xf32, #tpu.memory_space<vmem>>, %arg7: memref<2x128x128xbf16, #tpu.memory_space<vmem>>, %arg8: memref<2x1x128xf32, #tpu.memory_space<vmem>>, %arg9: memref<2x1x128xf32, #tpu.memory_space<vmem>>, %arg10: memref<2x1x128xf32, #tpu.memory_space<vmem>>, %arg11: memref<2x128x256xbf16, #tpu.memory_space<vmem>>, %arg12: memref<2x1x256xf32, #tpu.memory_space<vmem>>, %arg13: memref<2x256x128xbf16, #tpu.memory_space<vmem>>, %arg14: memref<2x1x128xf32, #tpu.memory_space<vmem>>, %arg15: memref<2x1x128xf32, #tpu.memory_space<vmem>>, %arg16: memref<2x1x128xf32, #tpu.memory_space<vmem>>, %arg17: memref<2x128x384xbf16, #tpu.memory_space<vmem>>, %arg18: memref<2x1x384xf32, #tpu.memory_space<vmem>>, %arg19: memref<2x128x128xbf16, #tpu.memory_space<vmem>>, %arg20: memref<2x1x128xf32, #tpu.memory_space<vmem>>, %arg21: memref<2x1x128xf32, #tpu.memory_space<vmem>>, %arg22: memref<2x1x128xf32, #tpu.memory_space<vmem>>, %arg23: memref<2x128x256xbf16, #tpu.memory_space<vmem>>, %arg24: memref<2x1x256xf32, #tpu.memory_space<vmem>>, %arg25: memref<2x128x128xbf16, #tpu.memory_space<vmem>>, %arg26: memref<2x1x128xf32, #tpu.memory_space<vmem>>, %arg27: memref<2x128x128xbf16, #tpu.memory_space<vmem>>, %arg28: memref<2x1x128xf32, #tpu.memory_space<vmem>>, %arg29: memref<2x1x128xf32, #tpu.memory_space<vmem>>, %arg30: memref<2x1x128xf32, #tpu.memory_space<vmem>>, %arg31: memref<2x128x256xbf16, #tpu.memory_space<vmem>>, %arg32: memref<2x1x256xf32, #tpu.memory_space<vmem>>, %arg33: memref<2x256x128xbf16, #tpu.memory_space<vmem>>, %arg34: memref<2x1x128xf32, #tpu.memory_space<vmem>>, %arg35: memref<2x1x128xf32, #tpu.memory_space<vmem>>, %arg36: memref<2x1x128xf32, #tpu.memory_space<vmem>>, %arg37: memref<128x128xbf16, #tpu.memory_space<vmem>>, %arg38: memref<1x128xf32, #tpu.memory_space<vmem>>, %arg39: memref<1x16x128xf32, #tpu.memory_space<vmem>>) attributes {dimension_semantics = [#tpu.dimension_semantics<parallel>], iteration_bounds = array<i64: 2>, scalar_prefetch = 0 : i64, scratch_operands = 0 : i64, tpu.core_type = #tpu.core_type<tc>, window_params = [{transform_indices = @transform_0, window_bounds = array<i64: 1, 16, 128>}, {transform_indices = @transform_1, window_bounds = array<i64: 1, 16, 128>}, {transform_indices = @transform_2, window_bounds = array<i64: 1, 16, 16>}, {transform_indices = @transform_3, window_bounds = array<i64: 1, 16, 16>}, {pipeline_mode = #tpu.pipeline_mode<synchronous>, transform_indices = @transform_4, window_bounds = array<i64: 2, 128, 384>}, {pipeline_mode = #tpu.pipeline_mode<synchronous>, transform_indices = @transform_5, window_bounds = array<i64: 2, 1, 384>}, {pipeline_mode = #tpu.pipeline_mode<synchronous>, transform_indices = @transform_6, window_bounds = array<i64: 2, 128, 128>}, {pipeline_mode = #tpu.pipeline_mode<synchronous>, transform_indices = @transform_7, window_bounds = array<i64: 2, 1, 128>}, {pipeline_mode = #tpu.pipeline_mode<synchronous>, transform_indices = @transform_8, window_bounds = array<i64: 2, 1, 128>}, {pipeline_mode = #tpu.pipeline_mode<synchronous>, transform_indices = @transform_9, window_bounds = array<i64: 2, 1, 128>}, {pipeline_mode = #tpu.pipeline_mode<synchronous>, transform_indices = @transform_10, window_bounds = array<i64: 2, 128, 256>}, {pipeline_mode = #tpu.pipeline_mode<synchronous>, transform_indices = @transform_11, window_bounds = array<i64: 2, 1, 256>}, {pipeline_mode = #tpu.pipeline_mode<synchronous>, transform_indices = @transform_12, window_bounds = array<i64: 2, 256, 128>}, {pipeline_mode = #tpu.pipeline_mode<synchronous>, transform_indices = @transform_13, window_bounds = array<i64: 2, 1, 128>}, {pipeline_mode = #tpu.pipeline_mode<synchronous>, transform_indices = @transform_14, window_bounds = array<i64: 2, 1, 128>}, {pipeline_mode = #tpu.pipeline_mode<synchronous>, transform_indices = @transform_15, window_bounds = array<i64: 2, 1, 128>}, {pipeline_mode = #tpu.pipeline_mode<synchronous>, transform_indices = @transform_16, window_bounds = array<i64: 2, 128, 384>}, {pipeline_mode = #tpu.pipeline_mode<synchronous>, transform_indices = @transform_17, window_bounds = array<i64: 2, 1, 384>}, {pipeline_mode = #tpu.pipeline_mode<synchronous>, transform_indices = @transform_18, window_bounds = array<i64: 2, 128, 128>}, {pipeline_mode = #tpu.pipeline_mode<synchronous>, transform_indices = @transform_19, window_bounds = array<i64: 2, 1, 128>}, {pipeline_mode = #tpu.pipeline_mode<synchronous>, transform_indices = @transform_20, window_bounds = array<i64: 2, 1, 128>}, {pipeline_mode = #tpu.pipeline_mode<synchronous>, transform_indices = @transform_21, window_bounds = array<i64: 2, 1, 128>}, {pipeline_mode = #tpu.pipeline_mode<synchronous>, transform_indices = @transform_22, window_bounds = array<i64: 2, 128, 256>}, {pipeline_mode = #tpu.pipeline_mode<synchronous>, transform_indices = @transform_23, window_bounds = array<i64: 2, 1, 256>}, {pipeline_mode = #tpu.pipeline_mode<synchronous>, transform_indices = @transform_24, window_bounds = array<i64: 2, 128, 128>}, {pipeline_mode = #tpu.pipeline_mode<synchronous>, transform_indices = @transform_25, window_bounds = array<i64: 2, 1, 128>}, {pipeline_mode = #tpu.pipeline_mode<synchronous>, transform_indices = @transform_26, window_bounds = array<i64: 2, 128, 128>}, {pipeline_mode = #tpu.pipeline_mode<synchronous>, transform_indices = @transform_27, window_bounds = array<i64: 2, 1, 128>}, {pipeline_mode = #tpu.pipeline_mode<synchronous>, transform_indices = @transform_28, window_bounds = array<i64: 2, 1, 128>}, {pipeline_mode = #tpu.pipeline_mode<synchronous>, transform_indices = @transform_29, window_bounds = array<i64: 2, 1, 128>}, {pipeline_mode = #tpu.pipeline_mode<synchronous>, transform_indices = @transform_30, window_bounds = array<i64: 2, 128, 256>}, {pipeline_mode = #tpu.pipeline_mode<synchronous>, transform_indices = @transform_31, window_bounds = array<i64: 2, 1, 256>}, {pipeline_mode = #tpu.pipeline_mode<synchronous>, transform_indices = @transform_32, window_bounds = array<i64: 2, 256, 128>}, {pipeline_mode = #tpu.pipeline_mode<synchronous>, transform_indices = @transform_33, window_bounds = array<i64: 2, 1, 128>}, {pipeline_mode = #tpu.pipeline_mode<synchronous>, transform_indices = @transform_34, window_bounds = array<i64: 2, 1, 128>}, {pipeline_mode = #tpu.pipeline_mode<synchronous>, transform_indices = @transform_35, window_bounds = array<i64: 2, 1, 128>}, {pipeline_mode = #tpu.pipeline_mode<synchronous>, transform_indices = @transform_36, window_bounds = array<i64: 128, 128>}, {pipeline_mode = #tpu.pipeline_mode<synchronous>, transform_indices = @transform_37, window_bounds = array<i64: 1, 128>}, {transform_indices = @transform_38, window_bounds = array<i64: 1, 16, 128>}]} {
    %c0 = arith.constant 0 : index
    %c0_0 = arith.constant 0 : index
    %c0_1 = arith.constant 0 : index
    %0 = vector.load %arg1[%c0, %c0_0, %c0_1] : memref<1x16x128xf32, #tpu.memory_space<vmem>>, vector<1x16x128xf32>
    %1 = vector.shape_cast %0 : vector<1x16x128xf32> to vector<16x128xf32>
    %c0_2 = arith.constant 0 : index
    %c0_3 = arith.constant 0 : index
    %c0_4 = arith.constant 0 : index
    %2 = vector.load %arg3[%c0_2, %c0_3, %c0_4] : memref<1x16x16xf32, #tpu.memory_space<vmem>>, vector<1x16x16xf32>
    %3 = vector.shape_cast %2 : vector<1x16x16xf32> to vector<16x16xf32>
    %c0_5 = arith.constant 0 : index
    %c0_6 = arith.constant 0 : index
    %c0_7 = arith.constant 0 : index
    %4 = vector.load %arg5[%c0_5, %c0_6, %c0_7] : memref<2x128x384xbf16, #tpu.memory_space<vmem>>, vector<1x128x384xbf16>
    %5 = vector.shape_cast %4 : vector<1x128x384xbf16> to vector<128x384xbf16>
    %c0_8 = arith.constant 0 : index
    %c0_9 = arith.constant 0 : index
    %c0_10 = arith.constant 0 : index
    %6 = vector.load %arg6[%c0_8, %c0_9, %c0_10] : memref<2x1x384xf32, #tpu.memory_space<vmem>>, vector<1x1x384xf32>
    %7 = vector.shape_cast %6 : vector<1x1x384xf32> to vector<1x384xf32>
    %c0_11 = arith.constant 0 : index
    %c0_12 = arith.constant 0 : index
    %c0_13 = arith.constant 0 : index
    %8 = vector.load %arg7[%c0_11, %c0_12, %c0_13] : memref<2x128x128xbf16, #tpu.memory_space<vmem>>, vector<1x128x128xbf16>
    %9 = vector.shape_cast %8 : vector<1x128x128xbf16> to vector<128x128xbf16>
    %c0_14 = arith.constant 0 : index
    %c0_15 = arith.constant 0 : index
    %c0_16 = arith.constant 0 : index
    %10 = vector.load %arg8[%c0_14, %c0_15, %c0_16] : memref<2x1x128xf32, #tpu.memory_space<vmem>>, vector<1x1x128xf32>
    %11 = vector.shape_cast %10 : vector<1x1x128xf32> to vector<1x128xf32>
    %12 = arith.truncf %1 : vector<16x128xf32> to vector<16x128xbf16>
    %cst = arith.constant dense<0.000000e+00> : vector<16x384xf32>
    %13 = tpu.matmul %12, %5, %cst {dimension_numbers = #tpu.dot_dimension_numbers<[1], [0], [0], [1], [0, 0, 1, 1], [], []>} : vector<16x128xbf16>, vector<128x384xbf16>, vector<16x384xf32> -> vector<16x384xf32>
    %14 = vector.broadcast %7 : vector<1x384xf32> to vector<16x384xf32>
    %15 = arith.addf %13, %14 : vector<16x384xf32>
    %16 = vector.extract_strided_slice %15 {offsets = [0, 0], sizes = [16, 32], strides = [1, 1]} : vector<16x384xf32> to vector<16x32xf32>
    %17 = vector.extract_strided_slice %15 {offsets = [0, 32], sizes = [16, 32], strides = [1, 1]} : vector<16x384xf32> to vector<16x32xf32>
    %18 = vector.extract_strided_slice %15 {offsets = [0, 64], sizes = [16, 32], strides = [1, 1]} : vector<16x384xf32> to vector<16x32xf32>
    %19 = arith.truncf %16 : vector<16x32xf32> to vector<16x32xbf16>
    %20 = tpu.transpose %17, [1, 0] : vector<16x32xf32> -> vector<32x16xf32>
    %21 = arith.truncf %20 : vector<32x16xf32> to vector<32x16xbf16>
    %cst_17 = arith.constant dense<0.000000e+00> : vector<16x16xf32>
    %22 = tpu.matmul %19, %21, %cst_17 {dimension_numbers = #tpu.dot_dimension_numbers<[1], [0], [0], [1], [0, 0, 1, 1], [], []>} : vector<16x32xbf16>, vector<32x16xbf16>, vector<16x16xf32> -> vector<16x16xf32>
    %cst_18 = arith.constant 0.176776692 : f32
    %23 = vector.broadcast %cst_18 : f32 to vector<16x16xf32>
    %24 = arith.mulf %22, %23 : vector<16x16xf32>
    %25 = arith.addf %24, %3 : vector<16x16xf32>
    %cst_19 = arith.constant dense<0xFF800000> : vector<16xf32>
    %26 = vector.multi_reduction <maximumf>, %25, %cst_19 [1] : vector<16x16xf32> to vector<16xf32>
    %27 = vector.shape_cast %26 : vector<16xf32> to vector<16x1xf32>
    %28 = vector.broadcast %27 : vector<16x1xf32> to vector<16x16xf32>
    %29 = arith.subf %25, %28 : vector<16x16xf32>
    %30 = math.exp %29 : vector<16x16xf32>
    %cst_20 = arith.constant dense<0.000000e+00> : vector<16xf32>
    %31 = vector.multi_reduction <add>, %30, %cst_20 [1] : vector<16x16xf32> to vector<16xf32>
    %32 = vector.shape_cast %31 : vector<16xf32> to vector<16x1xf32>
    %33 = tpu.reciprocal %32 {approx = true} : vector<16x1xf32> -> vector<16x1xf32>
    %34 = vector.broadcast %33 : vector<16x1xf32> to vector<16x16xf32>
    %35 = arith.mulf %30, %34 : vector<16x16xf32>
    %36 = arith.truncf %35 : vector<16x16xf32> to vector<16x16xbf16>
    %37 = arith.truncf %18 : vector<16x32xf32> to vector<16x32xbf16>
    %cst_21 = arith.constant dense<0.000000e+00> : vector<16x32xf32>
    %38 = tpu.matmul %36, %37, %cst_21 {dimension_numbers = #tpu.dot_dimension_numbers<[1], [0], [0], [1], [0, 0, 1, 1], [], []>} : vector<16x16xbf16>, vector<16x32xbf16>, vector<16x32xf32> -> vector<16x32xf32>
    %39 = vector.extract_strided_slice %15 {offsets = [0, 96], sizes = [16, 32], strides = [1, 1]} : vector<16x384xf32> to vector<16x32xf32>
    %40 = vector.extract_strided_slice %15 {offsets = [0, 128], sizes = [16, 32], strides = [1, 1]} : vector<16x384xf32> to vector<16x32xf32>
    %41 = vector.extract_strided_slice %15 {offsets = [0, 160], sizes = [16, 32], strides = [1, 1]} : vector<16x384xf32> to vector<16x32xf32>
    %42 = arith.truncf %39 : vector<16x32xf32> to vector<16x32xbf16>
    %43 = tpu.transpose %40, [1, 0] : vector<16x32xf32> -> vector<32x16xf32>
    %44 = arith.truncf %43 : vector<32x16xf32> to vector<32x16xbf16>
    %cst_22 = arith.constant dense<0.000000e+00> : vector<16x16xf32>
    %45 = tpu.matmul %42, %44, %cst_22 {dimension_numbers = #tpu.dot_dimension_numbers<[1], [0], [0], [1], [0, 0, 1, 1], [], []>} : vector<16x32xbf16>, vector<32x16xbf16>, vector<16x16xf32> -> vector<16x16xf32>
    %cst_23 = arith.constant 0.176776692 : f32
    %46 = vector.broadcast %cst_23 : f32 to vector<16x16xf32>
    %47 = arith.mulf %45, %46 : vector<16x16xf32>
    %48 = arith.addf %47, %3 : vector<16x16xf32>
    %cst_24 = arith.constant dense<0xFF800000> : vector<16xf32>
    %49 = vector.multi_reduction <maximumf>, %48, %cst_24 [1] : vector<16x16xf32> to vector<16xf32>
    %50 = vector.shape_cast %49 : vector<16xf32> to vector<16x1xf32>
    %51 = vector.broadcast %50 : vector<16x1xf32> to vector<16x16xf32>
    %52 = arith.subf %48, %51 : vector<16x16xf32>
    %53 = math.exp %52 : vector<16x16xf32>
    %cst_25 = arith.constant dense<0.000000e+00> : vector<16xf32>
    %54 = vector.multi_reduction <add>, %53, %cst_25 [1] : vector<16x16xf32> to vector<16xf32>
    %55 = vector.shape_cast %54 : vector<16xf32> to vector<16x1xf32>
    %56 = tpu.reciprocal %55 {approx = true} : vector<16x1xf32> -> vector<16x1xf32>
    %57 = vector.broadcast %56 : vector<16x1xf32> to vector<16x16xf32>
    %58 = arith.mulf %53, %57 : vector<16x16xf32>
    %59 = arith.truncf %58 : vector<16x16xf32> to vector<16x16xbf16>
    %60 = arith.truncf %41 : vector<16x32xf32> to vector<16x32xbf16>
    %cst_26 = arith.constant dense<0.000000e+00> : vector<16x32xf32>
    %61 = tpu.matmul %59, %60, %cst_26 {dimension_numbers = #tpu.dot_dimension_numbers<[1], [0], [0], [1], [0, 0, 1, 1], [], []>} : vector<16x16xbf16>, vector<16x32xbf16>, vector<16x32xf32> -> vector<16x32xf32>
    %62 = vector.extract_strided_slice %15 {offsets = [0, 192], sizes = [16, 32], strides = [1, 1]} : vector<16x384xf32> to vector<16x32xf32>
    %63 = vector.extract_strided_slice %15 {offsets = [0, 224], sizes = [16, 32], strides = [1, 1]} : vector<16x384xf32> to vector<16x32xf32>
    %64 = vector.extract_strided_slice %15 {offsets = [0, 256], sizes = [16, 32], strides = [1, 1]} : vector<16x384xf32> to vector<16x32xf32>
    %65 = arith.truncf %62 : vector<16x32xf32> to vector<16x32xbf16>
    %66 = tpu.transpose %63, [1, 0] : vector<16x32xf32> -> vector<32x16xf32>
    %67 = arith.truncf %66 : vector<32x16xf32> to vector<32x16xbf16>
    %cst_27 = arith.constant dense<0.000000e+00> : vector<16x16xf32>
    %68 = tpu.matmul %65, %67, %cst_27 {dimension_numbers = #tpu.dot_dimension_numbers<[1], [0], [0], [1], [0, 0, 1, 1], [], []>} : vector<16x32xbf16>, vector<32x16xbf16>, vector<16x16xf32> -> vector<16x16xf32>
    %cst_28 = arith.constant 0.176776692 : f32
    %69 = vector.broadcast %cst_28 : f32 to vector<16x16xf32>
    %70 = arith.mulf %68, %69 : vector<16x16xf32>
    %71 = arith.addf %70, %3 : vector<16x16xf32>
    %cst_29 = arith.constant dense<0xFF800000> : vector<16xf32>
    %72 = vector.multi_reduction <maximumf>, %71, %cst_29 [1] : vector<16x16xf32> to vector<16xf32>
    %73 = vector.shape_cast %72 : vector<16xf32> to vector<16x1xf32>
    %74 = vector.broadcast %73 : vector<16x1xf32> to vector<16x16xf32>
    %75 = arith.subf %71, %74 : vector<16x16xf32>
    %76 = math.exp %75 : vector<16x16xf32>
    %cst_30 = arith.constant dense<0.000000e+00> : vector<16xf32>
    %77 = vector.multi_reduction <add>, %76, %cst_30 [1] : vector<16x16xf32> to vector<16xf32>
    %78 = vector.shape_cast %77 : vector<16xf32> to vector<16x1xf32>
    %79 = tpu.reciprocal %78 {approx = true} : vector<16x1xf32> -> vector<16x1xf32>
    %80 = vector.broadcast %79 : vector<16x1xf32> to vector<16x16xf32>
    %81 = arith.mulf %76, %80 : vector<16x16xf32>
    %82 = arith.truncf %81 : vector<16x16xf32> to vector<16x16xbf16>
    %83 = arith.truncf %64 : vector<16x32xf32> to vector<16x32xbf16>
    %cst_31 = arith.constant dense<0.000000e+00> : vector<16x32xf32>
    %84 = tpu.matmul %82, %83, %cst_31 {dimension_numbers = #tpu.dot_dimension_numbers<[1], [0], [0], [1], [0, 0, 1, 1], [], []>} : vector<16x16xbf16>, vector<16x32xbf16>, vector<16x32xf32> -> vector<16x32xf32>
    %85 = vector.extract_strided_slice %15 {offsets = [0, 288], sizes = [16, 32], strides = [1, 1]} : vector<16x384xf32> to vector<16x32xf32>
    %86 = vector.extract_strided_slice %15 {offsets = [0, 320], sizes = [16, 32], strides = [1, 1]} : vector<16x384xf32> to vector<16x32xf32>
    %87 = vector.extract_strided_slice %15 {offsets = [0, 352], sizes = [16, 32], strides = [1, 1]} : vector<16x384xf32> to vector<16x32xf32>
    %88 = arith.truncf %85 : vector<16x32xf32> to vector<16x32xbf16>
    %89 = tpu.transpose %86, [1, 0] : vector<16x32xf32> -> vector<32x16xf32>
    %90 = arith.truncf %89 : vector<32x16xf32> to vector<32x16xbf16>
    %cst_32 = arith.constant dense<0.000000e+00> : vector<16x16xf32>
    %91 = tpu.matmul %88, %90, %cst_32 {dimension_numbers = #tpu.dot_dimension_numbers<[1], [0], [0], [1], [0, 0, 1, 1], [], []>} : vector<16x32xbf16>, vector<32x16xbf16>, vector<16x16xf32> -> vector<16x16xf32>
    %cst_33 = arith.constant 0.176776692 : f32
    %92 = vector.broadcast %cst_33 : f32 to vector<16x16xf32>
    %93 = arith.mulf %91, %92 : vector<16x16xf32>
    %94 = arith.addf %93, %3 : vector<16x16xf32>
    %cst_34 = arith.constant dense<0xFF800000> : vector<16xf32>
    %95 = vector.multi_reduction <maximumf>, %94, %cst_34 [1] : vector<16x16xf32> to vector<16xf32>
    %96 = vector.shape_cast %95 : vector<16xf32> to vector<16x1xf32>
    %97 = vector.broadcast %96 : vector<16x1xf32> to vector<16x16xf32>
    %98 = arith.subf %94, %97 : vector<16x16xf32>
    %99 = math.exp %98 : vector<16x16xf32>
    %cst_35 = arith.constant dense<0.000000e+00> : vector<16xf32>
    %100 = vector.multi_reduction <add>, %99, %cst_35 [1] : vector<16x16xf32> to vector<16xf32>
    %101 = vector.shape_cast %100 : vector<16xf32> to vector<16x1xf32>
    %102 = tpu.reciprocal %101 {approx = true} : vector<16x1xf32> -> vector<16x1xf32>
    %103 = vector.broadcast %102 : vector<16x1xf32> to vector<16x16xf32>
    %104 = arith.mulf %99, %103 : vector<16x16xf32>
    %105 = arith.truncf %104 : vector<16x16xf32> to vector<16x16xbf16>
    %106 = arith.truncf %87 : vector<16x32xf32> to vector<16x32xbf16>
    %cst_36 = arith.constant dense<0.000000e+00> : vector<16x32xf32>
    %107 = tpu.matmul %105, %106, %cst_36 {dimension_numbers = #tpu.dot_dimension_numbers<[1], [0], [0], [1], [0, 0, 1, 1], [], []>} : vector<16x16xbf16>, vector<16x32xbf16>, vector<16x32xf32> -> vector<16x32xf32>
    %108 = tpu.concatenate %38, %61, %84, %107 in 1 : vector<16x32xf32>, vector<16x32xf32>, vector<16x32xf32>, vector<16x32xf32> -> vector<16x128xf32>
    %109 = arith.truncf %108 : vector<16x128xf32> to vector<16x128xbf16>
    %cst_37 = arith.constant dense<0.000000e+00> : vector<16x128xf32>
    %110 = tpu.matmul %109, %9, %cst_37 {dimension_numbers = #tpu.dot_dimension_numbers<[1], [0], [0], [1], [0, 0, 1, 1], [], []>} : vector<16x128xbf16>, vector<128x128xbf16>, vector<16x128xf32> -> vector<16x128xf32>
    %111 = vector.broadcast %11 : vector<1x128xf32> to vector<16x128xf32>
    %112 = arith.addf %110, %111 : vector<16x128xf32>
    %113 = arith.addf %112, %1 : vector<16x128xf32>
    %c0_38 = arith.constant 0 : index
    %c0_39 = arith.constant 0 : index
    %c0_40 = arith.constant 0 : index
    %114 = vector.load %arg9[%c0_38, %c0_39, %c0_40] : memref<2x1x128xf32, #tpu.memory_space<vmem>>, vector<1x1x128xf32>
    %115 = vector.shape_cast %114 : vector<1x1x128xf32> to vector<1x128xf32>
    %c0_41 = arith.constant 0 : index
    %c0_42 = arith.constant 0 : index
    %c0_43 = arith.constant 0 : index
    %116 = vector.load %arg10[%c0_41, %c0_42, %c0_43] : memref<2x1x128xf32, #tpu.memory_space<vmem>>, vector<1x1x128xf32>
    %117 = vector.shape_cast %116 : vector<1x1x128xf32> to vector<1x128xf32>
    %cst_44 = arith.constant dense<0.000000e+00> : vector<16xf32>
    %118 = vector.multi_reduction <add>, %113, %cst_44 [1] : vector<16x128xf32> to vector<16xf32>
    %119 = vector.shape_cast %118 : vector<16xf32> to vector<16x1xf32>
    %cst_45 = arith.constant 1.280000e+02 : f32
    %120 = vector.broadcast %cst_45 : f32 to vector<16x1xf32>
    %121 = arith.divf %119, %120 : vector<16x1xf32>
    %122 = vector.broadcast %121 : vector<16x1xf32> to vector<16x128xf32>
    %123 = arith.subf %113, %122 : vector<16x128xf32>
    %124 = arith.mulf %123, %123 : vector<16x128xf32>
    %cst_46 = arith.constant dense<0.000000e+00> : vector<16xf32>
    %125 = vector.multi_reduction <add>, %124, %cst_46 [1] : vector<16x128xf32> to vector<16xf32>
    %126 = vector.shape_cast %125 : vector<16xf32> to vector<16x1xf32>
    %cst_47 = arith.constant 1.280000e+02 : f32
    %127 = vector.broadcast %cst_47 : f32 to vector<16x1xf32>
    %128 = arith.divf %126, %127 : vector<16x1xf32>
    %129 = vector.broadcast %121 : vector<16x1xf32> to vector<16x128xf32>
    %130 = arith.subf %113, %129 : vector<16x128xf32>
    %cst_48 = arith.constant 9.99999974E-6 : f32
    %131 = vector.broadcast %cst_48 : f32 to vector<16x1xf32>
    %132 = arith.addf %128, %131 : vector<16x1xf32>
    %133 = math.rsqrt %132 : vector<16x1xf32>
    %134 = vector.broadcast %133 : vector<16x1xf32> to vector<16x128xf32>
    %135 = arith.mulf %130, %134 : vector<16x128xf32>
    %136 = vector.broadcast %115 : vector<1x128xf32> to vector<16x128xf32>
    %137 = arith.mulf %135, %136 : vector<16x128xf32>
    %138 = vector.broadcast %117 : vector<1x128xf32> to vector<16x128xf32>
    %139 = arith.addf %137, %138 : vector<16x128xf32>
    %c0_49 = arith.constant 0 : index
    %c0_50 = arith.constant 0 : index
    %c0_51 = arith.constant 0 : index
    %140 = vector.load %arg11[%c0_49, %c0_50, %c0_51] : memref<2x128x256xbf16, #tpu.memory_space<vmem>>, vector<1x128x256xbf16>
    %141 = vector.shape_cast %140 : vector<1x128x256xbf16> to vector<128x256xbf16>
    %c0_52 = arith.constant 0 : index
    %c0_53 = arith.constant 0 : index
    %c0_54 = arith.constant 0 : index
    %142 = vector.load %arg12[%c0_52, %c0_53, %c0_54] : memref<2x1x256xf32, #tpu.memory_space<vmem>>, vector<1x1x256xf32>
    %143 = vector.shape_cast %142 : vector<1x1x256xf32> to vector<1x256xf32>
    %144 = arith.truncf %139 : vector<16x128xf32> to vector<16x128xbf16>
    %cst_55 = arith.constant dense<0.000000e+00> : vector<16x256xf32>
    %145 = tpu.matmul %144, %141, %cst_55 {dimension_numbers = #tpu.dot_dimension_numbers<[1], [0], [0], [1], [0, 0, 1, 1], [], []>} : vector<16x128xbf16>, vector<128x256xbf16>, vector<16x256xf32> -> vector<16x256xf32>
    %146 = vector.broadcast %143 : vector<1x256xf32> to vector<16x256xf32>
    %147 = arith.addf %145, %146 : vector<16x256xf32>
    %cst_56 = arith.constant 0.000000e+00 : f32
    %148 = vector.broadcast %cst_56 : f32 to vector<16x256xf32>
    %149 = arith.maximumf %147, %148 : vector<16x256xf32>
    %c0_57 = arith.constant 0 : index
    %c0_58 = arith.constant 0 : index
    %c0_59 = arith.constant 0 : index
    %150 = vector.load %arg13[%c0_57, %c0_58, %c0_59] : memref<2x256x128xbf16, #tpu.memory_space<vmem>>, vector<1x256x128xbf16>
    %151 = vector.shape_cast %150 : vector<1x256x128xbf16> to vector<256x128xbf16>
    %c0_60 = arith.constant 0 : index
    %c0_61 = arith.constant 0 : index
    %c0_62 = arith.constant 0 : index
    %152 = vector.load %arg14[%c0_60, %c0_61, %c0_62] : memref<2x1x128xf32, #tpu.memory_space<vmem>>, vector<1x1x128xf32>
    %153 = vector.shape_cast %152 : vector<1x1x128xf32> to vector<1x128xf32>
    %154 = arith.truncf %149 : vector<16x256xf32> to vector<16x256xbf16>
    %cst_63 = arith.constant dense<0.000000e+00> : vector<16x128xf32>
    %155 = tpu.matmul %154, %151, %cst_63 {dimension_numbers = #tpu.dot_dimension_numbers<[1], [0], [0], [1], [0, 0, 1, 1], [], []>} : vector<16x256xbf16>, vector<256x128xbf16>, vector<16x128xf32> -> vector<16x128xf32>
    %156 = vector.broadcast %153 : vector<1x128xf32> to vector<16x128xf32>
    %157 = arith.addf %155, %156 : vector<16x128xf32>
    %158 = arith.addf %157, %139 : vector<16x128xf32>
    %c0_64 = arith.constant 0 : index
    %c0_65 = arith.constant 0 : index
    %c0_66 = arith.constant 0 : index
    %159 = vector.load %arg15[%c0_64, %c0_65, %c0_66] : memref<2x1x128xf32, #tpu.memory_space<vmem>>, vector<1x1x128xf32>
    %160 = vector.shape_cast %159 : vector<1x1x128xf32> to vector<1x128xf32>
    %c0_67 = arith.constant 0 : index
    %c0_68 = arith.constant 0 : index
    %c0_69 = arith.constant 0 : index
    %161 = vector.load %arg16[%c0_67, %c0_68, %c0_69] : memref<2x1x128xf32, #tpu.memory_space<vmem>>, vector<1x1x128xf32>
    %162 = vector.shape_cast %161 : vector<1x1x128xf32> to vector<1x128xf32>
    %cst_70 = arith.constant dense<0.000000e+00> : vector<16xf32>
    %163 = vector.multi_reduction <add>, %158, %cst_70 [1] : vector<16x128xf32> to vector<16xf32>
    %164 = vector.shape_cast %163 : vector<16xf32> to vector<16x1xf32>
    %cst_71 = arith.constant 1.280000e+02 : f32
    %165 = vector.broadcast %cst_71 : f32 to vector<16x1xf32>
    %166 = arith.divf %164, %165 : vector<16x1xf32>
    %167 = vector.broadcast %166 : vector<16x1xf32> to vector<16x128xf32>
    %168 = arith.subf %158, %167 : vector<16x128xf32>
    %169 = arith.mulf %168, %168 : vector<16x128xf32>
    %cst_72 = arith.constant dense<0.000000e+00> : vector<16xf32>
    %170 = vector.multi_reduction <add>, %169, %cst_72 [1] : vector<16x128xf32> to vector<16xf32>
    %171 = vector.shape_cast %170 : vector<16xf32> to vector<16x1xf32>
    %cst_73 = arith.constant 1.280000e+02 : f32
    %172 = vector.broadcast %cst_73 : f32 to vector<16x1xf32>
    %173 = arith.divf %171, %172 : vector<16x1xf32>
    %174 = vector.broadcast %166 : vector<16x1xf32> to vector<16x128xf32>
    %175 = arith.subf %158, %174 : vector<16x128xf32>
    %cst_74 = arith.constant 9.99999974E-6 : f32
    %176 = vector.broadcast %cst_74 : f32 to vector<16x1xf32>
    %177 = arith.addf %173, %176 : vector<16x1xf32>
    %178 = math.rsqrt %177 : vector<16x1xf32>
    %179 = vector.broadcast %178 : vector<16x1xf32> to vector<16x128xf32>
    %180 = arith.mulf %175, %179 : vector<16x128xf32>
    %181 = vector.broadcast %160 : vector<1x128xf32> to vector<16x128xf32>
    %182 = arith.mulf %180, %181 : vector<16x128xf32>
    %183 = vector.broadcast %162 : vector<1x128xf32> to vector<16x128xf32>
    %184 = arith.addf %182, %183 : vector<16x128xf32>
    %c1 = arith.constant 1 : index
    %c0_75 = arith.constant 0 : index
    %c0_76 = arith.constant 0 : index
    %185 = vector.load %arg5[%c1, %c0_75, %c0_76] : memref<2x128x384xbf16, #tpu.memory_space<vmem>>, vector<1x128x384xbf16>
    %186 = vector.shape_cast %185 : vector<1x128x384xbf16> to vector<128x384xbf16>
    %c1_77 = arith.constant 1 : index
    %c0_78 = arith.constant 0 : index
    %c0_79 = arith.constant 0 : index
    %187 = vector.load %arg6[%c1_77, %c0_78, %c0_79] : memref<2x1x384xf32, #tpu.memory_space<vmem>>, vector<1x1x384xf32>
    %188 = vector.shape_cast %187 : vector<1x1x384xf32> to vector<1x384xf32>
    %c1_80 = arith.constant 1 : index
    %c0_81 = arith.constant 0 : index
    %c0_82 = arith.constant 0 : index
    %189 = vector.load %arg7[%c1_80, %c0_81, %c0_82] : memref<2x128x128xbf16, #tpu.memory_space<vmem>>, vector<1x128x128xbf16>
    %190 = vector.shape_cast %189 : vector<1x128x128xbf16> to vector<128x128xbf16>
    %c1_83 = arith.constant 1 : index
    %c0_84 = arith.constant 0 : index
    %c0_85 = arith.constant 0 : index
    %191 = vector.load %arg8[%c1_83, %c0_84, %c0_85] : memref<2x1x128xf32, #tpu.memory_space<vmem>>, vector<1x1x128xf32>
    %192 = vector.shape_cast %191 : vector<1x1x128xf32> to vector<1x128xf32>
    %193 = arith.truncf %184 : vector<16x128xf32> to vector<16x128xbf16>
    %cst_86 = arith.constant dense<0.000000e+00> : vector<16x384xf32>
    %194 = tpu.matmul %193, %186, %cst_86 {dimension_numbers = #tpu.dot_dimension_numbers<[1], [0], [0], [1], [0, 0, 1, 1], [], []>} : vector<16x128xbf16>, vector<128x384xbf16>, vector<16x384xf32> -> vector<16x384xf32>
    %195 = vector.broadcast %188 : vector<1x384xf32> to vector<16x384xf32>
    %196 = arith.addf %194, %195 : vector<16x384xf32>
    %197 = vector.extract_strided_slice %196 {offsets = [0, 0], sizes = [16, 32], strides = [1, 1]} : vector<16x384xf32> to vector<16x32xf32>
    %198 = vector.extract_strided_slice %196 {offsets = [0, 32], sizes = [16, 32], strides = [1, 1]} : vector<16x384xf32> to vector<16x32xf32>
    %199 = vector.extract_strided_slice %196 {offsets = [0, 64], sizes = [16, 32], strides = [1, 1]} : vector<16x384xf32> to vector<16x32xf32>
    %200 = arith.truncf %197 : vector<16x32xf32> to vector<16x32xbf16>
    %201 = tpu.transpose %198, [1, 0] : vector<16x32xf32> -> vector<32x16xf32>
    %202 = arith.truncf %201 : vector<32x16xf32> to vector<32x16xbf16>
    %cst_87 = arith.constant dense<0.000000e+00> : vector<16x16xf32>
    %203 = tpu.matmul %200, %202, %cst_87 {dimension_numbers = #tpu.dot_dimension_numbers<[1], [0], [0], [1], [0, 0, 1, 1], [], []>} : vector<16x32xbf16>, vector<32x16xbf16>, vector<16x16xf32> -> vector<16x16xf32>
    %cst_88 = arith.constant 0.176776692 : f32
    %204 = vector.broadcast %cst_88 : f32 to vector<16x16xf32>
    %205 = arith.mulf %203, %204 : vector<16x16xf32>
    %206 = arith.addf %205, %3 : vector<16x16xf32>
    %cst_89 = arith.constant dense<0xFF800000> : vector<16xf32>
    %207 = vector.multi_reduction <maximumf>, %206, %cst_89 [1] : vector<16x16xf32> to vector<16xf32>
    %208 = vector.shape_cast %207 : vector<16xf32> to vector<16x1xf32>
    %209 = vector.broadcast %208 : vector<16x1xf32> to vector<16x16xf32>
    %210 = arith.subf %206, %209 : vector<16x16xf32>
    %211 = math.exp %210 : vector<16x16xf32>
    %cst_90 = arith.constant dense<0.000000e+00> : vector<16xf32>
    %212 = vector.multi_reduction <add>, %211, %cst_90 [1] : vector<16x16xf32> to vector<16xf32>
    %213 = vector.shape_cast %212 : vector<16xf32> to vector<16x1xf32>
    %214 = tpu.reciprocal %213 {approx = true} : vector<16x1xf32> -> vector<16x1xf32>
    %215 = vector.broadcast %214 : vector<16x1xf32> to vector<16x16xf32>
    %216 = arith.mulf %211, %215 : vector<16x16xf32>
    %217 = arith.truncf %216 : vector<16x16xf32> to vector<16x16xbf16>
    %218 = arith.truncf %199 : vector<16x32xf32> to vector<16x32xbf16>
    %cst_91 = arith.constant dense<0.000000e+00> : vector<16x32xf32>
    %219 = tpu.matmul %217, %218, %cst_91 {dimension_numbers = #tpu.dot_dimension_numbers<[1], [0], [0], [1], [0, 0, 1, 1], [], []>} : vector<16x16xbf16>, vector<16x32xbf16>, vector<16x32xf32> -> vector<16x32xf32>
    %220 = vector.extract_strided_slice %196 {offsets = [0, 96], sizes = [16, 32], strides = [1, 1]} : vector<16x384xf32> to vector<16x32xf32>
    %221 = vector.extract_strided_slice %196 {offsets = [0, 128], sizes = [16, 32], strides = [1, 1]} : vector<16x384xf32> to vector<16x32xf32>
    %222 = vector.extract_strided_slice %196 {offsets = [0, 160], sizes = [16, 32], strides = [1, 1]} : vector<16x384xf32> to vector<16x32xf32>
    %223 = arith.truncf %220 : vector<16x32xf32> to vector<16x32xbf16>
    %224 = tpu.transpose %221, [1, 0] : vector<16x32xf32> -> vector<32x16xf32>
    %225 = arith.truncf %224 : vector<32x16xf32> to vector<32x16xbf16>
    %cst_92 = arith.constant dense<0.000000e+00> : vector<16x16xf32>
    %226 = tpu.matmul %223, %225, %cst_92 {dimension_numbers = #tpu.dot_dimension_numbers<[1], [0], [0], [1], [0, 0, 1, 1], [], []>} : vector<16x32xbf16>, vector<32x16xbf16>, vector<16x16xf32> -> vector<16x16xf32>
    %cst_93 = arith.constant 0.176776692 : f32
    %227 = vector.broadcast %cst_93 : f32 to vector<16x16xf32>
    %228 = arith.mulf %226, %227 : vector<16x16xf32>
    %229 = arith.addf %228, %3 : vector<16x16xf32>
    %cst_94 = arith.constant dense<0xFF800000> : vector<16xf32>
    %230 = vector.multi_reduction <maximumf>, %229, %cst_94 [1] : vector<16x16xf32> to vector<16xf32>
    %231 = vector.shape_cast %230 : vector<16xf32> to vector<16x1xf32>
    %232 = vector.broadcast %231 : vector<16x1xf32> to vector<16x16xf32>
    %233 = arith.subf %229, %232 : vector<16x16xf32>
    %234 = math.exp %233 : vector<16x16xf32>
    %cst_95 = arith.constant dense<0.000000e+00> : vector<16xf32>
    %235 = vector.multi_reduction <add>, %234, %cst_95 [1] : vector<16x16xf32> to vector<16xf32>
    %236 = vector.shape_cast %235 : vector<16xf32> to vector<16x1xf32>
    %237 = tpu.reciprocal %236 {approx = true} : vector<16x1xf32> -> vector<16x1xf32>
    %238 = vector.broadcast %237 : vector<16x1xf32> to vector<16x16xf32>
    %239 = arith.mulf %234, %238 : vector<16x16xf32>
    %240 = arith.truncf %239 : vector<16x16xf32> to vector<16x16xbf16>
    %241 = arith.truncf %222 : vector<16x32xf32> to vector<16x32xbf16>
    %cst_96 = arith.constant dense<0.000000e+00> : vector<16x32xf32>
    %242 = tpu.matmul %240, %241, %cst_96 {dimension_numbers = #tpu.dot_dimension_numbers<[1], [0], [0], [1], [0, 0, 1, 1], [], []>} : vector<16x16xbf16>, vector<16x32xbf16>, vector<16x32xf32> -> vector<16x32xf32>
    %243 = vector.extract_strided_slice %196 {offsets = [0, 192], sizes = [16, 32], strides = [1, 1]} : vector<16x384xf32> to vector<16x32xf32>
    %244 = vector.extract_strided_slice %196 {offsets = [0, 224], sizes = [16, 32], strides = [1, 1]} : vector<16x384xf32> to vector<16x32xf32>
    %245 = vector.extract_strided_slice %196 {offsets = [0, 256], sizes = [16, 32], strides = [1, 1]} : vector<16x384xf32> to vector<16x32xf32>
    %246 = arith.truncf %243 : vector<16x32xf32> to vector<16x32xbf16>
    %247 = tpu.transpose %244, [1, 0] : vector<16x32xf32> -> vector<32x16xf32>
    %248 = arith.truncf %247 : vector<32x16xf32> to vector<32x16xbf16>
    %cst_97 = arith.constant dense<0.000000e+00> : vector<16x16xf32>
    %249 = tpu.matmul %246, %248, %cst_97 {dimension_numbers = #tpu.dot_dimension_numbers<[1], [0], [0], [1], [0, 0, 1, 1], [], []>} : vector<16x32xbf16>, vector<32x16xbf16>, vector<16x16xf32> -> vector<16x16xf32>
    %cst_98 = arith.constant 0.176776692 : f32
    %250 = vector.broadcast %cst_98 : f32 to vector<16x16xf32>
    %251 = arith.mulf %249, %250 : vector<16x16xf32>
    %252 = arith.addf %251, %3 : vector<16x16xf32>
    %cst_99 = arith.constant dense<0xFF800000> : vector<16xf32>
    %253 = vector.multi_reduction <maximumf>, %252, %cst_99 [1] : vector<16x16xf32> to vector<16xf32>
    %254 = vector.shape_cast %253 : vector<16xf32> to vector<16x1xf32>
    %255 = vector.broadcast %254 : vector<16x1xf32> to vector<16x16xf32>
    %256 = arith.subf %252, %255 : vector<16x16xf32>
    %257 = math.exp %256 : vector<16x16xf32>
    %cst_100 = arith.constant dense<0.000000e+00> : vector<16xf32>
    %258 = vector.multi_reduction <add>, %257, %cst_100 [1] : vector<16x16xf32> to vector<16xf32>
    %259 = vector.shape_cast %258 : vector<16xf32> to vector<16x1xf32>
    %260 = tpu.reciprocal %259 {approx = true} : vector<16x1xf32> -> vector<16x1xf32>
    %261 = vector.broadcast %260 : vector<16x1xf32> to vector<16x16xf32>
    %262 = arith.mulf %257, %261 : vector<16x16xf32>
    %263 = arith.truncf %262 : vector<16x16xf32> to vector<16x16xbf16>
    %264 = arith.truncf %245 : vector<16x32xf32> to vector<16x32xbf16>
    %cst_101 = arith.constant dense<0.000000e+00> : vector<16x32xf32>
    %265 = tpu.matmul %263, %264, %cst_101 {dimension_numbers = #tpu.dot_dimension_numbers<[1], [0], [0], [1], [0, 0, 1, 1], [], []>} : vector<16x16xbf16>, vector<16x32xbf16>, vector<16x32xf32> -> vector<16x32xf32>
    %266 = vector.extract_strided_slice %196 {offsets = [0, 288], sizes = [16, 32], strides = [1, 1]} : vector<16x384xf32> to vector<16x32xf32>
    %267 = vector.extract_strided_slice %196 {offsets = [0, 320], sizes = [16, 32], strides = [1, 1]} : vector<16x384xf32> to vector<16x32xf32>
    %268 = vector.extract_strided_slice %196 {offsets = [0, 352], sizes = [16, 32], strides = [1, 1]} : vector<16x384xf32> to vector<16x32xf32>
    %269 = arith.truncf %266 : vector<16x32xf32> to vector<16x32xbf16>
    %270 = tpu.transpose %267, [1, 0] : vector<16x32xf32> -> vector<32x16xf32>
    %271 = arith.truncf %270 : vector<32x16xf32> to vector<32x16xbf16>
    %cst_102 = arith.constant dense<0.000000e+00> : vector<16x16xf32>
    %272 = tpu.matmul %269, %271, %cst_102 {dimension_numbers = #tpu.dot_dimension_numbers<[1], [0], [0], [1], [0, 0, 1, 1], [], []>} : vector<16x32xbf16>, vector<32x16xbf16>, vector<16x16xf32> -> vector<16x16xf32>
    %cst_103 = arith.constant 0.176776692 : f32
    %273 = vector.broadcast %cst_103 : f32 to vector<16x16xf32>
    %274 = arith.mulf %272, %273 : vector<16x16xf32>
    %275 = arith.addf %274, %3 : vector<16x16xf32>
    %cst_104 = arith.constant dense<0xFF800000> : vector<16xf32>
    %276 = vector.multi_reduction <maximumf>, %275, %cst_104 [1] : vector<16x16xf32> to vector<16xf32>
    %277 = vector.shape_cast %276 : vector<16xf32> to vector<16x1xf32>
    %278 = vector.broadcast %277 : vector<16x1xf32> to vector<16x16xf32>
    %279 = arith.subf %275, %278 : vector<16x16xf32>
    %280 = math.exp %279 : vector<16x16xf32>
    %cst_105 = arith.constant dense<0.000000e+00> : vector<16xf32>
    %281 = vector.multi_reduction <add>, %280, %cst_105 [1] : vector<16x16xf32> to vector<16xf32>
    %282 = vector.shape_cast %281 : vector<16xf32> to vector<16x1xf32>
    %283 = tpu.reciprocal %282 {approx = true} : vector<16x1xf32> -> vector<16x1xf32>
    %284 = vector.broadcast %283 : vector<16x1xf32> to vector<16x16xf32>
    %285 = arith.mulf %280, %284 : vector<16x16xf32>
    %286 = arith.truncf %285 : vector<16x16xf32> to vector<16x16xbf16>
    %287 = arith.truncf %268 : vector<16x32xf32> to vector<16x32xbf16>
    %cst_106 = arith.constant dense<0.000000e+00> : vector<16x32xf32>
    %288 = tpu.matmul %286, %287, %cst_106 {dimension_numbers = #tpu.dot_dimension_numbers<[1], [0], [0], [1], [0, 0, 1, 1], [], []>} : vector<16x16xbf16>, vector<16x32xbf16>, vector<16x32xf32> -> vector<16x32xf32>
    %289 = tpu.concatenate %219, %242, %265, %288 in 1 : vector<16x32xf32>, vector<16x32xf32>, vector<16x32xf32>, vector<16x32xf32> -> vector<16x128xf32>
    %290 = arith.truncf %289 : vector<16x128xf32> to vector<16x128xbf16>
    %cst_107 = arith.constant dense<0.000000e+00> : vector<16x128xf32>
    %291 = tpu.matmul %290, %190, %cst_107 {dimension_numbers = #tpu.dot_dimension_numbers<[1], [0], [0], [1], [0, 0, 1, 1], [], []>} : vector<16x128xbf16>, vector<128x128xbf16>, vector<16x128xf32> -> vector<16x128xf32>
    %292 = vector.broadcast %192 : vector<1x128xf32> to vector<16x128xf32>
    %293 = arith.addf %291, %292 : vector<16x128xf32>
    %294 = arith.addf %293, %184 : vector<16x128xf32>
    %c1_108 = arith.constant 1 : index
    %c0_109 = arith.constant 0 : index
    %c0_110 = arith.constant 0 : index
    %295 = vector.load %arg9[%c1_108, %c0_109, %c0_110] : memref<2x1x128xf32, #tpu.memory_space<vmem>>, vector<1x1x128xf32>
    %296 = vector.shape_cast %295 : vector<1x1x128xf32> to vector<1x128xf32>
    %c1_111 = arith.constant 1 : index
    %c0_112 = arith.constant 0 : index
    %c0_113 = arith.constant 0 : index
    %297 = vector.load %arg10[%c1_111, %c0_112, %c0_113] : memref<2x1x128xf32, #tpu.memory_space<vmem>>, vector<1x1x128xf32>
    %298 = vector.shape_cast %297 : vector<1x1x128xf32> to vector<1x128xf32>
    %cst_114 = arith.constant dense<0.000000e+00> : vector<16xf32>
    %299 = vector.multi_reduction <add>, %294, %cst_114 [1] : vector<16x128xf32> to vector<16xf32>
    %300 = vector.shape_cast %299 : vector<16xf32> to vector<16x1xf32>
    %cst_115 = arith.constant 1.280000e+02 : f32
    %301 = vector.broadcast %cst_115 : f32 to vector<16x1xf32>
    %302 = arith.divf %300, %301 : vector<16x1xf32>
    %303 = vector.broadcast %302 : vector<16x1xf32> to vector<16x128xf32>
    %304 = arith.subf %294, %303 : vector<16x128xf32>
    %305 = arith.mulf %304, %304 : vector<16x128xf32>
    %cst_116 = arith.constant dense<0.000000e+00> : vector<16xf32>
    %306 = vector.multi_reduction <add>, %305, %cst_116 [1] : vector<16x128xf32> to vector<16xf32>
    %307 = vector.shape_cast %306 : vector<16xf32> to vector<16x1xf32>
    %cst_117 = arith.constant 1.280000e+02 : f32
    %308 = vector.broadcast %cst_117 : f32 to vector<16x1xf32>
    %309 = arith.divf %307, %308 : vector<16x1xf32>
    %310 = vector.broadcast %302 : vector<16x1xf32> to vector<16x128xf32>
    %311 = arith.subf %294, %310 : vector<16x128xf32>
    %cst_118 = arith.constant 9.99999974E-6 : f32
    %312 = vector.broadcast %cst_118 : f32 to vector<16x1xf32>
    %313 = arith.addf %309, %312 : vector<16x1xf32>
    %314 = math.rsqrt %313 : vector<16x1xf32>
    %315 = vector.broadcast %314 : vector<16x1xf32> to vector<16x128xf32>
    %316 = arith.mulf %311, %315 : vector<16x128xf32>
    %317 = vector.broadcast %296 : vector<1x128xf32> to vector<16x128xf32>
    %318 = arith.mulf %316, %317 : vector<16x128xf32>
    %319 = vector.broadcast %298 : vector<1x128xf32> to vector<16x128xf32>
    %320 = arith.addf %318, %319 : vector<16x128xf32>
    %c1_119 = arith.constant 1 : index
    %c0_120 = arith.constant 0 : index
    %c0_121 = arith.constant 0 : index
    %321 = vector.load %arg11[%c1_119, %c0_120, %c0_121] : memref<2x128x256xbf16, #tpu.memory_space<vmem>>, vector<1x128x256xbf16>
    %322 = vector.shape_cast %321 : vector<1x128x256xbf16> to vector<128x256xbf16>
    %c1_122 = arith.constant 1 : index
    %c0_123 = arith.constant 0 : index
    %c0_124 = arith.constant 0 : index
    %323 = vector.load %arg12[%c1_122, %c0_123, %c0_124] : memref<2x1x256xf32, #tpu.memory_space<vmem>>, vector<1x1x256xf32>
    %324 = vector.shape_cast %323 : vector<1x1x256xf32> to vector<1x256xf32>
    %325 = arith.truncf %320 : vector<16x128xf32> to vector<16x128xbf16>
    %cst_125 = arith.constant dense<0.000000e+00> : vector<16x256xf32>
    %326 = tpu.matmul %325, %322, %cst_125 {dimension_numbers = #tpu.dot_dimension_numbers<[1], [0], [0], [1], [0, 0, 1, 1], [], []>} : vector<16x128xbf16>, vector<128x256xbf16>, vector<16x256xf32> -> vector<16x256xf32>
    %327 = vector.broadcast %324 : vector<1x256xf32> to vector<16x256xf32>
    %328 = arith.addf %326, %327 : vector<16x256xf32>
    %cst_126 = arith.constant 0.000000e+00 : f32
    %329 = vector.broadcast %cst_126 : f32 to vector<16x256xf32>
    %330 = arith.maximumf %328, %329 : vector<16x256xf32>
    %c1_127 = arith.constant 1 : index
    %c0_128 = arith.constant 0 : index
    %c0_129 = arith.constant 0 : index
    %331 = vector.load %arg13[%c1_127, %c0_128, %c0_129] : memref<2x256x128xbf16, #tpu.memory_space<vmem>>, vector<1x256x128xbf16>
    %332 = vector.shape_cast %331 : vector<1x256x128xbf16> to vector<256x128xbf16>
    %c1_130 = arith.constant 1 : index
    %c0_131 = arith.constant 0 : index
    %c0_132 = arith.constant 0 : index
    %333 = vector.load %arg14[%c1_130, %c0_131, %c0_132] : memref<2x1x128xf32, #tpu.memory_space<vmem>>, vector<1x1x128xf32>
    %334 = vector.shape_cast %333 : vector<1x1x128xf32> to vector<1x128xf32>
    %335 = arith.truncf %330 : vector<16x256xf32> to vector<16x256xbf16>
    %cst_133 = arith.constant dense<0.000000e+00> : vector<16x128xf32>
    %336 = tpu.matmul %335, %332, %cst_133 {dimension_numbers = #tpu.dot_dimension_numbers<[1], [0], [0], [1], [0, 0, 1, 1], [], []>} : vector<16x256xbf16>, vector<256x128xbf16>, vector<16x128xf32> -> vector<16x128xf32>
    %337 = vector.broadcast %334 : vector<1x128xf32> to vector<16x128xf32>
    %338 = arith.addf %336, %337 : vector<16x128xf32>
    %339 = arith.addf %338, %320 : vector<16x128xf32>
    %c1_134 = arith.constant 1 : index
    %c0_135 = arith.constant 0 : index
    %c0_136 = arith.constant 0 : index
    %340 = vector.load %arg15[%c1_134, %c0_135, %c0_136] : memref<2x1x128xf32, #tpu.memory_space<vmem>>, vector<1x1x128xf32>
    %341 = vector.shape_cast %340 : vector<1x1x128xf32> to vector<1x128xf32>
    %c1_137 = arith.constant 1 : index
    %c0_138 = arith.constant 0 : index
    %c0_139 = arith.constant 0 : index
    %342 = vector.load %arg16[%c1_137, %c0_138, %c0_139] : memref<2x1x128xf32, #tpu.memory_space<vmem>>, vector<1x1x128xf32>
    %343 = vector.shape_cast %342 : vector<1x1x128xf32> to vector<1x128xf32>
    %cst_140 = arith.constant dense<0.000000e+00> : vector<16xf32>
    %344 = vector.multi_reduction <add>, %339, %cst_140 [1] : vector<16x128xf32> to vector<16xf32>
    %345 = vector.shape_cast %344 : vector<16xf32> to vector<16x1xf32>
    %cst_141 = arith.constant 1.280000e+02 : f32
    %346 = vector.broadcast %cst_141 : f32 to vector<16x1xf32>
    %347 = arith.divf %345, %346 : vector<16x1xf32>
    %348 = vector.broadcast %347 : vector<16x1xf32> to vector<16x128xf32>
    %349 = arith.subf %339, %348 : vector<16x128xf32>
    %350 = arith.mulf %349, %349 : vector<16x128xf32>
    %cst_142 = arith.constant dense<0.000000e+00> : vector<16xf32>
    %351 = vector.multi_reduction <add>, %350, %cst_142 [1] : vector<16x128xf32> to vector<16xf32>
    %352 = vector.shape_cast %351 : vector<16xf32> to vector<16x1xf32>
    %cst_143 = arith.constant 1.280000e+02 : f32
    %353 = vector.broadcast %cst_143 : f32 to vector<16x1xf32>
    %354 = arith.divf %352, %353 : vector<16x1xf32>
    %355 = vector.broadcast %347 : vector<16x1xf32> to vector<16x128xf32>
    %356 = arith.subf %339, %355 : vector<16x128xf32>
    %cst_144 = arith.constant 9.99999974E-6 : f32
    %357 = vector.broadcast %cst_144 : f32 to vector<16x1xf32>
    %358 = arith.addf %354, %357 : vector<16x1xf32>
    %359 = math.rsqrt %358 : vector<16x1xf32>
    %360 = vector.broadcast %359 : vector<16x1xf32> to vector<16x128xf32>
    %361 = arith.mulf %356, %360 : vector<16x128xf32>
    %362 = vector.broadcast %341 : vector<1x128xf32> to vector<16x128xf32>
    %363 = arith.mulf %361, %362 : vector<16x128xf32>
    %364 = vector.broadcast %343 : vector<1x128xf32> to vector<16x128xf32>
    %365 = arith.addf %363, %364 : vector<16x128xf32>
    %c0_145 = arith.constant 0 : index
    %c0_146 = arith.constant 0 : index
    %c0_147 = arith.constant 0 : index
    %366 = vector.load %arg2[%c0_145, %c0_146, %c0_147] : memref<1x16x128xf32, #tpu.memory_space<vmem>>, vector<1x16x128xf32>
    %367 = vector.shape_cast %366 : vector<1x16x128xf32> to vector<16x128xf32>
    %c0_148 = arith.constant 0 : index
    %c0_149 = arith.constant 0 : index
    %c0_150 = arith.constant 0 : index
    %368 = vector.load %arg4[%c0_148, %c0_149, %c0_150] : memref<1x16x16xf32, #tpu.memory_space<vmem>>, vector<1x16x16xf32>
    %369 = vector.shape_cast %368 : vector<1x16x16xf32> to vector<16x16xf32>
    %c0_151 = arith.constant 0 : index
    %c0_152 = arith.constant 0 : index
    %c0_153 = arith.constant 0 : index
    %370 = vector.load %arg17[%c0_151, %c0_152, %c0_153] : memref<2x128x384xbf16, #tpu.memory_space<vmem>>, vector<1x128x384xbf16>
    %371 = vector.shape_cast %370 : vector<1x128x384xbf16> to vector<128x384xbf16>
    %c0_154 = arith.constant 0 : index
    %c0_155 = arith.constant 0 : index
    %c0_156 = arith.constant 0 : index
    %372 = vector.load %arg18[%c0_154, %c0_155, %c0_156] : memref<2x1x384xf32, #tpu.memory_space<vmem>>, vector<1x1x384xf32>
    %373 = vector.shape_cast %372 : vector<1x1x384xf32> to vector<1x384xf32>
    %c0_157 = arith.constant 0 : index
    %c0_158 = arith.constant 0 : index
    %c0_159 = arith.constant 0 : index
    %374 = vector.load %arg19[%c0_157, %c0_158, %c0_159] : memref<2x128x128xbf16, #tpu.memory_space<vmem>>, vector<1x128x128xbf16>
    %375 = vector.shape_cast %374 : vector<1x128x128xbf16> to vector<128x128xbf16>
    %c0_160 = arith.constant 0 : index
    %c0_161 = arith.constant 0 : index
    %c0_162 = arith.constant 0 : index
    %376 = vector.load %arg20[%c0_160, %c0_161, %c0_162] : memref<2x1x128xf32, #tpu.memory_space<vmem>>, vector<1x1x128xf32>
    %377 = vector.shape_cast %376 : vector<1x1x128xf32> to vector<1x128xf32>
    %378 = arith.truncf %367 : vector<16x128xf32> to vector<16x128xbf16>
    %cst_163 = arith.constant dense<0.000000e+00> : vector<16x384xf32>
    %379 = tpu.matmul %378, %371, %cst_163 {dimension_numbers = #tpu.dot_dimension_numbers<[1], [0], [0], [1], [0, 0, 1, 1], [], []>} : vector<16x128xbf16>, vector<128x384xbf16>, vector<16x384xf32> -> vector<16x384xf32>
    %380 = vector.broadcast %373 : vector<1x384xf32> to vector<16x384xf32>
    %381 = arith.addf %379, %380 : vector<16x384xf32>
    %382 = vector.extract_strided_slice %381 {offsets = [0, 0], sizes = [16, 32], strides = [1, 1]} : vector<16x384xf32> to vector<16x32xf32>
    %383 = vector.extract_strided_slice %381 {offsets = [0, 32], sizes = [16, 32], strides = [1, 1]} : vector<16x384xf32> to vector<16x32xf32>
    %384 = vector.extract_strided_slice %381 {offsets = [0, 64], sizes = [16, 32], strides = [1, 1]} : vector<16x384xf32> to vector<16x32xf32>
    %385 = arith.truncf %382 : vector<16x32xf32> to vector<16x32xbf16>
    %386 = tpu.transpose %383, [1, 0] : vector<16x32xf32> -> vector<32x16xf32>
    %387 = arith.truncf %386 : vector<32x16xf32> to vector<32x16xbf16>
    %cst_164 = arith.constant dense<0.000000e+00> : vector<16x16xf32>
    %388 = tpu.matmul %385, %387, %cst_164 {dimension_numbers = #tpu.dot_dimension_numbers<[1], [0], [0], [1], [0, 0, 1, 1], [], []>} : vector<16x32xbf16>, vector<32x16xbf16>, vector<16x16xf32> -> vector<16x16xf32>
    %cst_165 = arith.constant 0.176776692 : f32
    %389 = vector.broadcast %cst_165 : f32 to vector<16x16xf32>
    %390 = arith.mulf %388, %389 : vector<16x16xf32>
    %391 = arith.addf %390, %369 : vector<16x16xf32>
    %cst_166 = arith.constant dense<0xFF800000> : vector<16xf32>
    %392 = vector.multi_reduction <maximumf>, %391, %cst_166 [1] : vector<16x16xf32> to vector<16xf32>
    %393 = vector.shape_cast %392 : vector<16xf32> to vector<16x1xf32>
    %394 = vector.broadcast %393 : vector<16x1xf32> to vector<16x16xf32>
    %395 = arith.subf %391, %394 : vector<16x16xf32>
    %396 = math.exp %395 : vector<16x16xf32>
    %cst_167 = arith.constant dense<0.000000e+00> : vector<16xf32>
    %397 = vector.multi_reduction <add>, %396, %cst_167 [1] : vector<16x16xf32> to vector<16xf32>
    %398 = vector.shape_cast %397 : vector<16xf32> to vector<16x1xf32>
    %399 = tpu.reciprocal %398 {approx = true} : vector<16x1xf32> -> vector<16x1xf32>
    %400 = vector.broadcast %399 : vector<16x1xf32> to vector<16x16xf32>
    %401 = arith.mulf %396, %400 : vector<16x16xf32>
    %402 = arith.truncf %401 : vector<16x16xf32> to vector<16x16xbf16>
    %403 = arith.truncf %384 : vector<16x32xf32> to vector<16x32xbf16>
    %cst_168 = arith.constant dense<0.000000e+00> : vector<16x32xf32>
    %404 = tpu.matmul %402, %403, %cst_168 {dimension_numbers = #tpu.dot_dimension_numbers<[1], [0], [0], [1], [0, 0, 1, 1], [], []>} : vector<16x16xbf16>, vector<16x32xbf16>, vector<16x32xf32> -> vector<16x32xf32>
    %405 = vector.extract_strided_slice %381 {offsets = [0, 96], sizes = [16, 32], strides = [1, 1]} : vector<16x384xf32> to vector<16x32xf32>
    %406 = vector.extract_strided_slice %381 {offsets = [0, 128], sizes = [16, 32], strides = [1, 1]} : vector<16x384xf32> to vector<16x32xf32>
    %407 = vector.extract_strided_slice %381 {offsets = [0, 160], sizes = [16, 32], strides = [1, 1]} : vector<16x384xf32> to vector<16x32xf32>
    %408 = arith.truncf %405 : vector<16x32xf32> to vector<16x32xbf16>
    %409 = tpu.transpose %406, [1, 0] : vector<16x32xf32> -> vector<32x16xf32>
    %410 = arith.truncf %409 : vector<32x16xf32> to vector<32x16xbf16>
    %cst_169 = arith.constant dense<0.000000e+00> : vector<16x16xf32>
    %411 = tpu.matmul %408, %410, %cst_169 {dimension_numbers = #tpu.dot_dimension_numbers<[1], [0], [0], [1], [0, 0, 1, 1], [], []>} : vector<16x32xbf16>, vector<32x16xbf16>, vector<16x16xf32> -> vector<16x16xf32>
    %cst_170 = arith.constant 0.176776692 : f32
    %412 = vector.broadcast %cst_170 : f32 to vector<16x16xf32>
    %413 = arith.mulf %411, %412 : vector<16x16xf32>
    %414 = arith.addf %413, %369 : vector<16x16xf32>
    %cst_171 = arith.constant dense<0xFF800000> : vector<16xf32>
    %415 = vector.multi_reduction <maximumf>, %414, %cst_171 [1] : vector<16x16xf32> to vector<16xf32>
    %416 = vector.shape_cast %415 : vector<16xf32> to vector<16x1xf32>
    %417 = vector.broadcast %416 : vector<16x1xf32> to vector<16x16xf32>
    %418 = arith.subf %414, %417 : vector<16x16xf32>
    %419 = math.exp %418 : vector<16x16xf32>
    %cst_172 = arith.constant dense<0.000000e+00> : vector<16xf32>
    %420 = vector.multi_reduction <add>, %419, %cst_172 [1] : vector<16x16xf32> to vector<16xf32>
    %421 = vector.shape_cast %420 : vector<16xf32> to vector<16x1xf32>
    %422 = tpu.reciprocal %421 {approx = true} : vector<16x1xf32> -> vector<16x1xf32>
    %423 = vector.broadcast %422 : vector<16x1xf32> to vector<16x16xf32>
    %424 = arith.mulf %419, %423 : vector<16x16xf32>
    %425 = arith.truncf %424 : vector<16x16xf32> to vector<16x16xbf16>
    %426 = arith.truncf %407 : vector<16x32xf32> to vector<16x32xbf16>
    %cst_173 = arith.constant dense<0.000000e+00> : vector<16x32xf32>
    %427 = tpu.matmul %425, %426, %cst_173 {dimension_numbers = #tpu.dot_dimension_numbers<[1], [0], [0], [1], [0, 0, 1, 1], [], []>} : vector<16x16xbf16>, vector<16x32xbf16>, vector<16x32xf32> -> vector<16x32xf32>
    %428 = vector.extract_strided_slice %381 {offsets = [0, 192], sizes = [16, 32], strides = [1, 1]} : vector<16x384xf32> to vector<16x32xf32>
    %429 = vector.extract_strided_slice %381 {offsets = [0, 224], sizes = [16, 32], strides = [1, 1]} : vector<16x384xf32> to vector<16x32xf32>
    %430 = vector.extract_strided_slice %381 {offsets = [0, 256], sizes = [16, 32], strides = [1, 1]} : vector<16x384xf32> to vector<16x32xf32>
    %431 = arith.truncf %428 : vector<16x32xf32> to vector<16x32xbf16>
    %432 = tpu.transpose %429, [1, 0] : vector<16x32xf32> -> vector<32x16xf32>
    %433 = arith.truncf %432 : vector<32x16xf32> to vector<32x16xbf16>
    %cst_174 = arith.constant dense<0.000000e+00> : vector<16x16xf32>
    %434 = tpu.matmul %431, %433, %cst_174 {dimension_numbers = #tpu.dot_dimension_numbers<[1], [0], [0], [1], [0, 0, 1, 1], [], []>} : vector<16x32xbf16>, vector<32x16xbf16>, vector<16x16xf32> -> vector<16x16xf32>
    %cst_175 = arith.constant 0.176776692 : f32
    %435 = vector.broadcast %cst_175 : f32 to vector<16x16xf32>
    %436 = arith.mulf %434, %435 : vector<16x16xf32>
    %437 = arith.addf %436, %369 : vector<16x16xf32>
    %cst_176 = arith.constant dense<0xFF800000> : vector<16xf32>
    %438 = vector.multi_reduction <maximumf>, %437, %cst_176 [1] : vector<16x16xf32> to vector<16xf32>
    %439 = vector.shape_cast %438 : vector<16xf32> to vector<16x1xf32>
    %440 = vector.broadcast %439 : vector<16x1xf32> to vector<16x16xf32>
    %441 = arith.subf %437, %440 : vector<16x16xf32>
    %442 = math.exp %441 : vector<16x16xf32>
    %cst_177 = arith.constant dense<0.000000e+00> : vector<16xf32>
    %443 = vector.multi_reduction <add>, %442, %cst_177 [1] : vector<16x16xf32> to vector<16xf32>
    %444 = vector.shape_cast %443 : vector<16xf32> to vector<16x1xf32>
    %445 = tpu.reciprocal %444 {approx = true} : vector<16x1xf32> -> vector<16x1xf32>
    %446 = vector.broadcast %445 : vector<16x1xf32> to vector<16x16xf32>
    %447 = arith.mulf %442, %446 : vector<16x16xf32>
    %448 = arith.truncf %447 : vector<16x16xf32> to vector<16x16xbf16>
    %449 = arith.truncf %430 : vector<16x32xf32> to vector<16x32xbf16>
    %cst_178 = arith.constant dense<0.000000e+00> : vector<16x32xf32>
    %450 = tpu.matmul %448, %449, %cst_178 {dimension_numbers = #tpu.dot_dimension_numbers<[1], [0], [0], [1], [0, 0, 1, 1], [], []>} : vector<16x16xbf16>, vector<16x32xbf16>, vector<16x32xf32> -> vector<16x32xf32>
    %451 = vector.extract_strided_slice %381 {offsets = [0, 288], sizes = [16, 32], strides = [1, 1]} : vector<16x384xf32> to vector<16x32xf32>
    %452 = vector.extract_strided_slice %381 {offsets = [0, 320], sizes = [16, 32], strides = [1, 1]} : vector<16x384xf32> to vector<16x32xf32>
    %453 = vector.extract_strided_slice %381 {offsets = [0, 352], sizes = [16, 32], strides = [1, 1]} : vector<16x384xf32> to vector<16x32xf32>
    %454 = arith.truncf %451 : vector<16x32xf32> to vector<16x32xbf16>
    %455 = tpu.transpose %452, [1, 0] : vector<16x32xf32> -> vector<32x16xf32>
    %456 = arith.truncf %455 : vector<32x16xf32> to vector<32x16xbf16>
    %cst_179 = arith.constant dense<0.000000e+00> : vector<16x16xf32>
    %457 = tpu.matmul %454, %456, %cst_179 {dimension_numbers = #tpu.dot_dimension_numbers<[1], [0], [0], [1], [0, 0, 1, 1], [], []>} : vector<16x32xbf16>, vector<32x16xbf16>, vector<16x16xf32> -> vector<16x16xf32>
    %cst_180 = arith.constant 0.176776692 : f32
    %458 = vector.broadcast %cst_180 : f32 to vector<16x16xf32>
    %459 = arith.mulf %457, %458 : vector<16x16xf32>
    %460 = arith.addf %459, %369 : vector<16x16xf32>
    %cst_181 = arith.constant dense<0xFF800000> : vector<16xf32>
    %461 = vector.multi_reduction <maximumf>, %460, %cst_181 [1] : vector<16x16xf32> to vector<16xf32>
    %462 = vector.shape_cast %461 : vector<16xf32> to vector<16x1xf32>
    %463 = vector.broadcast %462 : vector<16x1xf32> to vector<16x16xf32>
    %464 = arith.subf %460, %463 : vector<16x16xf32>
    %465 = math.exp %464 : vector<16x16xf32>
    %cst_182 = arith.constant dense<0.000000e+00> : vector<16xf32>
    %466 = vector.multi_reduction <add>, %465, %cst_182 [1] : vector<16x16xf32> to vector<16xf32>
    %467 = vector.shape_cast %466 : vector<16xf32> to vector<16x1xf32>
    %468 = tpu.reciprocal %467 {approx = true} : vector<16x1xf32> -> vector<16x1xf32>
    %469 = vector.broadcast %468 : vector<16x1xf32> to vector<16x16xf32>
    %470 = arith.mulf %465, %469 : vector<16x16xf32>
    %471 = arith.truncf %470 : vector<16x16xf32> to vector<16x16xbf16>
    %472 = arith.truncf %453 : vector<16x32xf32> to vector<16x32xbf16>
    %cst_183 = arith.constant dense<0.000000e+00> : vector<16x32xf32>
    %473 = tpu.matmul %471, %472, %cst_183 {dimension_numbers = #tpu.dot_dimension_numbers<[1], [0], [0], [1], [0, 0, 1, 1], [], []>} : vector<16x16xbf16>, vector<16x32xbf16>, vector<16x32xf32> -> vector<16x32xf32>
    %474 = tpu.concatenate %404, %427, %450, %473 in 1 : vector<16x32xf32>, vector<16x32xf32>, vector<16x32xf32>, vector<16x32xf32> -> vector<16x128xf32>
    %475 = arith.truncf %474 : vector<16x128xf32> to vector<16x128xbf16>
    %cst_184 = arith.constant dense<0.000000e+00> : vector<16x128xf32>
    %476 = tpu.matmul %475, %375, %cst_184 {dimension_numbers = #tpu.dot_dimension_numbers<[1], [0], [0], [1], [0, 0, 1, 1], [], []>} : vector<16x128xbf16>, vector<128x128xbf16>, vector<16x128xf32> -> vector<16x128xf32>
    %477 = vector.broadcast %377 : vector<1x128xf32> to vector<16x128xf32>
    %478 = arith.addf %476, %477 : vector<16x128xf32>
    %479 = arith.addf %478, %367 : vector<16x128xf32>
    %c0_185 = arith.constant 0 : index
    %c0_186 = arith.constant 0 : index
    %c0_187 = arith.constant 0 : index
    %480 = vector.load %arg21[%c0_185, %c0_186, %c0_187] : memref<2x1x128xf32, #tpu.memory_space<vmem>>, vector<1x1x128xf32>
    %481 = vector.shape_cast %480 : vector<1x1x128xf32> to vector<1x128xf32>
    %c0_188 = arith.constant 0 : index
    %c0_189 = arith.constant 0 : index
    %c0_190 = arith.constant 0 : index
    %482 = vector.load %arg22[%c0_188, %c0_189, %c0_190] : memref<2x1x128xf32, #tpu.memory_space<vmem>>, vector<1x1x128xf32>
    %483 = vector.shape_cast %482 : vector<1x1x128xf32> to vector<1x128xf32>
    %cst_191 = arith.constant dense<0.000000e+00> : vector<16xf32>
    %484 = vector.multi_reduction <add>, %479, %cst_191 [1] : vector<16x128xf32> to vector<16xf32>
    %485 = vector.shape_cast %484 : vector<16xf32> to vector<16x1xf32>
    %cst_192 = arith.constant 1.280000e+02 : f32
    %486 = vector.broadcast %cst_192 : f32 to vector<16x1xf32>
    %487 = arith.divf %485, %486 : vector<16x1xf32>
    %488 = vector.broadcast %487 : vector<16x1xf32> to vector<16x128xf32>
    %489 = arith.subf %479, %488 : vector<16x128xf32>
    %490 = arith.mulf %489, %489 : vector<16x128xf32>
    %cst_193 = arith.constant dense<0.000000e+00> : vector<16xf32>
    %491 = vector.multi_reduction <add>, %490, %cst_193 [1] : vector<16x128xf32> to vector<16xf32>
    %492 = vector.shape_cast %491 : vector<16xf32> to vector<16x1xf32>
    %cst_194 = arith.constant 1.280000e+02 : f32
    %493 = vector.broadcast %cst_194 : f32 to vector<16x1xf32>
    %494 = arith.divf %492, %493 : vector<16x1xf32>
    %495 = vector.broadcast %487 : vector<16x1xf32> to vector<16x128xf32>
    %496 = arith.subf %479, %495 : vector<16x128xf32>
    %cst_195 = arith.constant 9.99999974E-6 : f32
    %497 = vector.broadcast %cst_195 : f32 to vector<16x1xf32>
    %498 = arith.addf %494, %497 : vector<16x1xf32>
    %499 = math.rsqrt %498 : vector<16x1xf32>
    %500 = vector.broadcast %499 : vector<16x1xf32> to vector<16x128xf32>
    %501 = arith.mulf %496, %500 : vector<16x128xf32>
    %502 = vector.broadcast %481 : vector<1x128xf32> to vector<16x128xf32>
    %503 = arith.mulf %501, %502 : vector<16x128xf32>
    %504 = vector.broadcast %483 : vector<1x128xf32> to vector<16x128xf32>
    %505 = arith.addf %503, %504 : vector<16x128xf32>
    %c0_196 = arith.constant 0 : index
    %c0_197 = arith.constant 0 : index
    %c0_198 = arith.constant 0 : index
    %506 = vector.load %arg25[%c0_196, %c0_197, %c0_198] : memref<2x128x128xbf16, #tpu.memory_space<vmem>>, vector<1x128x128xbf16>
    %507 = vector.shape_cast %506 : vector<1x128x128xbf16> to vector<128x128xbf16>
    %c0_199 = arith.constant 0 : index
    %c0_200 = arith.constant 0 : index
    %c0_201 = arith.constant 0 : index
    %508 = vector.load %arg26[%c0_199, %c0_200, %c0_201] : memref<2x1x128xf32, #tpu.memory_space<vmem>>, vector<1x1x128xf32>
    %509 = vector.shape_cast %508 : vector<1x1x128xf32> to vector<1x128xf32>
    %c0_202 = arith.constant 0 : index
    %c0_203 = arith.constant 0 : index
    %c0_204 = arith.constant 0 : index
    %510 = vector.load %arg23[%c0_202, %c0_203, %c0_204] : memref<2x128x256xbf16, #tpu.memory_space<vmem>>, vector<1x128x256xbf16>
    %511 = vector.shape_cast %510 : vector<1x128x256xbf16> to vector<128x256xbf16>
    %c0_205 = arith.constant 0 : index
    %c0_206 = arith.constant 0 : index
    %c0_207 = arith.constant 0 : index
    %512 = vector.load %arg24[%c0_205, %c0_206, %c0_207] : memref<2x1x256xf32, #tpu.memory_space<vmem>>, vector<1x1x256xf32>
    %513 = vector.shape_cast %512 : vector<1x1x256xf32> to vector<1x256xf32>
    %c0_208 = arith.constant 0 : index
    %c0_209 = arith.constant 0 : index
    %c0_210 = arith.constant 0 : index
    %514 = vector.load %arg27[%c0_208, %c0_209, %c0_210] : memref<2x128x128xbf16, #tpu.memory_space<vmem>>, vector<1x128x128xbf16>
    %515 = vector.shape_cast %514 : vector<1x128x128xbf16> to vector<128x128xbf16>
    %c0_211 = arith.constant 0 : index
    %c0_212 = arith.constant 0 : index
    %c0_213 = arith.constant 0 : index
    %516 = vector.load %arg28[%c0_211, %c0_212, %c0_213] : memref<2x1x128xf32, #tpu.memory_space<vmem>>, vector<1x1x128xf32>
    %517 = vector.shape_cast %516 : vector<1x1x128xf32> to vector<1x128xf32>
    %518 = arith.truncf %505 : vector<16x128xf32> to vector<16x128xbf16>
    %cst_214 = arith.constant dense<0.000000e+00> : vector<16x128xf32>
    %519 = tpu.matmul %518, %507, %cst_214 {dimension_numbers = #tpu.dot_dimension_numbers<[1], [0], [0], [1], [0, 0, 1, 1], [], []>} : vector<16x128xbf16>, vector<128x128xbf16>, vector<16x128xf32> -> vector<16x128xf32>
    %520 = vector.broadcast %509 : vector<1x128xf32> to vector<16x128xf32>
    %521 = arith.addf %519, %520 : vector<16x128xf32>
    %522 = arith.truncf %365 : vector<16x128xf32> to vector<16x128xbf16>
    %cst_215 = arith.constant dense<0.000000e+00> : vector<16x256xf32>
    %523 = tpu.matmul %522, %511, %cst_215 {dimension_numbers = #tpu.dot_dimension_numbers<[1], [0], [0], [1], [0, 0, 1, 1], [], []>} : vector<16x128xbf16>, vector<128x256xbf16>, vector<16x256xf32> -> vector<16x256xf32>
    %524 = vector.broadcast %513 : vector<1x256xf32> to vector<16x256xf32>
    %525 = arith.addf %523, %524 : vector<16x256xf32>
    %526 = vector.extract_strided_slice %521 {offsets = [0, 0], sizes = [16, 32], strides = [1, 1]} : vector<16x128xf32> to vector<16x32xf32>
    %527 = vector.extract_strided_slice %525 {offsets = [0, 0], sizes = [16, 32], strides = [1, 1]} : vector<16x256xf32> to vector<16x32xf32>
    %528 = vector.extract_strided_slice %525 {offsets = [0, 32], sizes = [16, 32], strides = [1, 1]} : vector<16x256xf32> to vector<16x32xf32>
    %529 = arith.truncf %526 : vector<16x32xf32> to vector<16x32xbf16>
    %530 = tpu.transpose %527, [1, 0] : vector<16x32xf32> -> vector<32x16xf32>
    %531 = arith.truncf %530 : vector<32x16xf32> to vector<32x16xbf16>
    %cst_216 = arith.constant dense<0.000000e+00> : vector<16x16xf32>
    %532 = tpu.matmul %529, %531, %cst_216 {dimension_numbers = #tpu.dot_dimension_numbers<[1], [0], [0], [1], [0, 0, 1, 1], [], []>} : vector<16x32xbf16>, vector<32x16xbf16>, vector<16x16xf32> -> vector<16x16xf32>
    %cst_217 = arith.constant 0.176776692 : f32
    %533 = vector.broadcast %cst_217 : f32 to vector<16x16xf32>
    %534 = arith.mulf %532, %533 : vector<16x16xf32>
    %cst_218 = arith.constant dense<0xFF800000> : vector<16xf32>
    %535 = vector.multi_reduction <maximumf>, %534, %cst_218 [1] : vector<16x16xf32> to vector<16xf32>
    %536 = vector.shape_cast %535 : vector<16xf32> to vector<16x1xf32>
    %537 = vector.broadcast %536 : vector<16x1xf32> to vector<16x16xf32>
    %538 = arith.subf %534, %537 : vector<16x16xf32>
    %539 = math.exp %538 : vector<16x16xf32>
    %cst_219 = arith.constant dense<0.000000e+00> : vector<16xf32>
    %540 = vector.multi_reduction <add>, %539, %cst_219 [1] : vector<16x16xf32> to vector<16xf32>
    %541 = vector.shape_cast %540 : vector<16xf32> to vector<16x1xf32>
    %542 = tpu.reciprocal %541 {approx = true} : vector<16x1xf32> -> vector<16x1xf32>
    %543 = vector.broadcast %542 : vector<16x1xf32> to vector<16x16xf32>
    %544 = arith.mulf %539, %543 : vector<16x16xf32>
    %545 = arith.truncf %544 : vector<16x16xf32> to vector<16x16xbf16>
    %546 = arith.truncf %528 : vector<16x32xf32> to vector<16x32xbf16>
    %cst_220 = arith.constant dense<0.000000e+00> : vector<16x32xf32>
    %547 = tpu.matmul %545, %546, %cst_220 {dimension_numbers = #tpu.dot_dimension_numbers<[1], [0], [0], [1], [0, 0, 1, 1], [], []>} : vector<16x16xbf16>, vector<16x32xbf16>, vector<16x32xf32> -> vector<16x32xf32>
    %548 = vector.extract_strided_slice %521 {offsets = [0, 32], sizes = [16, 32], strides = [1, 1]} : vector<16x128xf32> to vector<16x32xf32>
    %549 = vector.extract_strided_slice %525 {offsets = [0, 64], sizes = [16, 32], strides = [1, 1]} : vector<16x256xf32> to vector<16x32xf32>
    %550 = vector.extract_strided_slice %525 {offsets = [0, 96], sizes = [16, 32], strides = [1, 1]} : vector<16x256xf32> to vector<16x32xf32>
    %551 = arith.truncf %548 : vector<16x32xf32> to vector<16x32xbf16>
    %552 = tpu.transpose %549, [1, 0] : vector<16x32xf32> -> vector<32x16xf32>
    %553 = arith.truncf %552 : vector<32x16xf32> to vector<32x16xbf16>
    %cst_221 = arith.constant dense<0.000000e+00> : vector<16x16xf32>
    %554 = tpu.matmul %551, %553, %cst_221 {dimension_numbers = #tpu.dot_dimension_numbers<[1], [0], [0], [1], [0, 0, 1, 1], [], []>} : vector<16x32xbf16>, vector<32x16xbf16>, vector<16x16xf32> -> vector<16x16xf32>
    %cst_222 = arith.constant 0.176776692 : f32
    %555 = vector.broadcast %cst_222 : f32 to vector<16x16xf32>
    %556 = arith.mulf %554, %555 : vector<16x16xf32>
    %cst_223 = arith.constant dense<0xFF800000> : vector<16xf32>
    %557 = vector.multi_reduction <maximumf>, %556, %cst_223 [1] : vector<16x16xf32> to vector<16xf32>
    %558 = vector.shape_cast %557 : vector<16xf32> to vector<16x1xf32>
    %559 = vector.broadcast %558 : vector<16x1xf32> to vector<16x16xf32>
    %560 = arith.subf %556, %559 : vector<16x16xf32>
    %561 = math.exp %560 : vector<16x16xf32>
    %cst_224 = arith.constant dense<0.000000e+00> : vector<16xf32>
    %562 = vector.multi_reduction <add>, %561, %cst_224 [1] : vector<16x16xf32> to vector<16xf32>
    %563 = vector.shape_cast %562 : vector<16xf32> to vector<16x1xf32>
    %564 = tpu.reciprocal %563 {approx = true} : vector<16x1xf32> -> vector<16x1xf32>
    %565 = vector.broadcast %564 : vector<16x1xf32> to vector<16x16xf32>
    %566 = arith.mulf %561, %565 : vector<16x16xf32>
    %567 = arith.truncf %566 : vector<16x16xf32> to vector<16x16xbf16>
    %568 = arith.truncf %550 : vector<16x32xf32> to vector<16x32xbf16>
    %cst_225 = arith.constant dense<0.000000e+00> : vector<16x32xf32>
    %569 = tpu.matmul %567, %568, %cst_225 {dimension_numbers = #tpu.dot_dimension_numbers<[1], [0], [0], [1], [0, 0, 1, 1], [], []>} : vector<16x16xbf16>, vector<16x32xbf16>, vector<16x32xf32> -> vector<16x32xf32>
    %570 = vector.extract_strided_slice %521 {offsets = [0, 64], sizes = [16, 32], strides = [1, 1]} : vector<16x128xf32> to vector<16x32xf32>
    %571 = vector.extract_strided_slice %525 {offsets = [0, 128], sizes = [16, 32], strides = [1, 1]} : vector<16x256xf32> to vector<16x32xf32>
    %572 = vector.extract_strided_slice %525 {offsets = [0, 160], sizes = [16, 32], strides = [1, 1]} : vector<16x256xf32> to vector<16x32xf32>
    %573 = arith.truncf %570 : vector<16x32xf32> to vector<16x32xbf16>
    %574 = tpu.transpose %571, [1, 0] : vector<16x32xf32> -> vector<32x16xf32>
    %575 = arith.truncf %574 : vector<32x16xf32> to vector<32x16xbf16>
    %cst_226 = arith.constant dense<0.000000e+00> : vector<16x16xf32>
    %576 = tpu.matmul %573, %575, %cst_226 {dimension_numbers = #tpu.dot_dimension_numbers<[1], [0], [0], [1], [0, 0, 1, 1], [], []>} : vector<16x32xbf16>, vector<32x16xbf16>, vector<16x16xf32> -> vector<16x16xf32>
    %cst_227 = arith.constant 0.176776692 : f32
    %577 = vector.broadcast %cst_227 : f32 to vector<16x16xf32>
    %578 = arith.mulf %576, %577 : vector<16x16xf32>
    %cst_228 = arith.constant dense<0xFF800000> : vector<16xf32>
    %579 = vector.multi_reduction <maximumf>, %578, %cst_228 [1] : vector<16x16xf32> to vector<16xf32>
    %580 = vector.shape_cast %579 : vector<16xf32> to vector<16x1xf32>
    %581 = vector.broadcast %580 : vector<16x1xf32> to vector<16x16xf32>
    %582 = arith.subf %578, %581 : vector<16x16xf32>
    %583 = math.exp %582 : vector<16x16xf32>
    %cst_229 = arith.constant dense<0.000000e+00> : vector<16xf32>
    %584 = vector.multi_reduction <add>, %583, %cst_229 [1] : vector<16x16xf32> to vector<16xf32>
    %585 = vector.shape_cast %584 : vector<16xf32> to vector<16x1xf32>
    %586 = tpu.reciprocal %585 {approx = true} : vector<16x1xf32> -> vector<16x1xf32>
    %587 = vector.broadcast %586 : vector<16x1xf32> to vector<16x16xf32>
    %588 = arith.mulf %583, %587 : vector<16x16xf32>
    %589 = arith.truncf %588 : vector<16x16xf32> to vector<16x16xbf16>
    %590 = arith.truncf %572 : vector<16x32xf32> to vector<16x32xbf16>
    %cst_230 = arith.constant dense<0.000000e+00> : vector<16x32xf32>
    %591 = tpu.matmul %589, %590, %cst_230 {dimension_numbers = #tpu.dot_dimension_numbers<[1], [0], [0], [1], [0, 0, 1, 1], [], []>} : vector<16x16xbf16>, vector<16x32xbf16>, vector<16x32xf32> -> vector<16x32xf32>
    %592 = vector.extract_strided_slice %521 {offsets = [0, 96], sizes = [16, 32], strides = [1, 1]} : vector<16x128xf32> to vector<16x32xf32>
    %593 = vector.extract_strided_slice %525 {offsets = [0, 192], sizes = [16, 32], strides = [1, 1]} : vector<16x256xf32> to vector<16x32xf32>
    %594 = vector.extract_strided_slice %525 {offsets = [0, 224], sizes = [16, 32], strides = [1, 1]} : vector<16x256xf32> to vector<16x32xf32>
    %595 = arith.truncf %592 : vector<16x32xf32> to vector<16x32xbf16>
    %596 = tpu.transpose %593, [1, 0] : vector<16x32xf32> -> vector<32x16xf32>
    %597 = arith.truncf %596 : vector<32x16xf32> to vector<32x16xbf16>
    %cst_231 = arith.constant dense<0.000000e+00> : vector<16x16xf32>
    %598 = tpu.matmul %595, %597, %cst_231 {dimension_numbers = #tpu.dot_dimension_numbers<[1], [0], [0], [1], [0, 0, 1, 1], [], []>} : vector<16x32xbf16>, vector<32x16xbf16>, vector<16x16xf32> -> vector<16x16xf32>
    %cst_232 = arith.constant 0.176776692 : f32
    %599 = vector.broadcast %cst_232 : f32 to vector<16x16xf32>
    %600 = arith.mulf %598, %599 : vector<16x16xf32>
    %cst_233 = arith.constant dense<0xFF800000> : vector<16xf32>
    %601 = vector.multi_reduction <maximumf>, %600, %cst_233 [1] : vector<16x16xf32> to vector<16xf32>
    %602 = vector.shape_cast %601 : vector<16xf32> to vector<16x1xf32>
    %603 = vector.broadcast %602 : vector<16x1xf32> to vector<16x16xf32>
    %604 = arith.subf %600, %603 : vector<16x16xf32>
    %605 = math.exp %604 : vector<16x16xf32>
    %cst_234 = arith.constant dense<0.000000e+00> : vector<16xf32>
    %606 = vector.multi_reduction <add>, %605, %cst_234 [1] : vector<16x16xf32> to vector<16xf32>
    %607 = vector.shape_cast %606 : vector<16xf32> to vector<16x1xf32>
    %608 = tpu.reciprocal %607 {approx = true} : vector<16x1xf32> -> vector<16x1xf32>
    %609 = vector.broadcast %608 : vector<16x1xf32> to vector<16x16xf32>
    %610 = arith.mulf %605, %609 : vector<16x16xf32>
    %611 = arith.truncf %610 : vector<16x16xf32> to vector<16x16xbf16>
    %612 = arith.truncf %594 : vector<16x32xf32> to vector<16x32xbf16>
    %cst_235 = arith.constant dense<0.000000e+00> : vector<16x32xf32>
    %613 = tpu.matmul %611, %612, %cst_235 {dimension_numbers = #tpu.dot_dimension_numbers<[1], [0], [0], [1], [0, 0, 1, 1], [], []>} : vector<16x16xbf16>, vector<16x32xbf16>, vector<16x32xf32> -> vector<16x32xf32>
    %614 = tpu.concatenate %547, %569, %591, %613 in 1 : vector<16x32xf32>, vector<16x32xf32>, vector<16x32xf32>, vector<16x32xf32> -> vector<16x128xf32>
    %615 = arith.truncf %614 : vector<16x128xf32> to vector<16x128xbf16>
    %cst_236 = arith.constant dense<0.000000e+00> : vector<16x128xf32>
    %616 = tpu.matmul %615, %515, %cst_236 {dimension_numbers = #tpu.dot_dimension_numbers<[1], [0], [0], [1], [0, 0, 1, 1], [], []>} : vector<16x128xbf16>, vector<128x128xbf16>, vector<16x128xf32> -> vector<16x128xf32>
    %617 = vector.broadcast %517 : vector<1x128xf32> to vector<16x128xf32>
    %618 = arith.addf %616, %617 : vector<16x128xf32>
    %619 = arith.addf %618, %505 : vector<16x128xf32>
    %c0_237 = arith.constant 0 : index
    %c0_238 = arith.constant 0 : index
    %c0_239 = arith.constant 0 : index
    %620 = vector.load %arg29[%c0_237, %c0_238, %c0_239] : memref<2x1x128xf32, #tpu.memory_space<vmem>>, vector<1x1x128xf32>
    %621 = vector.shape_cast %620 : vector<1x1x128xf32> to vector<1x128xf32>
    %c0_240 = arith.constant 0 : index
    %c0_241 = arith.constant 0 : index
    %c0_242 = arith.constant 0 : index
    %622 = vector.load %arg30[%c0_240, %c0_241, %c0_242] : memref<2x1x128xf32, #tpu.memory_space<vmem>>, vector<1x1x128xf32>
    %623 = vector.shape_cast %622 : vector<1x1x128xf32> to vector<1x128xf32>
    %cst_243 = arith.constant dense<0.000000e+00> : vector<16xf32>
    %624 = vector.multi_reduction <add>, %619, %cst_243 [1] : vector<16x128xf32> to vector<16xf32>
    %625 = vector.shape_cast %624 : vector<16xf32> to vector<16x1xf32>
    %cst_244 = arith.constant 1.280000e+02 : f32
    %626 = vector.broadcast %cst_244 : f32 to vector<16x1xf32>
    %627 = arith.divf %625, %626 : vector<16x1xf32>
    %628 = vector.broadcast %627 : vector<16x1xf32> to vector<16x128xf32>
    %629 = arith.subf %619, %628 : vector<16x128xf32>
    %630 = arith.mulf %629, %629 : vector<16x128xf32>
    %cst_245 = arith.constant dense<0.000000e+00> : vector<16xf32>
    %631 = vector.multi_reduction <add>, %630, %cst_245 [1] : vector<16x128xf32> to vector<16xf32>
    %632 = vector.shape_cast %631 : vector<16xf32> to vector<16x1xf32>
    %cst_246 = arith.constant 1.280000e+02 : f32
    %633 = vector.broadcast %cst_246 : f32 to vector<16x1xf32>
    %634 = arith.divf %632, %633 : vector<16x1xf32>
    %635 = vector.broadcast %627 : vector<16x1xf32> to vector<16x128xf32>
    %636 = arith.subf %619, %635 : vector<16x128xf32>
    %cst_247 = arith.constant 9.99999974E-6 : f32
    %637 = vector.broadcast %cst_247 : f32 to vector<16x1xf32>
    %638 = arith.addf %634, %637 : vector<16x1xf32>
    %639 = math.rsqrt %638 : vector<16x1xf32>
    %640 = vector.broadcast %639 : vector<16x1xf32> to vector<16x128xf32>
    %641 = arith.mulf %636, %640 : vector<16x128xf32>
    %642 = vector.broadcast %621 : vector<1x128xf32> to vector<16x128xf32>
    %643 = arith.mulf %641, %642 : vector<16x128xf32>
    %644 = vector.broadcast %623 : vector<1x128xf32> to vector<16x128xf32>
    %645 = arith.addf %643, %644 : vector<16x128xf32>
    %c0_248 = arith.constant 0 : index
    %c0_249 = arith.constant 0 : index
    %c0_250 = arith.constant 0 : index
    %646 = vector.load %arg31[%c0_248, %c0_249, %c0_250] : memref<2x128x256xbf16, #tpu.memory_space<vmem>>, vector<1x128x256xbf16>
    %647 = vector.shape_cast %646 : vector<1x128x256xbf16> to vector<128x256xbf16>
    %c0_251 = arith.constant 0 : index
    %c0_252 = arith.constant 0 : index
    %c0_253 = arith.constant 0 : index
    %648 = vector.load %arg32[%c0_251, %c0_252, %c0_253] : memref<2x1x256xf32, #tpu.memory_space<vmem>>, vector<1x1x256xf32>
    %649 = vector.shape_cast %648 : vector<1x1x256xf32> to vector<1x256xf32>
    %650 = arith.truncf %645 : vector<16x128xf32> to vector<16x128xbf16>
    %cst_254 = arith.constant dense<0.000000e+00> : vector<16x256xf32>
    %651 = tpu.matmul %650, %647, %cst_254 {dimension_numbers = #tpu.dot_dimension_numbers<[1], [0], [0], [1], [0, 0, 1, 1], [], []>} : vector<16x128xbf16>, vector<128x256xbf16>, vector<16x256xf32> -> vector<16x256xf32>
    %652 = vector.broadcast %649 : vector<1x256xf32> to vector<16x256xf32>
    %653 = arith.addf %651, %652 : vector<16x256xf32>
    %cst_255 = arith.constant 0.000000e+00 : f32
    %654 = vector.broadcast %cst_255 : f32 to vector<16x256xf32>
    %655 = arith.maximumf %653, %654 : vector<16x256xf32>
    %c0_256 = arith.constant 0 : index
    %c0_257 = arith.constant 0 : index
    %c0_258 = arith.constant 0 : index
    %656 = vector.load %arg33[%c0_256, %c0_257, %c0_258] : memref<2x256x128xbf16, #tpu.memory_space<vmem>>, vector<1x256x128xbf16>
    %657 = vector.shape_cast %656 : vector<1x256x128xbf16> to vector<256x128xbf16>
    %c0_259 = arith.constant 0 : index
    %c0_260 = arith.constant 0 : index
    %c0_261 = arith.constant 0 : index
    %658 = vector.load %arg34[%c0_259, %c0_260, %c0_261] : memref<2x1x128xf32, #tpu.memory_space<vmem>>, vector<1x1x128xf32>
    %659 = vector.shape_cast %658 : vector<1x1x128xf32> to vector<1x128xf32>
    %660 = arith.truncf %655 : vector<16x256xf32> to vector<16x256xbf16>
    %cst_262 = arith.constant dense<0.000000e+00> : vector<16x128xf32>
    %661 = tpu.matmul %660, %657, %cst_262 {dimension_numbers = #tpu.dot_dimension_numbers<[1], [0], [0], [1], [0, 0, 1, 1], [], []>} : vector<16x256xbf16>, vector<256x128xbf16>, vector<16x128xf32> -> vector<16x128xf32>
    %662 = vector.broadcast %659 : vector<1x128xf32> to vector<16x128xf32>
    %663 = arith.addf %661, %662 : vector<16x128xf32>
    %664 = arith.addf %663, %645 : vector<16x128xf32>
    %c0_263 = arith.constant 0 : index
    %c0_264 = arith.constant 0 : index
    %c0_265 = arith.constant 0 : index
    %665 = vector.load %arg35[%c0_263, %c0_264, %c0_265] : memref<2x1x128xf32, #tpu.memory_space<vmem>>, vector<1x1x128xf32>
    %666 = vector.shape_cast %665 : vector<1x1x128xf32> to vector<1x128xf32>
    %c0_266 = arith.constant 0 : index
    %c0_267 = arith.constant 0 : index
    %c0_268 = arith.constant 0 : index
    %667 = vector.load %arg36[%c0_266, %c0_267, %c0_268] : memref<2x1x128xf32, #tpu.memory_space<vmem>>, vector<1x1x128xf32>
    %668 = vector.shape_cast %667 : vector<1x1x128xf32> to vector<1x128xf32>
    %cst_269 = arith.constant dense<0.000000e+00> : vector<16xf32>
    %669 = vector.multi_reduction <add>, %664, %cst_269 [1] : vector<16x128xf32> to vector<16xf32>
    %670 = vector.shape_cast %669 : vector<16xf32> to vector<16x1xf32>
    %cst_270 = arith.constant 1.280000e+02 : f32
    %671 = vector.broadcast %cst_270 : f32 to vector<16x1xf32>
    %672 = arith.divf %670, %671 : vector<16x1xf32>
    %673 = vector.broadcast %672 : vector<16x1xf32> to vector<16x128xf32>
    %674 = arith.subf %664, %673 : vector<16x128xf32>
    %675 = arith.mulf %674, %674 : vector<16x128xf32>
    %cst_271 = arith.constant dense<0.000000e+00> : vector<16xf32>
    %676 = vector.multi_reduction <add>, %675, %cst_271 [1] : vector<16x128xf32> to vector<16xf32>
    %677 = vector.shape_cast %676 : vector<16xf32> to vector<16x1xf32>
    %cst_272 = arith.constant 1.280000e+02 : f32
    %678 = vector.broadcast %cst_272 : f32 to vector<16x1xf32>
    %679 = arith.divf %677, %678 : vector<16x1xf32>
    %680 = vector.broadcast %672 : vector<16x1xf32> to vector<16x128xf32>
    %681 = arith.subf %664, %680 : vector<16x128xf32>
    %cst_273 = arith.constant 9.99999974E-6 : f32
    %682 = vector.broadcast %cst_273 : f32 to vector<16x1xf32>
    %683 = arith.addf %679, %682 : vector<16x1xf32>
    %684 = math.rsqrt %683 : vector<16x1xf32>
    %685 = vector.broadcast %684 : vector<16x1xf32> to vector<16x128xf32>
    %686 = arith.mulf %681, %685 : vector<16x128xf32>
    %687 = vector.broadcast %666 : vector<1x128xf32> to vector<16x128xf32>
    %688 = arith.mulf %686, %687 : vector<16x128xf32>
    %689 = vector.broadcast %668 : vector<1x128xf32> to vector<16x128xf32>
    %690 = arith.addf %688, %689 : vector<16x128xf32>
    %c1_274 = arith.constant 1 : index
    %c0_275 = arith.constant 0 : index
    %c0_276 = arith.constant 0 : index
    %691 = vector.load %arg17[%c1_274, %c0_275, %c0_276] : memref<2x128x384xbf16, #tpu.memory_space<vmem>>, vector<1x128x384xbf16>
    %692 = vector.shape_cast %691 : vector<1x128x384xbf16> to vector<128x384xbf16>
    %c1_277 = arith.constant 1 : index
    %c0_278 = arith.constant 0 : index
    %c0_279 = arith.constant 0 : index
    %693 = vector.load %arg18[%c1_277, %c0_278, %c0_279] : memref<2x1x384xf32, #tpu.memory_space<vmem>>, vector<1x1x384xf32>
    %694 = vector.shape_cast %693 : vector<1x1x384xf32> to vector<1x384xf32>
    %c1_280 = arith.constant 1 : index
    %c0_281 = arith.constant 0 : index
    %c0_282 = arith.constant 0 : index
    %695 = vector.load %arg19[%c1_280, %c0_281, %c0_282] : memref<2x128x128xbf16, #tpu.memory_space<vmem>>, vector<1x128x128xbf16>
    %696 = vector.shape_cast %695 : vector<1x128x128xbf16> to vector<128x128xbf16>
    %c1_283 = arith.constant 1 : index
    %c0_284 = arith.constant 0 : index
    %c0_285 = arith.constant 0 : index
    %697 = vector.load %arg20[%c1_283, %c0_284, %c0_285] : memref<2x1x128xf32, #tpu.memory_space<vmem>>, vector<1x1x128xf32>
    %698 = vector.shape_cast %697 : vector<1x1x128xf32> to vector<1x128xf32>
    %699 = arith.truncf %690 : vector<16x128xf32> to vector<16x128xbf16>
    %cst_286 = arith.constant dense<0.000000e+00> : vector<16x384xf32>
    %700 = tpu.matmul %699, %692, %cst_286 {dimension_numbers = #tpu.dot_dimension_numbers<[1], [0], [0], [1], [0, 0, 1, 1], [], []>} : vector<16x128xbf16>, vector<128x384xbf16>, vector<16x384xf32> -> vector<16x384xf32>
    %701 = vector.broadcast %694 : vector<1x384xf32> to vector<16x384xf32>
    %702 = arith.addf %700, %701 : vector<16x384xf32>
    %703 = vector.extract_strided_slice %702 {offsets = [0, 0], sizes = [16, 32], strides = [1, 1]} : vector<16x384xf32> to vector<16x32xf32>
    %704 = vector.extract_strided_slice %702 {offsets = [0, 32], sizes = [16, 32], strides = [1, 1]} : vector<16x384xf32> to vector<16x32xf32>
    %705 = vector.extract_strided_slice %702 {offsets = [0, 64], sizes = [16, 32], strides = [1, 1]} : vector<16x384xf32> to vector<16x32xf32>
    %706 = arith.truncf %703 : vector<16x32xf32> to vector<16x32xbf16>
    %707 = tpu.transpose %704, [1, 0] : vector<16x32xf32> -> vector<32x16xf32>
    %708 = arith.truncf %707 : vector<32x16xf32> to vector<32x16xbf16>
    %cst_287 = arith.constant dense<0.000000e+00> : vector<16x16xf32>
    %709 = tpu.matmul %706, %708, %cst_287 {dimension_numbers = #tpu.dot_dimension_numbers<[1], [0], [0], [1], [0, 0, 1, 1], [], []>} : vector<16x32xbf16>, vector<32x16xbf16>, vector<16x16xf32> -> vector<16x16xf32>
    %cst_288 = arith.constant 0.176776692 : f32
    %710 = vector.broadcast %cst_288 : f32 to vector<16x16xf32>
    %711 = arith.mulf %709, %710 : vector<16x16xf32>
    %712 = arith.addf %711, %369 : vector<16x16xf32>
    %cst_289 = arith.constant dense<0xFF800000> : vector<16xf32>
    %713 = vector.multi_reduction <maximumf>, %712, %cst_289 [1] : vector<16x16xf32> to vector<16xf32>
    %714 = vector.shape_cast %713 : vector<16xf32> to vector<16x1xf32>
    %715 = vector.broadcast %714 : vector<16x1xf32> to vector<16x16xf32>
    %716 = arith.subf %712, %715 : vector<16x16xf32>
    %717 = math.exp %716 : vector<16x16xf32>
    %cst_290 = arith.constant dense<0.000000e+00> : vector<16xf32>
    %718 = vector.multi_reduction <add>, %717, %cst_290 [1] : vector<16x16xf32> to vector<16xf32>
    %719 = vector.shape_cast %718 : vector<16xf32> to vector<16x1xf32>
    %720 = tpu.reciprocal %719 {approx = true} : vector<16x1xf32> -> vector<16x1xf32>
    %721 = vector.broadcast %720 : vector<16x1xf32> to vector<16x16xf32>
    %722 = arith.mulf %717, %721 : vector<16x16xf32>
    %723 = arith.truncf %722 : vector<16x16xf32> to vector<16x16xbf16>
    %724 = arith.truncf %705 : vector<16x32xf32> to vector<16x32xbf16>
    %cst_291 = arith.constant dense<0.000000e+00> : vector<16x32xf32>
    %725 = tpu.matmul %723, %724, %cst_291 {dimension_numbers = #tpu.dot_dimension_numbers<[1], [0], [0], [1], [0, 0, 1, 1], [], []>} : vector<16x16xbf16>, vector<16x32xbf16>, vector<16x32xf32> -> vector<16x32xf32>
    %726 = vector.extract_strided_slice %702 {offsets = [0, 96], sizes = [16, 32], strides = [1, 1]} : vector<16x384xf32> to vector<16x32xf32>
    %727 = vector.extract_strided_slice %702 {offsets = [0, 128], sizes = [16, 32], strides = [1, 1]} : vector<16x384xf32> to vector<16x32xf32>
    %728 = vector.extract_strided_slice %702 {offsets = [0, 160], sizes = [16, 32], strides = [1, 1]} : vector<16x384xf32> to vector<16x32xf32>
    %729 = arith.truncf %726 : vector<16x32xf32> to vector<16x32xbf16>
    %730 = tpu.transpose %727, [1, 0] : vector<16x32xf32> -> vector<32x16xf32>
    %731 = arith.truncf %730 : vector<32x16xf32> to vector<32x16xbf16>
    %cst_292 = arith.constant dense<0.000000e+00> : vector<16x16xf32>
    %732 = tpu.matmul %729, %731, %cst_292 {dimension_numbers = #tpu.dot_dimension_numbers<[1], [0], [0], [1], [0, 0, 1, 1], [], []>} : vector<16x32xbf16>, vector<32x16xbf16>, vector<16x16xf32> -> vector<16x16xf32>
    %cst_293 = arith.constant 0.176776692 : f32
    %733 = vector.broadcast %cst_293 : f32 to vector<16x16xf32>
    %734 = arith.mulf %732, %733 : vector<16x16xf32>
    %735 = arith.addf %734, %369 : vector<16x16xf32>
    %cst_294 = arith.constant dense<0xFF800000> : vector<16xf32>
    %736 = vector.multi_reduction <maximumf>, %735, %cst_294 [1] : vector<16x16xf32> to vector<16xf32>
    %737 = vector.shape_cast %736 : vector<16xf32> to vector<16x1xf32>
    %738 = vector.broadcast %737 : vector<16x1xf32> to vector<16x16xf32>
    %739 = arith.subf %735, %738 : vector<16x16xf32>
    %740 = math.exp %739 : vector<16x16xf32>
    %cst_295 = arith.constant dense<0.000000e+00> : vector<16xf32>
    %741 = vector.multi_reduction <add>, %740, %cst_295 [1] : vector<16x16xf32> to vector<16xf32>
    %742 = vector.shape_cast %741 : vector<16xf32> to vector<16x1xf32>
    %743 = tpu.reciprocal %742 {approx = true} : vector<16x1xf32> -> vector<16x1xf32>
    %744 = vector.broadcast %743 : vector<16x1xf32> to vector<16x16xf32>
    %745 = arith.mulf %740, %744 : vector<16x16xf32>
    %746 = arith.truncf %745 : vector<16x16xf32> to vector<16x16xbf16>
    %747 = arith.truncf %728 : vector<16x32xf32> to vector<16x32xbf16>
    %cst_296 = arith.constant dense<0.000000e+00> : vector<16x32xf32>
    %748 = tpu.matmul %746, %747, %cst_296 {dimension_numbers = #tpu.dot_dimension_numbers<[1], [0], [0], [1], [0, 0, 1, 1], [], []>} : vector<16x16xbf16>, vector<16x32xbf16>, vector<16x32xf32> -> vector<16x32xf32>
    %749 = vector.extract_strided_slice %702 {offsets = [0, 192], sizes = [16, 32], strides = [1, 1]} : vector<16x384xf32> to vector<16x32xf32>
    %750 = vector.extract_strided_slice %702 {offsets = [0, 224], sizes = [16, 32], strides = [1, 1]} : vector<16x384xf32> to vector<16x32xf32>
    %751 = vector.extract_strided_slice %702 {offsets = [0, 256], sizes = [16, 32], strides = [1, 1]} : vector<16x384xf32> to vector<16x32xf32>
    %752 = arith.truncf %749 : vector<16x32xf32> to vector<16x32xbf16>
    %753 = tpu.transpose %750, [1, 0] : vector<16x32xf32> -> vector<32x16xf32>
    %754 = arith.truncf %753 : vector<32x16xf32> to vector<32x16xbf16>
    %cst_297 = arith.constant dense<0.000000e+00> : vector<16x16xf32>
    %755 = tpu.matmul %752, %754, %cst_297 {dimension_numbers = #tpu.dot_dimension_numbers<[1], [0], [0], [1], [0, 0, 1, 1], [], []>} : vector<16x32xbf16>, vector<32x16xbf16>, vector<16x16xf32> -> vector<16x16xf32>
    %cst_298 = arith.constant 0.176776692 : f32
    %756 = vector.broadcast %cst_298 : f32 to vector<16x16xf32>
    %757 = arith.mulf %755, %756 : vector<16x16xf32>
    %758 = arith.addf %757, %369 : vector<16x16xf32>
    %cst_299 = arith.constant dense<0xFF800000> : vector<16xf32>
    %759 = vector.multi_reduction <maximumf>, %758, %cst_299 [1] : vector<16x16xf32> to vector<16xf32>
    %760 = vector.shape_cast %759 : vector<16xf32> to vector<16x1xf32>
    %761 = vector.broadcast %760 : vector<16x1xf32> to vector<16x16xf32>
    %762 = arith.subf %758, %761 : vector<16x16xf32>
    %763 = math.exp %762 : vector<16x16xf32>
    %cst_300 = arith.constant dense<0.000000e+00> : vector<16xf32>
    %764 = vector.multi_reduction <add>, %763, %cst_300 [1] : vector<16x16xf32> to vector<16xf32>
    %765 = vector.shape_cast %764 : vector<16xf32> to vector<16x1xf32>
    %766 = tpu.reciprocal %765 {approx = true} : vector<16x1xf32> -> vector<16x1xf32>
    %767 = vector.broadcast %766 : vector<16x1xf32> to vector<16x16xf32>
    %768 = arith.mulf %763, %767 : vector<16x16xf32>
    %769 = arith.truncf %768 : vector<16x16xf32> to vector<16x16xbf16>
    %770 = arith.truncf %751 : vector<16x32xf32> to vector<16x32xbf16>
    %cst_301 = arith.constant dense<0.000000e+00> : vector<16x32xf32>
    %771 = tpu.matmul %769, %770, %cst_301 {dimension_numbers = #tpu.dot_dimension_numbers<[1], [0], [0], [1], [0, 0, 1, 1], [], []>} : vector<16x16xbf16>, vector<16x32xbf16>, vector<16x32xf32> -> vector<16x32xf32>
    %772 = vector.extract_strided_slice %702 {offsets = [0, 288], sizes = [16, 32], strides = [1, 1]} : vector<16x384xf32> to vector<16x32xf32>
    %773 = vector.extract_strided_slice %702 {offsets = [0, 320], sizes = [16, 32], strides = [1, 1]} : vector<16x384xf32> to vector<16x32xf32>
    %774 = vector.extract_strided_slice %702 {offsets = [0, 352], sizes = [16, 32], strides = [1, 1]} : vector<16x384xf32> to vector<16x32xf32>
    %775 = arith.truncf %772 : vector<16x32xf32> to vector<16x32xbf16>
    %776 = tpu.transpose %773, [1, 0] : vector<16x32xf32> -> vector<32x16xf32>
    %777 = arith.truncf %776 : vector<32x16xf32> to vector<32x16xbf16>
    %cst_302 = arith.constant dense<0.000000e+00> : vector<16x16xf32>
    %778 = tpu.matmul %775, %777, %cst_302 {dimension_numbers = #tpu.dot_dimension_numbers<[1], [0], [0], [1], [0, 0, 1, 1], [], []>} : vector<16x32xbf16>, vector<32x16xbf16>, vector<16x16xf32> -> vector<16x16xf32>
    %cst_303 = arith.constant 0.176776692 : f32
    %779 = vector.broadcast %cst_303 : f32 to vector<16x16xf32>
    %780 = arith.mulf %778, %779 : vector<16x16xf32>
    %781 = arith.addf %780, %369 : vector<16x16xf32>
    %cst_304 = arith.constant dense<0xFF800000> : vector<16xf32>
    %782 = vector.multi_reduction <maximumf>, %781, %cst_304 [1] : vector<16x16xf32> to vector<16xf32>
    %783 = vector.shape_cast %782 : vector<16xf32> to vector<16x1xf32>
    %784 = vector.broadcast %783 : vector<16x1xf32> to vector<16x16xf32>
    %785 = arith.subf %781, %784 : vector<16x16xf32>
    %786 = math.exp %785 : vector<16x16xf32>
    %cst_305 = arith.constant dense<0.000000e+00> : vector<16xf32>
    %787 = vector.multi_reduction <add>, %786, %cst_305 [1] : vector<16x16xf32> to vector<16xf32>
    %788 = vector.shape_cast %787 : vector<16xf32> to vector<16x1xf32>
    %789 = tpu.reciprocal %788 {approx = true} : vector<16x1xf32> -> vector<16x1xf32>
    %790 = vector.broadcast %789 : vector<16x1xf32> to vector<16x16xf32>
    %791 = arith.mulf %786, %790 : vector<16x16xf32>
    %792 = arith.truncf %791 : vector<16x16xf32> to vector<16x16xbf16>
    %793 = arith.truncf %774 : vector<16x32xf32> to vector<16x32xbf16>
    %cst_306 = arith.constant dense<0.000000e+00> : vector<16x32xf32>
    %794 = tpu.matmul %792, %793, %cst_306 {dimension_numbers = #tpu.dot_dimension_numbers<[1], [0], [0], [1], [0, 0, 1, 1], [], []>} : vector<16x16xbf16>, vector<16x32xbf16>, vector<16x32xf32> -> vector<16x32xf32>
    %795 = tpu.concatenate %725, %748, %771, %794 in 1 : vector<16x32xf32>, vector<16x32xf32>, vector<16x32xf32>, vector<16x32xf32> -> vector<16x128xf32>
    %796 = arith.truncf %795 : vector<16x128xf32> to vector<16x128xbf16>
    %cst_307 = arith.constant dense<0.000000e+00> : vector<16x128xf32>
    %797 = tpu.matmul %796, %696, %cst_307 {dimension_numbers = #tpu.dot_dimension_numbers<[1], [0], [0], [1], [0, 0, 1, 1], [], []>} : vector<16x128xbf16>, vector<128x128xbf16>, vector<16x128xf32> -> vector<16x128xf32>
    %798 = vector.broadcast %698 : vector<1x128xf32> to vector<16x128xf32>
    %799 = arith.addf %797, %798 : vector<16x128xf32>
    %800 = arith.addf %799, %690 : vector<16x128xf32>
    %c1_308 = arith.constant 1 : index
    %c0_309 = arith.constant 0 : index
    %c0_310 = arith.constant 0 : index
    %801 = vector.load %arg21[%c1_308, %c0_309, %c0_310] : memref<2x1x128xf32, #tpu.memory_space<vmem>>, vector<1x1x128xf32>
    %802 = vector.shape_cast %801 : vector<1x1x128xf32> to vector<1x128xf32>
    %c1_311 = arith.constant 1 : index
    %c0_312 = arith.constant 0 : index
    %c0_313 = arith.constant 0 : index
    %803 = vector.load %arg22[%c1_311, %c0_312, %c0_313] : memref<2x1x128xf32, #tpu.memory_space<vmem>>, vector<1x1x128xf32>
    %804 = vector.shape_cast %803 : vector<1x1x128xf32> to vector<1x128xf32>
    %cst_314 = arith.constant dense<0.000000e+00> : vector<16xf32>
    %805 = vector.multi_reduction <add>, %800, %cst_314 [1] : vector<16x128xf32> to vector<16xf32>
    %806 = vector.shape_cast %805 : vector<16xf32> to vector<16x1xf32>
    %cst_315 = arith.constant 1.280000e+02 : f32
    %807 = vector.broadcast %cst_315 : f32 to vector<16x1xf32>
    %808 = arith.divf %806, %807 : vector<16x1xf32>
    %809 = vector.broadcast %808 : vector<16x1xf32> to vector<16x128xf32>
    %810 = arith.subf %800, %809 : vector<16x128xf32>
    %811 = arith.mulf %810, %810 : vector<16x128xf32>
    %cst_316 = arith.constant dense<0.000000e+00> : vector<16xf32>
    %812 = vector.multi_reduction <add>, %811, %cst_316 [1] : vector<16x128xf32> to vector<16xf32>
    %813 = vector.shape_cast %812 : vector<16xf32> to vector<16x1xf32>
    %cst_317 = arith.constant 1.280000e+02 : f32
    %814 = vector.broadcast %cst_317 : f32 to vector<16x1xf32>
    %815 = arith.divf %813, %814 : vector<16x1xf32>
    %816 = vector.broadcast %808 : vector<16x1xf32> to vector<16x128xf32>
    %817 = arith.subf %800, %816 : vector<16x128xf32>
    %cst_318 = arith.constant 9.99999974E-6 : f32
    %818 = vector.broadcast %cst_318 : f32 to vector<16x1xf32>
    %819 = arith.addf %815, %818 : vector<16x1xf32>
    %820 = math.rsqrt %819 : vector<16x1xf32>
    %821 = vector.broadcast %820 : vector<16x1xf32> to vector<16x128xf32>
    %822 = arith.mulf %817, %821 : vector<16x128xf32>
    %823 = vector.broadcast %802 : vector<1x128xf32> to vector<16x128xf32>
    %824 = arith.mulf %822, %823 : vector<16x128xf32>
    %825 = vector.broadcast %804 : vector<1x128xf32> to vector<16x128xf32>
    %826 = arith.addf %824, %825 : vector<16x128xf32>
    %c1_319 = arith.constant 1 : index
    %c0_320 = arith.constant 0 : index
    %c0_321 = arith.constant 0 : index
    %827 = vector.load %arg25[%c1_319, %c0_320, %c0_321] : memref<2x128x128xbf16, #tpu.memory_space<vmem>>, vector<1x128x128xbf16>
    %828 = vector.shape_cast %827 : vector<1x128x128xbf16> to vector<128x128xbf16>
    %c1_322 = arith.constant 1 : index
    %c0_323 = arith.constant 0 : index
    %c0_324 = arith.constant 0 : index
    %829 = vector.load %arg26[%c1_322, %c0_323, %c0_324] : memref<2x1x128xf32, #tpu.memory_space<vmem>>, vector<1x1x128xf32>
    %830 = vector.shape_cast %829 : vector<1x1x128xf32> to vector<1x128xf32>
    %c1_325 = arith.constant 1 : index
    %c0_326 = arith.constant 0 : index
    %c0_327 = arith.constant 0 : index
    %831 = vector.load %arg23[%c1_325, %c0_326, %c0_327] : memref<2x128x256xbf16, #tpu.memory_space<vmem>>, vector<1x128x256xbf16>
    %832 = vector.shape_cast %831 : vector<1x128x256xbf16> to vector<128x256xbf16>
    %c1_328 = arith.constant 1 : index
    %c0_329 = arith.constant 0 : index
    %c0_330 = arith.constant 0 : index
    %833 = vector.load %arg24[%c1_328, %c0_329, %c0_330] : memref<2x1x256xf32, #tpu.memory_space<vmem>>, vector<1x1x256xf32>
    %834 = vector.shape_cast %833 : vector<1x1x256xf32> to vector<1x256xf32>
    %c1_331 = arith.constant 1 : index
    %c0_332 = arith.constant 0 : index
    %c0_333 = arith.constant 0 : index
    %835 = vector.load %arg27[%c1_331, %c0_332, %c0_333] : memref<2x128x128xbf16, #tpu.memory_space<vmem>>, vector<1x128x128xbf16>
    %836 = vector.shape_cast %835 : vector<1x128x128xbf16> to vector<128x128xbf16>
    %c1_334 = arith.constant 1 : index
    %c0_335 = arith.constant 0 : index
    %c0_336 = arith.constant 0 : index
    %837 = vector.load %arg28[%c1_334, %c0_335, %c0_336] : memref<2x1x128xf32, #tpu.memory_space<vmem>>, vector<1x1x128xf32>
    %838 = vector.shape_cast %837 : vector<1x1x128xf32> to vector<1x128xf32>
    %839 = arith.truncf %826 : vector<16x128xf32> to vector<16x128xbf16>
    %cst_337 = arith.constant dense<0.000000e+00> : vector<16x128xf32>
    %840 = tpu.matmul %839, %828, %cst_337 {dimension_numbers = #tpu.dot_dimension_numbers<[1], [0], [0], [1], [0, 0, 1, 1], [], []>} : vector<16x128xbf16>, vector<128x128xbf16>, vector<16x128xf32> -> vector<16x128xf32>
    %841 = vector.broadcast %830 : vector<1x128xf32> to vector<16x128xf32>
    %842 = arith.addf %840, %841 : vector<16x128xf32>
    %843 = arith.truncf %365 : vector<16x128xf32> to vector<16x128xbf16>
    %cst_338 = arith.constant dense<0.000000e+00> : vector<16x256xf32>
    %844 = tpu.matmul %843, %832, %cst_338 {dimension_numbers = #tpu.dot_dimension_numbers<[1], [0], [0], [1], [0, 0, 1, 1], [], []>} : vector<16x128xbf16>, vector<128x256xbf16>, vector<16x256xf32> -> vector<16x256xf32>
    %845 = vector.broadcast %834 : vector<1x256xf32> to vector<16x256xf32>
    %846 = arith.addf %844, %845 : vector<16x256xf32>
    %847 = vector.extract_strided_slice %842 {offsets = [0, 0], sizes = [16, 32], strides = [1, 1]} : vector<16x128xf32> to vector<16x32xf32>
    %848 = vector.extract_strided_slice %846 {offsets = [0, 0], sizes = [16, 32], strides = [1, 1]} : vector<16x256xf32> to vector<16x32xf32>
    %849 = vector.extract_strided_slice %846 {offsets = [0, 32], sizes = [16, 32], strides = [1, 1]} : vector<16x256xf32> to vector<16x32xf32>
    %850 = arith.truncf %847 : vector<16x32xf32> to vector<16x32xbf16>
    %851 = tpu.transpose %848, [1, 0] : vector<16x32xf32> -> vector<32x16xf32>
    %852 = arith.truncf %851 : vector<32x16xf32> to vector<32x16xbf16>
    %cst_339 = arith.constant dense<0.000000e+00> : vector<16x16xf32>
    %853 = tpu.matmul %850, %852, %cst_339 {dimension_numbers = #tpu.dot_dimension_numbers<[1], [0], [0], [1], [0, 0, 1, 1], [], []>} : vector<16x32xbf16>, vector<32x16xbf16>, vector<16x16xf32> -> vector<16x16xf32>
    %cst_340 = arith.constant 0.176776692 : f32
    %854 = vector.broadcast %cst_340 : f32 to vector<16x16xf32>
    %855 = arith.mulf %853, %854 : vector<16x16xf32>
    %cst_341 = arith.constant dense<0xFF800000> : vector<16xf32>
    %856 = vector.multi_reduction <maximumf>, %855, %cst_341 [1] : vector<16x16xf32> to vector<16xf32>
    %857 = vector.shape_cast %856 : vector<16xf32> to vector<16x1xf32>
    %858 = vector.broadcast %857 : vector<16x1xf32> to vector<16x16xf32>
    %859 = arith.subf %855, %858 : vector<16x16xf32>
    %860 = math.exp %859 : vector<16x16xf32>
    %cst_342 = arith.constant dense<0.000000e+00> : vector<16xf32>
    %861 = vector.multi_reduction <add>, %860, %cst_342 [1] : vector<16x16xf32> to vector<16xf32>
    %862 = vector.shape_cast %861 : vector<16xf32> to vector<16x1xf32>
    %863 = tpu.reciprocal %862 {approx = true} : vector<16x1xf32> -> vector<16x1xf32>
    %864 = vector.broadcast %863 : vector<16x1xf32> to vector<16x16xf32>
    %865 = arith.mulf %860, %864 : vector<16x16xf32>
    %866 = arith.truncf %865 : vector<16x16xf32> to vector<16x16xbf16>
    %867 = arith.truncf %849 : vector<16x32xf32> to vector<16x32xbf16>
    %cst_343 = arith.constant dense<0.000000e+00> : vector<16x32xf32>
    %868 = tpu.matmul %866, %867, %cst_343 {dimension_numbers = #tpu.dot_dimension_numbers<[1], [0], [0], [1], [0, 0, 1, 1], [], []>} : vector<16x16xbf16>, vector<16x32xbf16>, vector<16x32xf32> -> vector<16x32xf32>
    %869 = vector.extract_strided_slice %842 {offsets = [0, 32], sizes = [16, 32], strides = [1, 1]} : vector<16x128xf32> to vector<16x32xf32>
    %870 = vector.extract_strided_slice %846 {offsets = [0, 64], sizes = [16, 32], strides = [1, 1]} : vector<16x256xf32> to vector<16x32xf32>
    %871 = vector.extract_strided_slice %846 {offsets = [0, 96], sizes = [16, 32], strides = [1, 1]} : vector<16x256xf32> to vector<16x32xf32>
    %872 = arith.truncf %869 : vector<16x32xf32> to vector<16x32xbf16>
    %873 = tpu.transpose %870, [1, 0] : vector<16x32xf32> -> vector<32x16xf32>
    %874 = arith.truncf %873 : vector<32x16xf32> to vector<32x16xbf16>
    %cst_344 = arith.constant dense<0.000000e+00> : vector<16x16xf32>
    %875 = tpu.matmul %872, %874, %cst_344 {dimension_numbers = #tpu.dot_dimension_numbers<[1], [0], [0], [1], [0, 0, 1, 1], [], []>} : vector<16x32xbf16>, vector<32x16xbf16>, vector<16x16xf32> -> vector<16x16xf32>
    %cst_345 = arith.constant 0.176776692 : f32
    %876 = vector.broadcast %cst_345 : f32 to vector<16x16xf32>
    %877 = arith.mulf %875, %876 : vector<16x16xf32>
    %cst_346 = arith.constant dense<0xFF800000> : vector<16xf32>
    %878 = vector.multi_reduction <maximumf>, %877, %cst_346 [1] : vector<16x16xf32> to vector<16xf32>
    %879 = vector.shape_cast %878 : vector<16xf32> to vector<16x1xf32>
    %880 = vector.broadcast %879 : vector<16x1xf32> to vector<16x16xf32>
    %881 = arith.subf %877, %880 : vector<16x16xf32>
    %882 = math.exp %881 : vector<16x16xf32>
    %cst_347 = arith.constant dense<0.000000e+00> : vector<16xf32>
    %883 = vector.multi_reduction <add>, %882, %cst_347 [1] : vector<16x16xf32> to vector<16xf32>
    %884 = vector.shape_cast %883 : vector<16xf32> to vector<16x1xf32>
    %885 = tpu.reciprocal %884 {approx = true} : vector<16x1xf32> -> vector<16x1xf32>
    %886 = vector.broadcast %885 : vector<16x1xf32> to vector<16x16xf32>
    %887 = arith.mulf %882, %886 : vector<16x16xf32>
    %888 = arith.truncf %887 : vector<16x16xf32> to vector<16x16xbf16>
    %889 = arith.truncf %871 : vector<16x32xf32> to vector<16x32xbf16>
    %cst_348 = arith.constant dense<0.000000e+00> : vector<16x32xf32>
    %890 = tpu.matmul %888, %889, %cst_348 {dimension_numbers = #tpu.dot_dimension_numbers<[1], [0], [0], [1], [0, 0, 1, 1], [], []>} : vector<16x16xbf16>, vector<16x32xbf16>, vector<16x32xf32> -> vector<16x32xf32>
    %891 = vector.extract_strided_slice %842 {offsets = [0, 64], sizes = [16, 32], strides = [1, 1]} : vector<16x128xf32> to vector<16x32xf32>
    %892 = vector.extract_strided_slice %846 {offsets = [0, 128], sizes = [16, 32], strides = [1, 1]} : vector<16x256xf32> to vector<16x32xf32>
    %893 = vector.extract_strided_slice %846 {offsets = [0, 160], sizes = [16, 32], strides = [1, 1]} : vector<16x256xf32> to vector<16x32xf32>
    %894 = arith.truncf %891 : vector<16x32xf32> to vector<16x32xbf16>
    %895 = tpu.transpose %892, [1, 0] : vector<16x32xf32> -> vector<32x16xf32>
    %896 = arith.truncf %895 : vector<32x16xf32> to vector<32x16xbf16>
    %cst_349 = arith.constant dense<0.000000e+00> : vector<16x16xf32>
    %897 = tpu.matmul %894, %896, %cst_349 {dimension_numbers = #tpu.dot_dimension_numbers<[1], [0], [0], [1], [0, 0, 1, 1], [], []>} : vector<16x32xbf16>, vector<32x16xbf16>, vector<16x16xf32> -> vector<16x16xf32>
    %cst_350 = arith.constant 0.176776692 : f32
    %898 = vector.broadcast %cst_350 : f32 to vector<16x16xf32>
    %899 = arith.mulf %897, %898 : vector<16x16xf32>
    %cst_351 = arith.constant dense<0xFF800000> : vector<16xf32>
    %900 = vector.multi_reduction <maximumf>, %899, %cst_351 [1] : vector<16x16xf32> to vector<16xf32>
    %901 = vector.shape_cast %900 : vector<16xf32> to vector<16x1xf32>
    %902 = vector.broadcast %901 : vector<16x1xf32> to vector<16x16xf32>
    %903 = arith.subf %899, %902 : vector<16x16xf32>
    %904 = math.exp %903 : vector<16x16xf32>
    %cst_352 = arith.constant dense<0.000000e+00> : vector<16xf32>
    %905 = vector.multi_reduction <add>, %904, %cst_352 [1] : vector<16x16xf32> to vector<16xf32>
    %906 = vector.shape_cast %905 : vector<16xf32> to vector<16x1xf32>
    %907 = tpu.reciprocal %906 {approx = true} : vector<16x1xf32> -> vector<16x1xf32>
    %908 = vector.broadcast %907 : vector<16x1xf32> to vector<16x16xf32>
    %909 = arith.mulf %904, %908 : vector<16x16xf32>
    %910 = arith.truncf %909 : vector<16x16xf32> to vector<16x16xbf16>
    %911 = arith.truncf %893 : vector<16x32xf32> to vector<16x32xbf16>
    %cst_353 = arith.constant dense<0.000000e+00> : vector<16x32xf32>
    %912 = tpu.matmul %910, %911, %cst_353 {dimension_numbers = #tpu.dot_dimension_numbers<[1], [0], [0], [1], [0, 0, 1, 1], [], []>} : vector<16x16xbf16>, vector<16x32xbf16>, vector<16x32xf32> -> vector<16x32xf32>
    %913 = vector.extract_strided_slice %842 {offsets = [0, 96], sizes = [16, 32], strides = [1, 1]} : vector<16x128xf32> to vector<16x32xf32>
    %914 = vector.extract_strided_slice %846 {offsets = [0, 192], sizes = [16, 32], strides = [1, 1]} : vector<16x256xf32> to vector<16x32xf32>
    %915 = vector.extract_strided_slice %846 {offsets = [0, 224], sizes = [16, 32], strides = [1, 1]} : vector<16x256xf32> to vector<16x32xf32>
    %916 = arith.truncf %913 : vector<16x32xf32> to vector<16x32xbf16>
    %917 = tpu.transpose %914, [1, 0] : vector<16x32xf32> -> vector<32x16xf32>
    %918 = arith.truncf %917 : vector<32x16xf32> to vector<32x16xbf16>
    %cst_354 = arith.constant dense<0.000000e+00> : vector<16x16xf32>
    %919 = tpu.matmul %916, %918, %cst_354 {dimension_numbers = #tpu.dot_dimension_numbers<[1], [0], [0], [1], [0, 0, 1, 1], [], []>} : vector<16x32xbf16>, vector<32x16xbf16>, vector<16x16xf32> -> vector<16x16xf32>
    %cst_355 = arith.constant 0.176776692 : f32
    %920 = vector.broadcast %cst_355 : f32 to vector<16x16xf32>
    %921 = arith.mulf %919, %920 : vector<16x16xf32>
    %cst_356 = arith.constant dense<0xFF800000> : vector<16xf32>
    %922 = vector.multi_reduction <maximumf>, %921, %cst_356 [1] : vector<16x16xf32> to vector<16xf32>
    %923 = vector.shape_cast %922 : vector<16xf32> to vector<16x1xf32>
    %924 = vector.broadcast %923 : vector<16x1xf32> to vector<16x16xf32>
    %925 = arith.subf %921, %924 : vector<16x16xf32>
    %926 = math.exp %925 : vector<16x16xf32>
    %cst_357 = arith.constant dense<0.000000e+00> : vector<16xf32>
    %927 = vector.multi_reduction <add>, %926, %cst_357 [1] : vector<16x16xf32> to vector<16xf32>
    %928 = vector.shape_cast %927 : vector<16xf32> to vector<16x1xf32>
    %929 = tpu.reciprocal %928 {approx = true} : vector<16x1xf32> -> vector<16x1xf32>
    %930 = vector.broadcast %929 : vector<16x1xf32> to vector<16x16xf32>
    %931 = arith.mulf %926, %930 : vector<16x16xf32>
    %932 = arith.truncf %931 : vector<16x16xf32> to vector<16x16xbf16>
    %933 = arith.truncf %915 : vector<16x32xf32> to vector<16x32xbf16>
    %cst_358 = arith.constant dense<0.000000e+00> : vector<16x32xf32>
    %934 = tpu.matmul %932, %933, %cst_358 {dimension_numbers = #tpu.dot_dimension_numbers<[1], [0], [0], [1], [0, 0, 1, 1], [], []>} : vector<16x16xbf16>, vector<16x32xbf16>, vector<16x32xf32> -> vector<16x32xf32>
    %935 = tpu.concatenate %868, %890, %912, %934 in 1 : vector<16x32xf32>, vector<16x32xf32>, vector<16x32xf32>, vector<16x32xf32> -> vector<16x128xf32>
    %936 = arith.truncf %935 : vector<16x128xf32> to vector<16x128xbf16>
    %cst_359 = arith.constant dense<0.000000e+00> : vector<16x128xf32>
    %937 = tpu.matmul %936, %836, %cst_359 {dimension_numbers = #tpu.dot_dimension_numbers<[1], [0], [0], [1], [0, 0, 1, 1], [], []>} : vector<16x128xbf16>, vector<128x128xbf16>, vector<16x128xf32> -> vector<16x128xf32>
    %938 = vector.broadcast %838 : vector<1x128xf32> to vector<16x128xf32>
    %939 = arith.addf %937, %938 : vector<16x128xf32>
    %940 = arith.addf %939, %826 : vector<16x128xf32>
    %c1_360 = arith.constant 1 : index
    %c0_361 = arith.constant 0 : index
    %c0_362 = arith.constant 0 : index
    %941 = vector.load %arg29[%c1_360, %c0_361, %c0_362] : memref<2x1x128xf32, #tpu.memory_space<vmem>>, vector<1x1x128xf32>
    %942 = vector.shape_cast %941 : vector<1x1x128xf32> to vector<1x128xf32>
    %c1_363 = arith.constant 1 : index
    %c0_364 = arith.constant 0 : index
    %c0_365 = arith.constant 0 : index
    %943 = vector.load %arg30[%c1_363, %c0_364, %c0_365] : memref<2x1x128xf32, #tpu.memory_space<vmem>>, vector<1x1x128xf32>
    %944 = vector.shape_cast %943 : vector<1x1x128xf32> to vector<1x128xf32>
    %cst_366 = arith.constant dense<0.000000e+00> : vector<16xf32>
    %945 = vector.multi_reduction <add>, %940, %cst_366 [1] : vector<16x128xf32> to vector<16xf32>
    %946 = vector.shape_cast %945 : vector<16xf32> to vector<16x1xf32>
    %cst_367 = arith.constant 1.280000e+02 : f32
    %947 = vector.broadcast %cst_367 : f32 to vector<16x1xf32>
    %948 = arith.divf %946, %947 : vector<16x1xf32>
    %949 = vector.broadcast %948 : vector<16x1xf32> to vector<16x128xf32>
    %950 = arith.subf %940, %949 : vector<16x128xf32>
    %951 = arith.mulf %950, %950 : vector<16x128xf32>
    %cst_368 = arith.constant dense<0.000000e+00> : vector<16xf32>
    %952 = vector.multi_reduction <add>, %951, %cst_368 [1] : vector<16x128xf32> to vector<16xf32>
    %953 = vector.shape_cast %952 : vector<16xf32> to vector<16x1xf32>
    %cst_369 = arith.constant 1.280000e+02 : f32
    %954 = vector.broadcast %cst_369 : f32 to vector<16x1xf32>
    %955 = arith.divf %953, %954 : vector<16x1xf32>
    %956 = vector.broadcast %948 : vector<16x1xf32> to vector<16x128xf32>
    %957 = arith.subf %940, %956 : vector<16x128xf32>
    %cst_370 = arith.constant 9.99999974E-6 : f32
    %958 = vector.broadcast %cst_370 : f32 to vector<16x1xf32>
    %959 = arith.addf %955, %958 : vector<16x1xf32>
    %960 = math.rsqrt %959 : vector<16x1xf32>
    %961 = vector.broadcast %960 : vector<16x1xf32> to vector<16x128xf32>
    %962 = arith.mulf %957, %961 : vector<16x128xf32>
    %963 = vector.broadcast %942 : vector<1x128xf32> to vector<16x128xf32>
    %964 = arith.mulf %962, %963 : vector<16x128xf32>
    %965 = vector.broadcast %944 : vector<1x128xf32> to vector<16x128xf32>
    %966 = arith.addf %964, %965 : vector<16x128xf32>
    %c1_371 = arith.constant 1 : index
    %c0_372 = arith.constant 0 : index
    %c0_373 = arith.constant 0 : index
    %967 = vector.load %arg31[%c1_371, %c0_372, %c0_373] : memref<2x128x256xbf16, #tpu.memory_space<vmem>>, vector<1x128x256xbf16>
    %968 = vector.shape_cast %967 : vector<1x128x256xbf16> to vector<128x256xbf16>
    %c1_374 = arith.constant 1 : index
    %c0_375 = arith.constant 0 : index
    %c0_376 = arith.constant 0 : index
    %969 = vector.load %arg32[%c1_374, %c0_375, %c0_376] : memref<2x1x256xf32, #tpu.memory_space<vmem>>, vector<1x1x256xf32>
    %970 = vector.shape_cast %969 : vector<1x1x256xf32> to vector<1x256xf32>
    %971 = arith.truncf %966 : vector<16x128xf32> to vector<16x128xbf16>
    %cst_377 = arith.constant dense<0.000000e+00> : vector<16x256xf32>
    %972 = tpu.matmul %971, %968, %cst_377 {dimension_numbers = #tpu.dot_dimension_numbers<[1], [0], [0], [1], [0, 0, 1, 1], [], []>} : vector<16x128xbf16>, vector<128x256xbf16>, vector<16x256xf32> -> vector<16x256xf32>
    %973 = vector.broadcast %970 : vector<1x256xf32> to vector<16x256xf32>
    %974 = arith.addf %972, %973 : vector<16x256xf32>
    %cst_378 = arith.constant 0.000000e+00 : f32
    %975 = vector.broadcast %cst_378 : f32 to vector<16x256xf32>
    %976 = arith.maximumf %974, %975 : vector<16x256xf32>
    %c1_379 = arith.constant 1 : index
    %c0_380 = arith.constant 0 : index
    %c0_381 = arith.constant 0 : index
    %977 = vector.load %arg33[%c1_379, %c0_380, %c0_381] : memref<2x256x128xbf16, #tpu.memory_space<vmem>>, vector<1x256x128xbf16>
    %978 = vector.shape_cast %977 : vector<1x256x128xbf16> to vector<256x128xbf16>
    %c1_382 = arith.constant 1 : index
    %c0_383 = arith.constant 0 : index
    %c0_384 = arith.constant 0 : index
    %979 = vector.load %arg34[%c1_382, %c0_383, %c0_384] : memref<2x1x128xf32, #tpu.memory_space<vmem>>, vector<1x1x128xf32>
    %980 = vector.shape_cast %979 : vector<1x1x128xf32> to vector<1x128xf32>
    %981 = arith.truncf %976 : vector<16x256xf32> to vector<16x256xbf16>
    %cst_385 = arith.constant dense<0.000000e+00> : vector<16x128xf32>
    %982 = tpu.matmul %981, %978, %cst_385 {dimension_numbers = #tpu.dot_dimension_numbers<[1], [0], [0], [1], [0, 0, 1, 1], [], []>} : vector<16x256xbf16>, vector<256x128xbf16>, vector<16x128xf32> -> vector<16x128xf32>
    %983 = vector.broadcast %980 : vector<1x128xf32> to vector<16x128xf32>
    %984 = arith.addf %982, %983 : vector<16x128xf32>
    %985 = arith.addf %984, %966 : vector<16x128xf32>
    %c1_386 = arith.constant 1 : index
    %c0_387 = arith.constant 0 : index
    %c0_388 = arith.constant 0 : index
    %986 = vector.load %arg35[%c1_386, %c0_387, %c0_388] : memref<2x1x128xf32, #tpu.memory_space<vmem>>, vector<1x1x128xf32>
    %987 = vector.shape_cast %986 : vector<1x1x128xf32> to vector<1x128xf32>
    %c1_389 = arith.constant 1 : index
    %c0_390 = arith.constant 0 : index
    %c0_391 = arith.constant 0 : index
    %988 = vector.load %arg36[%c1_389, %c0_390, %c0_391] : memref<2x1x128xf32, #tpu.memory_space<vmem>>, vector<1x1x128xf32>
    %989 = vector.shape_cast %988 : vector<1x1x128xf32> to vector<1x128xf32>
    %cst_392 = arith.constant dense<0.000000e+00> : vector<16xf32>
    %990 = vector.multi_reduction <add>, %985, %cst_392 [1] : vector<16x128xf32> to vector<16xf32>
    %991 = vector.shape_cast %990 : vector<16xf32> to vector<16x1xf32>
    %cst_393 = arith.constant 1.280000e+02 : f32
    %992 = vector.broadcast %cst_393 : f32 to vector<16x1xf32>
    %993 = arith.divf %991, %992 : vector<16x1xf32>
    %994 = vector.broadcast %993 : vector<16x1xf32> to vector<16x128xf32>
    %995 = arith.subf %985, %994 : vector<16x128xf32>
    %996 = arith.mulf %995, %995 : vector<16x128xf32>
    %cst_394 = arith.constant dense<0.000000e+00> : vector<16xf32>
    %997 = vector.multi_reduction <add>, %996, %cst_394 [1] : vector<16x128xf32> to vector<16xf32>
    %998 = vector.shape_cast %997 : vector<16xf32> to vector<16x1xf32>
    %cst_395 = arith.constant 1.280000e+02 : f32
    %999 = vector.broadcast %cst_395 : f32 to vector<16x1xf32>
    %1000 = arith.divf %998, %999 : vector<16x1xf32>
    %1001 = vector.broadcast %993 : vector<16x1xf32> to vector<16x128xf32>
    %1002 = arith.subf %985, %1001 : vector<16x128xf32>
    %cst_396 = arith.constant 9.99999974E-6 : f32
    %1003 = vector.broadcast %cst_396 : f32 to vector<16x1xf32>
    %1004 = arith.addf %1000, %1003 : vector<16x1xf32>
    %1005 = math.rsqrt %1004 : vector<16x1xf32>
    %1006 = vector.broadcast %1005 : vector<16x1xf32> to vector<16x128xf32>
    %1007 = arith.mulf %1002, %1006 : vector<16x128xf32>
    %1008 = vector.broadcast %987 : vector<1x128xf32> to vector<16x128xf32>
    %1009 = arith.mulf %1007, %1008 : vector<16x128xf32>
    %1010 = vector.broadcast %989 : vector<1x128xf32> to vector<16x128xf32>
    %1011 = arith.addf %1009, %1010 : vector<16x128xf32>
    %1012 = arith.truncf %1011 : vector<16x128xf32> to vector<16x128xbf16>
    %c0_397 = arith.constant 0 : index
    %c0_398 = arith.constant 0 : index
    %1013 = vector.load %arg37[%c0_397, %c0_398] : memref<128x128xbf16, #tpu.memory_space<vmem>>, vector<128x128xbf16>
    %cst_399 = arith.constant dense<0.000000e+00> : vector<16x128xf32>
    %1014 = tpu.matmul %1012, %1013, %cst_399 {dimension_numbers = #tpu.dot_dimension_numbers<[1], [0], [0], [1], [0, 0, 1, 1], [], []>} : vector<16x128xbf16>, vector<128x128xbf16>, vector<16x128xf32> -> vector<16x128xf32>
    %c0_400 = arith.constant 0 : index
    %c0_401 = arith.constant 0 : index
    %1015 = vector.load %arg38[%c0_400, %c0_401] : memref<1x128xf32, #tpu.memory_space<vmem>>, vector<1x128xf32>
    %1016 = vector.broadcast %1015 : vector<1x128xf32> to vector<16x128xf32>
    %1017 = arith.addf %1014, %1016 : vector<16x128xf32>
    %c0_402 = arith.constant 0 : index
    %c0_403 = arith.constant 0 : index
    %c0_404 = arith.constant 0 : index
    %1018 = vector.load %arg39[%c0_402, %c0_403, %c0_404] : memref<1x16x128xf32, #tpu.memory_space<vmem>>, vector<1x16x128xf32>
    %1019 = vector.shape_cast %1018 : vector<1x16x128xf32> to vector<16x128xf32>
    %1020 = vector.shape_cast %1017 : vector<16x128xf32> to vector<1x16x128xf32>
    tpu.vector_store %arg39[%c0_402, %c0_403, %c0_404], %1020 {strides = array<i32>} : memref<1x16x128xf32, #tpu.memory_space<vmem>>, vector<1x16x128xf32>,
    return
  }
  func.func @transform_0(%arg0: i32) -> (i32, i32, i32) {
    %c0_i32 = arith.constant 0 : i32
    %c0_i32_0 = arith.constant 0 : i32
    %c0_i32_1 = arith.constant 0 : i32
    return %arg0, %c0_i32, %c0_i32_0 : i32, i32, i32
  }
  func.func @transform_1(%arg0: i32) -> (i32, i32, i32) {
    %c0_i32 = arith.constant 0 : i32
    %c0_i32_0 = arith.constant 0 : i32
    %c0_i32_1 = arith.constant 0 : i32
    return %arg0, %c0_i32, %c0_i32_0 : i32, i32, i32
  }
  func.func @transform_2(%arg0: i32) -> (i32, i32, i32) {
    %c0_i32 = arith.constant 0 : i32
    %c0_i32_0 = arith.constant 0 : i32
    %c0_i32_1 = arith.constant 0 : i32
    return %arg0, %c0_i32, %c0_i32_0 : i32, i32, i32
  }
  func.func @transform_3(%arg0: i32) -> (i32, i32, i32) {
    %c0_i32 = arith.constant 0 : i32
    %c0_i32_0 = arith.constant 0 : i32
    %c0_i32_1 = arith.constant 0 : i32
    return %arg0, %c0_i32, %c0_i32_0 : i32, i32, i32
  }
  func.func @transform_4(%arg0: i32) -> (i32, i32, i32) {
    %c0_i32 = arith.constant 0 : i32
    %c0_i32_0 = arith.constant 0 : i32
    %c0_i32_1 = arith.constant 0 : i32
    %c0_i32_2 = arith.constant 0 : i32
    return %c0_i32, %c0_i32_0, %c0_i32_1 : i32, i32, i32
  }
  func.func @transform_5(%arg0: i32) -> (i32, i32, i32) {
    %c0_i32 = arith.constant 0 : i32
    %c0_i32_0 = arith.constant 0 : i32
    %c0_i32_1 = arith.constant 0 : i32
    %c0_i32_2 = arith.constant 0 : i32
    return %c0_i32, %c0_i32_0, %c0_i32_1 : i32, i32, i32
  }
  func.func @transform_6(%arg0: i32) -> (i32, i32, i32) {
    %c0_i32 = arith.constant 0 : i32
    %c0_i32_0 = arith.constant 0 : i32
    %c0_i32_1 = arith.constant 0 : i32
    %c0_i32_2 = arith.constant 0 : i32
    return %c0_i32, %c0_i32_0, %c0_i32_1 : i32, i32, i32
  }
  func.func @transform_7(%arg0: i32) -> (i32, i32, i32) {
    %c0_i32 = arith.constant 0 : i32
    %c0_i32_0 = arith.constant 0 : i32
    %c0_i32_1 = arith.constant 0 : i32
    %c0_i32_2 = arith.constant 0 : i32
    return %c0_i32, %c0_i32_0, %c0_i32_1 : i32, i32, i32
  }
  func.func @transform_8(%arg0: i32) -> (i32, i32, i32) {
    %c0_i32 = arith.constant 0 : i32
    %c0_i32_0 = arith.constant 0 : i32
    %c0_i32_1 = arith.constant 0 : i32
    %c0_i32_2 = arith.constant 0 : i32
    return %c0_i32, %c0_i32_0, %c0_i32_1 : i32, i32, i32
  }
  func.func @transform_9(%arg0: i32) -> (i32, i32, i32) {
    %c0_i32 = arith.constant 0 : i32
    %c0_i32_0 = arith.constant 0 : i32
    %c0_i32_1 = arith.constant 0 : i32
    %c0_i32_2 = arith.constant 0 : i32
    return %c0_i32, %c0_i32_0, %c0_i32_1 : i32, i32, i32
  }
  func.func @transform_10(%arg0: i32) -> (i32, i32, i32) {
    %c0_i32 = arith.constant 0 : i32
    %c0_i32_0 = arith.constant 0 : i32
    %c0_i32_1 = arith.constant 0 : i32
    %c0_i32_2 = arith.constant 0 : i32
    return %c0_i32, %c0_i32_0, %c0_i32_1 : i32, i32, i32
  }
  func.func @transform_11(%arg0: i32) -> (i32, i32, i32) {
    %c0_i32 = arith.constant 0 : i32
    %c0_i32_0 = arith.constant 0 : i32
    %c0_i32_1 = arith.constant 0 : i32
    %c0_i32_2 = arith.constant 0 : i32
    return %c0_i32, %c0_i32_0, %c0_i32_1 : i32, i32, i32
  }
  func.func @transform_12(%arg0: i32) -> (i32, i32, i32) {
    %c0_i32 = arith.constant 0 : i32
    %c0_i32_0 = arith.constant 0 : i32
    %c0_i32_1 = arith.constant 0 : i32
    %c0_i32_2 = arith.constant 0 : i32
    return %c0_i32, %c0_i32_0, %c0_i32_1 : i32, i32, i32
  }
  func.func @transform_13(%arg0: i32) -> (i32, i32, i32) {
    %c0_i32 = arith.constant 0 : i32
    %c0_i32_0 = arith.constant 0 : i32
    %c0_i32_1 = arith.constant 0 : i32
    %c0_i32_2 = arith.constant 0 : i32
    return %c0_i32, %c0_i32_0, %c0_i32_1 : i32, i32, i32
  }
  func.func @transform_14(%arg0: i32) -> (i32, i32, i32) {
    %c0_i32 = arith.constant 0 : i32
    %c0_i32_0 = arith.constant 0 : i32
    %c0_i32_1 = arith.constant 0 : i32
    %c0_i32_2 = arith.constant 0 : i32
    return %c0_i32, %c0_i32_0, %c0_i32_1 : i32, i32, i32
  }
  func.func @transform_15(%arg0: i32) -> (i32, i32, i32) {
    %c0_i32 = arith.constant 0 : i32
    %c0_i32_0 = arith.constant 0 : i32
    %c0_i32_1 = arith.constant 0 : i32
    %c0_i32_2 = arith.constant 0 : i32
    return %c0_i32, %c0_i32_0, %c0_i32_1 : i32, i32, i32
  }
  func.func @transform_16(%arg0: i32) -> (i32, i32, i32) {
    %c0_i32 = arith.constant 0 : i32
    %c0_i32_0 = arith.constant 0 : i32
    %c0_i32_1 = arith.constant 0 : i32
    %c0_i32_2 = arith.constant 0 : i32
    return %c0_i32, %c0_i32_0, %c0_i32_1 : i32, i32, i32
  }
  func.func @transform_17(%arg0: i32) -> (i32, i32, i32) {
    %c0_i32 = arith.constant 0 : i32
    %c0_i32_0 = arith.constant 0 : i32
    %c0_i32_1 = arith.constant 0 : i32
    %c0_i32_2 = arith.constant 0 : i32
    return %c0_i32, %c0_i32_0, %c0_i32_1 : i32, i32, i32
  }
  func.func @transform_18(%arg0: i32) -> (i32, i32, i32) {
    %c0_i32 = arith.constant 0 : i32
    %c0_i32_0 = arith.constant 0 : i32
    %c0_i32_1 = arith.constant 0 : i32
    %c0_i32_2 = arith.constant 0 : i32
    return %c0_i32, %c0_i32_0, %c0_i32_1 : i32, i32, i32
  }
  func.func @transform_19(%arg0: i32) -> (i32, i32, i32) {
    %c0_i32 = arith.constant 0 : i32
    %c0_i32_0 = arith.constant 0 : i32
    %c0_i32_1 = arith.constant 0 : i32
    %c0_i32_2 = arith.constant 0 : i32
    return %c0_i32, %c0_i32_0, %c0_i32_1 : i32, i32, i32
  }
  func.func @transform_20(%arg0: i32) -> (i32, i32, i32) {
    %c0_i32 = arith.constant 0 : i32
    %c0_i32_0 = arith.constant 0 : i32
    %c0_i32_1 = arith.constant 0 : i32
    %c0_i32_2 = arith.constant 0 : i32
    return %c0_i32, %c0_i32_0, %c0_i32_1 : i32, i32, i32
  }
  func.func @transform_21(%arg0: i32) -> (i32, i32, i32) {
    %c0_i32 = arith.constant 0 : i32
    %c0_i32_0 = arith.constant 0 : i32
    %c0_i32_1 = arith.constant 0 : i32
    %c0_i32_2 = arith.constant 0 : i32
    return %c0_i32, %c0_i32_0, %c0_i32_1 : i32, i32, i32
  }
  func.func @transform_22(%arg0: i32) -> (i32, i32, i32) {
    %c0_i32 = arith.constant 0 : i32
    %c0_i32_0 = arith.constant 0 : i32
    %c0_i32_1 = arith.constant 0 : i32
    %c0_i32_2 = arith.constant 0 : i32
    return %c0_i32, %c0_i32_0, %c0_i32_1 : i32, i32, i32
  }
  func.func @transform_23(%arg0: i32) -> (i32, i32, i32) {
    %c0_i32 = arith.constant 0 : i32
    %c0_i32_0 = arith.constant 0 : i32
    %c0_i32_1 = arith.constant 0 : i32
    %c0_i32_2 = arith.constant 0 : i32
    return %c0_i32, %c0_i32_0, %c0_i32_1 : i32, i32, i32
  }
  func.func @transform_24(%arg0: i32) -> (i32, i32, i32) {
    %c0_i32 = arith.constant 0 : i32
    %c0_i32_0 = arith.constant 0 : i32
    %c0_i32_1 = arith.constant 0 : i32
    %c0_i32_2 = arith.constant 0 : i32
    return %c0_i32, %c0_i32_0, %c0_i32_1 : i32, i32, i32
  }
  func.func @transform_25(%arg0: i32) -> (i32, i32, i32) {
    %c0_i32 = arith.constant 0 : i32
    %c0_i32_0 = arith.constant 0 : i32
    %c0_i32_1 = arith.constant 0 : i32
    %c0_i32_2 = arith.constant 0 : i32
    return %c0_i32, %c0_i32_0, %c0_i32_1 : i32, i32, i32
  }
  func.func @transform_26(%arg0: i32) -> (i32, i32, i32) {
    %c0_i32 = arith.constant 0 : i32
    %c0_i32_0 = arith.constant 0 : i32
    %c0_i32_1 = arith.constant 0 : i32
    %c0_i32_2 = arith.constant 0 : i32
    return %c0_i32, %c0_i32_0, %c0_i32_1 : i32, i32, i32
  }
  func.func @transform_27(%arg0: i32) -> (i32, i32, i32) {
    %c0_i32 = arith.constant 0 : i32
    %c0_i32_0 = arith.constant 0 : i32
    %c0_i32_1 = arith.constant 0 : i32
    %c0_i32_2 = arith.constant 0 : i32
    return %c0_i32, %c0_i32_0, %c0_i32_1 : i32, i32, i32
  }
  func.func @transform_28(%arg0: i32) -> (i32, i32, i32) {
    %c0_i32 = arith.constant 0 : i32
    %c0_i32_0 = arith.constant 0 : i32
    %c0_i32_1 = arith.constant 0 : i32
    %c0_i32_2 = arith.constant 0 : i32
    return %c0_i32, %c0_i32_0, %c0_i32_1 : i32, i32, i32
  }
  func.func @transform_29(%arg0: i32) -> (i32, i32, i32) {
    %c0_i32 = arith.constant 0 : i32
    %c0_i32_0 = arith.constant 0 : i32
    %c0_i32_1 = arith.constant 0 : i32
    %c0_i32_2 = arith.constant 0 : i32
    return %c0_i32, %c0_i32_0, %c0_i32_1 : i32, i32, i32
  }
  func.func @transform_30(%arg0: i32) -> (i32, i32, i32) {
    %c0_i32 = arith.constant 0 : i32
    %c0_i32_0 = arith.constant 0 : i32
    %c0_i32_1 = arith.constant 0 : i32
    %c0_i32_2 = arith.constant 0 : i32
    return %c0_i32, %c0_i32_0, %c0_i32_1 : i32, i32, i32
  }
  func.func @transform_31(%arg0: i32) -> (i32, i32, i32) {
    %c0_i32 = arith.constant 0 : i32
    %c0_i32_0 = arith.constant 0 : i32
    %c0_i32_1 = arith.constant 0 : i32
    %c0_i32_2 = arith.constant 0 : i32
    return %c0_i32, %c0_i32_0, %c0_i32_1 : i32, i32, i32
  }
  func.func @transform_32(%arg0: i32) -> (i32, i32, i32) {
    %c0_i32 = arith.constant 0 : i32
    %c0_i32_0 = arith.constant 0 : i32
    %c0_i32_1 = arith.constant 0 : i32
    %c0_i32_2 = arith.constant 0 : i32
    return %c0_i32, %c0_i32_0, %c0_i32_1 : i32, i32, i32
  }
  func.func @transform_33(%arg0: i32) -> (i32, i32, i32) {
    %c0_i32 = arith.constant 0 : i32
    %c0_i32_0 = arith.constant 0 : i32
    %c0_i32_1 = arith.constant 0 : i32
    %c0_i32_2 = arith.constant 0 : i32
    return %c0_i32, %c0_i32_0, %c0_i32_1 : i32, i32, i32
  }
  func.func @transform_34(%arg0: i32) -> (i32, i32, i32) {
    %c0_i32 = arith.constant 0 : i32
    %c0_i32_0 = arith.constant 0 : i32
    %c0_i32_1 = arith.constant 0 : i32
    %c0_i32_2 = arith.constant 0 : i32
    return %c0_i32, %c0_i32_0, %c0_i32_1 : i32, i32, i32
  }
  func.func @transform_35(%arg0: i32) -> (i32, i32, i32) {
    %c0_i32 = arith.constant 0 : i32
    %c0_i32_0 = arith.constant 0 : i32
    %c0_i32_1 = arith.constant 0 : i32
    %c0_i32_2 = arith.constant 0 : i32
    return %c0_i32, %c0_i32_0, %c0_i32_1 : i32, i32, i32
  }
  func.func @transform_36(%arg0: i32) -> (i32, i32) {
    %c0_i32 = arith.constant 0 : i32
    %c0_i32_0 = arith.constant 0 : i32
    %c0_i32_1 = arith.constant 0 : i32
    return %c0_i32, %c0_i32_0 : i32, i32
  }
  func.func @transform_37(%arg0: i32) -> (i32, i32) {
    %c0_i32 = arith.constant 0 : i32
    %c0_i32_0 = arith.constant 0 : i32
    %c0_i32_1 = arith.constant 0 : i32
    return %c0_i32, %c0_i32_0 : i32, i32
  }
  func.func @transform_38(%arg0: i32) -> (i32, i32, i32) {
    %c0_i32 = arith.constant 0 : i32
    %c0_i32_0 = arith.constant 0 : i32
    %c0_i32_1 = arith.constant 0 : i32
    return %arg0, %c0_i32, %c0_i32_0 : i32, i32, i32
  }
}

</mosaic_0001>

<llo_original>
// kernel: machine_translation_forward.1
$region0: #{machine_translation_forward.1}
  #allocation0 [shape = 'u32[]', space=smem, size = 0x4, offset = 0x4, fixed_abs, tag = 'smem constant byte address 0x4 - core index']
  #allocation1 [shape = 'u32[72,128]{1,0:T(1,128)}', space=vmem, size = 0x9000, scoped, tag = 'internal scratch']
  %s0 = inlined_call_operand.smem [shape: u32[39], index: -1, kind: input, shape index: {}]
  %s1 = sld [smem:[%s0]]
  %s2 = scalar_lea.smem %s0, 1
  %s3 = sld [smem:[%s2]]
  %s4 = scalar_lea.smem %s0, 2
  %s5 = sld [smem:[%s4]]
  %s6 = scalar_lea.smem %s0, 3
  %s7 = sld [smem:[%s6]]
  %s8 = scalar_lea.smem %s0, 4
  %s9 = sld [smem:[%s8]]
  %s10 = scalar_lea.smem %s0, 5
  %s11 = sld [smem:[%s10]]
  %s12 = scalar_lea.smem %s0, 6
  %s13 = sld [smem:[%s12]]
  %s14 = scalar_lea.smem %s0, 7
  %s15 = sld [smem:[%s14]]
  %s16 = scalar_lea.smem %s0, 8
  %s17 = sld [smem:[%s16]]
  %s18 = scalar_lea.smem %s0, 9
  %s19 = sld [smem:[%s18]]
  %s20 = scalar_lea.smem %s0, 10
  %s21 = sld [smem:[%s20]]
  %s22 = scalar_lea.smem %s0, 11
  %s23 = sld [smem:[%s22]]
  %s24 = scalar_lea.smem %s0, 12
  %s25 = sld [smem:[%s24]]
  %s26 = scalar_lea.smem %s0, 13
  %s27 = sld [smem:[%s26]]
  %s28 = scalar_lea.smem %s0, 14
  %s29 = sld [smem:[%s28]]
  %s30 = scalar_lea.smem %s0, 15
  %s31 = sld [smem:[%s30]]
  %s32 = scalar_lea.smem %s0, 16
  %s33 = sld [smem:[%s32]]
  %s34 = scalar_lea.smem %s0, 17
  %s35 = sld [smem:[%s34]]
  %s36 = scalar_lea.smem %s0, 18
  %s37 = sld [smem:[%s36]]
  %s38 = scalar_lea.smem %s0, 19
  %s39 = sld [smem:[%s38]]
  %s40 = scalar_lea.smem %s0, 20
  %s41 = sld [smem:[%s40]]
  %s42 = scalar_lea.smem %s0, 21
  %s43 = sld [smem:[%s42]]
  %s44 = scalar_lea.smem %s0, 22
  %s45 = sld [smem:[%s44]]
  %s46 = scalar_lea.smem %s0, 23
  %s47 = sld [smem:[%s46]]
  %s48 = scalar_lea.smem %s0, 24
  %s49 = sld [smem:[%s48]]
  %s50 = scalar_lea.smem %s0, 25
  %s51 = sld [smem:[%s50]]
  %s52 = scalar_lea.smem %s0, 26
  %s53 = sld [smem:[%s52]]
  %s54 = scalar_lea.smem %s0, 27
  %s55 = sld [smem:[%s54]]
  %s56 = scalar_lea.smem %s0, 28
  %s57 = sld [smem:[%s56]]
  %s58 = scalar_lea.smem %s0, 29
  %s59 = sld [smem:[%s58]]
  %s60 = scalar_lea.smem %s0, 30
  %s61 = sld [smem:[%s60]]
  %s62 = scalar_lea.smem %s0, 31
  %s63 = sld [smem:[%s62]]
  %s64 = scalar_lea.smem %s0, 32
  %s65 = sld [smem:[%s64]]
  %s66 = scalar_lea.smem %s0, 33
  %s67 = sld [smem:[%s66]]
  %s68 = scalar_lea.smem %s0, 34
  %s69 = sld [smem:[%s68]]
  %s70 = scalar_lea.smem %s0, 35
  %s71 = sld [smem:[%s70]]
  %s72 = scalar_lea.smem %s0, 36
  %s73 = sld [smem:[%s72]]
  %s74 = scalar_lea.smem %s0, 37
  %s75 = sld [smem:[%s74]]
  %s76 = scalar_lea.smem %s0, 38
  %s77 = sld [smem:[%s76]]
  %s78 = sld [smem:[#allocation0]]
  $region297: #{machine_translation_forward.1} parent=0
    _
  %s80 = ssub.s32 1, %s78
  %s81 = scalar_select 0, %s80, %s78
  $region1: #{machine_translation_forward.1} parent=0
    #allocation2 [shape = 'u8[16384]{0}', space=vmem, size = 0x4000, scoped, tag = 'input window, operand 3']
    #allocation3 [shape = 's32[2]{0}', space=sflag, size = 0x8, scoped, tag = 'scoped memory for machine_translation_forward.1']
    #allocation4 [shape = 's32[2]{0}', space=sflag, size = 0x8, scoped, tag = 'scoped memory for machine_translation_forward.1']
    #allocation5 [shape = 'u8[1024]{0}', space=vmem, size = 0x400, scoped, tag = 'input window, operand 8, single buffered']
    #allocation6 [shape = 's32[1]{0}', space=sflag, size = 0x4, scoped, tag = 'scoped memory for machine_translation_forward.1']
    #allocation7 [shape = 'u8[1024]{0}', space=vmem, size = 0x400, scoped, tag = 'input window, operand 9, single buffered']
    #allocation8 [shape = 'u8[2048]{0}', space=vmem, size = 0x800, scoped, tag = 'input window, operand 11, single buffered']
    #allocation9 [shape = 's32[1]{0}', space=sflag, size = 0x4, scoped, tag = 'scoped memory for machine_translation_forward.1']
    #allocation10 [shape = 'u8[1024]{0}', space=vmem, size = 0x400, scoped, tag = 'input window, operand 13, single buffered']
    #allocation11 [shape = 'u8[1024]{0}', space=vmem, size = 0x400, scoped, tag = 'input window, operand 14, single buffered']
    #allocation12 [shape = 's32[1]{0}', space=sflag, size = 0x4, scoped, tag = 'scoped memory for machine_translation_forward.1']
    #allocation13 [shape = 'u8[1024]{0}', space=vmem, size = 0x400, scoped, tag = 'input window, operand 15, single buffered']
    #allocation14 [shape = 'u8[196608]{0}', space=vmem, size = 0x30000, scoped, tag = 'input window, operand 16, single buffered']
    #allocation15 [shape = 's32[1]{0}', space=sflag, size = 0x4, scoped, tag = 'scoped memory for machine_translation_forward.1']
    #allocation16 [shape = 'u8[3072]{0}', space=vmem, size = 0xc00, scoped, tag = 'input window, operand 17, single buffered']
    #allocation17 [shape = 'u8[65536]{0}', space=vmem, size = 0x10000, scoped, tag = 'input window, operand 18, single buffered']
    #allocation18 [shape = 's32[1]{0}', space=sflag, size = 0x4, scoped, tag = 'scoped memory for machine_translation_forward.1']
    #allocation19 [shape = 'u8[1024]{0}', space=vmem, size = 0x400, scoped, tag = 'input window, operand 19, single buffered']
    #allocation20 [shape = 'u8[1024]{0}', space=vmem, size = 0x400, scoped, tag = 'input window, operand 20, single buffered']
    #allocation21 [shape = 's32[1]{0}', space=sflag, size = 0x4, scoped, tag = 'scoped memory for machine_translation_forward.1']
    #allocation22 [shape = 'u8[1024]{0}', space=vmem, size = 0x400, scoped, tag = 'input window, operand 21, single buffered']
    #allocation23 [shape = 'u8[131072]{0}', space=vmem, size = 0x20000, scoped, tag = 'input window, operand 22, single buffered']
    #allocation24 [shape = 's32[1]{0}', space=sflag, size = 0x4, scoped, tag = 'scoped memory for machine_translation_forward.1']
    #allocation25 [shape = 'u8[2048]{0}', space=vmem, size = 0x800, scoped, tag = 'input window, operand 23, single buffered']
    #allocation26 [shape = 'u8[65536]{0}', space=vmem, size = 0x10000, scoped, tag = 'input window, operand 24, single buffered']
    #allocation27 [shape = 's32[1]{0}', space=sflag, size = 0x4, scoped, tag = 'scoped memory for machine_translation_forward.1']
    #allocation28 [shape = 'u8[1024]{0}', space=vmem, size = 0x400, scoped, tag = 'input window, operand 25, single buffered']
    #allocation29 [shape = 'u8[65536]{0}', space=vmem, size = 0x10000, scoped, tag = 'input window, operand 26, single buffered']
    #allocation30 [shape = 's32[1]{0}', space=sflag, size = 0x4, scoped, tag = 'scoped memory for machine_translation_forward.1']
    #allocation31 [shape = 'u8[1024]{0}', space=vmem, size = 0x400, scoped, tag = 'input window, operand 27, single buffered']
    #allocation32 [shape = 'u8[1024]{0}', space=vmem, size = 0x400, scoped, tag = 'input window, operand 28, single buffered']
    #allocation33 [shape = 's32[1]{0}', space=sflag, size = 0x4, scoped, tag = 'scoped memory for machine_translation_forward.1']
    #allocation34 [shape = 'u8[1024]{0}', space=vmem, size = 0x400, scoped, tag = 'input window, operand 29, single buffered']
    #allocation35 [shape = 'u8[131072]{0}', space=vmem, size = 0x20000, scoped, tag = 'input window, operand 30, single buffered']
    #allocation36 [shape = 's32[1]{0}', space=sflag, size = 0x4, scoped, tag = 'scoped memory for machine_translation_forward.1']
    #allocation37 [shape = 'u8[2048]{0}', space=vmem, size = 0x800, scoped, tag = 'input window, operand 31, single buffered']
    #allocation38 [shape = 'u8[131072]{0}', space=vmem, size = 0x20000, scoped, tag = 'input window, operand 32, single buffered']
    #allocation39 [shape = 's32[1]{0}', space=sflag, size = 0x4, scoped, tag = 'scoped memory for machine_translation_forward.1']
    #allocation40 [shape = 'u8[1024]{0}', space=vmem, size = 0x400, scoped, tag = 'input window, operand 33, single buffered']
    #allocation41 [shape = 'u8[1024]{0}', space=vmem, size = 0x400, scoped, tag = 'input window, operand 34, single buffered']
    #allocation42 [shape = 's32[1]{0}', space=sflag, size = 0x4, scoped, tag = 'scoped memory for machine_translation_forward.1']
    #allocation43 [shape = 'u8[1024]{0}', space=vmem, size = 0x400, scoped, tag = 'input window, operand 35, single buffered']
    #allocation44 [shape = 'u8[512]{0}', space=vmem, size = 0x400, scoped, tag = 'input window, operand 37, single buffered']
    #allocation45 [shape = 's32[1]{0}', space=sflag, size = 0x4, scoped, tag = 'scoped memory for machine_translation_forward.1']
    #allocation46 [shape = 'u8[16384]{0}', space=vmem, size = 0x4000, scoped, tag = 'output window, operand 0']
    %82 = vsyncpa [#allocation3], 0
    %s83 = scalar_lea.sflag [#allocation3], 1
    %84 = vsyncpa %s83, 0
    %85 = vsyncpa [#allocation6], 0
    %86 = vsyncpa [#allocation9], 0
    %87 = vsyncpa [#allocation12], 0
    %88 = vsyncpa [#allocation15], 0
    %89 = vsyncpa [#allocation18], 0
    %90 = vsyncpa [#allocation21], 0
    %91 = vsyncpa [#allocation24], 0
    %92 = vsyncpa [#allocation27], 0
    %93 = vsyncpa [#allocation30], 0
    %94 = vsyncpa [#allocation33], 0
    %95 = vsyncpa [#allocation36], 0
    %96 = vsyncpa [#allocation39], 0
    %97 = vsyncpa [#allocation42], 0
    %98 = vsyncpa [#allocation45], 0
    %99 = vsyncpa [#allocation4], 0
    %s100 = scalar_lea.sflag [#allocation4], 1
    %101 = vsyncpa %s100, 0
    loop: start=0, step=1, limit=4
    $region2: #{machine_translation_forward.1} parent=1 // loop_pre_header
      _
    $region3: #{machine_translation_forward.1} parent=1 // loop_header
      %s103 = sphi 0, %s107
      %p104 = scmp.ge.s32.totalorder %s103, 4
      %s113 = sphi 0, %s115
      %s116 = sphi 0, %s113
      %s117 = sphi 0, %s116
      %s133 = sphi 0, %s117
      %s139 = sphi 0, %s141
      %s142 = sphi 0, %s139
      %s143 = sphi 0, %s142
      %s159 = sphi 0, %s143
      %s165 = sphi 0, %s167
      %s168 = sphi 0, %s165
      %s169 = sphi 0, %s168
      %s185 = sphi 0, %s169
      %s191 = sphi 0, %s193
      %s194 = sphi 0, %s191
      %s195 = sphi 0, %s194
      %s211 = sphi 0, %s195
      %s215 = sphi 0, %s215
      %s217 = sphi 0, %s215
      %s218 = sphi 0, %s217
      %s232 = sphi 0, %s218
      %s236 = sphi 0, %s236
      %s238 = sphi 0, %s236
      %s239 = sphi 0, %s238
      %s253 = sphi 0, %s239
      %s257 = sphi 0, %s257
      %s259 = sphi 0, %s257
      %s260 = sphi 0, %s259
      %s274 = sphi 0, %s260
      %s278 = sphi 0, %s278
      %s280 = sphi 0, %s278
      %s281 = sphi 0, %s280
      %s295 = sphi 0, %s281
      %s299 = sphi 0, %s299
      %s301 = sphi 0, %s299
      %s302 = sphi 0, %s301
      %s316 = sphi 0, %s302
      %s320 = sphi 0, %s320
      %s322 = sphi 0, %s320
      %s323 = sphi 0, %s322
      %s337 = sphi 0, %s323
      %s341 = sphi 0, %s341
      %s343 = sphi 0, %s341
      %s344 = sphi 0, %s343
      %s358 = sphi 0, %s344
      %s362 = sphi 0, %s362
      %s364 = sphi 0, %s362
      %s365 = sphi 0, %s364
      %s379 = sphi 0, %s365
      %s383 = sphi 0, %s383
      %s385 = sphi 0, %s383
      %s386 = sphi 0, %s385
      %s400 = sphi 0, %s386
      %s404 = sphi 0, %s404
      %s406 = sphi 0, %s404
      %s407 = sphi 0, %s406
      %s421 = sphi 0, %s407
      %s425 = sphi 0, %s425
      %s427 = sphi 0, %s425
      %s428 = sphi 0, %s427
      %s442 = sphi 0, %s428
      %s446 = sphi 0, %s446
      %s448 = sphi 0, %s446
      %s449 = sphi 0, %s448
      %s463 = sphi 0, %s449
      %s467 = sphi 0, %s467
      %s469 = sphi 0, %s467
      %s470 = sphi 0, %s469
      %s484 = sphi 0, %s470
      %s488 = sphi 0, %s488
      %s490 = sphi 0, %s488
      %s491 = sphi 0, %s490
      %s505 = sphi 0, %s491
      %s509 = sphi 0, %s509
      %s511 = sphi 0, %s509
      %s512 = sphi 0, %s511
      %s526 = sphi 0, %s512
      %s530 = sphi 0, %s530
      %s532 = sphi 0, %s530
      %s533 = sphi 0, %s532
      %s547 = sphi 0, %s533
      %s551 = sphi 0, %s551
      %s553 = sphi 0, %s551
      %s554 = sphi 0, %s553
      %s568 = sphi 0, %s554
      %s572 = sphi 0, %s572
      %s574 = sphi 0, %s572
      %s575 = sphi 0, %s574
      %s589 = sphi 0, %s575
      %s593 = sphi 0, %s593
      %s595 = sphi 0, %s593
      %s596 = sphi 0, %s595
      %s610 = sphi 0, %s596
      %s614 = sphi 0, %s614
      %s616 = sphi 0, %s614
      %s617 = sphi 0, %s616
      %s631 = sphi 0, %s617
      %s635 = sphi 0, %s635
      %s637 = sphi 0, %s635
      %s638 = sphi 0, %s637
      %s652 = sphi 0, %s638
      %s656 = sphi 0, %s656
      %s658 = sphi 0, %s656
      %s659 = sphi 0, %s658
      %s673 = sphi 0, %s659
      %s677 = sphi 0, %s677
      %s679 = sphi 0, %s677
      %s680 = sphi 0, %s679
      %s694 = sphi 0, %s680
      %s698 = sphi 0, %s698
      %s700 = sphi 0, %s698
      %s701 = sphi 0, %s700
      %s715 = sphi 0, %s701
      %s719 = sphi 0, %s719
      %s721 = sphi 0, %s719
      %s722 = sphi 0, %s721
      %s736 = sphi 0, %s722
      %s740 = sphi 0, %s740
      %s742 = sphi 0, %s740
      %s743 = sphi 0, %s742
      %s757 = sphi 0, %s743
      %s761 = sphi 0, %s761
      %s763 = sphi 0, %s761
      %s764 = sphi 0, %s763
      %s778 = sphi 0, %s764
      %s782 = sphi 0, %s782
      %s784 = sphi 0, %s782
      %s785 = sphi 0, %s784
      %s799 = sphi 0, %s785
      %s803 = sphi 0, %s803
      %s805 = sphi 0, %s803
      %s806 = sphi 0, %s805
      %s820 = sphi 0, %s806
      %s824 = sphi 0, %s824
      %s826 = sphi 0, %s824
      %s827 = sphi 0, %s826
      %s841 = sphi 0, %s827
      %s845 = sphi 0, %s845
      %s847 = sphi 0, %s845
      %s848 = sphi 0, %s847
      %s862 = sphi 0, %s848
      %s866 = sphi 0, %s866
      %s868 = sphi 0, %s866
      %s869 = sphi 0, %s868
      %s883 = sphi 0, %s869
      %s887 = sphi 0, %s887
      %s889 = sphi 0, %s887
      %s890 = sphi 0, %s889
      %s904 = sphi 0, %s890
      %s908 = sphi 0, %s908
      %s910 = sphi 0, %s908
      %s911 = sphi 0, %s910
      %s925 = sphi 0, %s911
      %s931 = sphi 0, %s933
      %s934 = sphi 0, %s931
      %s935 = sphi 0, %s934
      %s951 = sphi 0, %s935
    $region4: #{machine_translation_forward.1} parent=1 // loop_header_branch
      %106 = sbr.rel (%p104) target = $region8
    $region5: #{machine_translation_forward.1} parent=1 // loop_body
      %s108 = ssub.s32 %s103, 1
      %s109 = ssub.s32 %s103, 2
      %s110 = sadd.s32 %s103, 1
      %s111 = ssub.s32 %s103, %s110
      %p112 = scmp.eq.s32.totalorder %s111, 0
      %s114 = sadd.s32 %s113, 1
      %s115 = scalar_select %p112, %s113, %s114
      %p118 = pneg %p112
      %p119 = scmp.eq.s32.totalorder %s103, 1
      %p120 = por %p118, %p119
      %p121 = scmp.ne.s32.totalorder %s113, %s116
      %p122 = scmp.eq.s32.totalorder %s103, 0
      %p123 = por %p121, %p122
      %p124 = scmp.ne.s32.totalorder %s113, %s116
      %p125 = scmp.eq.s32.totalorder %s108, 1
      %p126 = por %p124, %p125
      %p127 = scmp.ne.s32.totalorder %s116, %s117
      %p128 = scmp.eq.s32.totalorder %s108, 0
      %p129 = por %p127, %p128
      %p130 = scmp.ne.s32.totalorder %s116, %s117
      %p131 = scmp.eq.s32.totalorder %s109, 1
      %p132 = por %p130, %p131
      %p134 = scmp.ne.s32.totalorder %s117, %s133
      %p135 = scmp.eq.s32.totalorder %s109, 0
      %p136 = por %p134, %p135
      %s137 = ssub.s32 %s103, %s110
      %p138 = scmp.eq.s32.totalorder %s137, 0
      %s140 = sadd.s32 %s139, 1
      %s141 = scalar_select %p138, %s139, %s140
      %p144 = pneg %p138
      %p145 = scmp.eq.s32.totalorder %s103, 1
      %p146 = por %p144, %p145
      %p147 = scmp.ne.s32.totalorder %s139, %s142
      %p148 = scmp.eq.s32.totalorder %s103, 0
      %p149 = por %p147, %p148
      %p150 = scmp.ne.s32.totalorder %s139, %s142
      %p151 = scmp.eq.s32.totalorder %s108, 1
      %p152 = por %p150, %p151
      %p153 = scmp.ne.s32.totalorder %s142, %s143
      %p154 = scmp.eq.s32.totalorder %s108, 0
      %p155 = por %p153, %p154
      %p156 = scmp.ne.s32.totalorder %s142, %s143
      %p157 = scmp.eq.s32.totalorder %s109, 1
      %p158 = por %p156, %p157
      %p160 = scmp.ne.s32.totalorder %s143, %s159
      %p161 = scmp.eq.s32.totalorder %s109, 0
      %p162 = por %p160, %p161
      %s163 = ssub.s32 %s103, %s110
      %p164 = scmp.eq.s32.totalorder %s163, 0
      %s166 = sadd.s32 %s165, 1
      %s167 = scalar_select %p164, %s165, %s166
      %p170 = pneg %p164
      %p171 = scmp.eq.s32.totalorder %s103, 1
      %p172 = por %p170, %p171
      %p173 = scmp.ne.s32.totalorder %s165, %s168
      %p174 = scmp.eq.s32.totalorder %s103, 0
      %p175 = por %p173, %p174
      %p176 = scmp.ne.s32.totalorder %s165, %s168
      %p177 = scmp.eq.s32.totalorder %s108, 1
      %p178 = por %p176, %p177
      %p179 = scmp.ne.s32.totalorder %s168, %s169
      %p180 = scmp.eq.s32.totalorder %s108, 0
      %p181 = por %p179, %p180
      %p182 = scmp.ne.s32.totalorder %s168, %s169
      %p183 = scmp.eq.s32.totalorder %s109, 1
      %p184 = por %p182, %p183
      %p186 = scmp.ne.s32.totalorder %s169, %s185
      %p187 = scmp.eq.s32.totalorder %s109, 0
      %p188 = por %p186, %p187
      %s189 = ssub.s32 %s103, %s110
      %p190 = scmp.eq.s32.totalorder %s189, 0
      %s192 = sadd.s32 %s191, 1
      %s193 = scalar_select %p190, %s191, %s192
      %p196 = pneg %p190
      %p197 = scmp.eq.s32.totalorder %s103, 1
      %p198 = por %p196, %p197
      %p199 = scmp.ne.s32.totalorder %s191, %s194
      %p200 = scmp.eq.s32.totalorder %s103, 0
      %p201 = por %p199, %p200
      %p202 = scmp.ne.s32.totalorder %s191, %s194
      %p203 = scmp.eq.s32.totalorder %s108, 1
      %p204 = por %p202, %p203
      %p205 = scmp.ne.s32.totalorder %s194, %s195
      %p206 = scmp.eq.s32.totalorder %s108, 0
      %p207 = por %p205, %p206
      %p208 = scmp.ne.s32.totalorder %s194, %s195
      %p209 = scmp.eq.s32.totalorder %s109, 1
      %p210 = por %p208, %p209
      %p212 = scmp.ne.s32.totalorder %s195, %s211
      %p213 = scmp.eq.s32.totalorder %s109, 0
      %p214 = por %p212, %p213
      %s216 = sadd.s32 %s215, 1
      %p219 = scmp.eq.s32.totalorder %s103, 1
      %p220 = scmp.ne.s32.totalorder %s215, %s217
      %p221 = scmp.eq.s32.totalorder %s103, 0
      %p222 = por %p220, %p221
      %p223 = scmp.ne.s32.totalorder %s215, %s217
      %p224 = scmp.eq.s32.totalorder %s108, 1
      %p225 = por %p223, %p224
      %p226 = scmp.ne.s32.totalorder %s217, %s218
      %p227 = scmp.eq.s32.totalorder %s108, 0
      %p228 = por %p226, %p227
      %p229 = scmp.ne.s32.totalorder %s217, %s218
      %p230 = scmp.eq.s32.totalorder %s109, 1
      %p231 = por %p229, %p230
      %p233 = scmp.ne.s32.totalorder %s218, %s232
      %p234 = scmp.eq.s32.totalorder %s109, 0
      %p235 = por %p233, %p234
      %s237 = sadd.s32 %s236, 1
      %p240 = scmp.eq.s32.totalorder %s103, 1
      %p241 = scmp.ne.s32.totalorder %s236, %s238
      %p242 = scmp.eq.s32.totalorder %s103, 0
      %p243 = por %p241, %p242
      %p244 = scmp.ne.s32.totalorder %s236, %s238
      %p245 = scmp.eq.s32.totalorder %s108, 1
      %p246 = por %p244, %p245
      %p247 = scmp.ne.s32.totalorder %s238, %s239
      %p248 = scmp.eq.s32.totalorder %s108, 0
      %p249 = por %p247, %p248
      %p250 = scmp.ne.s32.totalorder %s238, %s239
      %p251 = scmp.eq.s32.totalorder %s109, 1
      %p252 = por %p250, %p251
      %p254 = scmp.ne.s32.totalorder %s239, %s253
      %p255 = scmp.eq.s32.totalorder %s109, 0
      %p256 = por %p254, %p255
      %s258 = sadd.s32 %s257, 1
      %p261 = scmp.eq.s32.totalorder %s103, 1
      %p262 = scmp.ne.s32.totalorder %s257, %s259
      %p263 = scmp.eq.s32.totalorder %s103, 0
      %p264 = por %p262, %p263
      %p265 = scmp.ne.s32.totalorder %s257, %s259
      %p266 = scmp.eq.s32.totalorder %s108, 1
      %p267 = por %p265, %p266
      %p268 = scmp.ne.s32.totalorder %s259, %s260
      %p269 = scmp.eq.s32.totalorder %s108, 0
      %p270 = por %p268, %p269
      %p271 = scmp.ne.s32.totalorder %s259, %s260
      %p272 = scmp.eq.s32.totalorder %s109, 1
      %p273 = por %p271, %p272
      %p275 = scmp.ne.s32.totalorder %s260, %s274
      %p276 = scmp.eq.s32.totalorder %s109, 0
      %p277 = por %p275, %p276
      %s279 = sadd.s32 %s278, 1
      %p282 = scmp.eq.s32.totalorder %s103, 1
      %p283 = scmp.ne.s32.totalorder %s278, %s280
      %p284 = scmp.eq.s32.totalorder %s103, 0
      %p285 = por %p283, %p284
      %p286 = scmp.ne.s32.totalorder %s278, %s280
      %p287 = scmp.eq.s32.totalorder %s108, 1
      %p288 = por %p286, %p287
      %p289 = scmp.ne.s32.totalorder %s280, %s281
      %p290 = scmp.eq.s32.totalorder %s108, 0
      %p291 = por %p289, %p290
      %p292 = scmp.ne.s32.totalorder %s280, %s281
      %p293 = scmp.eq.s32.totalorder %s109, 1
      %p294 = por %p292, %p293
      %p296 = scmp.ne.s32.totalorder %s281, %s295
      %p297 = scmp.eq.s32.totalorder %s109, 0
      %p298 = por %p296, %p297
      %s300 = sadd.s32 %s299, 1
      %p303 = scmp.eq.s32.totalorder %s103, 1
      %p304 = scmp.ne.s32.totalorder %s299, %s301
      %p305 = scmp.eq.s32.totalorder %s103, 0
      %p306 = por %p304, %p305
      %p307 = scmp.ne.s32.totalorder %s299, %s301
      %p308 = scmp.eq.s32.totalorder %s108, 1
      %p309 = por %p307, %p308
      %p310 = scmp.ne.s32.totalorder %s301, %s302
      %p311 = scmp.eq.s32.totalorder %s108, 0
      %p312 = por %p310, %p311
      %p313 = scmp.ne.s32.totalorder %s301, %s302
      %p314 = scmp.eq.s32.totalorder %s109, 1
      %p315 = por %p313, %p314
      %p317 = scmp.ne.s32.totalorder %s302, %s316
      %p318 = scmp.eq.s32.totalorder %s109, 0
      %p319 = por %p317, %p318
      %s321 = sadd.s32 %s320, 1
      %p324 = scmp.eq.s32.totalorder %s103, 1
      %p325 = scmp.ne.s32.totalorder %s320, %s322
      %p326 = scmp.eq.s32.totalorder %s103, 0
      %p327 = por %p325, %p326
      %p328 = scmp.ne.s32.totalorder %s320, %s322
      %p329 = scmp.eq.s32.totalorder %s108, 1
      %p330 = por %p328, %p329
      %p331 = scmp.ne.s32.totalorder %s322, %s323
      %p332 = scmp.eq.s32.totalorder %s108, 0
      %p333 = por %p331, %p332
      %p334 = scmp.ne.s32.totalorder %s322, %s323
      %p335 = scmp.eq.s32.totalorder %s109, 1
      %p336 = por %p334, %p335
      %p338 = scmp.ne.s32.totalorder %s323, %s337
      %p339 = scmp.eq.s32.totalorder %s109, 0
      %p340 = por %p338, %p339
      %s342 = sadd.s32 %s341, 1
      %p345 = scmp.eq.s32.totalorder %s103, 1
      %p346 = scmp.ne.s32.totalorder %s341, %s343
      %p347 = scmp.eq.s32.totalorder %s103, 0
      %p348 = por %p346, %p347
      %p349 = scmp.ne.s32.totalorder %s341, %s343
      %p350 = scmp.eq.s32.totalorder %s108, 1
      %p351 = por %p349, %p350
      %p352 = scmp.ne.s32.totalorder %s343, %s344
      %p353 = scmp.eq.s32.totalorder %s108, 0
      %p354 = por %p352, %p353
      %p355 = scmp.ne.s32.totalorder %s343, %s344
      %p356 = scmp.eq.s32.totalorder %s109, 1
      %p357 = por %p355, %p356
      %p359 = scmp.ne.s32.totalorder %s344, %s358
      %p360 = scmp.eq.s32.totalorder %s109, 0
      %p361 = por %p359, %p360
      %s363 = sadd.s32 %s362, 1
      %p366 = scmp.eq.s32.totalorder %s103, 1
      %p367 = scmp.ne.s32.totalorder %s362, %s364
      %p368 = scmp.eq.s32.totalorder %s103, 0
      %p369 = por %p367, %p368
      %p370 = scmp.ne.s32.totalorder %s362, %s364
      %p371 = scmp.eq.s32.totalorder %s108, 1
      %p372 = por %p370, %p371
      %p373 = scmp.ne.s32.totalorder %s364, %s365
      %p374 = scmp.eq.s32.totalorder %s108, 0
      %p375 = por %p373, %p374
      %p376 = scmp.ne.s32.totalorder %s364, %s365
      %p377 = scmp.eq.s32.totalorder %s109, 1
      %p378 = por %p376, %p377
      %p380 = scmp.ne.s32.totalorder %s365, %s379
      %p381 = scmp.eq.s32.totalorder %s109, 0
      %p382 = por %p380, %p381
      %s384 = sadd.s32 %s383, 1
      %p387 = scmp.eq.s32.totalorder %s103, 1
      %p388 = scmp.ne.s32.totalorder %s383, %s385
      %p389 = scmp.eq.s32.totalorder %s103, 0
      %p390 = por %p388, %p389
      %p391 = scmp.ne.s32.totalorder %s383, %s385
      %p392 = scmp.eq.s32.totalorder %s108, 1
      %p393 = por %p391, %p392
      %p394 = scmp.ne.s32.totalorder %s385, %s386
      %p395 = scmp.eq.s32.totalorder %s108, 0
      %p396 = por %p394, %p395
      %p397 = scmp.ne.s32.totalorder %s385, %s386
      %p398 = scmp.eq.s32.totalorder %s109, 1
      %p399 = por %p397, %p398
      %p401 = scmp.ne.s32.totalorder %s386, %s400
      %p402 = scmp.eq.s32.totalorder %s109, 0
      %p403 = por %p401, %p402
      %s405 = sadd.s32 %s404, 1
      %p408 = scmp.eq.s32.totalorder %s103, 1
      %p409 = scmp.ne.s32.totalorder %s404, %s406
      %p410 = scmp.eq.s32.totalorder %s103, 0
      %p411 = por %p409, %p410
      %p412 = scmp.ne.s32.totalorder %s404, %s406
      %p413 = scmp.eq.s32.totalorder %s108, 1
      %p414 = por %p412, %p413
      %p415 = scmp.ne.s32.totalorder %s406, %s407
      %p416 = scmp.eq.s32.totalorder %s108, 0
      %p417 = por %p415, %p416
      %p418 = scmp.ne.s32.totalorder %s406, %s407
      %p419 = scmp.eq.s32.totalorder %s109, 1
      %p420 = por %p418, %p419
      %p422 = scmp.ne.s32.totalorder %s407, %s421
      %p423 = scmp.eq.s32.totalorder %s109, 0
      %p424 = por %p422, %p423
      %s426 = sadd.s32 %s425, 1
      %p429 = scmp.eq.s32.totalorder %s103, 1
      %p430 = scmp.ne.s32.totalorder %s425, %s427
      %p431 = scmp.eq.s32.totalorder %s103, 0
      %p432 = por %p430, %p431
      %p433 = scmp.ne.s32.totalorder %s425, %s427
      %p434 = scmp.eq.s32.totalorder %s108, 1
      %p435 = por %p433, %p434
      %p436 = scmp.ne.s32.totalorder %s427, %s428
      %p437 = scmp.eq.s32.totalorder %s108, 0
      %p438 = por %p436, %p437
      %p439 = scmp.ne.s32.totalorder %s427, %s428
      %p440 = scmp.eq.s32.totalorder %s109, 1
      %p441 = por %p439, %p440
      %p443 = scmp.ne.s32.totalorder %s428, %s442
      %p444 = scmp.eq.s32.totalorder %s109, 0
      %p445 = por %p443, %p444
      %s447 = sadd.s32 %s446, 1
      %p450 = scmp.eq.s32.totalorder %s103, 1
      %p451 = scmp.ne.s32.totalorder %s446, %s448
      %p452 = scmp.eq.s32.totalorder %s103, 0
      %p453 = por %p451, %p452
      %p454 = scmp.ne.s32.totalorder %s446, %s448
      %p455 = scmp.eq.s32.totalorder %s108, 1
      %p456 = por %p454, %p455
      %p457 = scmp.ne.s32.totalorder %s448, %s449
      %p458 = scmp.eq.s32.totalorder %s108, 0
      %p459 = por %p457, %p458
      %p460 = scmp.ne.s32.totalorder %s448, %s449
      %p461 = scmp.eq.s32.totalorder %s109, 1
      %p462 = por %p460, %p461
      %p464 = scmp.ne.s32.totalorder %s449, %s463
      %p465 = scmp.eq.s32.totalorder %s109, 0
      %p466 = por %p464, %p465
      %s468 = sadd.s32 %s467, 1
      %p471 = scmp.eq.s32.totalorder %s103, 1
      %p472 = scmp.ne.s32.totalorder %s467, %s469
      %p473 = scmp.eq.s32.totalorder %s103, 0
      %p474 = por %p472, %p473
      %p475 = scmp.ne.s32.totalorder %s467, %s469
      %p476 = scmp.eq.s32.totalorder %s108, 1
      %p477 = por %p475, %p476
      %p478 = scmp.ne.s32.totalorder %s469, %s470
      %p479 = scmp.eq.s32.totalorder %s108, 0
      %p480 = por %p478, %p479
      %p481 = scmp.ne.s32.totalorder %s469, %s470
      %p482 = scmp.eq.s32.totalorder %s109, 1
      %p483 = por %p481, %p482
      %p485 = scmp.ne.s32.totalorder %s470, %s484
      %p486 = scmp.eq.s32.totalorder %s109, 0
      %p487 = por %p485, %p486
      %s489 = sadd.s32 %s488, 1
      %p492 = scmp.eq.s32.totalorder %s103, 1
      %p493 = scmp.ne.s32.totalorder %s488, %s490
      %p494 = scmp.eq.s32.totalorder %s103, 0
      %p495 = por %p493, %p494
      %p496 = scmp.ne.s32.totalorder %s488, %s490
      %p497 = scmp.eq.s32.totalorder %s108, 1
      %p498 = por %p496, %p497
      %p499 = scmp.ne.s32.totalorder %s490, %s491
      %p500 = scmp.eq.s32.totalorder %s108, 0
      %p501 = por %p499, %p500
      %p502 = scmp.ne.s32.totalorder %s490, %s491
      %p503 = scmp.eq.s32.totalorder %s109, 1
      %p504 = por %p502, %p503
      %p506 = scmp.ne.s32.totalorder %s491, %s505
      %p507 = scmp.eq.s32.totalorder %s109, 0
      %p508 = por %p506, %p507
      %s510 = sadd.s32 %s509, 1
      %p513 = scmp.eq.s32.totalorder %s103, 1
      %p514 = scmp.ne.s32.totalorder %s509, %s511
      %p515 = scmp.eq.s32.totalorder %s103, 0
      %p516 = por %p514, %p515
      %p517 = scmp.ne.s32.totalorder %s509, %s511
      %p518 = scmp.eq.s32.totalorder %s108, 1
      %p519 = por %p517, %p518
      %p520 = scmp.ne.s32.totalorder %s511, %s512
      %p521 = scmp.eq.s32.totalorder %s108, 0
      %p522 = por %p520, %p521
      %p523 = scmp.ne.s32.totalorder %s511, %s512
      %p524 = scmp.eq.s32.totalorder %s109, 1
      %p525 = por %p523, %p524
      %p527 = scmp.ne.s32.totalorder %s512, %s526
      %p528 = scmp.eq.s32.totalorder %s109, 0
      %p529 = por %p527, %p528
      %s531 = sadd.s32 %s530, 1
      %p534 = scmp.eq.s32.totalorder %s103, 1
      %p535 = scmp.ne.s32.totalorder %s530, %s532
      %p536 = scmp.eq.s32.totalorder %s103, 0
      %p537 = por %p535, %p536
      %p538 = scmp.ne.s32.totalorder %s530, %s532
      %p539 = scmp.eq.s32.totalorder %s108, 1
      %p540 = por %p538, %p539
      %p541 = scmp.ne.s32.totalorder %s532, %s533
      %p542 = scmp.eq.s32.totalorder %s108, 0
      %p543 = por %p541, %p542
      %p544 = scmp.ne.s32.totalorder %s532, %s533
      %p545 = scmp.eq.s32.totalorder %s109, 1
      %p546 = por %p544, %p545
      %p548 = scmp.ne.s32.totalorder %s533, %s547
      %p549 = scmp.eq.s32.totalorder %s109, 0
      %p550 = por %p548, %p549
      %s552 = sadd.s32 %s551, 1
      %p555 = scmp.eq.s32.totalorder %s103, 1
      %p556 = scmp.ne.s32.totalorder %s551, %s553
      %p557 = scmp.eq.s32.totalorder %s103, 0
      %p558 = por %p556, %p557
      %p559 = scmp.ne.s32.totalorder %s551, %s553
      %p560 = scmp.eq.s32.totalorder %s108, 1
      %p561 = por %p559, %p560
      %p562 = scmp.ne.s32.totalorder %s553, %s554
      %p563 = scmp.eq.s32.totalorder %s108, 0
      %p564 = por %p562, %p563
      %p565 = scmp.ne.s32.totalorder %s553, %s554
      %p566 = scmp.eq.s32.totalorder %s109, 1
      %p567 = por %p565, %p566
      %p569 = scmp.ne.s32.totalorder %s554, %s568
      %p570 = scmp.eq.s32.totalorder %s109, 0
      %p571 = por %p569, %p570
      %s573 = sadd.s32 %s572, 1
      %p576 = scmp.eq.s32.totalorder %s103, 1
      %p577 = scmp.ne.s32.totalorder %s572, %s574
      %p578 = scmp.eq.s32.totalorder %s103, 0
      %p579 = por %p577, %p578
      %p580 = scmp.ne.s32.totalorder %s572, %s574
      %p581 = scmp.eq.s32.totalorder %s108, 1
      %p582 = por %p580, %p581
      %p583 = scmp.ne.s32.totalorder %s574, %s575
      %p584 = scmp.eq.s32.totalorder %s108, 0
      %p585 = por %p583, %p584
      %p586 = scmp.ne.s32.totalorder %s574, %s575
      %p587 = scmp.eq.s32.totalorder %s109, 1
      %p588 = por %p586, %p587
      %p590 = scmp.ne.s32.totalorder %s575, %s589
      %p591 = scmp.eq.s32.totalorder %s109, 0
      %p592 = por %p590, %p591
      %s594 = sadd.s32 %s593, 1
      %p597 = scmp.eq.s32.totalorder %s103, 1
      %p598 = scmp.ne.s32.totalorder %s593, %s595
      %p599 = scmp.eq.s32.totalorder %s103, 0
      %p600 = por %p598, %p599
      %p601 = scmp.ne.s32.totalorder %s593, %s595
      %p602 = scmp.eq.s32.totalorder %s108, 1
      %p603 = por %p601, %p602
      %p604 = scmp.ne.s32.totalorder %s595, %s596
      %p605 = scmp.eq.s32.totalorder %s108, 0
      %p606 = por %p604, %p605
      %p607 = scmp.ne.s32.totalorder %s595, %s596
      %p608 = scmp.eq.s32.totalorder %s109, 1
      %p609 = por %p607, %p608
      %p611 = scmp.ne.s32.totalorder %s596, %s610
      %p612 = scmp.eq.s32.totalorder %s109, 0
      %p613 = por %p611, %p612
      %s615 = sadd.s32 %s614, 1
      %p618 = scmp.eq.s32.totalorder %s103, 1
      %p619 = scmp.ne.s32.totalorder %s614, %s616
      %p620 = scmp.eq.s32.totalorder %s103, 0
      %p621 = por %p619, %p620
      %p622 = scmp.ne.s32.totalorder %s614, %s616
      %p623 = scmp.eq.s32.totalorder %s108, 1
      %p624 = por %p622, %p623
      %p625 = scmp.ne.s32.totalorder %s616, %s617
      %p626 = scmp.eq.s32.totalorder %s108, 0
      %p627 = por %p625, %p626
      %p628 = scmp.ne.s32.totalorder %s616, %s617
      %p629 = scmp.eq.s32.totalorder %s109, 1
      %p630 = por %p628, %p629
      %p632 = scmp.ne.s32.totalorder %s617, %s631
      %p633 = scmp.eq.s32.totalorder %s109, 0
      %p634 = por %p632, %p633
      %s636 = sadd.s32 %s635, 1
      %p639 = scmp.eq.s32.totalorder %s103, 1
      %p640 = scmp.ne.s32.totalorder %s635, %s637
      %p641 = scmp.eq.s32.totalorder %s103, 0
      %p642 = por %p640, %p641
      %p643 = scmp.ne.s32.totalorder %s635, %s637
      %p644 = scmp.eq.s32.totalorder %s108, 1
      %p645 = por %p643, %p644
      %p646 = scmp.ne.s32.totalorder %s637, %s638
      %p647 = scmp.eq.s32.totalorder %s108, 0
      %p648 = por %p646, %p647
      %p649 = scmp.ne.s32.totalorder %s637, %s638
      %p650 = scmp.eq.s32.totalorder %s109, 1
      %p651 = por %p649, %p650
      %p653 = scmp.ne.s32.totalorder %s638, %s652
      %p654 = scmp.eq.s32.totalorder %s109, 0
      %p655 = por %p653, %p654
      %s657 = sadd.s32 %s656, 1
      %p660 = scmp.eq.s32.totalorder %s103, 1
      %p661 = scmp.ne.s32.totalorder %s656, %s658
      %p662 = scmp.eq.s32.totalorder %s103, 0
      %p663 = por %p661, %p662
      %p664 = scmp.ne.s32.totalorder %s656, %s658
      %p665 = scmp.eq.s32.totalorder %s108, 1
      %p666 = por %p664, %p665
      %p667 = scmp.ne.s32.totalorder %s658, %s659
      %p668 = scmp.eq.s32.totalorder %s108, 0
      %p669 = por %p667, %p668
      %p670 = scmp.ne.s32.totalorder %s658, %s659
      %p671 = scmp.eq.s32.totalorder %s109, 1
      %p672 = por %p670, %p671
      %p674 = scmp.ne.s32.totalorder %s659, %s673
      %p675 = scmp.eq.s32.totalorder %s109, 0
      %p676 = por %p674, %p675
      %s678 = sadd.s32 %s677, 1
      %p681 = scmp.eq.s32.totalorder %s103, 1
      %p682 = scmp.ne.s32.totalorder %s677, %s679
      %p683 = scmp.eq.s32.totalorder %s103, 0
      %p684 = por %p682, %p683
      %p685 = scmp.ne.s32.totalorder %s677, %s679
      %p686 = scmp.eq.s32.totalorder %s108, 1
      %p687 = por %p685, %p686
      %p688 = scmp.ne.s32.totalorder %s679, %s680
      %p689 = scmp.eq.s32.totalorder %s108, 0
      %p690 = por %p688, %p689
      %p691 = scmp.ne.s32.totalorder %s679, %s680
      %p692 = scmp.eq.s32.totalorder %s109, 1
      %p693 = por %p691, %p692
      %p695 = scmp.ne.s32.totalorder %s680, %s694
      %p696 = scmp.eq.s32.totalorder %s109, 0
      %p697 = por %p695, %p696
      %s699 = sadd.s32 %s698, 1
      %p702 = scmp.eq.s32.totalorder %s103, 1
      %p703 = scmp.ne.s32.totalorder %s698, %s700
      %p704 = scmp.eq.s32.totalorder %s103, 0
      %p705 = por %p703, %p704
      %p706 = scmp.ne.s32.totalorder %s698, %s700
      %p707 = scmp.eq.s32.totalorder %s108, 1
      %p708 = por %p706, %p707
      %p709 = scmp.ne.s32.totalorder %s700, %s701
      %p710 = scmp.eq.s32.totalorder %s108, 0
      %p711 = por %p709, %p710
      %p712 = scmp.ne.s32.totalorder %s700, %s701
      %p713 = scmp.eq.s32.totalorder %s109, 1
      %p714 = por %p712, %p713
      %p716 = scmp.ne.s32.totalorder %s701, %s715
      %p717 = scmp.eq.s32.totalorder %s109, 0
      %p718 = por %p716, %p717
      %s720 = sadd.s32 %s719, 1
      %p723 = scmp.eq.s32.totalorder %s103, 1
      %p724 = scmp.ne.s32.totalorder %s719, %s721
      %p725 = scmp.eq.s32.totalorder %s103, 0
      %p726 = por %p724, %p725
      %p727 = scmp.ne.s32.totalorder %s719, %s721
      %p728 = scmp.eq.s32.totalorder %s108, 1
      %p729 = por %p727, %p728
      %p730 = scmp.ne.s32.totalorder %s721, %s722
      %p731 = scmp.eq.s32.totalorder %s108, 0
      %p732 = por %p730, %p731
      %p733 = scmp.ne.s32.totalorder %s721, %s722
      %p734 = scmp.eq.s32.totalorder %s109, 1
      %p735 = por %p733, %p734
      %p737 = scmp.ne.s32.totalorder %s722, %s736
      %p738 = scmp.eq.s32.totalorder %s109, 0
      %p739 = por %p737, %p738
      %s741 = sadd.s32 %s740, 1
      %p744 = scmp.eq.s32.totalorder %s103, 1
      %p745 = scmp.ne.s32.totalorder %s740, %s742
      %p746 = scmp.eq.s32.totalorder %s103, 0
      %p747 = por %p745, %p746
      %p748 = scmp.ne.s32.totalorder %s740, %s742
      %p749 = scmp.eq.s32.totalorder %s108, 1
      %p750 = por %p748, %p749
      %p751 = scmp.ne.s32.totalorder %s742, %s743
      %p752 = scmp.eq.s32.totalorder %s108, 0
      %p753 = por %p751, %p752
      %p754 = scmp.ne.s32.totalorder %s742, %s743
      %p755 = scmp.eq.s32.totalorder %s109, 1
      %p756 = por %p754, %p755
      %p758 = scmp.ne.s32.totalorder %s743, %s757
      %p759 = scmp.eq.s32.totalorder %s109, 0
      %p760 = por %p758, %p759
      %s762 = sadd.s32 %s761, 1
      %p765 = scmp.eq.s32.totalorder %s103, 1
      %p766 = scmp.ne.s32.totalorder %s761, %s763
      %p767 = scmp.eq.s32.totalorder %s103, 0
      %p768 = por %p766, %p767
      %p769 = scmp.ne.s32.totalorder %s761, %s763
      %p770 = scmp.eq.s32.totalorder %s108, 1
      %p771 = por %p769, %p770
      %p772 = scmp.ne.s32.totalorder %s763, %s764
      %p773 = scmp.eq.s32.totalorder %s108, 0
      %p774 = por %p772, %p773
      %p775 = scmp.ne.s32.totalorder %s763, %s764
      %p776 = scmp.eq.s32.totalorder %s109, 1
      %p777 = por %p775, %p776
      %p779 = scmp.ne.s32.totalorder %s764, %s778
      %p780 = scmp.eq.s32.totalorder %s109, 0
      %p781 = por %p779, %p780
      %s783 = sadd.s32 %s782, 1
      %p786 = scmp.eq.s32.totalorder %s103, 1
      %p787 = scmp.ne.s32.totalorder %s782, %s784
      %p788 = scmp.eq.s32.totalorder %s103, 0
      %p789 = por %p787, %p788
      %p790 = scmp.ne.s32.totalorder %s782, %s784
      %p791 = scmp.eq.s32.totalorder %s108, 1
      %p792 = por %p790, %p791
      %p793 = scmp.ne.s32.totalorder %s784, %s785
      %p794 = scmp.eq.s32.totalorder %s108, 0
      %p795 = por %p793, %p794
      %p796 = scmp.ne.s32.totalorder %s784, %s785
      %p797 = scmp.eq.s32.totalorder %s109, 1
      %p798 = por %p796, %p797
      %p800 = scmp.ne.s32.totalorder %s785, %s799
      %p801 = scmp.eq.s32.totalorder %s109, 0
      %p802 = por %p800, %p801
      %s804 = sadd.s32 %s803, 1
      %p807 = scmp.eq.s32.totalorder %s103, 1
      %p808 = scmp.ne.s32.totalorder %s803, %s805
      %p809 = scmp.eq.s32.totalorder %s103, 0
      %p810 = por %p808, %p809
      %p811 = scmp.ne.s32.totalorder %s803, %s805
      %p812 = scmp.eq.s32.totalorder %s108, 1
      %p813 = por %p811, %p812
      %p814 = scmp.ne.s32.totalorder %s805, %s806
      %p815 = scmp.eq.s32.totalorder %s108, 0
      %p816 = por %p814, %p815
      %p817 = scmp.ne.s32.totalorder %s805, %s806
      %p818 = scmp.eq.s32.totalorder %s109, 1
      %p819 = por %p817, %p818
      %p821 = scmp.ne.s32.totalorder %s806, %s820
      %p822 = scmp.eq.s32.totalorder %s109, 0
      %p823 = por %p821, %p822
      %s825 = sadd.s32 %s824, 1
      %p828 = scmp.eq.s32.totalorder %s103, 1
      %p829 = scmp.ne.s32.totalorder %s824, %s826
      %p830 = scmp.eq.s32.totalorder %s103, 0
      %p831 = por %p829, %p830
      %p832 = scmp.ne.s32.totalorder %s824, %s826
      %p833 = scmp.eq.s32.totalorder %s108, 1
      %p834 = por %p832, %p833
      %p835 = scmp.ne.s32.totalorder %s826, %s827
      %p836 = scmp.eq.s32.totalorder %s108, 0
      %p837 = por %p835, %p836
      %p838 = scmp.ne.s32.totalorder %s826, %s827
      %p839 = scmp.eq.s32.totalorder %s109, 1
      %p840 = por %p838, %p839
      %p842 = scmp.ne.s32.totalorder %s827, %s841
      %p843 = scmp.eq.s32.totalorder %s109, 0
      %p844 = por %p842, %p843
      %s846 = sadd.s32 %s845, 1
      %p849 = scmp.eq.s32.totalorder %s103, 1
      %p850 = scmp.ne.s32.totalorder %s845, %s847
      %p851 = scmp.eq.s32.totalorder %s103, 0
      %p852 = por %p850, %p851
      %p853 = scmp.ne.s32.totalorder %s845, %s847
      %p854 = scmp.eq.s32.totalorder %s108, 1
      %p855 = por %p853, %p854
      %p856 = scmp.ne.s32.totalorder %s847, %s848
      %p857 = scmp.eq.s32.totalorder %s108, 0
      %p858 = por %p856, %p857
      %p859 = scmp.ne.s32.totalorder %s847, %s848
      %p860 = scmp.eq.s32.totalorder %s109, 1
      %p861 = por %p859, %p860
      %p863 = scmp.ne.s32.totalorder %s848, %s862
      %p864 = scmp.eq.s32.totalorder %s109, 0
      %p865 = por %p863, %p864
      %s867 = sadd.s32 %s866, 1
      %p870 = scmp.eq.s32.totalorder %s103, 1
      %p871 = scmp.ne.s32.totalorder %s866, %s868
      %p872 = scmp.eq.s32.totalorder %s103, 0
      %p873 = por %p871, %p872
      %p874 = scmp.ne.s32.totalorder %s866, %s868
      %p875 = scmp.eq.s32.totalorder %s108, 1
      %p876 = por %p874, %p875
      %p877 = scmp.ne.s32.totalorder %s868, %s869
      %p878 = scmp.eq.s32.totalorder %s108, 0
      %p879 = por %p877, %p878
      %p880 = scmp.ne.s32.totalorder %s868, %s869
      %p881 = scmp.eq.s32.totalorder %s109, 1
      %p882 = por %p880, %p881
      %p884 = scmp.ne.s32.totalorder %s869, %s883
      %p885 = scmp.eq.s32.totalorder %s109, 0
      %p886 = por %p884, %p885
      %s888 = sadd.s32 %s887, 1
      %p891 = scmp.eq.s32.totalorder %s103, 1
      %p892 = scmp.ne.s32.totalorder %s887, %s889
      %p893 = scmp.eq.s32.totalorder %s103, 0
      %p894 = por %p892, %p893
      %p895 = scmp.ne.s32.totalorder %s887, %s889
      %p896 = scmp.eq.s32.totalorder %s108, 1
      %p897 = por %p895, %p896
      %p898 = scmp.ne.s32.totalorder %s889, %s890
      %p899 = scmp.eq.s32.totalorder %s108, 0
      %p900 = por %p898, %p899
      %p901 = scmp.ne.s32.totalorder %s889, %s890
      %p902 = scmp.eq.s32.totalorder %s109, 1
      %p903 = por %p901, %p902
      %p905 = scmp.ne.s32.totalorder %s890, %s904
      %p906 = scmp.eq.s32.totalorder %s109, 0
      %p907 = por %p905, %p906
      %s909 = sadd.s32 %s908, 1
      %p912 = scmp.eq.s32.totalorder %s103, 1
      %p913 = scmp.ne.s32.totalorder %s908, %s910
      %p914 = scmp.eq.s32.totalorder %s103, 0
      %p915 = por %p913, %p914
      %p916 = scmp.ne.s32.totalorder %s908, %s910
      %p917 = scmp.eq.s32.totalorder %s108, 1
      %p918 = por %p916, %p917
      %p919 = scmp.ne.s32.totalorder %s910, %s911
      %p920 = scmp.eq.s32.totalorder %s108, 0
      %p921 = por %p919, %p920
      %p922 = scmp.ne.s32.totalorder %s910, %s911
      %p923 = scmp.eq.s32.totalorder %s109, 1
      %p924 = por %p922, %p923
      %p926 = scmp.ne.s32.totalorder %s911, %s925
      %p927 = scmp.eq.s32.totalorder %s109, 0
      %p928 = por %p926, %p927
      %s929 = ssub.s32 %s103, %s110
      %p930 = scmp.eq.s32.totalorder %s929, 0
      %s932 = sadd.s32 %s931, 1
      %s933 = scalar_select %p930, %s931, %s932
      %p936 = pneg %p930
      %p937 = scmp.eq.s32.totalorder %s103, 1
      %p938 = por %p936, %p937
      %p939 = scmp.ne.s32.totalorder %s931, %s934
      %p940 = scmp.eq.s32.totalorder %s103, 0
      %p941 = por %p939, %p940
      %p942 = scmp.ne.s32.totalorder %s931, %s934
      %p943 = scmp.eq.s32.totalorder %s108, 1
      %p944 = por %p942, %p943
      %p945 = scmp.ne.s32.totalorder %s934, %s935
      %p946 = scmp.eq.s32.totalorder %s108, 0
      %p947 = por %p945, %p946
      %p948 = scmp.ne.s32.totalorder %s934, %s935
      %p949 = scmp.eq.s32.totalorder %s109, 1
      %p950 = por %p948, %p949
      %p952 = scmp.ne.s32.totalorder %s935, %s951
      %p953 = scmp.eq.s32.totalorder %s109, 0
      %p954 = por %p952, %p953
      %p955 = scmp.le.s32.totalorder 1, %s103
      %p956 = scmp.lt.s32.totalorder %s103, 3
      %p957 = pnand %p955, %p956
      %p958 = pneg %p957
      // Predicated region
      $region9: #{machine_translation_forward.1} parent=5 // pred_check
        _
      $region10: #{machine_translation_forward.1} parent=5 // pred_check_branch
        %960 = sbr.rel (%p957) target = $region12
      $region11: #{machine_translation_forward.1} parent=5 // pred_region
        %s961 = ssub.s32 %s103, 1
        // Predicated region
        $region13: #{machine_translation_forward.1} parent=11 // pred_check
          %p962 = pneg %p228
        $region14: #{machine_translation_forward.1} parent=11 // pred_check_branch
          %964 = sbr.rel (%p962) target = $region16
        $region15: #{machine_translation_forward.1} parent=11 // pred_region
          _
        $region16: #{machine_translation_forward.1} parent=11 // pred_fallthru
          _
        // Predicated region
        $region17: #{machine_translation_forward.1} parent=11 // pred_check
          %p965 = pneg %p249
        $region18: #{machine_translation_forward.1} parent=11 // pred_check_branch
          %967 = sbr.rel (%p965) target = $region20
        $region19: #{machine_translation_forward.1} parent=11 // pred_region
          _
        $region20: #{machine_translation_forward.1} parent=11 // pred_fallthru
          _
        // Predicated region
        $region21: #{machine_translation_forward.1} parent=11 // pred_check
          %p968 = pneg %p270
        $region22: #{machine_translation_forward.1} parent=11 // pred_check_branch
          %970 = sbr.rel (%p968) target = $region24
        $region23: #{machine_translation_forward.1} parent=11 // pred_region
          _
        $region24: #{machine_translation_forward.1} parent=11 // pred_fallthru
          _
        // Predicated region
        $region25: #{machine_translation_forward.1} parent=11 // pred_check
          %p971 = pneg %p291
        $region26: #{machine_translation_forward.1} parent=11 // pred_check_branch
          %973 = sbr.rel (%p971) target = $region28
        $region27: #{machine_translation_forward.1} parent=11 // pred_region
          _
        $region28: #{machine_translation_forward.1} parent=11 // pred_fallthru
          _
        // Predicated region
        $region29: #{machine_translation_forward.1} parent=11 // pred_check
          %p974 = pneg %p312
        $region30: #{machine_translation_forward.1} parent=11 // pred_check_branch
          %976 = sbr.rel (%p974) target = $region32
        $region31: #{machine_translation_forward.1} parent=11 // pred_region
          %978 = vsyncadd [#allocation6], 0
          %s979 = sshll.u32 %s17, 4
          %s980 = int_to_ptr.hbm [resolvable:$true] %s979
          %s981 = sshll.u32 [#allocation5], 4
          %s982 = int_to_ptr.vmem [resolvable:$true] %s981
          %987 = dma.hbm_to_vmem [thread:$0]  %s980, 32, %s982, [#allocation6], 16, 16, 1
        $region32: #{machine_translation_forward.1} parent=11 // pred_fallthru
          _
        // Predicated region
        $region33: #{machine_translation_forward.1} parent=11 // pred_check
          %p988 = pneg %p333
        $region34: #{machine_translation_forward.1} parent=11 // pred_check_branch
          %990 = sbr.rel (%p988) target = $region36
        $region35: #{machine_translation_forward.1} parent=11 // pred_region
          %992 = vsyncadd [#allocation6], 0
          %s993 = sshll.u32 %s19, 4
          %s994 = int_to_ptr.hbm [resolvable:$true] %s993
          %s995 = sshll.u32 [#allocation7], 4
          %s996 = int_to_ptr.vmem [resolvable:$true] %s995
          %1001 = dma.hbm_to_vmem [thread:$0]  %s994, 32, %s996, [#allocation6], 16, 16, 1
        $region36: #{machine_translation_forward.1} parent=11 // pred_fallthru
          _
        // Predicated region
        $region37: #{machine_translation_forward.1} parent=11 // pred_check
          %p1002 = pneg %p354
        $region38: #{machine_translation_forward.1} parent=11 // pred_check_branch
          %1004 = sbr.rel (%p1002) target = $region40
        $region39: #{machine_translation_forward.1} parent=11 // pred_region
          _
        $region40: #{machine_translation_forward.1} parent=11 // pred_fallthru
          _
        // Predicated region
        $region41: #{machine_translation_forward.1} parent=11 // pred_check
          %p1005 = pneg %p375
        $region42: #{machine_translation_forward.1} parent=11 // pred_check_branch
          %1007 = sbr.rel (%p1005) target = $region44
        $region43: #{machine_translation_forward.1} parent=11 // pred_region
          %1009 = vsyncadd [#allocation9], 0
          %s1010 = sshll.u32 %s23, 4
          %s1011 = int_to_ptr.hbm [resolvable:$true] %s1010
          %s1012 = sshll.u32 [#allocation8], 4
          %s1013 = int_to_ptr.vmem [resolvable:$true] %s1012
          %1018 = dma.hbm_to_vmem [thread:$0]  %s1011, 64, %s1013, [#allocation9], 32, 32, 2
        $region44: #{machine_translation_forward.1} parent=11 // pred_fallthru
          _
        // Predicated region
        $region45: #{machine_translation_forward.1} parent=11 // pred_check
          %p1019 = pneg %p396
        $region46: #{machine_translation_forward.1} parent=11 // pred_check_branch
          %1021 = sbr.rel (%p1019) target = $region48
        $region47: #{machine_translation_forward.1} parent=11 // pred_region
          _
        $region48: #{machine_translation_forward.1} parent=11 // pred_fallthru
          _
        // Predicated region
        $region49: #{machine_translation_forward.1} parent=11 // pred_check
          %p1022 = pneg %p417
        $region50: #{machine_translation_forward.1} parent=11 // pred_check_branch
          %1024 = sbr.rel (%p1022) target = $region52
        $region51: #{machine_translation_forward.1} parent=11 // pred_region
          %1026 = vsyncadd [#allocation9], 0
          %s1027 = sshll.u32 %s27, 4
          %s1028 = int_to_ptr.hbm [resolvable:$true] %s1027
          %s1029 = sshll.u32 [#allocation10], 4
          %s1030 = int_to_ptr.vmem [resolvable:$true] %s1029
          %1035 = dma.hbm_to_vmem [thread:$0]  %s1028, 32, %s1030, [#allocation9], 16, 16, 1
        $region52: #{machine_translation_forward.1} parent=11 // pred_fallthru
          _
        // Predicated region
        $region53: #{machine_translation_forward.1} parent=11 // pred_check
          %p1036 = pneg %p438
        $region54: #{machine_translation_forward.1} parent=11 // pred_check_branch
          %1038 = sbr.rel (%p1036) target = $region56
        $region55: #{machine_translation_forward.1} parent=11 // pred_region
          %1040 = vsyncadd [#allocation12], 0
          %s1041 = sshll.u32 %s29, 4
          %s1042 = int_to_ptr.hbm [resolvable:$true] %s1041
          %s1043 = sshll.u32 [#allocation11], 4
          %s1044 = int_to_ptr.vmem [resolvable:$true] %s1043
          %1049 = dma.hbm_to_vmem [thread:$0]  %s1042, 32, %s1044, [#allocation12], 16, 16, 1
        $region56: #{machine_translation_forward.1} parent=11 // pred_fallthru
          _
        // Predicated region
        $region57: #{machine_translation_forward.1} parent=11 // pred_check
          %p1050 = pneg %p459
        $region58: #{machine_translation_forward.1} parent=11 // pred_check_branch
          %1052 = sbr.rel (%p1050) target = $region60
        $region59: #{machine_translation_forward.1} parent=11 // pred_region
          %1054 = vsyncadd [#allocation12], 0
          %s1055 = sshll.u32 %s31, 4
          %s1056 = int_to_ptr.hbm [resolvable:$true] %s1055
          %s1057 = sshll.u32 [#allocation13], 4
          %s1058 = int_to_ptr.vmem [resolvable:$true] %s1057
          %1063 = dma.hbm_to_vmem [thread:$0]  %s1056, 32, %s1058, [#allocation12], 16, 16, 1
        $region60: #{machine_translation_forward.1} parent=11 // pred_fallthru
          _
        // Predicated region
        $region61: #{machine_translation_forward.1} parent=11 // pred_check
          %p1064 = pneg %p480
        $region62: #{machine_translation_forward.1} parent=11 // pred_check_branch
          %1066 = sbr.rel (%p1064) target = $region64
        $region63: #{machine_translation_forward.1} parent=11 // pred_region
          %1068 = vsyncadd [#allocation15], 0
          %s1069 = sshll.u32 %s33, 4
          %s1070 = int_to_ptr.hbm [resolvable:$true] %s1069
          %s1071 = sshll.u32 [#allocation14], 4
          %s1072 = int_to_ptr.vmem [resolvable:$true] %s1071
          %1077 = dma.hbm_to_vmem [thread:$0]  %s1070, 6144, %s1072, [#allocation15], 192, 192, 12
        $region64: #{machine_translation_forward.1} parent=11 // pred_fallthru
          _
        // Predicated region
        $region65: #{machine_translation_forward.1} parent=11 // pred_check
          %p1078 = pneg %p501
        $region66: #{machine_translation_forward.1} parent=11 // pred_check_branch
          %1080 = sbr.rel (%p1078) target = $region68
        $region67: #{machine_translation_forward.1} parent=11 // pred_region
          %1082 = vsyncadd [#allocation15], 0
          %s1083 = sshll.u32 %s35, 4
          %s1084 = int_to_ptr.hbm [resolvable:$true] %s1083
          %s1085 = sshll.u32 [#allocation16], 4
          %s1086 = int_to_ptr.vmem [resolvable:$true] %s1085
          %1091 = dma.hbm_to_vmem [thread:$0]  %s1084, 96, %s1086, [#allocation15], 48, 48, 3
        $region68: #{machine_translation_forward.1} parent=11 // pred_fallthru
          _
        // Predicated region
        $region69: #{machine_translation_forward.1} parent=11 // pred_check
          %p1092 = pneg %p522
        $region70: #{machine_translation_forward.1} parent=11 // pred_check_branch
          %1094 = sbr.rel (%p1092) target = $region72
        $region71: #{machine_translation_forward.1} parent=11 // pred_region
          %1096 = vsyncadd [#allocation18], 0
          %s1097 = sshll.u32 %s37, 4
          %s1098 = int_to_ptr.hbm [resolvable:$true] %s1097
          %s1099 = sshll.u32 [#allocation17], 4
          %s1100 = int_to_ptr.vmem [resolvable:$true] %s1099
          %1105 = dma.hbm_to_vmem [thread:$0]  %s1098, 2048, %s1100, [#allocation18], 64, 64, 4
        $region72: #{machine_translation_forward.1} parent=11 // pred_fallthru
          _
        // Predicated region
        $region73: #{machine_translation_forward.1} parent=11 // pred_check
          %p1106 = pneg %p543
        $region74: #{machine_translation_forward.1} parent=11 // pred_check_branch
          %1108 = sbr.rel (%p1106) target = $region76
        $region75: #{machine_translation_forward.1} parent=11 // pred_region
          %1110 = vsyncadd [#allocation18], 0
          %s1111 = sshll.u32 %s39, 4
          %s1112 = int_to_ptr.hbm [resolvable:$true] %s1111
          %s1113 = sshll.u32 [#allocation19], 4
          %s1114 = int_to_ptr.vmem [resolvable:$true] %s1113
          %1119 = dma.hbm_to_vmem [thread:$0]  %s1112, 32, %s1114, [#allocation18], 16, 16, 1
        $region76: #{machine_translation_forward.1} parent=11 // pred_fallthru
          _
        // Predicated region
        $region77: #{machine_translation_forward.1} parent=11 // pred_check
          %p1120 = pneg %p564
        $region78: #{machine_translation_forward.1} parent=11 // pred_check_branch
          %1122 = sbr.rel (%p1120) target = $region80
        $region79: #{machine_translation_forward.1} parent=11 // pred_region
          %1124 = vsyncadd [#allocation21], 0
          %s1125 = sshll.u32 %s41, 4
          %s1126 = int_to_ptr.hbm [resolvable:$true] %s1125
          %s1127 = sshll.u32 [#allocation20], 4
          %s1128 = int_to_ptr.vmem [resolvable:$true] %s1127
          %1133 = dma.hbm_to_vmem [thread:$0]  %s1126, 32, %s1128, [#allocation21], 16, 16, 1
        $region80: #{machine_translation_forward.1} parent=11 // pred_fallthru
          _
        // Predicated region
        $region81: #{machine_translation_forward.1} parent=11 // pred_check
          %p1134 = pneg %p585
        $region82: #{machine_translation_forward.1} parent=11 // pred_check_branch
          %1136 = sbr.rel (%p1134) target = $region84
        $region83: #{machine_translation_forward.1} parent=11 // pred_region
          %1138 = vsyncadd [#allocation21], 0
          %s1139 = sshll.u32 %s43, 4
          %s1140 = int_to_ptr.hbm [resolvable:$true] %s1139
          %s1141 = sshll.u32 [#allocation22], 4
          %s1142 = int_to_ptr.vmem [resolvable:$true] %s1141
          %1147 = dma.hbm_to_vmem [thread:$0]  %s1140, 32, %s1142, [#allocation21], 16, 16, 1
        $region84: #{machine_translation_forward.1} parent=11 // pred_fallthru
          _
        // Predicated region
        $region85: #{machine_translation_forward.1} parent=11 // pred_check
          %p1148 = pneg %p606
        $region86: #{machine_translation_forward.1} parent=11 // pred_check_branch
          %1150 = sbr.rel (%p1148) target = $region88
        $region87: #{machine_translation_forward.1} parent=11 // pred_region
          %1152 = vsyncadd [#allocation24], 0
          %s1153 = sshll.u32 %s45, 4
          %s1154 = int_to_ptr.hbm [resolvable:$true] %s1153
          %s1155 = sshll.u32 [#allocation23], 4
          %s1156 = int_to_ptr.vmem [resolvable:$true] %s1155
          %1161 = dma.hbm_to_vmem [thread:$0]  %s1154, 4096, %s1156, [#allocation24], 128, 128, 8
        $region88: #{machine_translation_forward.1} parent=11 // pred_fallthru
          _
        // Predicated region
        $region89: #{machine_translation_forward.1} parent=11 // pred_check
          %p1162 = pneg %p627
        $region90: #{machine_translation_forward.1} parent=11 // pred_check_branch
          %1164 = sbr.rel (%p1162) target = $region92
        $region91: #{machine_translation_forward.1} parent=11 // pred_region
          %1166 = vsyncadd [#allocation24], 0
          %s1167 = sshll.u32 %s47, 4
          %s1168 = int_to_ptr.hbm [resolvable:$true] %s1167
          %s1169 = sshll.u32 [#allocation25], 4
          %s1170 = int_to_ptr.vmem [resolvable:$true] %s1169
          %1175 = dma.hbm_to_vmem [thread:$0]  %s1168, 64, %s1170, [#allocation24], 32, 32, 2
        $region92: #{machine_translation_forward.1} parent=11 // pred_fallthru
          _
        // Predicated region
        $region93: #{machine_translation_forward.1} parent=11 // pred_check
          %p1176 = pneg %p648
        $region94: #{machine_translation_forward.1} parent=11 // pred_check_branch
          %1178 = sbr.rel (%p1176) target = $region96
        $region95: #{machine_translation_forward.1} parent=11 // pred_region
          %1180 = vsyncadd [#allocation27], 0
          %s1181 = sshll.u32 %s49, 4
          %s1182 = int_to_ptr.hbm [resolvable:$true] %s1181
          %s1183 = sshll.u32 [#allocation26], 4
          %s1184 = int_to_ptr.vmem [resolvable:$true] %s1183
          %1189 = dma.hbm_to_vmem [thread:$0]  %s1182, 2048, %s1184, [#allocation27], 64, 64, 4
        $region96: #{machine_translation_forward.1} parent=11 // pred_fallthru
          _
        // Predicated region
        $region97: #{machine_translation_forward.1} parent=11 // pred_check
          %p1190 = pneg %p669
        $region98: #{machine_translation_forward.1} parent=11 // pred_check_branch
          %1192 = sbr.rel (%p1190) target = $region100
        $region99: #{machine_translation_forward.1} parent=11 // pred_region
          %1194 = vsyncadd [#allocation27], 0
          %s1195 = sshll.u32 %s51, 4
          %s1196 = int_to_ptr.hbm [resolvable:$true] %s1195
          %s1197 = sshll.u32 [#allocation28], 4
          %s1198 = int_to_ptr.vmem [resolvable:$true] %s1197
          %1203 = dma.hbm_to_vmem [thread:$0]  %s1196, 32, %s1198, [#allocation27], 16, 16, 1
        $region100: #{machine_translation_forward.1} parent=11 // pred_fallthru
          _
        // Predicated region
        $region101: #{machine_translation_forward.1} parent=11 // pred_check
          %p1204 = pneg %p690
        $region102: #{machine_translation_forward.1} parent=11 // pred_check_branch
          %1206 = sbr.rel (%p1204) target = $region104
        $region103: #{machine_translation_forward.1} parent=11 // pred_region
          %1208 = vsyncadd [#allocation30], 0
          %s1209 = sshll.u32 %s53, 4
          %s1210 = int_to_ptr.hbm [resolvable:$true] %s1209
          %s1211 = sshll.u32 [#allocation29], 4
          %s1212 = int_to_ptr.vmem [resolvable:$true] %s1211
          %1217 = dma.hbm_to_vmem [thread:$0]  %s1210, 2048, %s1212, [#allocation30], 64, 64, 4
        $region104: #{machine_translation_forward.1} parent=11 // pred_fallthru
          _
        // Predicated region
        $region105: #{machine_translation_forward.1} parent=11 // pred_check
          %p1218 = pneg %p711
        $region106: #{machine_translation_forward.1} parent=11 // pred_check_branch
          %1220 = sbr.rel (%p1218) target = $region108
        $region107: #{machine_translation_forward.1} parent=11 // pred_region
          %1222 = vsyncadd [#allocation30], 0
          %s1223 = sshll.u32 %s55, 4
          %s1224 = int_to_ptr.hbm [resolvable:$true] %s1223
          %s1225 = sshll.u32 [#allocation31], 4
          %s1226 = int_to_ptr.vmem [resolvable:$true] %s1225
          %1231 = dma.hbm_to_vmem [thread:$0]  %s1224, 32, %s1226, [#allocation30], 16, 16, 1
        $region108: #{machine_translation_forward.1} parent=11 // pred_fallthru
          _
        // Predicated region
        $region109: #{machine_translation_forward.1} parent=11 // pred_check
          %p1232 = pneg %p732
        $region110: #{machine_translation_forward.1} parent=11 // pred_check_branch
          %1234 = sbr.rel (%p1232) target = $region112
        $region111: #{machine_translation_forward.1} parent=11 // pred_region
          %1236 = vsyncadd [#allocation33], 0
          %s1237 = sshll.u32 %s57, 4
          %s1238 = int_to_ptr.hbm [resolvable:$true] %s1237
          %s1239 = sshll.u32 [#allocation32], 4
          %s1240 = int_to_ptr.vmem [resolvable:$true] %s1239
          %1245 = dma.hbm_to_vmem [thread:$0]  %s1238, 32, %s1240, [#allocation33], 16, 16, 1
        $region112: #{machine_translation_forward.1} parent=11 // pred_fallthru
          _
        // Predicated region
        $region113: #{machine_translation_forward.1} parent=11 // pred_check
          %p1246 = pneg %p753
        $region114: #{machine_translation_forward.1} parent=11 // pred_check_branch
          %1248 = sbr.rel (%p1246) target = $region116
        $region115: #{machine_translation_forward.1} parent=11 // pred_region
          %1250 = vsyncadd [#allocation33], 0
          %s1251 = sshll.u32 %s59, 4
          %s1252 = int_to_ptr.hbm [resolvable:$true] %s1251
          %s1253 = sshll.u32 [#allocation34], 4
          %s1254 = int_to_ptr.vmem [resolvable:$true] %s1253
          %1259 = dma.hbm_to_vmem [thread:$0]  %s1252, 32, %s1254, [#allocation33], 16, 16, 1
        $region116: #{machine_translation_forward.1} parent=11 // pred_fallthru
          _
        // Predicated region
        $region117: #{machine_translation_forward.1} parent=11 // pred_check
          %p1260 = pneg %p774
        $region118: #{machine_translation_forward.1} parent=11 // pred_check_branch
          %1262 = sbr.rel (%p1260) target = $region120
        $region119: #{machine_translation_forward.1} parent=11 // pred_region
          %1264 = vsyncadd [#allocation36], 0
          %s1265 = sshll.u32 %s61, 4
          %s1266 = int_to_ptr.hbm [resolvable:$true] %s1265
          %s1267 = sshll.u32 [#allocation35], 4
          %s1268 = int_to_ptr.vmem [resolvable:$true] %s1267
          %1273 = dma.hbm_to_vmem [thread:$0]  %s1266, 4096, %s1268, [#allocation36], 128, 128, 8
        $region120: #{machine_translation_forward.1} parent=11 // pred_fallthru
          _
        // Predicated region
        $region121: #{machine_translation_forward.1} parent=11 // pred_check
          %p1274 = pneg %p795
        $region122: #{machine_translation_forward.1} parent=11 // pred_check_branch
          %1276 = sbr.rel (%p1274) target = $region124
        $region123: #{machine_translation_forward.1} parent=11 // pred_region
          %1278 = vsyncadd [#allocation36], 0
          %s1279 = sshll.u32 %s63, 4
          %s1280 = int_to_ptr.hbm [resolvable:$true] %s1279
          %s1281 = sshll.u32 [#allocation37], 4
          %s1282 = int_to_ptr.vmem [resolvable:$true] %s1281
          %1287 = dma.hbm_to_vmem [thread:$0]  %s1280, 64, %s1282, [#allocation36], 32, 32, 2
        $region124: #{machine_translation_forward.1} parent=11 // pred_fallthru
          _
        // Predicated region
        $region125: #{machine_translation_forward.1} parent=11 // pred_check
          %p1288 = pneg %p816
        $region126: #{machine_translation_forward.1} parent=11 // pred_check_branch
          %1290 = sbr.rel (%p1288) target = $region128
        $region127: #{machine_translation_forward.1} parent=11 // pred_region
          %1292 = vsyncadd [#allocation39], 0
          %s1293 = sshll.u32 %s65, 4
          %s1294 = int_to_ptr.hbm [resolvable:$true] %s1293
          %s1295 = sshll.u32 [#allocation38], 4
          %s1296 = int_to_ptr.vmem [resolvable:$true] %s1295
          %1301 = dma.hbm_to_vmem [thread:$0]  %s1294, 4096, %s1296, [#allocation39], 64, 64, 4
        $region128: #{machine_translation_forward.1} parent=11 // pred_fallthru
          _
        // Predicated region
        $region129: #{machine_translation_forward.1} parent=11 // pred_check
          %p1302 = pneg %p837
        $region130: #{machine_translation_forward.1} parent=11 // pred_check_branch
          %1304 = sbr.rel (%p1302) target = $region132
        $region131: #{machine_translation_forward.1} parent=11 // pred_region
          %1306 = vsyncadd [#allocation39], 0
          %s1307 = sshll.u32 %s67, 4
          %s1308 = int_to_ptr.hbm [resolvable:$true] %s1307
          %s1309 = sshll.u32 [#allocation40], 4
          %s1310 = int_to_ptr.vmem [resolvable:$true] %s1309
          %1315 = dma.hbm_to_vmem [thread:$0]  %s1308, 32, %s1310, [#allocation39], 16, 16, 1
        $region132: #{machine_translation_forward.1} parent=11 // pred_fallthru
          _
        // Predicated region
        $region133: #{machine_translation_forward.1} parent=11 // pred_check
          %p1316 = pneg %p858
        $region134: #{machine_translation_forward.1} parent=11 // pred_check_branch
          %1318 = sbr.rel (%p1316) target = $region136
        $region135: #{machine_translation_forward.1} parent=11 // pred_region
          %1320 = vsyncadd [#allocation42], 0
          %s1321 = sshll.u32 %s69, 4
          %s1322 = int_to_ptr.hbm [resolvable:$true] %s1321
          %s1323 = sshll.u32 [#allocation41], 4
          %s1324 = int_to_ptr.vmem [resolvable:$true] %s1323
          %1329 = dma.hbm_to_vmem [thread:$0]  %s1322, 32, %s1324, [#allocation42], 16, 16, 1
        $region136: #{machine_translation_forward.1} parent=11 // pred_fallthru
          _
        // Predicated region
        $region137: #{machine_translation_forward.1} parent=11 // pred_check
          %p1330 = pneg %p879
        $region138: #{machine_translation_forward.1} parent=11 // pred_check_branch
          %1332 = sbr.rel (%p1330) target = $region140
        $region139: #{machine_translation_forward.1} parent=11 // pred_region
          %1334 = vsyncadd [#allocation42], 0
          %s1335 = sshll.u32 %s71, 4
          %s1336 = int_to_ptr.hbm [resolvable:$true] %s1335
          %s1337 = sshll.u32 [#allocation43], 4
          %s1338 = int_to_ptr.vmem [resolvable:$true] %s1337
          %1343 = dma.hbm_to_vmem [thread:$0]  %s1336, 32, %s1338, [#allocation42], 16, 16, 1
        $region140: #{machine_translation_forward.1} parent=11 // pred_fallthru
          _
        // Predicated region
        $region141: #{machine_translation_forward.1} parent=11 // pred_check
          %p1344 = pneg %p900
        $region142: #{machine_translation_forward.1} parent=11 // pred_check_branch
          %1346 = sbr.rel (%p1344) target = $region144
        $region143: #{machine_translation_forward.1} parent=11 // pred_region
          _
        $region144: #{machine_translation_forward.1} parent=11 // pred_fallthru
          _
        // Predicated region
        $region145: #{machine_translation_forward.1} parent=11 // pred_check
          %p1347 = pneg %p921
        $region146: #{machine_translation_forward.1} parent=11 // pred_check_branch
          %1349 = sbr.rel (%p1347) target = $region148
        $region147: #{machine_translation_forward.1} parent=11 // pred_region
          %1351 = vsyncadd [#allocation45], 0
          %s1353 = sshll.u32 %s75, 4
          %s1354 = int_to_ptr.hbm [resolvable:$true] %s1353
          %s1355 = sshll.u32 [#allocation44], 4
          %s1356 = int_to_ptr.vmem [resolvable:$true] %s1355
          %1358 = dma.hbm_to_vmem [thread:$0]  %s1354, 16, %s1356, [#allocation45]
        $region148: #{machine_translation_forward.1} parent=11 // pred_fallthru
          _
      $region12: #{machine_translation_forward.1} parent=5 // pred_fallthru
        _
      %p1359 = scmp.lt.s32.totalorder %s103, 2
      // Predicated region
      $region149: #{machine_translation_forward.1} parent=5 // pred_check
        %p1360 = pneg %p1359
      $region150: #{machine_translation_forward.1} parent=5 // pred_check_branch
        %1362 = sbr.rel (%p1360) target = $region152
      $region151: #{machine_translation_forward.1} parent=5 // pred_region
        // Predicated region
        $region153: #{machine_translation_forward.1} parent=151 // pred_check
          %p1363 = pneg %p123
        $region154: #{machine_translation_forward.1} parent=151 // pred_check_branch
          %1365 = sbr.rel (%p1363) target = $region156
        $region155: #{machine_translation_forward.1} parent=151 // pred_region
          %p1366 = scmp.lt.s32.totalorder %s103, 1
          %s1367 = scalar_select %p1366, %s103, 1
          %s1368 = smul.addr %s1367, 2
          %s1369 = smul.addr %s1368, 8
          %s1370 = scalar_lea.vmem %s1, %s1369
        $region156: #{machine_translation_forward.1} parent=151 // pred_fallthru
          _
        // Predicated region
        $region157: #{machine_translation_forward.1} parent=151 // pred_check
          %p1371 = pneg %p149
        $region158: #{machine_translation_forward.1} parent=151 // pred_check_branch
          %1373 = sbr.rel (%p1371) target = $region160
        $region159: #{machine_translation_forward.1} parent=151 // pred_region
          %p1374 = scmp.lt.s32.totalorder %s103, 1
          %s1375 = scalar_select %p1374, %s103, 1
          %s1376 = smul.addr %s1375, 2
          %s1377 = smul.addr %s1376, 8
          %s1378 = scalar_lea.vmem %s3, %s1377
        $region160: #{machine_translation_forward.1} parent=151 // pred_fallthru
          _
        // Predicated region
        $region161: #{machine_translation_forward.1} parent=151 // pred_check
          %p1379 = pneg %p175
        $region162: #{machine_translation_forward.1} parent=151 // pred_check_branch
          %1381 = sbr.rel (%p1379) target = $region164
        $region163: #{machine_translation_forward.1} parent=151 // pred_region
          %p1382 = scmp.lt.s32.totalorder %s103, 1
          %s1383 = scalar_select %p1382, %s103, 1
          %s1384 = smul.addr %s1383, 2
          %s1385 = smul.addr %s1384, 8
          %s1386 = scalar_lea.vmem %s5, %s1385
        $region164: #{machine_translation_forward.1} parent=151 // pred_fallthru
          _
        // Predicated region
        $region165: #{machine_translation_forward.1} parent=151 // pred_check
          %p1387 = pneg %p201
        $region166: #{machine_translation_forward.1} parent=151 // pred_check_branch
          %1389 = sbr.rel (%p1387) target = $region168
        $region167: #{machine_translation_forward.1} parent=151 // pred_region
          %s1390 = sand.u32 %s191, 1
          %s1391 = scalar_lea.sflag [#allocation3], %s1390
          %s1392 = sand.u32 %s191, 1
          %s1393 = smul.addr %s1392, 16
          %s1394 = scalar_lea.vmem [#allocation2], %s1393
          %1396 = vsyncadd %s1391, 0
          %s1397 = smul.addr %s103, 2
          %s1398 = smul.addr %s1397, 8
          %s1399 = scalar_lea.hbm %s7, %s1398
          %s1400 = sshll.u32 %s1399, 4
          %s1401 = int_to_ptr.hbm [resolvable:$true] %s1400
          %s1402 = sshll.u32 %s1394, 4
          %s1403 = int_to_ptr.vmem [resolvable:$true] %s1402
          %1408 = dma.hbm_to_vmem [thread:$0]  %s1401, 256, %s1403, %s1391, 128, 128, 8
        $region168: #{machine_translation_forward.1} parent=151 // pred_fallthru
          _
      $region152: #{machine_translation_forward.1} parent=5 // pred_fallthru
        _
      %p1409 = scmp.le.s32.totalorder 1, %s103
      %p1410 = scmp.lt.s32.totalorder %s103, 3
      %p1411 = pnand %p1409, %p1410
      %p1412 = pneg %p1411
      // Predicated region
      $region169: #{machine_translation_forward.1} parent=5 // pred_check
        _
      $region170: #{machine_translation_forward.1} parent=5 // pred_check_branch
        %1414 = sbr.rel (%p1411) target = $region172
      $region171: #{machine_translation_forward.1} parent=5 // pred_region
        %s1415 = ssub.s32 %s103, 1
        %s1416 = sand.u32 %s194, 1
        %s1417 = scalar_lea.sflag [#allocation3], %s1416
        %s1418 = sand.u32 %s194, 1
        %s1419 = smul.addr %s1418, 16
        %s1420 = scalar_lea.vmem [#allocation2], %s1419
        // Predicated region
        $region173: #{machine_translation_forward.1} parent=171 // pred_check
          %p1421 = pneg %p207
        $region174: #{machine_translation_forward.1} parent=171 // pred_check_branch
          %1423 = sbr.rel (%p1421) target = $region176
        $region175: #{machine_translation_forward.1} parent=171 // pred_region
          %1425 = dma.done %s1417, 256
        $region176: #{machine_translation_forward.1} parent=171 // pred_fallthru
          _
        // Predicated region
        $region177: #{machine_translation_forward.1} parent=171 // pred_check
          %p1426 = pneg %p312
        $region178: #{machine_translation_forward.1} parent=171 // pred_check_branch
          %1428 = sbr.rel (%p1426) target = $region180
        $region179: #{machine_translation_forward.1} parent=171 // pred_region
          %1430 = dma.done [#allocation6], 32
        $region180: #{machine_translation_forward.1} parent=171 // pred_fallthru
          _
        // Predicated region
        $region181: #{machine_translation_forward.1} parent=171 // pred_check
          %p1431 = pneg %p333
        $region182: #{machine_translation_forward.1} parent=171 // pred_check_branch
          %1433 = sbr.rel (%p1431) target = $region184
        $region183: #{machine_translation_forward.1} parent=171 // pred_region
          %1435 = dma.done [#allocation6], 32
        $region184: #{machine_translation_forward.1} parent=171 // pred_fallthru
          _
        // Predicated region
        $region185: #{machine_translation_forward.1} parent=171 // pred_check
          %p1436 = pneg %p375
        $region186: #{machine_translation_forward.1} parent=171 // pred_check_branch
          %1438 = sbr.rel (%p1436) target = $region188
        $region187: #{machine_translation_forward.1} parent=171 // pred_region
          %1440 = dma.done [#allocation9], 64
        $region188: #{machine_translation_forward.1} parent=171 // pred_fallthru
          _
        // Predicated region
        $region189: #{machine_translation_forward.1} parent=171 // pred_check
          %p1441 = pneg %p417
        $region190: #{machine_translation_forward.1} parent=171 // pred_check_branch
          %1443 = sbr.rel (%p1441) target = $region192
        $region191: #{machine_translation_forward.1} parent=171 // pred_region
          %1445 = dma.done [#allocation9], 32
        $region192: #{machine_translation_forward.1} parent=171 // pred_fallthru
          _
        // Predicated region
        $region193: #{machine_translation_forward.1} parent=171 // pred_check
          %p1446 = pneg %p438
        $region194: #{machine_translation_forward.1} parent=171 // pred_check_branch
          %1448 = sbr.rel (%p1446) target = $region196
        $region195: #{machine_translation_forward.1} parent=171 // pred_region
          %1450 = dma.done [#allocation12], 32
        $region196: #{machine_translation_forward.1} parent=171 // pred_fallthru
          _
        // Predicated region
        $region197: #{machine_translation_forward.1} parent=171 // pred_check
          %p1451 = pneg %p459
        $region198: #{machine_translation_forward.1} parent=171 // pred_check_branch
          %1453 = sbr.rel (%p1451) target = $region200
        $region199: #{machine_translation_forward.1} parent=171 // pred_region
          %1455 = dma.done [#allocation12], 32
        $region200: #{machine_translation_forward.1} parent=171 // pred_fallthru
          _
        // Predicated region
        $region201: #{machine_translation_forward.1} parent=171 // pred_check
          %p1456 = pneg %p480
        $region202: #{machine_translation_forward.1} parent=171 // pred_check_branch
          %1458 = sbr.rel (%p1456) target = $region204
        $region203: #{machine_translation_forward.1} parent=171 // pred_region
          %1460 = dma.done [#allocation15], 6144
        $region204: #{machine_translation_forward.1} parent=171 // pred_fallthru
          _
        // Predicated region
        $region205: #{machine_translation_forward.1} parent=171 // pred_check
          %p1461 = pneg %p501
        $region206: #{machine_translation_forward.1} parent=171 // pred_check_branch
          %1463 = sbr.rel (%p1461) target = $region208
        $region207: #{machine_translation_forward.1} parent=171 // pred_region
          %1465 = dma.done [#allocation15], 96
        $region208: #{machine_translation_forward.1} parent=171 // pred_fallthru
          _
        // Predicated region
        $region209: #{machine_translation_forward.1} parent=171 // pred_check
          %p1466 = pneg %p522
        $region210: #{machine_translation_forward.1} parent=171 // pred_check_branch
          %1468 = sbr.rel (%p1466) target = $region212
        $region211: #{machine_translation_forward.1} parent=171 // pred_region
          %1470 = dma.done [#allocation18], 2048
        $region212: #{machine_translation_forward.1} parent=171 // pred_fallthru
          _
        // Predicated region
        $region213: #{machine_translation_forward.1} parent=171 // pred_check
          %p1471 = pneg %p543
        $region214: #{machine_translation_forward.1} parent=171 // pred_check_branch
          %1473 = sbr.rel (%p1471) target = $region216
        $region215: #{machine_translation_forward.1} parent=171 // pred_region
          %1475 = dma.done [#allocation18], 32
        $region216: #{machine_translation_forward.1} parent=171 // pred_fallthru
          _
        // Predicated region
        $region217: #{machine_translation_forward.1} parent=171 // pred_check
          %p1476 = pneg %p564
        $region218: #{machine_translation_forward.1} parent=171 // pred_check_branch
          %1478 = sbr.rel (%p1476) target = $region220
        $region219: #{machine_translation_forward.1} parent=171 // pred_region
          %1480 = dma.done [#allocation21], 32
        $region220: #{machine_translation_forward.1} parent=171 // pred_fallthru
          _
        // Predicated region
        $region221: #{machine_translation_forward.1} parent=171 // pred_check
          %p1481 = pneg %p585
        $region222: #{machine_translation_forward.1} parent=171 // pred_check_branch
          %1483 = sbr.rel (%p1481) target = $region224
        $region223: #{machine_translation_forward.1} parent=171 // pred_region
          %1485 = dma.done [#allocation21], 32
        $region224: #{machine_translation_forward.1} parent=171 // pred_fallthru
          _
        // Predicated region
        $region225: #{machine_translation_forward.1} parent=171 // pred_check
          %p1486 = pneg %p606
        $region226: #{machine_translation_forward.1} parent=171 // pred_check_branch
          %1488 = sbr.rel (%p1486) target = $region228
        $region227: #{machine_translation_forward.1} parent=171 // pred_region
          %1490 = dma.done [#allocation24], 4096
        $region228: #{machine_translation_forward.1} parent=171 // pred_fallthru
          _
        // Predicated region
        $region229: #{machine_translation_forward.1} parent=171 // pred_check
          %p1491 = pneg %p627
        $region230: #{machine_translation_forward.1} parent=171 // pred_check_branch
          %1493 = sbr.rel (%p1491) target = $region232
        $region231: #{machine_translation_forward.1} parent=171 // pred_region
          %1495 = dma.done [#allocation24], 64
        $region232: #{machine_translation_forward.1} parent=171 // pred_fallthru
          _
        // Predicated region
        $region233: #{machine_translation_forward.1} parent=171 // pred_check
          %p1496 = pneg %p648
        $region234: #{machine_translation_forward.1} parent=171 // pred_check_branch
          %1498 = sbr.rel (%p1496) target = $region236
        $region235: #{machine_translation_forward.1} parent=171 // pred_region
          %1500 = dma.done [#allocation27], 2048
        $region236: #{machine_translation_forward.1} parent=171 // pred_fallthru
          _
        // Predicated region
        $region237: #{machine_translation_forward.1} parent=171 // pred_check
          %p1501 = pneg %p669
        $region238: #{machine_translation_forward.1} parent=171 // pred_check_branch
          %1503 = sbr.rel (%p1501) target = $region240
        $region239: #{machine_translation_forward.1} parent=171 // pred_region
          %1505 = dma.done [#allocation27], 32
        $region240: #{machine_translation_forward.1} parent=171 // pred_fallthru
          _
        // Predicated region
        $region241: #{machine_translation_forward.1} parent=171 // pred_check
          %p1506 = pneg %p690
        $region242: #{machine_translation_forward.1} parent=171 // pred_check_branch
          %1508 = sbr.rel (%p1506) target = $region244
        $region243: #{machine_translation_forward.1} parent=171 // pred_region
          %1510 = dma.done [#allocation30], 2048
        $region244: #{machine_translation_forward.1} parent=171 // pred_fallthru
          _
        // Predicated region
        $region245: #{machine_translation_forward.1} parent=171 // pred_check
          %p1511 = pneg %p711
        $region246: #{machine_translation_forward.1} parent=171 // pred_check_branch
          %1513 = sbr.rel (%p1511) target = $region248
        $region247: #{machine_translation_forward.1} parent=171 // pred_region
          %1515 = dma.done [#allocation30], 32
        $region248: #{machine_translation_forward.1} parent=171 // pred_fallthru
          _
        // Predicated region
        $region249: #{machine_translation_forward.1} parent=171 // pred_check
          %p1516 = pneg %p732
        $region250: #{machine_translation_forward.1} parent=171 // pred_check_branch
          %1518 = sbr.rel (%p1516) target = $region252
        $region251: #{machine_translation_forward.1} parent=171 // pred_region
          %1520 = dma.done [#allocation33], 32
        $region252: #{machine_translation_forward.1} parent=171 // pred_fallthru
          _
        // Predicated region
        $region253: #{machine_translation_forward.1} parent=171 // pred_check
          %p1521 = pneg %p753
        $region254: #{machine_translation_forward.1} parent=171 // pred_check_branch
          %1523 = sbr.rel (%p1521) target = $region256
        $region255: #{machine_translation_forward.1} parent=171 // pred_region
          %1525 = dma.done [#allocation33], 32
        $region256: #{machine_translation_forward.1} parent=171 // pred_fallthru
          _
        // Predicated region
        $region257: #{machine_translation_forward.1} parent=171 // pred_check
          %p1526 = pneg %p774
        $region258: #{machine_translation_forward.1} parent=171 // pred_check_branch
          %1528 = sbr.rel (%p1526) target = $region260
        $region259: #{machine_translation_forward.1} parent=171 // pred_region
          %1530 = dma.done [#allocation36], 4096
        $region260: #{machine_translation_forward.1} parent=171 // pred_fallthru
          _
        // Predicated region
        $region261: #{machine_translation_forward.1} parent=171 // pred_check
          %p1531 = pneg %p795
        $region262: #{machine_translation_forward.1} parent=171 // pred_check_branch
          %1533 = sbr.rel (%p1531) target = $region264
        $region263: #{machine_translation_forward.1} parent=171 // pred_region
          %1535 = dma.done [#allocation36], 64
        $region264: #{machine_translation_forward.1} parent=171 // pred_fallthru
          _
        // Predicated region
        $region265: #{machine_translation_forward.1} parent=171 // pred_check
          %p1536 = pneg %p816
        $region266: #{machine_translation_forward.1} parent=171 // pred_check_branch
          %1538 = sbr.rel (%p1536) target = $region268
        $region267: #{machine_translation_forward.1} parent=171 // pred_region
          %1540 = dma.done [#allocation39], 4096
        $region268: #{machine_translation_forward.1} parent=171 // pred_fallthru
          _
        // Predicated region
        $region269: #{machine_translation_forward.1} parent=171 // pred_check
          %p1541 = pneg %p837
        $region270: #{machine_translation_forward.1} parent=171 // pred_check_branch
          %1543 = sbr.rel (%p1541) target = $region272
        $region271: #{machine_translation_forward.1} parent=171 // pred_region
          %1545 = dma.done [#allocation39], 32
        $region272: #{machine_translation_forward.1} parent=171 // pred_fallthru
          _
        // Predicated region
        $region273: #{machine_translation_forward.1} parent=171 // pred_check
          %p1546 = pneg %p858
        $region274: #{machine_translation_forward.1} parent=171 // pred_check_branch
          %1548 = sbr.rel (%p1546) target = $region276
        $region275: #{machine_translation_forward.1} parent=171 // pred_region
          %1550 = dma.done [#allocation42], 32
        $region276: #{machine_translation_forward.1} parent=171 // pred_fallthru
          _
        // Predicated region
        $region277: #{machine_translation_forward.1} parent=171 // pred_check
          %p1551 = pneg %p879
        $region278: #{machine_translation_forward.1} parent=171 // pred_check_branch
          %1553 = sbr.rel (%p1551) target = $region280
        $region279: #{machine_translation_forward.1} parent=171 // pred_region
          %1555 = dma.done [#allocation42], 32
        $region280: #{machine_translation_forward.1} parent=171 // pred_fallthru
          _
        // Predicated region
        $region281: #{machine_translation_forward.1} parent=171 // pred_check
          %p1556 = pneg %p921
        $region282: #{machine_translation_forward.1} parent=171 // pred_check_branch
          %1558 = sbr.rel (%p1556) target = $region284
        $region283: #{machine_translation_forward.1} parent=171 // pred_region
          %1560 = dma.done [#allocation45], 16
        $region284: #{machine_translation_forward.1} parent=171 // pred_fallthru
          _
        %p1561 = scmp.lt.s32.totalorder %s108, 1
        %s1562 = scalar_select %p1561, %s108, 1
        %s1563 = smul.addr %s1562, 2
        %s1564 = smul.addr %s1563, 8
        %s1565 = scalar_lea.vmem %s1, %s1564
        %p1566 = pneg %p129
        %p1567 = pneg %p126
        %p1568 = scmp.lt.s32.totalorder %s108, 1
        %s1569 = scalar_select %p1568, %s108, 1
        %s1570 = smul.addr %s1569, 2
        %s1571 = smul.addr %s1570, 8
        %s1572 = scalar_lea.vmem %s3, %s1571
        %p1573 = pneg %p155
        %p1574 = pneg %p152
        %p1575 = scmp.lt.s32.totalorder %s108, 1
        %s1576 = scalar_select %p1575, %s108, 1
        %s1577 = smul.addr %s1576, 2
        %s1578 = smul.addr %s1577, 8
        %s1579 = scalar_lea.vmem %s5, %s1578
        %p1580 = pneg %p181
        %p1581 = pneg %p178
        %s1582 = sand.u32 %s194, 1
        %s1583 = scalar_lea.sflag [#allocation3], %s1582
        %s1584 = sand.u32 %s194, 1
        %s1585 = smul.addr %s1584, 16
        %s1586 = scalar_lea.vmem [#allocation2], %s1585
        %p1587 = pneg %p207
        %p1588 = pneg %p204
        %p1589 = pneg %p228
        %p1590 = pneg %p225
        %p1591 = pneg %p249
        %p1592 = pneg %p246
        %p1593 = pneg %p270
        %p1594 = pneg %p267
        %p1595 = pneg %p291
        %p1596 = pneg %p288
        %p1597 = pneg %p312
        %p1598 = pneg %p309
        %p1599 = pneg %p333
        %p1600 = pneg %p330
        %p1601 = pneg %p354
        %p1602 = pneg %p351
        %p1603 = pneg %p375
        %p1604 = pneg %p372
        %p1605 = pneg %p396
        %p1606 = pneg %p393
        %p1607 = pneg %p417
        %p1608 = pneg %p414
        %p1609 = pneg %p438
        %p1610 = pneg %p435
        %p1611 = pneg %p459
        %p1612 = pneg %p456
        %p1613 = pneg %p480
        %p1614 = pneg %p477
        %p1615 = pneg %p501
        %p1616 = pneg %p498
        %p1617 = pneg %p522
        %p1618 = pneg %p519
        %p1619 = pneg %p543
        %p1620 = pneg %p540
        %p1621 = pneg %p564
        %p1622 = pneg %p561
        %p1623 = pneg %p585
        %p1624 = pneg %p582
        %p1625 = pneg %p606
        %p1626 = pneg %p603
        %p1627 = pneg %p627
        %p1628 = pneg %p624
        %p1629 = pneg %p648
        %p1630 = pneg %p645
        %p1631 = pneg %p669
        %p1632 = pneg %p666
        %p1633 = pneg %p690
        %p1634 = pneg %p687
        %p1635 = pneg %p711
        %p1636 = pneg %p708
        %p1637 = pneg %p732
        %p1638 = pneg %p729
        %p1639 = pneg %p753
        %p1640 = pneg %p750
        %p1641 = pneg %p774
        %p1642 = pneg %p771
        %p1643 = pneg %p795
        %p1644 = pneg %p792
        %p1645 = pneg %p816
        %p1646 = pneg %p813
        %p1647 = pneg %p837
        %p1648 = pneg %p834
        %p1649 = pneg %p858
        %p1650 = pneg %p855
        %p1651 = pneg %p879
        %p1652 = pneg %p876
        %p1653 = pneg %p900
        %p1654 = pneg %p897
        %p1655 = pneg %p921
        %p1656 = pneg %p918
        %p1657 = pneg %p947
        %p1658 = pneg %p944
        %s1659 = sand.u32 %s934, 1
        %s1660 = scalar_lea.sflag [#allocation4], %s1659
        %s1661 = sand.u32 %s934, 1
        %s1662 = smul.addr %s1661, 16
        %s1663 = scalar_lea.vmem [#allocation46], %s1662
        %p1664 = scmp.lt.s32.totalorder %s108, 1
        %s1665 = scalar_select %p1664, %s108, 1
        %s1666 = smul.addr %s1665, 2
        %s1667 = smul.addr %s1666, 8
        %s1668 = scalar_lea.vmem %s1, %s1667
        %p1669 = scmp.lt.s32.totalorder %s108, 1
        %s1670 = scalar_select %p1669, %s108, 1
        %s1671 = smul.addr %s1670, 2
        %s1672 = smul.addr %s1671, 8
        %s1673 = scalar_lea.vmem %s3, %s1672
        %p1674 = scmp.lt.s32.totalorder %s108, 1
        %s1675 = scalar_select %p1674, %s108, 1
        %s1676 = smul.addr %s1675, 2
        %s1677 = smul.addr %s1676, 8
        %s1678 = scalar_lea.vmem %s5, %s1677
        %v1680 = vld [vmem:[%s1668] sm:$0xff]
        %v1681 = vld [vmem:[%s1668 + $0x8] sm:$0xff]
        %v1682 = vld [vmem:[%s1678] sm:$0xff]
        %v1683 = vld [vmem:[%s1678 + $0x8] sm:$0xff]
        %v1684 = vld [vmem:[%s9] sm:$0xff]
        %v1685 = vld [vmem:[%s9 + $0x8] sm:$0xf]
        %v1686 = vld [vmem:[%s9 + $0xc] sm:$0xff]
        %v1687 = vld [vmem:[%s9 + $0x14] sm:$0xf]
        %v1688 = vld [vmem:[%s9 + $0x18] sm:$0xff]
        %v1689 = vld [vmem:[%s9 + $0x20] sm:$0xf]
        %v1690 = vld [vmem:[%s9 + $0x24] sm:$0xff]
        %v1691 = vld [vmem:[%s9 + $0x2c] sm:$0xf]
        %v1692 = vld [vmem:[%s9 + $0x30] sm:$0xff]
        %v1693 = vld [vmem:[%s9 + $0x38] sm:$0xf]
        %v1694 = vld [vmem:[%s9 + $0x3c] sm:$0xff]
        %v1695 = vld [vmem:[%s9 + $0x44] sm:$0xf]
        %v1696 = vld [vmem:[%s9 + $0x48] sm:$0xff]
        %v1697 = vld [vmem:[%s9 + $0x50] sm:$0xf]
        %v1698 = vld [vmem:[%s9 + $0x54] sm:$0xff]
        %v1699 = vld [vmem:[%s9 + $0x5c] sm:$0xf]
        %v1700 = vld [vmem:[%s9 + $0x60] sm:$0xff]
        %v1701 = vld [vmem:[%s9 + $0x68] sm:$0xf]
        %v1702 = vld [vmem:[%s9 + $0x6c] sm:$0xff]
        %v1703 = vld [vmem:[%s9 + $0x74] sm:$0xf]
        %v1704 = vld [vmem:[%s9 + $0x78] sm:$0xff]
        %v1705 = vld [vmem:[%s9 + $0x80] sm:$0xf]
        %v1706 = vld [vmem:[%s9 + $0x84] sm:$0xff]
        %v1707 = vld [vmem:[%s9 + $0x8c] sm:$0xf]
        %v1708 = vld [vmem:[%s9 + $0x90] sm:$0xff]
        %v1709 = vld [vmem:[%s9 + $0x98] sm:$0xf]
        %v1710 = vld [vmem:[%s9 + $0x9c] sm:$0xff]
        %v1711 = vld [vmem:[%s9 + $0xa4] sm:$0xf]
        %v1712 = vld [vmem:[%s9 + $0xa8] sm:$0xff]
        %v1713 = vld [vmem:[%s9 + $0xb0] sm:$0xf]
        %v1714 = vld [vmem:[%s9 + $0xb4] sm:$0xff]
        %v1715 = vld [vmem:[%s9 + $0xbc] sm:$0xf]
        %v1716 = vld [vmem:[%s11] sm:$0x7]
        %v1717 = vld [vmem:[%s13] sm:$0xf]
        %v1718 = vld [vmem:[%s13 + $0x4] sm:$0xf]
        %v1719 = vld [vmem:[%s13 + $0x8] sm:$0xf]
        %v1720 = vld [vmem:[%s13 + $0xc] sm:$0xf]
        %v1721 = vld [vmem:[%s13 + $0x10] sm:$0xf]
        %v1722 = vld [vmem:[%s13 + $0x14] sm:$0xf]
        %v1723 = vld [vmem:[%s13 + $0x18] sm:$0xf]
        %v1724 = vld [vmem:[%s13 + $0x1c] sm:$0xf]
        %v1725 = vld [vmem:[%s13 + $0x20] sm:$0xf]
        %v1726 = vld [vmem:[%s13 + $0x24] sm:$0xf]
        %v1727 = vld [vmem:[%s13 + $0x28] sm:$0xf]
        %v1728 = vld [vmem:[%s13 + $0x2c] sm:$0xf]
        %v1729 = vld [vmem:[%s13 + $0x30] sm:$0xf]
        %v1730 = vld [vmem:[%s13 + $0x34] sm:$0xf]
        %v1731 = vld [vmem:[%s13 + $0x38] sm:$0xf]
        %v1732 = vld [vmem:[%s13 + $0x3c] sm:$0xf]
        %v1733 = vld [vmem:[%s15] sm:$0x1]
        %v1734 = vpack.c.bf16 %v1681, %v1680
        %v1736 = vperm.slane %v1716, 0
        %v1737 = vperm.slane %v1716, 1
        %v1738 = vperm.slane %v1716, 2
        %v1774 = vunpack.c.l.b16 %v1684
        %v1775 = vunpack.c.h.b16 %v1684
        %v1776 = vunpack.c.l.b16 %v1685
        %v1777 = vunpack.c.l.b16 %v1686
        %v1778 = vunpack.c.h.b16 %v1686
        %v1779 = vunpack.c.l.b16 %v1687
        %v1780 = vunpack.c.l.b16 %v1688
        %v1781 = vunpack.c.h.b16 %v1688
        %v1782 = vunpack.c.l.b16 %v1689
        %v1783 = vunpack.c.l.b16 %v1690
        %v1784 = vunpack.c.h.b16 %v1690
        %v1785 = vunpack.c.l.b16 %v1691
        %v1786 = vunpack.c.l.b16 %v1692
        %v1787 = vunpack.c.h.b16 %v1692
        %v1788 = vunpack.c.l.b16 %v1693
        %v1789 = vunpack.c.l.b16 %v1694
        %v1790 = vunpack.c.h.b16 %v1694
        %v1791 = vunpack.c.l.b16 %v1695
        %v1792 = vunpack.c.l.b16 %v1696
        %v1793 = vunpack.c.h.b16 %v1696
        %v1794 = vunpack.c.l.b16 %v1697
        %v1795 = vunpack.c.l.b16 %v1698
        %v1796 = vunpack.c.h.b16 %v1698
        %v1797 = vunpack.c.l.b16 %v1699
        %v1798 = vunpack.c.l.b16 %v1700
        %v1799 = vunpack.c.h.b16 %v1700
        %v1800 = vunpack.c.l.b16 %v1701
        %v1801 = vunpack.c.l.b16 %v1702
        %v1802 = vunpack.c.h.b16 %v1702
        %v1803 = vunpack.c.l.b16 %v1703
        %v1804 = vunpack.c.l.b16 %v1704
        %v1805 = vunpack.c.h.b16 %v1704
        %v1806 = vunpack.c.l.b16 %v1705
        %v1807 = vunpack.c.l.b16 %v1706
        %v1808 = vunpack.c.h.b16 %v1706
        %v1809 = vunpack.c.l.b16 %v1707
        %v1810 = vunpack.c.l.b16 %v1708
        %v1811 = vunpack.c.h.b16 %v1708
        %v1812 = vunpack.c.l.b16 %v1709
        %v1813 = vunpack.c.l.b16 %v1710
        %v1814 = vunpack.c.h.b16 %v1710
        %v1815 = vunpack.c.l.b16 %v1711
        %v1816 = vunpack.c.l.b16 %v1712
        %v1817 = vunpack.c.h.b16 %v1712
        %v1818 = vunpack.c.l.b16 %v1713
        %v1819 = vunpack.c.l.b16 %v1714
        %v1820 = vunpack.c.h.b16 %v1714
        %v1821 = vunpack.c.l.b16 %v1715
        %v1822 = vpack.c.b16 %v1777, %v1774
        %v1823 = vpack.c.b16 %v1778, %v1775
        %v1824 = vpack.c.b16 %v1779, %v1776
        %v1825 = vpack.c.b16 %v1783, %v1780
        %v1826 = vpack.c.b16 %v1784, %v1781
        %v1827 = vpack.c.b16 %v1785, %v1782
        %v1828 = vpack.c.b16 %v1789, %v1786
        %v1829 = vpack.c.b16 %v1790, %v1787
        %v1830 = vpack.c.b16 %v1791, %v1788
        %v1831 = vpack.c.b16 %v1795, %v1792
        %v1832 = vpack.c.b16 %v1796, %v1793
        %v1833 = vpack.c.b16 %v1797, %v1794
        %v1834 = vpack.c.b16 %v1801, %v1798
        %v1835 = vpack.c.b16 %v1802, %v1799
        %v1836 = vpack.c.b16 %v1803, %v1800
        %v1837 = vpack.c.b16 %v1807, %v1804
        %v1838 = vpack.c.b16 %v1808, %v1805
        %v1839 = vpack.c.b16 %v1809, %v1806
        %v1840 = vpack.c.b16 %v1813, %v1810
        %v1841 = vpack.c.b16 %v1814, %v1811
        %v1842 = vpack.c.b16 %v1815, %v1812
        %v1843 = vpack.c.b16 %v1819, %v1816
        %v1844 = vpack.c.b16 %v1820, %v1817
        %v1845 = vpack.c.b16 %v1821, %v1818
        %1870 = vmatpush.bf16.msra.mxu0 %v1843
        %1871 = vmatpush.bf16.msra.mxu0 %v1840
        %1872 = vmatpush.bf16.msra.mxu0 %v1837
        %1873 = vmatpush.bf16.msra.mxu0 %v1834
        %1874 = vmatpush.bf16.msra.mxu0 %v1831
        %1875 = vmatpush.bf16.msra.mxu0 %v1828
        %1876 = vmatpush.bf16.msra.mxu0 %v1825
        %1877 = vmatpush.bf16.msra.mxu0 %v1822
        %1878 = vmatmul.bf16.gmra.mxu0 %v1734
        %v1879 = vpop.f32.mrf.mxu0
        %v1880 = vadd.f32 %v1736, %v1879
        %v1881 = vpop.f32.mrf.mxu0
        %v1882 = vadd.f32 %v1736, %v1881
        %1883 = vdwg.mxu0
        %1884 = vmatpush.bf16.msra.mxu0 %v1844
        %1885 = vmatpush.bf16.msra.mxu0 %v1841
        %1886 = vmatpush.bf16.msra.mxu0 %v1838
        %1887 = vmatpush.bf16.msra.mxu0 %v1835
        %1888 = vmatpush.bf16.msra.mxu0 %v1832
        %1889 = vmatpush.bf16.msra.mxu0 %v1829
        %1890 = vmatpush.bf16.msra.mxu0 %v1826
        %1891 = vmatpush.bf16.msra.mxu0 %v1823
        %1892 = vmatmul.bf16.gmra.mxu0 %v1734
        %v1893 = vpop.f32.mrf.mxu0
        %v1894 = vadd.f32 %v1737, %v1893
        %v1895 = vpop.f32.mrf.mxu0
        %v1896 = vadd.f32 %v1737, %v1895
        %1897 = vdwg.mxu0
        %1898 = vmatpush.bf16.msra.mxu0 %v1845
        %1899 = vmatpush.bf16.msra.mxu0 %v1842
        %1900 = vmatpush.bf16.msra.mxu0 %v1839
        %1901 = vmatpush.bf16.msra.mxu0 %v1836
        %1902 = vmatpush.bf16.msra.mxu0 %v1833
        %1903 = vmatpush.bf16.msra.mxu0 %v1830
        %1904 = vmatpush.bf16.msra.mxu0 %v1827
        %1905 = vmatpush.bf16.msra.mxu0 %v1824
        %1906 = vmatmul.bf16.gmra.mxu0 %v1734
        %v1907 = vpop.f32.mrf.mxu0
        %v1908 = vadd.f32 %v1738, %v1907
        %v1909 = vpop.f32.mrf.mxu0
        %v1910 = vadd.f32 %v1738, %v1909
        %1911 = vdwg.mxu0
        %v1912 = vpack.c.bf16 %v1882, %v1880
        %1915 = vrot.lane.b32.xlu0 %v1880, 96
        %v1916 = vpop.permute.xlu0 %1915
        %1917 = vrot.lane.b32.xlu0 %v1882, 96
        %v1918 = vpop.permute.xlu0 %1917
        %1921 = vxpose.xlu0.b32.start [1/16] %v1916, 128
        %1922 = vxpose.xlu0.b32.cont [2/16] %v1918, 128
        %1923 = vxpose.xlu0.b32.cont [3/16] 0.0, 128
        %1924 = vxpose.xlu0.b32.cont [4/16] 0.0, 128
        %1925 = vxpose.xlu0.b32.cont [5/16] 0.0, 128
        %1926 = vxpose.xlu0.b32.cont [6/16] 0.0, 128
        %1927 = vxpose.xlu0.b32.cont [7/16] 0.0, 128
        %1928 = vxpose.xlu0.b32.cont [8/16] 0.0, 128
        %1929 = vxpose.xlu0.b32.cont [9/16] 0.0, 128
        %1930 = vxpose.xlu0.b32.cont [10/16] 0.0, 128
        %1931 = vxpose.xlu0.b32.cont [11/16] 0.0, 128
        %1932 = vxpose.xlu0.b32.cont [12/16] 0.0, 128
        %1933 = vxpose.xlu0.b32.cont [13/16] 0.0, 128
        %1934 = vxpose.xlu0.b32.cont [14/16] 0.0, 128
        %1935 = vxpose.xlu0.b32.cont [15/16] 0.0, 128
        %1936 = vxpose.xlu0.b32.end [16/16] 0.0, 128
        %v1937 = vpop.trf.xlu0
        %v1938 = vpop.trf.xlu0
        %v1939 = vpop.trf.xlu0
        %v1940 = vpop.trf.xlu0
        %v1941 = vpop.trf.xlu0
        %v1942 = vpop.trf.xlu0
        %v1943 = vpop.trf.xlu0
        %v1944 = vpop.trf.xlu0
        %v1945 = vpop.trf.xlu0
        %v1946 = vpop.trf.xlu0
        %v1947 = vpop.trf.xlu0
        %v1948 = vpop.trf.xlu0
        %v1949 = vpop.trf.xlu0
        %v1950 = vpop.trf.xlu0
        %v1951 = vpop.trf.xlu0
        %v1952 = vpop.trf.xlu0
        %v1953 = vpack.c.bf16 %v1938, %v1937
        %v1954 = vpack.c.bf16 %v1940, %v1939
        %vm1955 = vcmask 261120
        %v1957 = vsel %vm1955, %v1912, 0
        %1959 = vmatpush.bf16.msra.mxu0 0
        %1960 = vmatpush.bf16.msra.mxu0 0
        %1961 = vmatpush.bf16.msra.mxu0 0
        %1962 = vmatpush.bf16.msra.mxu0 0
        %1963 = vmatpush.bf16.msra.mxu0 0
        %1964 = vmatpush.bf16.msra.mxu0 0
        %1965 = vmatpush.bf16.msra.mxu0 %v1954
        %1966 = vmatpush.bf16.msra.mxu0 %v1953
        %1967 = vmatmul.bf16.gmra.mxu0 %v1957
        %v1968 = vpop.f32.mrf.mxu0
        %v1969 = vadd.f32 0.0, %v1968
        %v1970 = vpop.f32.mrf.mxu0
        %v1971 = vadd.f32 0.0, %v1970
        %1972 = vdwg.mxu0
        %v1973 = vmul.f32 %v1969, 0.17677669
        %v1974 = vmul.f32 %v1971, 0.17677669
        %v1975 = vadd.f32 %v1973, %v1682
        %v1976 = vadd.f32 %v1974, %v1683
        %vm1977 = vcmask 130048
        %v1978 = vsel %vm1977, %v1975, -inf
        %1979 = vmax.xlane.f32.xlu0 %v1978
        %v1980 = vpop.xlane.xlu0 %1979
        %v1981 = vsel %vm1977, %v1976, -inf
        %1982 = vmax.xlane.f32.xlu0 %v1981
        %v1983 = vpop.xlane.xlu0 %1982
        %v1984 = vsub.f32 %v1975, %v1980
        %v1985 = vsub.f32 %v1976, %v1983
        %v1986 = vmul.f32 %v1984, 1.442695
        %v1987 = vpow.pop %v1986
        %v1988 = vmul.f32 %v1985, 1.442695
        %v1989 = vpow.pop %v1988
        %v1990 = vsel %vm1977, %v1987, 0.0
        %1991 = vadd.xlane.f32.xlu0 %v1990
        %v1992 = vpop.xlane.xlu0 %1991
        %v1993 = vsel %vm1977, %v1989, 0.0
        %1994 = vadd.xlane.f32.xlu0 %v1993
        %v1995 = vpop.xlane.xlu0 %1994
        %v1996 = vrcp.pop %v1992
        %v1997 = vrcp.pop %v1995
        %v1998 = vmul.f32 %v1987, %v1996
        %v1999 = vmul.f32 %v1989, %v1997
        %v2000 = vpack.c.bf16 %v1999, %v1998
        %2002 = vrot.lane.b32.xlu0 %v1912, 64
        %v2003 = vpop.permute.xlu0 %2002
        %v2006 = vsel %vm1977, %v2000, 0
        %2008 = vmatpush.bf16.msra.mxu0 0
        %2009 = vmatpush.bf16.msra.mxu0 0
        %2010 = vmatpush.bf16.msra.mxu0 0
        %2011 = vmatpush.bf16.msra.mxu0 0
        %2012 = vmatpush.bf16.msra.mxu0 0
        %2013 = vmatpush.bf16.msra.mxu0 0
        %2014 = vmatpush.bf16.msra.mxu0 0
        %2015 = vmatpush.bf16.msra.mxu0 %v2003
        %2016 = vmatmul.bf16.gmra.mxu0 %v2006
        %v2017 = vpop.f32.mrf.mxu0
        %v2018 = vadd.f32 0.0, %v2017
        %v2019 = vpop.f32.mrf.mxu0
        %v2020 = vadd.f32 0.0, %v2019
        %2021 = vdwg.mxu0
        %2022 = vxpose.xlu0.b32.start [1/16] %v1894, 128
        %2023 = vxpose.xlu0.b32.cont [2/16] %v1896, 128
        %2024 = vxpose.xlu0.b32.cont [3/16] 0.0, 128
        %2025 = vxpose.xlu0.b32.cont [4/16] 0.0, 128
        %2026 = vxpose.xlu0.b32.cont [5/16] 0.0, 128
        %2027 = vxpose.xlu0.b32.cont [6/16] 0.0, 128
        %2028 = vxpose.xlu0.b32.cont [7/16] 0.0, 128
        %2029 = vxpose.xlu0.b32.cont [8/16] 0.0, 128
        %2030 = vxpose.xlu0.b32.cont [9/16] 0.0, 128
        %2031 = vxpose.xlu0.b32.cont [10/16] 0.0, 128
        %2032 = vxpose.xlu0.b32.cont [11/16] 0.0, 128
        %2033 = vxpose.xlu0.b32.cont [12/16] 0.0, 128
        %2034 = vxpose.xlu0.b32.cont [13/16] 0.0, 128
        %2035 = vxpose.xlu0.b32.cont [14/16] 0.0, 128
        %2036 = vxpose.xlu0.b32.cont [15/16] 0.0, 128
        %2037 = vxpose.xlu0.b32.end [16/16] 0.0, 128
        %v2038 = vpop.trf.xlu0
        %v2039 = vpop.trf.xlu0
        %v2040 = vpop.trf.xlu0
        %v2041 = vpop.trf.xlu0
        %v2042 = vpop.trf.xlu0
        %v2043 = vpop.trf.xlu0
        %v2044 = vpop.trf.xlu0
        %v2045 = vpop.trf.xlu0
        %v2046 = vpop.trf.xlu0
        %v2047 = vpop.trf.xlu0
        %v2048 = vpop.trf.xlu0
        %v2049 = vpop.trf.xlu0
        %v2050 = vpop.trf.xlu0
        %v2051 = vpop.trf.xlu0
        %v2052 = vpop.trf.xlu0
        %v2053 = vpop.trf.xlu0
        %v2054 = vpack.c.bf16 %v2039, %v2038
        %v2055 = vpack.c.bf16 %v2041, %v2040
        %2056 = vrot.lane.b32.xlu0 %v1912, 32
        %v2057 = vpop.permute.xlu0 %2056
        %v2059 = vsel %vm1955, %v2057, 0
        %2061 = vmatpush.bf16.msra.mxu0 0
        %2062 = vmatpush.bf16.msra.mxu0 0
        %2063 = vmatpush.bf16.msra.mxu0 0
        %2064 = vmatpush.bf16.msra.mxu0 0
        %2065 = vmatpush.bf16.msra.mxu0 0
        %2066 = vmatpush.bf16.msra.mxu0 0
        %2067 = vmatpush.bf16.msra.mxu0 %v2055
        %2068 = vmatpush.bf16.msra.mxu0 %v2054
        %2069 = vmatmul.bf16.gmra.mxu0 %v2059
        %v2070 = vpop.f32.mrf.mxu0
        %v2071 = vadd.f32 0.0, %v2070
        %v2072 = vpop.f32.mrf.mxu0
        %v2073 = vadd.f32 0.0, %v2072
        %2074 = vdwg.mxu0
        %v2075 = vmul.f32 %v2071, 0.17677669
        %v2076 = vmul.f32 %v2073, 0.17677669
        %v2077 = vadd.f32 %v2075, %v1682
        %v2078 = vadd.f32 %v2076, %v1683
        %v2079 = vsel %vm1977, %v2077, -inf
        %2080 = vmax.xlane.f32.xlu0 %v2079
        %v2081 = vpop.xlane.xlu0 %2080
        %v2082 = vsel %vm1977, %v2078, -inf
        %2083 = vmax.xlane.f32.xlu0 %v2082
        %v2084 = vpop.xlane.xlu0 %2083
        %v2085 = vsub.f32 %v2077, %v2081
        %v2086 = vsub.f32 %v2078, %v2084
        %v2087 = vmul.f32 %v2085, 1.442695
        %v2088 = vpow.pop %v2087
        %v2089 = vmul.f32 %v2086, 1.442695
        %v2090 = vpow.pop %v2089
        %v2091 = vsel %vm1977, %v2088, 0.0
        %2092 = vadd.xlane.f32.xlu0 %v2091
        %v2093 = vpop.xlane.xlu0 %2092
        %v2094 = vsel %vm1977, %v2090, 0.0
        %2095 = vadd.xlane.f32.xlu0 %v2094
        %v2096 = vpop.xlane.xlu0 %2095
        %v2097 = vrcp.pop %v2093
        %v2098 = vrcp.pop %v2096
        %v2099 = vmul.f32 %v2088, %v2097
        %v2100 = vmul.f32 %v2090, %v2098
        %v2101 = vpack.c.bf16 %v2100, %v2099
        %v2102 = vpack.c.bf16 %v1896, %v1894
        %2104 = vrot.lane.b32.xlu0 %v2102, 96
        %v2105 = vpop.permute.xlu0 %2104
        %v2108 = vsel %vm1977, %v2101, 0
        %2110 = vmatpush.bf16.msra.mxu0 0
        %2111 = vmatpush.bf16.msra.mxu0 0
        %2112 = vmatpush.bf16.msra.mxu0 0
        %2113 = vmatpush.bf16.msra.mxu0 0
        %2114 = vmatpush.bf16.msra.mxu0 0
        %2115 = vmatpush.bf16.msra.mxu0 0
        %2116 = vmatpush.bf16.msra.mxu0 0
        %2117 = vmatpush.bf16.msra.mxu0 %v2105
        %2118 = vmatmul.bf16.gmra.mxu0 %v2108
        %v2119 = vpop.f32.mrf.mxu0
        %v2120 = vadd.f32 0.0, %v2119
        %v2121 = vpop.f32.mrf.mxu0
        %v2122 = vadd.f32 0.0, %v2121
        %2123 = vdwg.mxu0
        %2126 = vrot.lane.b32.xlu0 %v1894, 32
        %v2127 = vpop.permute.xlu0 %2126
        %2128 = vrot.lane.b32.xlu0 %v1896, 32
        %v2129 = vpop.permute.xlu0 %2128
        %2132 = vxpose.xlu0.b32.start [1/16] %v2127, 128
        %2133 = vxpose.xlu0.b32.cont [2/16] %v2129, 128
        %2134 = vxpose.xlu0.b32.cont [3/16] 0.0, 128
        %2135 = vxpose.xlu0.b32.cont [4/16] 0.0, 128
        %2136 = vxpose.xlu0.b32.cont [5/16] 0.0, 128
        %2137 = vxpose.xlu0.b32.cont [6/16] 0.0, 128
        %2138 = vxpose.xlu0.b32.cont [7/16] 0.0, 128
        %2139 = vxpose.xlu0.b32.cont [8/16] 0.0, 128
        %2140 = vxpose.xlu0.b32.cont [9/16] 0.0, 128
        %2141 = vxpose.xlu0.b32.cont [10/16] 0.0, 128
        %2142 = vxpose.xlu0.b32.cont [11/16] 0.0, 128
        %2143 = vxpose.xlu0.b32.cont [12/16] 0.0, 128
        %2144 = vxpose.xlu0.b32.cont [13/16] 0.0, 128
        %2145 = vxpose.xlu0.b32.cont [14/16] 0.0, 128
        %2146 = vxpose.xlu0.b32.cont [15/16] 0.0, 128
        %2147 = vxpose.xlu0.b32.end [16/16] 0.0, 128
        %v2148 = vpop.trf.xlu0
        %v2149 = vpop.trf.xlu0
        %v2150 = vpop.trf.xlu0
        %v2151 = vpop.trf.xlu0
        %v2152 = vpop.trf.xlu0
        %v2153 = vpop.trf.xlu0
        %v2154 = vpop.trf.xlu0
        %v2155 = vpop.trf.xlu0
        %v2156 = vpop.trf.xlu0
        %v2157 = vpop.trf.xlu0
        %v2158 = vpop.trf.xlu0
        %v2159 = vpop.trf.xlu0
        %v2160 = vpop.trf.xlu0
        %v2161 = vpop.trf.xlu0
        %v2162 = vpop.trf.xlu0
        %v2163 = vpop.trf.xlu0
        %v2164 = vpack.c.bf16 %v2149, %v2148
        %v2165 = vpack.c.bf16 %v2151, %v2150
        %2166 = vrot.lane.b32.xlu0 %v2102, 64
        %v2167 = vpop.permute.xlu0 %2166
        %v2169 = vsel %vm1955, %v2167, 0
        %2171 = vmatpush.bf16.msra.mxu0 0
        %2172 = vmatpush.bf16.msra.mxu0 0
        %2173 = vmatpush.bf16.msra.mxu0 0
        %2174 = vmatpush.bf16.msra.mxu0 0
        %2175 = vmatpush.bf16.msra.mxu0 0
        %2176 = vmatpush.bf16.msra.mxu0 0
        %2177 = vmatpush.bf16.msra.mxu0 %v2165
        %2178 = vmatpush.bf16.msra.mxu0 %v2164
        %2179 = vmatmul.bf16.gmra.mxu0 %v2169
        %v2180 = vpop.f32.mrf.mxu0
        %v2181 = vadd.f32 0.0, %v2180
        %v2182 = vpop.f32.mrf.mxu0
        %v2183 = vadd.f32 0.0, %v2182
        %2184 = vdwg.mxu0
        %v2185 = vmul.f32 %v2181, 0.17677669
        %v2186 = vmul.f32 %v2183, 0.17677669
        %v2187 = vadd.f32 %v2185, %v1682
        %v2188 = vadd.f32 %v2186, %v1683
        %v2189 = vsel %vm1977, %v2187, -inf
        %2190 = vmax.xlane.f32.xlu0 %v2189
        %v2191 = vpop.xlane.xlu0 %2190
        %v2192 = vsel %vm1977, %v2188, -inf
        %2193 = vmax.xlane.f32.xlu0 %v2192
        %v2194 = vpop.xlane.xlu0 %2193
        %v2195 = vsub.f32 %v2187, %v2191
        %v2196 = vsub.f32 %v2188, %v2194
        %v2197 = vmul.f32 %v2195, 1.442695
        %v2198 = vpow.pop %v2197
        %v2199 = vmul.f32 %v2196, 1.442695
        %v2200 = vpow.pop %v2199
        %v2201 = vsel %vm1977, %v2198, 0.0
        %2202 = vadd.xlane.f32.xlu0 %v2201
        %v2203 = vpop.xlane.xlu0 %2202
        %v2204 = vsel %vm1977, %v2200, 0.0
        %2205 = vadd.xlane.f32.xlu0 %v2204
        %v2206 = vpop.xlane.xlu0 %2205
        %v2207 = vrcp.pop %v2203
        %v2208 = vrcp.pop %v2206
        %v2209 = vmul.f32 %v2198, %v2207
        %v2210 = vmul.f32 %v2200, %v2208
        %v2211 = vpack.c.bf16 %v2210, %v2209
        %v2212 = vpack.c.bf16 %v1910, %v1908
        %v2214 = vsel %vm1977, %v2211, 0
        %2216 = vmatpush.bf16.msra.mxu0 0
        %2217 = vmatpush.bf16.msra.mxu0 0
        %2218 = vmatpush.bf16.msra.mxu0 0
        %2219 = vmatpush.bf16.msra.mxu0 0
        %2220 = vmatpush.bf16.msra.mxu0 0
        %2221 = vmatpush.bf16.msra.mxu0 0
        %2222 = vmatpush.bf16.msra.mxu0 0
        %2223 = vmatpush.bf16.msra.mxu0 %v2212
        %2224 = vmatmul.bf16.gmra.mxu0 %v2214
        %v2225 = vpop.f32.mrf.mxu0
        %v2226 = vadd.f32 0.0, %v2225
        %v2227 = vpop.f32.mrf.mxu0
        %v2228 = vadd.f32 0.0, %v2227
        %2229 = vdwg.mxu0
        %2232 = vrot.lane.b32.xlu0 %v1908, 64
        %v2233 = vpop.permute.xlu0 %2232
        %2234 = vrot.lane.b32.xlu0 %v1910, 64
        %v2235 = vpop.permute.xlu0 %2234
        %2238 = vxpose.xlu0.b32.start [1/16] %v2233, 128
        %2239 = vxpose.xlu0.b32.cont [2/16] %v2235, 128
        %2240 = vxpose.xlu0.b32.cont [3/16] 0.0, 128
        %2241 = vxpose.xlu0.b32.cont [4/16] 0.0, 128
        %2242 = vxpose.xlu0.b32.cont [5/16] 0.0, 128
        %2243 = vxpose.xlu0.b32.cont [6/16] 0.0, 128
        %2244 = vxpose.xlu0.b32.cont [7/16] 0.0, 128
        %2245 = vxpose.xlu0.b32.cont [8/16] 0.0, 128
        %2246 = vxpose.xlu0.b32.cont [9/16] 0.0, 128
        %2247 = vxpose.xlu0.b32.cont [10/16] 0.0, 128
        %2248 = vxpose.xlu0.b32.cont [11/16] 0.0, 128
        %2249 = vxpose.xlu0.b32.cont [12/16] 0.0, 128
        %2250 = vxpose.xlu0.b32.cont [13/16] 0.0, 128
        %2251 = vxpose.xlu0.b32.cont [14/16] 0.0, 128
        %2252 = vxpose.xlu0.b32.cont [15/16] 0.0, 128
        %2253 = vxpose.xlu0.b32.end [16/16] 0.0, 128
        %v2254 = vpop.trf.xlu0
        %v2255 = vpop.trf.xlu0
        %v2256 = vpop.trf.xlu0
        %v2257 = vpop.trf.xlu0
        %v2258 = vpop.trf.xlu0
        %v2259 = vpop.trf.xlu0
        %v2260 = vpop.trf.xlu0
        %v2261 = vpop.trf.xlu0
        %v2262 = vpop.trf.xlu0
        %v2263 = vpop.trf.xlu0
        %v2264 = vpop.trf.xlu0
        %v2265 = vpop.trf.xlu0
        %v2266 = vpop.trf.xlu0
        %v2267 = vpop.trf.xlu0
        %v2268 = vpop.trf.xlu0
        %v2269 = vpop.trf.xlu0
        %v2270 = vpack.c.bf16 %v2255, %v2254
        %v2271 = vpack.c.bf16 %v2257, %v2256
        %2273 = vrot.lane.b32.xlu0 %v2212, 96
        %v2274 = vpop.permute.xlu0 %2273
        %v2276 = vsel %vm1955, %v2274, 0
        %2278 = vmatpush.bf16.msra.mxu0 0
        %2279 = vmatpush.bf16.msra.mxu0 0
        %2280 = vmatpush.bf16.msra.mxu0 0
        %2281 = vmatpush.bf16.msra.mxu0 0
        %2282 = vmatpush.bf16.msra.mxu0 0
        %2283 = vmatpush.bf16.msra.mxu0 0
        %2284 = vmatpush.bf16.msra.mxu0 %v2271
        %2285 = vmatpush.bf16.msra.mxu0 %v2270
        %2286 = vmatmul.bf16.gmra.mxu0 %v2276
        %v2287 = vpop.f32.mrf.mxu0
        %v2288 = vadd.f32 0.0, %v2287
        %v2289 = vpop.f32.mrf.mxu0
        %v2290 = vadd.f32 0.0, %v2289
        %2291 = vdwg.mxu0
        %v2292 = vmul.f32 %v2288, 0.17677669
        %v2293 = vmul.f32 %v2290, 0.17677669
        %v2294 = vadd.f32 %v2292, %v1682
        %v2295 = vadd.f32 %v2293, %v1683
        %v2296 = vsel %vm1977, %v2294, -inf
        %2297 = vmax.xlane.f32.xlu0 %v2296
        %v2298 = vpop.xlane.xlu0 %2297
        %v2299 = vsel %vm1977, %v2295, -inf
        %2300 = vmax.xlane.f32.xlu0 %v2299
        %v2301 = vpop.xlane.xlu0 %2300
        %v2302 = vsub.f32 %v2294, %v2298
        %v2303 = vsub.f32 %v2295, %v2301
        %v2304 = vmul.f32 %v2302, 1.442695
        %v2305 = vpow.pop %v2304
        %v2306 = vmul.f32 %v2303, 1.442695
        %v2307 = vpow.pop %v2306
        %v2308 = vsel %vm1977, %v2305, 0.0
        %2309 = vadd.xlane.f32.xlu0 %v2308
        %v2310 = vpop.xlane.xlu0 %2309
        %v2311 = vsel %vm1977, %v2307, 0.0
        %2312 = vadd.xlane.f32.xlu0 %v2311
        %v2313 = vpop.xlane.xlu0 %2312
        %v2314 = vrcp.pop %v2310
        %v2315 = vrcp.pop %v2313
        %v2316 = vmul.f32 %v2305, %v2314
        %v2317 = vmul.f32 %v2307, %v2315
        %v2318 = vpack.c.bf16 %v2317, %v2316
        %2319 = vrot.lane.b32.xlu0 %v2212, 32
        %v2320 = vpop.permute.xlu0 %2319
        %v2323 = vsel %vm1977, %v2318, 0
        %2325 = vmatpush.bf16.msra.mxu0 0
        %2326 = vmatpush.bf16.msra.mxu0 0
        %2327 = vmatpush.bf16.msra.mxu0 0
        %2328 = vmatpush.bf16.msra.mxu0 0
        %2329 = vmatpush.bf16.msra.mxu0 0
        %2330 = vmatpush.bf16.msra.mxu0 0
        %2331 = vmatpush.bf16.msra.mxu0 0
        %2332 = vmatpush.bf16.msra.mxu0 %v2320
        %2333 = vmatmul.bf16.gmra.mxu0 %v2323
        %v2334 = vpop.f32.mrf.mxu0
        %v2335 = vadd.f32 0.0, %v2334
        %v2336 = vpop.f32.mrf.mxu0
        %v2337 = vadd.f32 0.0, %v2336
        %2338 = vdwg.mxu0
        %2341 = vrot.lane.b32.xlu0 %v2120, 32
        %v2342 = vpop.permute.xlu0 %2341
        %2343 = vrot.lane.b32.xlu0 %v2122, 32
        %v2344 = vpop.permute.xlu0 %2343
        %2349 = vrot.lane.b32.xlu0 %v2226, 64
        %v2350 = vpop.permute.xlu0 %2349
        %2351 = vrot.lane.b32.xlu0 %v2228, 64
        %v2352 = vpop.permute.xlu0 %2351
        %2357 = vrot.lane.b32.xlu0 %v2335, 96
        %v2358 = vpop.permute.xlu0 %2357
        %2359 = vrot.lane.b32.xlu0 %v2337, 96
        %v2360 = vpop.permute.xlu0 %2359
        %v2363 = vsel %vm1955, %v2018, %v2342
        %v2364 = vsel %vm1955, %v2020, %v2344
        %vm2365 = vcmask 523264
        %v2366 = vsel %vm2365, %v2363, %v2350
        %v2367 = vsel %vm2365, %v2364, %v2352
        %vm2368 = vcmask 785408
        %v2369 = vsel %vm2368, %v2366, %v2358
        %v2370 = vsel %vm2368, %v2367, %v2360
        %v2371 = vpack.c.bf16 %v2370, %v2369
        %v2373 = vperm.slane %v1733, 0
        %v2391 = vunpack.c.l.b16 %v1717
        %v2392 = vunpack.c.l.b16 %v1718
        %v2393 = vunpack.c.l.b16 %v1719
        %v2394 = vunpack.c.l.b16 %v1720
        %v2395 = vunpack.c.l.b16 %v1721
        %v2396 = vunpack.c.l.b16 %v1722
        %v2397 = vunpack.c.l.b16 %v1723
        %v2398 = vunpack.c.l.b16 %v1724
        %v2399 = vunpack.c.l.b16 %v1725
        %v2400 = vunpack.c.l.b16 %v1726
        %v2401 = vunpack.c.l.b16 %v1727
        %v2402 = vunpack.c.l.b16 %v1728
        %v2403 = vunpack.c.l.b16 %v1729
        %v2404 = vunpack.c.l.b16 %v1730
        %v2405 = vunpack.c.l.b16 %v1731
        %v2406 = vunpack.c.l.b16 %v1732
        %v2407 = vpack.c.b16 %v2392, %v2391
        %v2408 = vpack.c.b16 %v2394, %v2393
        %v2409 = vpack.c.b16 %v2396, %v2395
        %v2410 = vpack.c.b16 %v2398, %v2397
        %v2411 = vpack.c.b16 %v2400, %v2399
        %v2412 = vpack.c.b16 %v2402, %v2401
        %v2413 = vpack.c.b16 %v2404, %v2403
        %v2414 = vpack.c.b16 %v2406, %v2405
        %2423 = vmatpush.bf16.msra.mxu0 %v2414
        %2424 = vmatpush.bf16.msra.mxu0 %v2413
        %2425 = vmatpush.bf16.msra.mxu0 %v2412
        %2426 = vmatpush.bf16.msra.mxu0 %v2411
        %2427 = vmatpush.bf16.msra.mxu0 %v2410
        %2428 = vmatpush.bf16.msra.mxu0 %v2409
        %2429 = vmatpush.bf16.msra.mxu0 %v2408
        %2430 = vmatpush.bf16.msra.mxu0 %v2407
        %2431 = vmatmul.bf16.gmra.mxu0 %v2371
        %v2432 = vpop.f32.mrf.mxu0
        %v2433 = vadd.f32 %v2373, %v2432
        %v2434 = vpop.f32.mrf.mxu0
        %v2435 = vadd.f32 %v2373, %v2434
        %2436 = vdwg.mxu0
        %v2437 = vadd.f32 %v2433, %v1680
        %v2438 = vadd.f32 %v2435, %v1681
        %v2439 = vld [vmem:[#allocation5] sm:$0x1]
        %v2440 = vld [vmem:[#allocation7] sm:$0x1]
        %2441 = vadd.xlane.f32.xlu0 %v2437
        %v2442 = vpop.xlane.xlu0 %2441
        %2443 = vadd.xlane.f32.xlu0 %v2438
        %v2444 = vpop.xlane.xlu0 %2443
        %v2445 = vrcp.pop 128.0
        %v2446 = vmul.f32 128.0, %v2445
        %v2447 = vsub.f32 1.0, %v2446
        %v2448 = vmul.f32 %v2445, %v2447
        %v2449 = vadd.f32 %v2445, %v2448
        %vm2450 = vweird.f32 %v2445
        %v2451 = vsel %vm2450, %v2445, %v2449
        %v2452 = vmul.f32 %v2442, %v2451
        %v2453 = vmul.f32 %v2444, %v2451
        %v2454 = vsub.f32 %v2437, %v2452
        %v2455 = vsub.f32 %v2438, %v2453
        %v2456 = vmul.f32 %v2454, %v2454
        %v2457 = vmul.f32 %v2455, %v2455
        %2458 = vadd.xlane.f32.xlu0 %v2456
        %v2459 = vpop.xlane.xlu0 %2458
        %2460 = vadd.xlane.f32.xlu0 %v2457
        %v2461 = vpop.xlane.xlu0 %2460
        %v2462 = vmul.f32 %v2459, %v2451
        %v2463 = vmul.f32 %v2461, %v2451
        %v2464 = vadd.f32 %v2462, 1e-05
        %v2465 = vadd.f32 %v2463, 1e-05
        %v2466 = vrsqrt.pop %v2464
        %v2467 = vmul.f32 %v2466, %v2464
        %v2468 = vmul.f32 %v2467, %v2466
        %v2469 = vmul.f32 0.5, %v2468
        %v2470 = vsub.f32 1.5, %v2469
        %v2471 = vmul.f32 %v2466, %v2470
        %vm2472 = vweird.f32 %v2464
        %vm2473 = vweird.f32 %v2466
        %vm2474 = vmor %vm2472, %vm2473
        %v2475 = vsel %vm2474, %v2466, %v2471
        %v2476 = vrsqrt.pop %v2465
        %v2477 = vmul.f32 %v2476, %v2465
        %v2478 = vmul.f32 %v2477, %v2476
        %v2479 = vmul.f32 0.5, %v2478
        %v2480 = vsub.f32 1.5, %v2479
        %v2481 = vmul.f32 %v2476, %v2480
        %vm2482 = vweird.f32 %v2465
        %vm2483 = vweird.f32 %v2476
        %vm2484 = vmor %vm2482, %vm2483
        %v2485 = vsel %vm2484, %v2476, %v2481
        %v2486 = vmul.f32 %v2454, %v2475
        %v2487 = vmul.f32 %v2455, %v2485
        %v2489 = vperm.slane %v2439, 0
        %v2491 = vmul.f32 %v2486, %v2489
        %v2492 = vmul.f32 %v2487, %v2489
        %v2494 = vperm.slane %v2440, 0
        %v2496 = vadd.f32 %v2491, %v2494
        %v2497 = vadd.f32 %v2492, %v2494
        %v2498 = vld [vmem:[%s21] sm:$0xff]
        %v2499 = vld [vmem:[%s21 + $0x8] sm:$0xff]
        %v2500 = vld [vmem:[%s21 + $0x10] sm:$0xff]
        %v2501 = vld [vmem:[%s21 + $0x18] sm:$0xff]
        %v2502 = vld [vmem:[%s21 + $0x20] sm:$0xff]
        %v2503 = vld [vmem:[%s21 + $0x28] sm:$0xff]
        %v2504 = vld [vmem:[%s21 + $0x30] sm:$0xff]
        %v2505 = vld [vmem:[%s21 + $0x38] sm:$0xff]
        %v2506 = vld [vmem:[%s21 + $0x40] sm:$0xff]
        %v2507 = vld [vmem:[%s21 + $0x48] sm:$0xff]
        %v2508 = vld [vmem:[%s21 + $0x50] sm:$0xff]
        %v2509 = vld [vmem:[%s21 + $0x58] sm:$0xff]
        %v2510 = vld [vmem:[%s21 + $0x60] sm:$0xff]
        %v2511 = vld [vmem:[%s21 + $0x68] sm:$0xff]
        %v2512 = vld [vmem:[%s21 + $0x70] sm:$0xff]
        %v2513 = vld [vmem:[%s21 + $0x78] sm:$0xff]
        %v2514 = vld [vmem:[#allocation8] sm:$0x3]
        %v2515 = vpack.c.bf16 %v2497, %v2496
        %v2517 = vperm.slane %v2514, 0
        %v2518 = vperm.slane %v2514, 1
        %v2537 = vunpack.c.l.b16 %v2498
        %v2538 = vunpack.c.h.b16 %v2498
        %v2539 = vunpack.c.l.b16 %v2499
        %v2540 = vunpack.c.h.b16 %v2499
        %v2541 = vunpack.c.l.b16 %v2500
        %v2542 = vunpack.c.h.b16 %v2500
        %v2543 = vunpack.c.l.b16 %v2501
        %v2544 = vunpack.c.h.b16 %v2501
        %v2545 = vunpack.c.l.b16 %v2502
        %v2546 = vunpack.c.h.b16 %v2502
        %v2547 = vunpack.c.l.b16 %v2503
        %v2548 = vunpack.c.h.b16 %v2503
        %v2549 = vunpack.c.l.b16 %v2504
        %v2550 = vunpack.c.h.b16 %v2504
        %v2551 = vunpack.c.l.b16 %v2505
        %v2552 = vunpack.c.h.b16 %v2505
        %v2553 = vunpack.c.l.b16 %v2506
        %v2554 = vunpack.c.h.b16 %v2506
        %v2555 = vunpack.c.l.b16 %v2507
        %v2556 = vunpack.c.h.b16 %v2507
        %v2557 = vunpack.c.l.b16 %v2508
        %v2558 = vunpack.c.h.b16 %v2508
        %v2559 = vunpack.c.l.b16 %v2509
        %v2560 = vunpack.c.h.b16 %v2509
        %v2561 = vunpack.c.l.b16 %v2510
        %v2562 = vunpack.c.h.b16 %v2510
        %v2563 = vunpack.c.l.b16 %v2511
        %v2564 = vunpack.c.h.b16 %v2511
        %v2565 = vunpack.c.l.b16 %v2512
        %v2566 = vunpack.c.h.b16 %v2512
        %v2567 = vunpack.c.l.b16 %v2513
        %v2568 = vunpack.c.h.b16 %v2513
        %v2569 = vpack.c.b16 %v2539, %v2537
        %v2570 = vpack.c.b16 %v2540, %v2538
        %v2571 = vpack.c.b16 %v2543, %v2541
        %v2572 = vpack.c.b16 %v2544, %v2542
        %v2573 = vpack.c.b16 %v2547, %v2545
        %v2574 = vpack.c.b16 %v2548, %v2546
        %v2575 = vpack.c.b16 %v2551, %v2549
        %v2576 = vpack.c.b16 %v2552, %v2550
        %v2577 = vpack.c.b16 %v2555, %v2553
        %v2578 = vpack.c.b16 %v2556, %v2554
        %v2579 = vpack.c.b16 %v2559, %v2557
        %v2580 = vpack.c.b16 %v2560, %v2558
        %v2581 = vpack.c.b16 %v2563, %v2561
        %v2582 = vpack.c.b16 %v2564, %v2562
        %v2583 = vpack.c.b16 %v2567, %v2565
        %v2584 = vpack.c.b16 %v2568, %v2566
        %2601 = vmatpush.bf16.msra.mxu0 %v2583
        %2602 = vmatpush.bf16.msra.mxu0 %v2581
        %2603 = vmatpush.bf16.msra.mxu0 %v2579
        %2604 = vmatpush.bf16.msra.mxu0 %v2577
        %2605 = vmatpush.bf16.msra.mxu0 %v2575
        %2606 = vmatpush.bf16.msra.mxu0 %v2573
        %2607 = vmatpush.bf16.msra.mxu0 %v2571
        %2608 = vmatpush.bf16.msra.mxu0 %v2569
        %2609 = vmatmul.bf16.gmra.mxu0 %v2515
        %v2610 = vpop.f32.mrf.mxu0
        %v2611 = vadd.f32 %v2517, %v2610
        %v2612 = vpop.f32.mrf.mxu0
        %v2613 = vadd.f32 %v2517, %v2612
        %2614 = vdwg.mxu0
        %2615 = vmatpush.bf16.msra.mxu0 %v2584
        %2616 = vmatpush.bf16.msra.mxu0 %v2582
        %2617 = vmatpush.bf16.msra.mxu0 %v2580
        %2618 = vmatpush.bf16.msra.mxu0 %v2578
        %2619 = vmatpush.bf16.msra.mxu0 %v2576
        %2620 = vmatpush.bf16.msra.mxu0 %v2574
        %2621 = vmatpush.bf16.msra.mxu0 %v2572
        %2622 = vmatpush.bf16.msra.mxu0 %v2570
        %2623 = vmatmul.bf16.gmra.mxu0 %v2515
        %v2624 = vpop.f32.mrf.mxu0
        %v2625 = vadd.f32 %v2518, %v2624
        %v2626 = vpop.f32.mrf.mxu0
        %v2627 = vadd.f32 %v2518, %v2626
        %2628 = vdwg.mxu0
        %v2629 = vmax.f32 %v2611, 0.0
        %v2630 = vmax.f32 %v2625, 0.0
        %v2631 = vmax.f32 %v2613, 0.0
        %v2632 = vmax.f32 %v2627, 0.0
        %v2633 = vld [vmem:[%s25] sm:$0xf]
        %v2634 = vld [vmem:[%s25 + $0x4] sm:$0xf]
        %v2635 = vld [vmem:[%s25 + $0x8] sm:$0xf]
        %v2636 = vld [vmem:[%s25 + $0xc] sm:$0xf]
        %v2637 = vld [vmem:[%s25 + $0x10] sm:$0xf]
        %v2638 = vld [vmem:[%s25 + $0x14] sm:$0xf]
        %v2639 = vld [vmem:[%s25 + $0x18] sm:$0xf]
        %v2640 = vld [vmem:[%s25 + $0x1c] sm:$0xf]
        %v2641 = vld [vmem:[%s25 + $0x20] sm:$0xf]
        %v2642 = vld [vmem:[%s25 + $0x24] sm:$0xf]
        %v2643 = vld [vmem:[%s25 + $0x28] sm:$0xf]
        %v2644 = vld [vmem:[%s25 + $0x2c] sm:$0xf]
        %v2645 = vld [vmem:[%s25 + $0x30] sm:$0xf]
        %v2646 = vld [vmem:[%s25 + $0x34] sm:$0xf]
        %v2647 = vld [vmem:[%s25 + $0x38] sm:$0xf]
        %v2648 = vld [vmem:[%s25 + $0x3c] sm:$0xf]
        %v2649 = vld [vmem:[%s25 + $0x40] sm:$0xf]
        %v2650 = vld [vmem:[%s25 + $0x44] sm:$0xf]
        %v2651 = vld [vmem:[%s25 + $0x48] sm:$0xf]
        %v2652 = vld [vmem:[%s25 + $0x4c] sm:$0xf]
        %v2653 = vld [vmem:[%s25 + $0x50] sm:$0xf]
        %v2654 = vld [vmem:[%s25 + $0x54] sm:$0xf]
        %v2655 = vld [vmem:[%s25 + $0x58] sm:$0xf]
        %v2656 = vld [vmem:[%s25 + $0x5c] sm:$0xf]
        %v2657 = vld [vmem:[%s25 + $0x60] sm:$0xf]
        %v2658 = vld [vmem:[%s25 + $0x64] sm:$0xf]
        %v2659 = vld [vmem:[%s25 + $0x68] sm:$0xf]
        %v2660 = vld [vmem:[%s25 + $0x6c] sm:$0xf]
        %v2661 = vld [vmem:[%s25 + $0x70] sm:$0xf]
        %v2662 = vld [vmem:[%s25 + $0x74] sm:$0xf]
        %v2663 = vld [vmem:[%s25 + $0x78] sm:$0xf]
        %v2664 = vld [vmem:[%s25 + $0x7c] sm:$0xf]
        %v2665 = vld [vmem:[#allocation10] sm:$0x1]
        %v2666 = vpack.c.bf16 %v2631, %v2629
        %v2667 = vpack.c.bf16 %v2632, %v2630
        %v2669 = vperm.slane %v2665, 0
        %v2703 = vunpack.c.l.b16 %v2633
        %v2704 = vunpack.c.l.b16 %v2634
        %v2705 = vunpack.c.l.b16 %v2635
        %v2706 = vunpack.c.l.b16 %v2636
        %v2707 = vunpack.c.l.b16 %v2637
        %v2708 = vunpack.c.l.b16 %v2638
        %v2709 = vunpack.c.l.b16 %v2639
        %v2710 = vunpack.c.l.b16 %v2640
        %v2711 = vunpack.c.l.b16 %v2641
        %v2712 = vunpack.c.l.b16 %v2642
        %v2713 = vunpack.c.l.b16 %v2643
        %v2714 = vunpack.c.l.b16 %v2644
        %v2715 = vunpack.c.l.b16 %v2645
        %v2716 = vunpack.c.l.b16 %v2646
        %v2717 = vunpack.c.l.b16 %v2647
        %v2718 = vunpack.c.l.b16 %v2648
        %v2719 = vunpack.c.l.b16 %v2649
        %v2720 = vunpack.c.l.b16 %v2650
        %v2721 = vunpack.c.l.b16 %v2651
        %v2722 = vunpack.c.l.b16 %v2652
        %v2723 = vunpack.c.l.b16 %v2653
        %v2724 = vunpack.c.l.b16 %v2654
        %v2725 = vunpack.c.l.b16 %v2655
        %v2726 = vunpack.c.l.b16 %v2656
        %v2727 = vunpack.c.l.b16 %v2657
        %v2728 = vunpack.c.l.b16 %v2658
        %v2729 = vunpack.c.l.b16 %v2659
        %v2730 = vunpack.c.l.b16 %v2660
        %v2731 = vunpack.c.l.b16 %v2661
        %v2732 = vunpack.c.l.b16 %v2662
        %v2733 = vunpack.c.l.b16 %v2663
        %v2734 = vunpack.c.l.b16 %v2664
        %v2735 = vpack.c.b16 %v2704, %v2703
        %v2736 = vpack.c.b16 %v2706, %v2705
        %v2737 = vpack.c.b16 %v2708, %v2707
        %v2738 = vpack.c.b16 %v2710, %v2709
        %v2739 = vpack.c.b16 %v2712, %v2711
        %v2740 = vpack.c.b16 %v2714, %v2713
        %v2741 = vpack.c.b16 %v2716, %v2715
        %v2742 = vpack.c.b16 %v2718, %v2717
        %v2743 = vpack.c.b16 %v2720, %v2719
        %v2744 = vpack.c.b16 %v2722, %v2721
        %v2745 = vpack.c.b16 %v2724, %v2723
        %v2746 = vpack.c.b16 %v2726, %v2725
        %v2747 = vpack.c.b16 %v2728, %v2727
        %v2748 = vpack.c.b16 %v2730, %v2729
        %v2749 = vpack.c.b16 %v2732, %v2731
        %v2750 = vpack.c.b16 %v2734, %v2733
        %2767 = vmatpush.bf16.msra.mxu0 %v2742
        %2768 = vmatpush.bf16.msra.mxu0 %v2741
        %2769 = vmatpush.bf16.msra.mxu0 %v2740
        %2770 = vmatpush.bf16.msra.mxu0 %v2739
        %2771 = vmatpush.bf16.msra.mxu0 %v2738
        %2772 = vmatpush.bf16.msra.mxu0 %v2737
        %2773 = vmatpush.bf16.msra.mxu0 %v2736
        %2774 = vmatpush.bf16.msra.mxu0 %v2735
        %2775 = vmatmul.bf16.gmra.mxu0 %v2666
        %v2776 = vpop.f32.mrf.mxu0
        %v2777 = vadd.f32 %v2669, %v2776
        %v2778 = vpop.f32.mrf.mxu0
        %v2779 = vadd.f32 %v2669, %v2778
        %2780 = vdwg.mxu0
        %2781 = vmatpush.bf16.msra.mxu0 %v2750
        %2782 = vmatpush.bf16.msra.mxu0 %v2749
        %2783 = vmatpush.bf16.msra.mxu0 %v2748
        %2784 = vmatpush.bf16.msra.mxu0 %v2747
        %2785 = vmatpush.bf16.msra.mxu0 %v2746
        %2786 = vmatpush.bf16.msra.mxu0 %v2745
        %2787 = vmatpush.bf16.msra.mxu0 %v2744
        %2788 = vmatpush.bf16.msra.mxu0 %v2743
        %2789 = vmatmul.bf16.gmra.mxu0 %v2667
        %v2790 = vpop.f32.mrf.mxu0
        %v2791 = vadd.f32 %v2777, %v2790
        %v2792 = vpop.f32.mrf.mxu0
        %v2793 = vadd.f32 %v2779, %v2792
        %2794 = vdwg.mxu0
        %v2795 = vadd.f32 %v2791, %v2496
        %v2796 = vadd.f32 %v2793, %v2497
        %v2797 = vld [vmem:[#allocation11] sm:$0x1]
        %v2798 = vld [vmem:[#allocation13] sm:$0x1]
        %2799 = vadd.xlane.f32.xlu0 %v2795
        %v2800 = vpop.xlane.xlu0 %2799
        %2801 = vadd.xlane.f32.xlu0 %v2796
        %v2802 = vpop.xlane.xlu0 %2801
        %v2803 = vmul.f32 %v2800, %v2451
        %v2804 = vmul.f32 %v2802, %v2451
        %v2805 = vsub.f32 %v2795, %v2803
        %v2806 = vsub.f32 %v2796, %v2804
        %v2807 = vmul.f32 %v2805, %v2805
        %v2808 = vmul.f32 %v2806, %v2806
        %2809 = vadd.xlane.f32.xlu0 %v2807
        %v2810 = vpop.xlane.xlu0 %2809
        %2811 = vadd.xlane.f32.xlu0 %v2808
        %v2812 = vpop.xlane.xlu0 %2811
        %v2813 = vmul.f32 %v2810, %v2451
        %v2814 = vmul.f32 %v2812, %v2451
        %v2815 = vadd.f32 %v2813, 1e-05
        %v2816 = vadd.f32 %v2814, 1e-05
        %v2817 = vrsqrt.pop %v2815
        %v2818 = vmul.f32 %v2817, %v2815
        %v2819 = vmul.f32 %v2818, %v2817
        %v2820 = vmul.f32 0.5, %v2819
        %v2821 = vsub.f32 1.5, %v2820
        %v2822 = vmul.f32 %v2817, %v2821
        %vm2823 = vweird.f32 %v2815
        %vm2824 = vweird.f32 %v2817
        %vm2825 = vmor %vm2823, %vm2824
        %v2826 = vsel %vm2825, %v2817, %v2822
        %v2827 = vrsqrt.pop %v2816
        %v2828 = vmul.f32 %v2827, %v2816
        %v2829 = vmul.f32 %v2828, %v2827
        %v2830 = vmul.f32 0.5, %v2829
        %v2831 = vsub.f32 1.5, %v2830
        %v2832 = vmul.f32 %v2827, %v2831
        %vm2833 = vweird.f32 %v2816
        %vm2834 = vweird.f32 %v2827
        %vm2835 = vmor %vm2833, %vm2834
        %v2836 = vsel %vm2835, %v2827, %v2832
        %v2837 = vmul.f32 %v2805, %v2826
        %v2838 = vmul.f32 %v2806, %v2836
        %v2840 = vperm.slane %v2797, 0
        %v2842 = vmul.f32 %v2837, %v2840
        %v2843 = vmul.f32 %v2838, %v2840
        %v2845 = vperm.slane %v2798, 0
        %v2847 = vadd.f32 %v2842, %v2845
        %v2848 = vadd.f32 %v2843, %v2845
        %s2849 = scalar_lea.vmem %s9, 192
        %v2850 = vld [vmem:[%s2849] sm:$0xff]
        %v2851 = vld [vmem:[%s2849 + $0x8] sm:$0xf]
        %v2852 = vld [vmem:[%s2849 + $0xc] sm:$0xff]
        %v2853 = vld [vmem:[%s2849 + $0x14] sm:$0xf]
        %v2854 = vld [vmem:[%s2849 + $0x18] sm:$0xff]
        %v2855 = vld [vmem:[%s2849 + $0x20] sm:$0xf]
        %v2856 = vld [vmem:[%s2849 + $0x24] sm:$0xff]
        %v2857 = vld [vmem:[%s2849 + $0x2c] sm:$0xf]
        %v2858 = vld [vmem:[%s2849 + $0x30] sm:$0xff]
        %v2859 = vld [vmem:[%s2849 + $0x38] sm:$0xf]
        %v2860 = vld [vmem:[%s2849 + $0x3c] sm:$0xff]
        %v2861 = vld [vmem:[%s2849 + $0x44] sm:$0xf]
        %v2862 = vld [vmem:[%s2849 + $0x48] sm:$0xff]
        %v2863 = vld [vmem:[%s2849 + $0x50] sm:$0xf]
        %v2864 = vld [vmem:[%s2849 + $0x54] sm:$0xff]
        %v2865 = vld [vmem:[%s2849 + $0x5c] sm:$0xf]
        %v2866 = vld [vmem:[%s2849 + $0x60] sm:$0xff]
        %v2867 = vld [vmem:[%s2849 + $0x68] sm:$0xf]
        %v2868 = vld [vmem:[%s2849 + $0x6c] sm:$0xff]
        %v2869 = vld [vmem:[%s2849 + $0x74] sm:$0xf]
        %v2870 = vld [vmem:[%s2849 + $0x78] sm:$0xff]
        %v2871 = vld [vmem:[%s2849 + $0x80] sm:$0xf]
        %v2872 = vld [vmem:[%s2849 + $0x84] sm:$0xff]
        %v2873 = vld [vmem:[%s2849 + $0x8c] sm:$0xf]
        %v2874 = vld [vmem:[%s2849 + $0x90] sm:$0xff]
        %v2875 = vld [vmem:[%s2849 + $0x98] sm:$0xf]
        %v2876 = vld [vmem:[%s2849 + $0x9c] sm:$0xff]
        %v2877 = vld [vmem:[%s2849 + $0xa4] sm:$0xf]
        %v2878 = vld [vmem:[%s2849 + $0xa8] sm:$0xff]
        %v2879 = vld [vmem:[%s2849 + $0xb0] sm:$0xf]
        %v2880 = vld [vmem:[%s2849 + $0xb4] sm:$0xff]
        %v2881 = vld [vmem:[%s2849 + $0xbc] sm:$0xf]
        %s2882 = scalar_lea.vmem %s11, 3
        %v2883 = vld [vmem:[%s2882] sm:$0x7]
        %s2884 = scalar_lea.vmem %s13, 64
        %v2885 = vld [vmem:[%s2884] sm:$0xf]
        %v2886 = vld [vmem:[%s2884 + $0x4] sm:$0xf]
        %v2887 = vld [vmem:[%s2884 + $0x8] sm:$0xf]
        %v2888 = vld [vmem:[%s2884 + $0xc] sm:$0xf]
        %v2889 = vld [vmem:[%s2884 + $0x10] sm:$0xf]
        %v2890 = vld [vmem:[%s2884 + $0x14] sm:$0xf]
        %v2891 = vld [vmem:[%s2884 + $0x18] sm:$0xf]
        %v2892 = vld [vmem:[%s2884 + $0x1c] sm:$0xf]
        %v2893 = vld [vmem:[%s2884 + $0x20] sm:$0xf]
        %v2894 = vld [vmem:[%s2884 + $0x24] sm:$0xf]
        %v2895 = vld [vmem:[%s2884 + $0x28] sm:$0xf]
        %v2896 = vld [vmem:[%s2884 + $0x2c] sm:$0xf]
        %v2897 = vld [vmem:[%s2884 + $0x30] sm:$0xf]
        %v2898 = vld [vmem:[%s2884 + $0x34] sm:$0xf]
        %v2899 = vld [vmem:[%s2884 + $0x38] sm:$0xf]
        %v2900 = vld [vmem:[%s2884 + $0x3c] sm:$0xf]
        %s2901 = scalar_lea.vmem %s15, 1
        %v2902 = vld [vmem:[%s2901] sm:$0x1]
        %v2903 = vpack.c.bf16 %v2848, %v2847
        %v2905 = vperm.slane %v2883, 0
        %v2906 = vperm.slane %v2883, 1
        %v2907 = vperm.slane %v2883, 2
        %v2943 = vunpack.c.l.b16 %v2850
        %v2944 = vunpack.c.h.b16 %v2850
        %v2945 = vunpack.c.l.b16 %v2851
        %v2946 = vunpack.c.l.b16 %v2852
        %v2947 = vunpack.c.h.b16 %v2852
        %v2948 = vunpack.c.l.b16 %v2853
        %v2949 = vunpack.c.l.b16 %v2854
        %v2950 = vunpack.c.h.b16 %v2854
        %v2951 = vunpack.c.l.b16 %v2855
        %v2952 = vunpack.c.l.b16 %v2856
        %v2953 = vunpack.c.h.b16 %v2856
        %v2954 = vunpack.c.l.b16 %v2857
        %v2955 = vunpack.c.l.b16 %v2858
        %v2956 = vunpack.c.h.b16 %v2858
        %v2957 = vunpack.c.l.b16 %v2859
        %v2958 = vunpack.c.l.b16 %v2860
        %v2959 = vunpack.c.h.b16 %v2860
        %v2960 = vunpack.c.l.b16 %v2861
        %v2961 = vunpack.c.l.b16 %v2862
        %v2962 = vunpack.c.h.b16 %v2862
        %v2963 = vunpack.c.l.b16 %v2863
        %v2964 = vunpack.c.l.b16 %v2864
        %v2965 = vunpack.c.h.b16 %v2864
        %v2966 = vunpack.c.l.b16 %v2865
        %v2967 = vunpack.c.l.b16 %v2866
        %v2968 = vunpack.c.h.b16 %v2866
        %v2969 = vunpack.c.l.b16 %v2867
        %v2970 = vunpack.c.l.b16 %v2868
        %v2971 = vunpack.c.h.b16 %v2868
        %v2972 = vunpack.c.l.b16 %v2869
        %v2973 = vunpack.c.l.b16 %v2870
        %v2974 = vunpack.c.h.b16 %v2870
        %v2975 = vunpack.c.l.b16 %v2871
        %v2976 = vunpack.c.l.b16 %v2872
        %v2977 = vunpack.c.h.b16 %v2872
        %v2978 = vunpack.c.l.b16 %v2873
        %v2979 = vunpack.c.l.b16 %v2874
        %v2980 = vunpack.c.h.b16 %v2874
        %v2981 = vunpack.c.l.b16 %v2875
        %v2982 = vunpack.c.l.b16 %v2876
        %v2983 = vunpack.c.h.b16 %v2876
        %v2984 = vunpack.c.l.b16 %v2877
        %v2985 = vunpack.c.l.b16 %v2878
        %v2986 = vunpack.c.h.b16 %v2878
        %v2987 = vunpack.c.l.b16 %v2879
        %v2988 = vunpack.c.l.b16 %v2880
        %v2989 = vunpack.c.h.b16 %v2880
        %v2990 = vunpack.c.l.b16 %v2881
        %v2991 = vpack.c.b16 %v2946, %v2943
        %v2992 = vpack.c.b16 %v2947, %v2944
        %v2993 = vpack.c.b16 %v2948, %v2945
        %v2994 = vpack.c.b16 %v2952, %v2949
        %v2995 = vpack.c.b16 %v2953, %v2950
        %v2996 = vpack.c.b16 %v2954, %v2951
        %v2997 = vpack.c.b16 %v2958, %v2955
        %v2998 = vpack.c.b16 %v2959, %v2956
        %v2999 = vpack.c.b16 %v2960, %v2957
        %v3000 = vpack.c.b16 %v2964, %v2961
        %v3001 = vpack.c.b16 %v2965, %v2962
        %v3002 = vpack.c.b16 %v2966, %v2963
        %v3003 = vpack.c.b16 %v2970, %v2967
        %v3004 = vpack.c.b16 %v2971, %v2968
        %v3005 = vpack.c.b16 %v2972, %v2969
        %v3006 = vpack.c.b16 %v2976, %v2973
        %v3007 = vpack.c.b16 %v2977, %v2974
        %v3008 = vpack.c.b16 %v2978, %v2975
        %v3009 = vpack.c.b16 %v2982, %v2979
        %v3010 = vpack.c.b16 %v2983, %v2980
        %v3011 = vpack.c.b16 %v2984, %v2981
        %v3012 = vpack.c.b16 %v2988, %v2985
        %v3013 = vpack.c.b16 %v2989, %v2986
        %v3014 = vpack.c.b16 %v2990, %v2987
        %3039 = vmatpush.bf16.msra.mxu0 %v3012
        %3040 = vmatpush.bf16.msra.mxu0 %v3009
        %3041 = vmatpush.bf16.msra.mxu0 %v3006
        %3042 = vmatpush.bf16.msra.mxu0 %v3003
        %3043 = vmatpush.bf16.msra.mxu0 %v3000
        %3044 = vmatpush.bf16.msra.mxu0 %v2997
        %3045 = vmatpush.bf16.msra.mxu0 %v2994
        %3046 = vmatpush.bf16.msra.mxu0 %v2991
        %3047 = vmatmul.bf16.gmra.mxu0 %v2903
        %v3048 = vpop.f32.mrf.mxu0
        %v3049 = vadd.f32 %v2905, %v3048
        %v3050 = vpop.f32.mrf.mxu0
        %v3051 = vadd.f32 %v2905, %v3050
        %3052 = vdwg.mxu0
        %3053 = vmatpush.bf16.msra.mxu0 %v3013
        %3054 = vmatpush.bf16.msra.mxu0 %v3010
        %3055 = vmatpush.bf16.msra.mxu0 %v3007
        %3056 = vmatpush.bf16.msra.mxu0 %v3004
        %3057 = vmatpush.bf16.msra.mxu0 %v3001
        %3058 = vmatpush.bf16.msra.mxu0 %v2998
        %3059 = vmatpush.bf16.msra.mxu0 %v2995
        %3060 = vmatpush.bf16.msra.mxu0 %v2992
        %3061 = vmatmul.bf16.gmra.mxu0 %v2903
        %v3062 = vpop.f32.mrf.mxu0
        %v3063 = vadd.f32 %v2906, %v3062
        %v3064 = vpop.f32.mrf.mxu0
        %v3065 = vadd.f32 %v2906, %v3064
        %3066 = vdwg.mxu0
        %3067 = vmatpush.bf16.msra.mxu0 %v3014
        %3068 = vmatpush.bf16.msra.mxu0 %v3011
        %3069 = vmatpush.bf16.msra.mxu0 %v3008
        %3070 = vmatpush.bf16.msra.mxu0 %v3005
        %3071 = vmatpush.bf16.msra.mxu0 %v3002
        %3072 = vmatpush.bf16.msra.mxu0 %v2999
        %3073 = vmatpush.bf16.msra.mxu0 %v2996
        %3074 = vmatpush.bf16.msra.mxu0 %v2993
        %3075 = vmatmul.bf16.gmra.mxu0 %v2903
        %v3076 = vpop.f32.mrf.mxu0
        %v3077 = vadd.f32 %v2907, %v3076
        %v3078 = vpop.f32.mrf.mxu0
        %v3079 = vadd.f32 %v2907, %v3078
        %3080 = vdwg.mxu0
        %v3081 = vpack.c.bf16 %v3051, %v3049
        %3084 = vrot.lane.b32.xlu0 %v3049, 96
        %v3085 = vpop.permute.xlu0 %3084
        %3086 = vrot.lane.b32.xlu0 %v3051, 96
        %v3087 = vpop.permute.xlu0 %3086
        %3090 = vxpose.xlu0.b32.start [1/16] %v3085, 128
        %3091 = vxpose.xlu0.b32.cont [2/16] %v3087, 128
        %3092 = vxpose.xlu0.b32.cont [3/16] 0.0, 128
        %3093 = vxpose.xlu0.b32.cont [4/16] 0.0, 128
        %3094 = vxpose.xlu0.b32.cont [5/16] 0.0, 128
        %3095 = vxpose.xlu0.b32.cont [6/16] 0.0, 128
        %3096 = vxpose.xlu0.b32.cont [7/16] 0.0, 128
        %3097 = vxpose.xlu0.b32.cont [8/16] 0.0, 128
        %3098 = vxpose.xlu0.b32.cont [9/16] 0.0, 128
        %3099 = vxpose.xlu0.b32.cont [10/16] 0.0, 128
        %3100 = vxpose.xlu0.b32.cont [11/16] 0.0, 128
        %3101 = vxpose.xlu0.b32.cont [12/16] 0.0, 128
        %3102 = vxpose.xlu0.b32.cont [13/16] 0.0, 128
        %3103 = vxpose.xlu0.b32.cont [14/16] 0.0, 128
        %3104 = vxpose.xlu0.b32.cont [15/16] 0.0, 128
        %3105 = vxpose.xlu0.b32.end [16/16] 0.0, 128
        %v3106 = vpop.trf.xlu0
        %v3107 = vpop.trf.xlu0
        %v3108 = vpop.trf.xlu0
        %v3109 = vpop.trf.xlu0
        %v3110 = vpop.trf.xlu0
        %v3111 = vpop.trf.xlu0
        %v3112 = vpop.trf.xlu0
        %v3113 = vpop.trf.xlu0
        %v3114 = vpop.trf.xlu0
        %v3115 = vpop.trf.xlu0
        %v3116 = vpop.trf.xlu0
        %v3117 = vpop.trf.xlu0
        %v3118 = vpop.trf.xlu0
        %v3119 = vpop.trf.xlu0
        %v3120 = vpop.trf.xlu0
        %v3121 = vpop.trf.xlu0
        %v3122 = vpack.c.bf16 %v3107, %v3106
        %v3123 = vpack.c.bf16 %v3109, %v3108
        %v3125 = vsel %vm1955, %v3081, 0
        %3127 = vmatpush.bf16.msra.mxu0 0
        %3128 = vmatpush.bf16.msra.mxu0 0
        %3129 = vmatpush.bf16.msra.mxu0 0
        %3130 = vmatpush.bf16.msra.mxu0 0
        %3131 = vmatpush.bf16.msra.mxu0 0
        %3132 = vmatpush.bf16.msra.mxu0 0
        %3133 = vmatpush.bf16.msra.mxu0 %v3123
        %3134 = vmatpush.bf16.msra.mxu0 %v3122
        %3135 = vmatmul.bf16.gmra.mxu0 %v3125
        %v3136 = vpop.f32.mrf.mxu0
        %v3137 = vadd.f32 0.0, %v3136
        %v3138 = vpop.f32.mrf.mxu0
        %v3139 = vadd.f32 0.0, %v3138
        %3140 = vdwg.mxu0
        %v3141 = vmul.f32 %v3137, 0.17677669
        %v3142 = vmul.f32 %v3139, 0.17677669
        %v3143 = vadd.f32 %v3141, %v1682
        %v3144 = vadd.f32 %v3142, %v1683
        %v3145 = vsel %vm1977, %v3143, -inf
        %3146 = vmax.xlane.f32.xlu0 %v3145
        %v3147 = vpop.xlane.xlu0 %3146
        %v3148 = vsel %vm1977, %v3144, -inf
        %3149 = vmax.xlane.f32.xlu0 %v3148
        %v3150 = vpop.xlane.xlu0 %3149
        %v3151 = vsub.f32 %v3143, %v3147
        %v3152 = vsub.f32 %v3144, %v3150
        %v3153 = vmul.f32 %v3151, 1.442695
        %v3154 = vpow.pop %v3153
        %v3155 = vmul.f32 %v3152, 1.442695
        %v3156 = vpow.pop %v3155
        %v3157 = vsel %vm1977, %v3154, 0.0
        %3158 = vadd.xlane.f32.xlu0 %v3157
        %v3159 = vpop.xlane.xlu0 %3158
        %v3160 = vsel %vm1977, %v3156, 0.0
        %3161 = vadd.xlane.f32.xlu0 %v3160
        %v3162 = vpop.xlane.xlu0 %3161
        %v3163 = vrcp.pop %v3159
        %v3164 = vrcp.pop %v3162
        %v3165 = vmul.f32 %v3154, %v3163
        %v3166 = vmul.f32 %v3156, %v3164
        %v3167 = vpack.c.bf16 %v3166, %v3165
        %3169 = vrot.lane.b32.xlu0 %v3081, 64
        %v3170 = vpop.permute.xlu0 %3169
        %v3173 = vsel %vm1977, %v3167, 0
        %3175 = vmatpush.bf16.msra.mxu0 0
        %3176 = vmatpush.bf16.msra.mxu0 0
        %3177 = vmatpush.bf16.msra.mxu0 0
        %3178 = vmatpush.bf16.msra.mxu0 0
        %3179 = vmatpush.bf16.msra.mxu0 0
        %3180 = vmatpush.bf16.msra.mxu0 0
        %3181 = vmatpush.bf16.msra.mxu0 0
        %3182 = vmatpush.bf16.msra.mxu0 %v3170
        %3183 = vmatmul.bf16.gmra.mxu0 %v3173
        %v3184 = vpop.f32.mrf.mxu0
        %v3185 = vadd.f32 0.0, %v3184
        %v3186 = vpop.f32.mrf.mxu0
        %v3187 = vadd.f32 0.0, %v3186
        %3188 = vdwg.mxu0
        %3189 = vxpose.xlu0.b32.start [1/16] %v3063, 128
        %3190 = vxpose.xlu0.b32.cont [2/16] %v3065, 128
        %3191 = vxpose.xlu0.b32.cont [3/16] 0.0, 128
        %3192 = vxpose.xlu0.b32.cont [4/16] 0.0, 128
        %3193 = vxpose.xlu0.b32.cont [5/16] 0.0, 128
        %3194 = vxpose.xlu0.b32.cont [6/16] 0.0, 128
        %3195 = vxpose.xlu0.b32.cont [7/16] 0.0, 128
        %3196 = vxpose.xlu0.b32.cont [8/16] 0.0, 128
        %3197 = vxpose.xlu0.b32.cont [9/16] 0.0, 128
        %3198 = vxpose.xlu0.b32.cont [10/16] 0.0, 128
        %3199 = vxpose.xlu0.b32.cont [11/16] 0.0, 128
        %3200 = vxpose.xlu0.b32.cont [12/16] 0.0, 128
        %3201 = vxpose.xlu0.b32.cont [13/16] 0.0, 128
        %3202 = vxpose.xlu0.b32.cont [14/16] 0.0, 128
        %3203 = vxpose.xlu0.b32.cont [15/16] 0.0, 128
        %3204 = vxpose.xlu0.b32.end [16/16] 0.0, 128
        %v3205 = vpop.trf.xlu0
        %v3206 = vpop.trf.xlu0
        %v3207 = vpop.trf.xlu0
        %v3208 = vpop.trf.xlu0
        %v3209 = vpop.trf.xlu0
        %v3210 = vpop.trf.xlu0
        %v3211 = vpop.trf.xlu0
        %v3212 = vpop.trf.xlu0
        %v3213 = vpop.trf.xlu0
        %v3214 = vpop.trf.xlu0
        %v3215 = vpop.trf.xlu0
        %v3216 = vpop.trf.xlu0
        %v3217 = vpop.trf.xlu0
        %v3218 = vpop.trf.xlu0
        %v3219 = vpop.trf.xlu0
        %v3220 = vpop.trf.xlu0
        %v3221 = vpack.c.bf16 %v3206, %v3205
        %v3222 = vpack.c.bf16 %v3208, %v3207
        %3223 = vrot.lane.b32.xlu0 %v3081, 32
        %v3224 = vpop.permute.xlu0 %3223
        %v3226 = vsel %vm1955, %v3224, 0
        %3228 = vmatpush.bf16.msra.mxu0 0
        %3229 = vmatpush.bf16.msra.mxu0 0
        %3230 = vmatpush.bf16.msra.mxu0 0
        %3231 = vmatpush.bf16.msra.mxu0 0
        %3232 = vmatpush.bf16.msra.mxu0 0
        %3233 = vmatpush.bf16.msra.mxu0 0
        %3234 = vmatpush.bf16.msra.mxu0 %v3222
        %3235 = vmatpush.bf16.msra.mxu0 %v3221
        %3236 = vmatmul.bf16.gmra.mxu0 %v3226
        %v3237 = vpop.f32.mrf.mxu0
        %v3238 = vadd.f32 0.0, %v3237
        %v3239 = vpop.f32.mrf.mxu0
        %v3240 = vadd.f32 0.0, %v3239
        %3241 = vdwg.mxu0
        %v3242 = vmul.f32 %v3238, 0.17677669
        %v3243 = vmul.f32 %v3240, 0.17677669
        %v3244 = vadd.f32 %v3242, %v1682
        %v3245 = vadd.f32 %v3243, %v1683
        %v3246 = vsel %vm1977, %v3244, -inf
        %3247 = vmax.xlane.f32.xlu0 %v3246
        %v3248 = vpop.xlane.xlu0 %3247
        %v3249 = vsel %vm1977, %v3245, -inf
        %3250 = vmax.xlane.f32.xlu0 %v3249
        %v3251 = vpop.xlane.xlu0 %3250
        %v3252 = vsub.f32 %v3244, %v3248
        %v3253 = vsub.f32 %v3245, %v3251
        %v3254 = vmul.f32 %v3252, 1.442695
        %v3255 = vpow.pop %v3254
        %v3256 = vmul.f32 %v3253, 1.442695
        %v3257 = vpow.pop %v3256
        %v3258 = vsel %vm1977, %v3255, 0.0
        %3259 = vadd.xlane.f32.xlu0 %v3258
        %v3260 = vpop.xlane.xlu0 %3259
        %v3261 = vsel %vm1977, %v3257, 0.0
        %3262 = vadd.xlane.f32.xlu0 %v3261
        %v3263 = vpop.xlane.xlu0 %3262
        %v3264 = vrcp.pop %v3260
        %v3265 = vrcp.pop %v3263
        %v3266 = vmul.f32 %v3255, %v3264
        %v3267 = vmul.f32 %v3257, %v3265
        %v3268 = vpack.c.bf16 %v3267, %v3266
        %v3269 = vpack.c.bf16 %v3065, %v3063
        %3271 = vrot.lane.b32.xlu0 %v3269, 96
        %v3272 = vpop.permute.xlu0 %3271
        %v3275 = vsel %vm1977, %v3268, 0
        %3277 = vmatpush.bf16.msra.mxu0 0
        %3278 = vmatpush.bf16.msra.mxu0 0
        %3279 = vmatpush.bf16.msra.mxu0 0
        %3280 = vmatpush.bf16.msra.mxu0 0
        %3281 = vmatpush.bf16.msra.mxu0 0
        %3282 = vmatpush.bf16.msra.mxu0 0
        %3283 = vmatpush.bf16.msra.mxu0 0
        %3284 = vmatpush.bf16.msra.mxu0 %v3272
        %3285 = vmatmul.bf16.gmra.mxu0 %v3275
        %v3286 = vpop.f32.mrf.mxu0
        %v3287 = vadd.f32 0.0, %v3286
        %v3288 = vpop.f32.mrf.mxu0
        %v3289 = vadd.f32 0.0, %v3288
        %3290 = vdwg.mxu0
        %3293 = vrot.lane.b32.xlu0 %v3063, 32
        %v3294 = vpop.permute.xlu0 %3293
        %3295 = vrot.lane.b32.xlu0 %v3065, 32
        %v3296 = vpop.permute.xlu0 %3295
        %3299 = vxpose.xlu0.b32.start [1/16] %v3294, 128
        %3300 = vxpose.xlu0.b32.cont [2/16] %v3296, 128
        %3301 = vxpose.xlu0.b32.cont [3/16] 0.0, 128
        %3302 = vxpose.xlu0.b32.cont [4/16] 0.0, 128
        %3303 = vxpose.xlu0.b32.cont [5/16] 0.0, 128
        %3304 = vxpose.xlu0.b32.cont [6/16] 0.0, 128
        %3305 = vxpose.xlu0.b32.cont [7/16] 0.0, 128
        %3306 = vxpose.xlu0.b32.cont [8/16] 0.0, 128
        %3307 = vxpose.xlu0.b32.cont [9/16] 0.0, 128
        %3308 = vxpose.xlu0.b32.cont [10/16] 0.0, 128
        %3309 = vxpose.xlu0.b32.cont [11/16] 0.0, 128
        %3310 = vxpose.xlu0.b32.cont [12/16] 0.0, 128
        %3311 = vxpose.xlu0.b32.cont [13/16] 0.0, 128
        %3312 = vxpose.xlu0.b32.cont [14/16] 0.0, 128
        %3313 = vxpose.xlu0.b32.cont [15/16] 0.0, 128
        %3314 = vxpose.xlu0.b32.end [16/16] 0.0, 128
        %v3315 = vpop.trf.xlu0
        %v3316 = vpop.trf.xlu0
        %v3317 = vpop.trf.xlu0
        %v3318 = vpop.trf.xlu0
        %v3319 = vpop.trf.xlu0
        %v3320 = vpop.trf.xlu0
        %v3321 = vpop.trf.xlu0
        %v3322 = vpop.trf.xlu0
        %v3323 = vpop.trf.xlu0
        %v3324 = vpop.trf.xlu0
        %v3325 = vpop.trf.xlu0
        %v3326 = vpop.trf.xlu0
        %v3327 = vpop.trf.xlu0
        %v3328 = vpop.trf.xlu0
        %v3329 = vpop.trf.xlu0
        %v3330 = vpop.trf.xlu0
        %v3331 = vpack.c.bf16 %v3316, %v3315
        %v3332 = vpack.c.bf16 %v3318, %v3317
        %3333 = vrot.lane.b32.xlu0 %v3269, 64
        %v3334 = vpop.permute.xlu0 %3333
        %v3336 = vsel %vm1955, %v3334, 0
        %3338 = vmatpush.bf16.msra.mxu0 0
        %3339 = vmatpush.bf16.msra.mxu0 0
        %3340 = vmatpush.bf16.msra.mxu0 0
        %3341 = vmatpush.bf16.msra.mxu0 0
        %3342 = vmatpush.bf16.msra.mxu0 0
        %3343 = vmatpush.bf16.msra.mxu0 0
        %3344 = vmatpush.bf16.msra.mxu0 %v3332
        %3345 = vmatpush.bf16.msra.mxu0 %v3331
        %3346 = vmatmul.bf16.gmra.mxu0 %v3336
        %v3347 = vpop.f32.mrf.mxu0
        %v3348 = vadd.f32 0.0, %v3347
        %v3349 = vpop.f32.mrf.mxu0
        %v3350 = vadd.f32 0.0, %v3349
        %3351 = vdwg.mxu0
        %v3352 = vmul.f32 %v3348, 0.17677669
        %v3353 = vmul.f32 %v3350, 0.17677669
        %v3354 = vadd.f32 %v3352, %v1682
        %v3355 = vadd.f32 %v3353, %v1683
        %v3356 = vsel %vm1977, %v3354, -inf
        %3357 = vmax.xlane.f32.xlu0 %v3356
        %v3358 = vpop.xlane.xlu0 %3357
        %v3359 = vsel %vm1977, %v3355, -inf
        %3360 = vmax.xlane.f32.xlu0 %v3359
        %v3361 = vpop.xlane.xlu0 %3360
        %v3362 = vsub.f32 %v3354, %v3358
        %v3363 = vsub.f32 %v3355, %v3361
        %v3364 = vmul.f32 %v3362, 1.442695
        %v3365 = vpow.pop %v3364
        %v3366 = vmul.f32 %v3363, 1.442695
        %v3367 = vpow.pop %v3366
        %v3368 = vsel %vm1977, %v3365, 0.0
        %3369 = vadd.xlane.f32.xlu0 %v3368
        %v3370 = vpop.xlane.xlu0 %3369
        %v3371 = vsel %vm1977, %v3367, 0.0
        %3372 = vadd.xlane.f32.xlu0 %v3371
        %v3373 = vpop.xlane.xlu0 %3372
        %v3374 = vrcp.pop %v3370
        %v3375 = vrcp.pop %v3373
        %v3376 = vmul.f32 %v3365, %v3374
        %v3377 = vmul.f32 %v3367, %v3375
        %v3378 = vpack.c.bf16 %v3377, %v3376
        %v3379 = vpack.c.bf16 %v3079, %v3077
        %v3381 = vsel %vm1977, %v3378, 0
        %3383 = vmatpush.bf16.msra.mxu0 0
        %3384 = vmatpush.bf16.msra.mxu0 0
        %3385 = vmatpush.bf16.msra.mxu0 0
        %3386 = vmatpush.bf16.msra.mxu0 0
        %3387 = vmatpush.bf16.msra.mxu0 0
        %3388 = vmatpush.bf16.msra.mxu0 0
        %3389 = vmatpush.bf16.msra.mxu0 0
        %3390 = vmatpush.bf16.msra.mxu0 %v3379
        %3391 = vmatmul.bf16.gmra.mxu0 %v3381
        %v3392 = vpop.f32.mrf.mxu0
        %v3393 = vadd.f32 0.0, %v3392
        %v3394 = vpop.f32.mrf.mxu0
        %v3395 = vadd.f32 0.0, %v3394
        %3396 = vdwg.mxu0
        %3399 = vrot.lane.b32.xlu0 %v3077, 64
        %v3400 = vpop.permute.xlu0 %3399
        %3401 = vrot.lane.b32.xlu0 %v3079, 64
        %v3402 = vpop.permute.xlu0 %3401
        %3405 = vxpose.xlu0.b32.start [1/16] %v3400, 128
        %3406 = vxpose.xlu0.b32.cont [2/16] %v3402, 128
        %3407 = vxpose.xlu0.b32.cont [3/16] 0.0, 128
        %3408 = vxpose.xlu0.b32.cont [4/16] 0.0, 128
        %3409 = vxpose.xlu0.b32.cont [5/16] 0.0, 128
        %3410 = vxpose.xlu0.b32.cont [6/16] 0.0, 128
        %3411 = vxpose.xlu0.b32.cont [7/16] 0.0, 128
        %3412 = vxpose.xlu0.b32.cont [8/16] 0.0, 128
        %3413 = vxpose.xlu0.b32.cont [9/16] 0.0, 128
        %3414 = vxpose.xlu0.b32.cont [10/16] 0.0, 128
        %3415 = vxpose.xlu0.b32.cont [11/16] 0.0, 128
        %3416 = vxpose.xlu0.b32.cont [12/16] 0.0, 128
        %3417 = vxpose.xlu0.b32.cont [13/16] 0.0, 128
        %3418 = vxpose.xlu0.b32.cont [14/16] 0.0, 128
        %3419 = vxpose.xlu0.b32.cont [15/16] 0.0, 128
        %3420 = vxpose.xlu0.b32.end [16/16] 0.0, 128
        %v3421 = vpop.trf.xlu0
        %v3422 = vpop.trf.xlu0
        %v3423 = vpop.trf.xlu0
        %v3424 = vpop.trf.xlu0
        %v3425 = vpop.trf.xlu0
        %v3426 = vpop.trf.xlu0
        %v3427 = vpop.trf.xlu0
        %v3428 = vpop.trf.xlu0
        %v3429 = vpop.trf.xlu0
        %v3430 = vpop.trf.xlu0
        %v3431 = vpop.trf.xlu0
        %v3432 = vpop.trf.xlu0
        %v3433 = vpop.trf.xlu0
        %v3434 = vpop.trf.xlu0
        %v3435 = vpop.trf.xlu0
        %v3436 = vpop.trf.xlu0
        %v3437 = vpack.c.bf16 %v3422, %v3421
        %v3438 = vpack.c.bf16 %v3424, %v3423
        %3440 = vrot.lane.b32.xlu0 %v3379, 96
        %v3441 = vpop.permute.xlu0 %3440
        %v3443 = vsel %vm1955, %v3441, 0
        %3445 = vmatpush.bf16.msra.mxu0 0
        %3446 = vmatpush.bf16.msra.mxu0 0
        %3447 = vmatpush.bf16.msra.mxu0 0
        %3448 = vmatpush.bf16.msra.mxu0 0
        %3449 = vmatpush.bf16.msra.mxu0 0
        %3450 = vmatpush.bf16.msra.mxu0 0
        %3451 = vmatpush.bf16.msra.mxu0 %v3438
        %3452 = vmatpush.bf16.msra.mxu0 %v3437
        %3453 = vmatmul.bf16.gmra.mxu0 %v3443
        %v3454 = vpop.f32.mrf.mxu0
        %v3455 = vadd.f32 0.0, %v3454
        %v3456 = vpop.f32.mrf.mxu0
        %v3457 = vadd.f32 0.0, %v3456
        %3458 = vdwg.mxu0
        %v3459 = vmul.f32 %v3455, 0.17677669
        %v3460 = vmul.f32 %v3457, 0.17677669
        %v3461 = vadd.f32 %v3459, %v1682
        %v3462 = vadd.f32 %v3460, %v1683
        %v3463 = vsel %vm1977, %v3461, -inf
        %3464 = vmax.xlane.f32.xlu0 %v3463
        %v3465 = vpop.xlane.xlu0 %3464
        %v3466 = vsel %vm1977, %v3462, -inf
        %3467 = vmax.xlane.f32.xlu0 %v3466
        %v3468 = vpop.xlane.xlu0 %3467
        %v3469 = vsub.f32 %v3461, %v3465
        %v3470 = vsub.f32 %v3462, %v3468
        %v3471 = vmul.f32 %v3469, 1.442695
        %v3472 = vpow.pop %v3471
        %v3473 = vmul.f32 %v3470, 1.442695
        %v3474 = vpow.pop %v3473
        %v3475 = vsel %vm1977, %v3472, 0.0
        %3476 = vadd.xlane.f32.xlu0 %v3475
        %v3477 = vpop.xlane.xlu0 %3476
        %v3478 = vsel %vm1977, %v3474, 0.0
        %3479 = vadd.xlane.f32.xlu0 %v3478
        %v3480 = vpop.xlane.xlu0 %3479
        %v3481 = vrcp.pop %v3477
        %v3482 = vrcp.pop %v3480
        %v3483 = vmul.f32 %v3472, %v3481
        %v3484 = vmul.f32 %v3474, %v3482
        %v3485 = vpack.c.bf16 %v3484, %v3483
        %3486 = vrot.lane.b32.xlu0 %v3379, 32
        %v3487 = vpop.permute.xlu0 %3486
        %v3490 = vsel %vm1977, %v3485, 0
        %3492 = vmatpush.bf16.msra.mxu0 0
        %3493 = vmatpush.bf16.msra.mxu0 0
        %3494 = vmatpush.bf16.msra.mxu0 0
        %3495 = vmatpush.bf16.msra.mxu0 0
        %3496 = vmatpush.bf16.msra.mxu0 0
        %3497 = vmatpush.bf16.msra.mxu0 0
        %3498 = vmatpush.bf16.msra.mxu0 0
        %3499 = vmatpush.bf16.msra.mxu0 %v3487
        %3500 = vmatmul.bf16.gmra.mxu0 %v3490
        %v3501 = vpop.f32.mrf.mxu0
        %v3502 = vadd.f32 0.0, %v3501
        %v3503 = vpop.f32.mrf.mxu0
        %v3504 = vadd.f32 0.0, %v3503
        %3505 = vdwg.mxu0
        %3508 = vrot.lane.b32.xlu0 %v3287, 32
        %v3509 = vpop.permute.xlu0 %3508
        %3510 = vrot.lane.b32.xlu0 %v3289, 32
        %v3511 = vpop.permute.xlu0 %3510
        %3516 = vrot.lane.b32.xlu0 %v3393, 64
        %v3517 = vpop.permute.xlu0 %3516
        %3518 = vrot.lane.b32.xlu0 %v3395, 64
        %v3519 = vpop.permute.xlu0 %3518
        %3524 = vrot.lane.b32.xlu0 %v3502, 96
        %v3525 = vpop.permute.xlu0 %3524
        %3526 = vrot.lane.b32.xlu0 %v3504, 96
        %v3527 = vpop.permute.xlu0 %3526
        %v3530 = vsel %vm1955, %v3185, %v3509
        %v3531 = vsel %vm1955, %v3187, %v3511
        %v3532 = vsel %vm2365, %v3530, %v3517
        %v3533 = vsel %vm2365, %v3531, %v3519
        %v3534 = vsel %vm2368, %v3532, %v3525
        %v3535 = vsel %vm2368, %v3533, %v3527
        %v3536 = vpack.c.bf16 %v3535, %v3534
        %v3538 = vperm.slane %v2902, 0
        %v3556 = vunpack.c.l.b16 %v2885
        %v3557 = vunpack.c.l.b16 %v2886
        %v3558 = vunpack.c.l.b16 %v2887
        %v3559 = vunpack.c.l.b16 %v2888
        %v3560 = vunpack.c.l.b16 %v2889
        %v3561 = vunpack.c.l.b16 %v2890
        %v3562 = vunpack.c.l.b16 %v2891
        %v3563 = vunpack.c.l.b16 %v2892
        %v3564 = vunpack.c.l.b16 %v2893
        %v3565 = vunpack.c.l.b16 %v2894
        %v3566 = vunpack.c.l.b16 %v2895
        %v3567 = vunpack.c.l.b16 %v2896
        %v3568 = vunpack.c.l.b16 %v2897
        %v3569 = vunpack.c.l.b16 %v2898
        %v3570 = vunpack.c.l.b16 %v2899
        %v3571 = vunpack.c.l.b16 %v2900
        %v3572 = vpack.c.b16 %v3557, %v3556
        %v3573 = vpack.c.b16 %v3559, %v3558
        %v3574 = vpack.c.b16 %v3561, %v3560
        %v3575 = vpack.c.b16 %v3563, %v3562
        %v3576 = vpack.c.b16 %v3565, %v3564
        %v3577 = vpack.c.b16 %v3567, %v3566
        %v3578 = vpack.c.b16 %v3569, %v3568
        %v3579 = vpack.c.b16 %v3571, %v3570
        %3588 = vmatpush.bf16.msra.mxu0 %v3579
        %3589 = vmatpush.bf16.msra.mxu0 %v3578
        %3590 = vmatpush.bf16.msra.mxu0 %v3577
        %3591 = vmatpush.bf16.msra.mxu0 %v3576
        %3592 = vmatpush.bf16.msra.mxu0 %v3575
        %3593 = vmatpush.bf16.msra.mxu0 %v3574
        %3594 = vmatpush.bf16.msra.mxu0 %v3573
        %3595 = vmatpush.bf16.msra.mxu0 %v3572
        %3596 = vmatmul.bf16.gmra.mxu0 %v3536
        %v3597 = vpop.f32.mrf.mxu0
        %v3598 = vadd.f32 %v3538, %v3597
        %v3599 = vpop.f32.mrf.mxu0
        %v3600 = vadd.f32 %v3538, %v3599
        %3601 = vdwg.mxu0
        %v3602 = vadd.f32 %v3598, %v2847
        %v3603 = vadd.f32 %v3600, %v2848
        %s3604 = scalar_lea.vmem [#allocation5], 1
        %v3605 = vld [vmem:[%s3604] sm:$0x1]
        %s3606 = scalar_lea.vmem [#allocation7], 1
        %v3607 = vld [vmem:[%s3606] sm:$0x1]
        %3608 = vadd.xlane.f32.xlu0 %v3602
        %v3609 = vpop.xlane.xlu0 %3608
        %3610 = vadd.xlane.f32.xlu0 %v3603
        %v3611 = vpop.xlane.xlu0 %3610
        %v3612 = vmul.f32 %v3609, %v2451
        %v3613 = vmul.f32 %v3611, %v2451
        %v3614 = vsub.f32 %v3602, %v3612
        %v3615 = vsub.f32 %v3603, %v3613
        %v3616 = vmul.f32 %v3614, %v3614
        %v3617 = vmul.f32 %v3615, %v3615
        %3618 = vadd.xlane.f32.xlu0 %v3616
        %v3619 = vpop.xlane.xlu0 %3618
        %3620 = vadd.xlane.f32.xlu0 %v3617
        %v3621 = vpop.xlane.xlu0 %3620
        %v3622 = vmul.f32 %v3619, %v2451
        %v3623 = vmul.f32 %v3621, %v2451
        %v3624 = vadd.f32 %v3622, 1e-05
        %v3625 = vadd.f32 %v3623, 1e-05
        %v3626 = vrsqrt.pop %v3624
        %v3627 = vmul.f32 %v3626, %v3624
        %v3628 = vmul.f32 %v3627, %v3626
        %v3629 = vmul.f32 0.5, %v3628
        %v3630 = vsub.f32 1.5, %v3629
        %v3631 = vmul.f32 %v3626, %v3630
        %vm3632 = vweird.f32 %v3624
        %vm3633 = vweird.f32 %v3626
        %vm3634 = vmor %vm3632, %vm3633
        %v3635 = vsel %vm3634, %v3626, %v3631
        %v3636 = vrsqrt.pop %v3625
        %v3637 = vmul.f32 %v3636, %v3625
        %v3638 = vmul.f32 %v3637, %v3636
        %v3639 = vmul.f32 0.5, %v3638
        %v3640 = vsub.f32 1.5, %v3639
        %v3641 = vmul.f32 %v3636, %v3640
        %vm3642 = vweird.f32 %v3625
        %vm3643 = vweird.f32 %v3636
        %vm3644 = vmor %vm3642, %vm3643
        %v3645 = vsel %vm3644, %v3636, %v3641
        %v3646 = vmul.f32 %v3614, %v3635
        %v3647 = vmul.f32 %v3615, %v3645
        %v3649 = vperm.slane %v3605, 0
        %v3651 = vmul.f32 %v3646, %v3649
        %v3652 = vmul.f32 %v3647, %v3649
        %v3654 = vperm.slane %v3607, 0
        %v3656 = vadd.f32 %v3651, %v3654
        %v3657 = vadd.f32 %v3652, %v3654
        %s3658 = scalar_lea.vmem %s21, 128
        %v3659 = vld [vmem:[%s3658] sm:$0xff]
        %v3660 = vld [vmem:[%s3658 + $0x8] sm:$0xff]
        %v3661 = vld [vmem:[%s3658 + $0x10] sm:$0xff]
        %v3662 = vld [vmem:[%s3658 + $0x18] sm:$0xff]
        %v3663 = vld [vmem:[%s3658 + $0x20] sm:$0xff]
        %v3664 = vld [vmem:[%s3658 + $0x28] sm:$0xff]
        %v3665 = vld [vmem:[%s3658 + $0x30] sm:$0xff]
        %v3666 = vld [vmem:[%s3658 + $0x38] sm:$0xff]
        %v3667 = vld [vmem:[%s3658 + $0x40] sm:$0xff]
        %v3668 = vld [vmem:[%s3658 + $0x48] sm:$0xff]
        %v3669 = vld [vmem:[%s3658 + $0x50] sm:$0xff]
        %v3670 = vld [vmem:[%s3658 + $0x58] sm:$0xff]
        %v3671 = vld [vmem:[%s3658 + $0x60] sm:$0xff]
        %v3672 = vld [vmem:[%s3658 + $0x68] sm:$0xff]
        %v3673 = vld [vmem:[%s3658 + $0x70] sm:$0xff]
        %v3674 = vld [vmem:[%s3658 + $0x78] sm:$0xff]
        %s3675 = scalar_lea.vmem [#allocation8], 2
        %v3676 = vld [vmem:[%s3675] sm:$0x3]
        %v3677 = vpack.c.bf16 %v3657, %v3656
        %v3679 = vperm.slane %v3676, 0
        %v3680 = vperm.slane %v3676, 1
        %v3699 = vunpack.c.l.b16 %v3659
        %v3700 = vunpack.c.h.b16 %v3659
        %v3701 = vunpack.c.l.b16 %v3660
        %v3702 = vunpack.c.h.b16 %v3660
        %v3703 = vunpack.c.l.b16 %v3661
        %v3704 = vunpack.c.h.b16 %v3661
        %v3705 = vunpack.c.l.b16 %v3662
        %v3706 = vunpack.c.h.b16 %v3662
        %v3707 = vunpack.c.l.b16 %v3663
        %v3708 = vunpack.c.h.b16 %v3663
        %v3709 = vunpack.c.l.b16 %v3664
        %v3710 = vunpack.c.h.b16 %v3664
        %v3711 = vunpack.c.l.b16 %v3665
        %v3712 = vunpack.c.h.b16 %v3665
        %v3713 = vunpack.c.l.b16 %v3666
        %v3714 = vunpack.c.h.b16 %v3666
        %v3715 = vunpack.c.l.b16 %v3667
        %v3716 = vunpack.c.h.b16 %v3667
        %v3717 = vunpack.c.l.b16 %v3668
        %v3718 = vunpack.c.h.b16 %v3668
        %v3719 = vunpack.c.l.b16 %v3669
        %v3720 = vunpack.c.h.b16 %v3669
        %v3721 = vunpack.c.l.b16 %v3670
        %v3722 = vunpack.c.h.b16 %v3670
        %v3723 = vunpack.c.l.b16 %v3671
        %v3724 = vunpack.c.h.b16 %v3671
        %v3725 = vunpack.c.l.b16 %v3672
        %v3726 = vunpack.c.h.b16 %v3672
        %v3727 = vunpack.c.l.b16 %v3673
        %v3728 = vunpack.c.h.b16 %v3673
        %v3729 = vunpack.c.l.b16 %v3674
        %v3730 = vunpack.c.h.b16 %v3674
        %v3731 = vpack.c.b16 %v3701, %v3699
        %v3732 = vpack.c.b16 %v3702, %v3700
        %v3733 = vpack.c.b16 %v3705, %v3703
        %v3734 = vpack.c.b16 %v3706, %v3704
        %v3735 = vpack.c.b16 %v3709, %v3707
        %v3736 = vpack.c.b16 %v3710, %v3708
        %v3737 = vpack.c.b16 %v3713, %v3711
        %v3738 = vpack.c.b16 %v3714, %v3712
        %v3739 = vpack.c.b16 %v3717, %v3715
        %v3740 = vpack.c.b16 %v3718, %v3716
        %v3741 = vpack.c.b16 %v3721, %v3719
        %v3742 = vpack.c.b16 %v3722, %v3720
        %v3743 = vpack.c.b16 %v3725, %v3723
        %v3744 = vpack.c.b16 %v3726, %v3724
        %v3745 = vpack.c.b16 %v3729, %v3727
        %v3746 = vpack.c.b16 %v3730, %v3728
        %3763 = vmatpush.bf16.msra.mxu0 %v3745
        %3764 = vmatpush.bf16.msra.mxu0 %v3743
        %3765 = vmatpush.bf16.msra.mxu0 %v3741
        %3766 = vmatpush.bf16.msra.mxu0 %v3739
        %3767 = vmatpush.bf16.msra.mxu0 %v3737
        %3768 = vmatpush.bf16.msra.mxu0 %v3735
        %3769 = vmatpush.bf16.msra.mxu0 %v3733
        %3770 = vmatpush.bf16.msra.mxu0 %v3731
        %3771 = vmatmul.bf16.gmra.mxu0 %v3677
        %v3772 = vpop.f32.mrf.mxu0
        %v3773 = vadd.f32 %v3679, %v3772
        %v3774 = vpop.f32.mrf.mxu0
        %v3775 = vadd.f32 %v3679, %v3774
        %3776 = vdwg.mxu0
        %3777 = vmatpush.bf16.msra.mxu0 %v3746
        %3778 = vmatpush.bf16.msra.mxu0 %v3744
        %3779 = vmatpush.bf16.msra.mxu0 %v3742
        %3780 = vmatpush.bf16.msra.mxu0 %v3740
        %3781 = vmatpush.bf16.msra.mxu0 %v3738
        %3782 = vmatpush.bf16.msra.mxu0 %v3736
        %3783 = vmatpush.bf16.msra.mxu0 %v3734
        %3784 = vmatpush.bf16.msra.mxu0 %v3732
        %3785 = vmatmul.bf16.gmra.mxu0 %v3677
        %v3786 = vpop.f32.mrf.mxu0
        %v3787 = vadd.f32 %v3680, %v3786
        %v3788 = vpop.f32.mrf.mxu0
        %v3789 = vadd.f32 %v3680, %v3788
        %3790 = vdwg.mxu0
        %v3791 = vmax.f32 %v3773, 0.0
        %v3792 = vmax.f32 %v3787, 0.0
        %v3793 = vmax.f32 %v3775, 0.0
        %v3794 = vmax.f32 %v3789, 0.0
        %s3795 = scalar_lea.vmem %s25, 128
        %v3796 = vld [vmem:[%s3795] sm:$0xf]
        %v3797 = vld [vmem:[%s3795 + $0x4] sm:$0xf]
        %v3798 = vld [vmem:[%s3795 + $0x8] sm:$0xf]
        %v3799 = vld [vmem:[%s3795 + $0xc] sm:$0xf]
        %v3800 = vld [vmem:[%s3795 + $0x10] sm:$0xf]
        %v3801 = vld [vmem:[%s3795 + $0x14] sm:$0xf]
        %v3802 = vld [vmem:[%s3795 + $0x18] sm:$0xf]
        %v3803 = vld [vmem:[%s3795 + $0x1c] sm:$0xf]
        %v3804 = vld [vmem:[%s3795 + $0x20] sm:$0xf]
        %v3805 = vld [vmem:[%s3795 + $0x24] sm:$0xf]
        %v3806 = vld [vmem:[%s3795 + $0x28] sm:$0xf]
        %v3807 = vld [vmem:[%s3795 + $0x2c] sm:$0xf]
        %v3808 = vld [vmem:[%s3795 + $0x30] sm:$0xf]
        %v3809 = vld [vmem:[%s3795 + $0x34] sm:$0xf]
        %v3810 = vld [vmem:[%s3795 + $0x38] sm:$0xf]
        %v3811 = vld [vmem:[%s3795 + $0x3c] sm:$0xf]
        %v3812 = vld [vmem:[%s3795 + $0x40] sm:$0xf]
        %v3813 = vld [vmem:[%s3795 + $0x44] sm:$0xf]
        %v3814 = vld [vmem:[%s3795 + $0x48] sm:$0xf]
        %v3815 = vld [vmem:[%s3795 + $0x4c] sm:$0xf]
        %v3816 = vld [vmem:[%s3795 + $0x50] sm:$0xf]
        %v3817 = vld [vmem:[%s3795 + $0x54] sm:$0xf]
        %v3818 = vld [vmem:[%s3795 + $0x58] sm:$0xf]
        %v3819 = vld [vmem:[%s3795 + $0x5c] sm:$0xf]
        %v3820 = vld [vmem:[%s3795 + $0x60] sm:$0xf]
        %v3821 = vld [vmem:[%s3795 + $0x64] sm:$0xf]
        %v3822 = vld [vmem:[%s3795 + $0x68] sm:$0xf]
        %v3823 = vld [vmem:[%s3795 + $0x6c] sm:$0xf]
        %v3824 = vld [vmem:[%s3795 + $0x70] sm:$0xf]
        %v3825 = vld [vmem:[%s3795 + $0x74] sm:$0xf]
        %v3826 = vld [vmem:[%s3795 + $0x78] sm:$0xf]
        %v3827 = vld [vmem:[%s3795 + $0x7c] sm:$0xf]
        %s3828 = scalar_lea.vmem [#allocation10], 1
        %v3829 = vld [vmem:[%s3828] sm:$0x1]
        %v3830 = vpack.c.bf16 %v3793, %v3791
        %v3831 = vpack.c.bf16 %v3794, %v3792
        %v3833 = vperm.slane %v3829, 0
        %v3867 = vunpack.c.l.b16 %v3796
        %v3868 = vunpack.c.l.b16 %v3797
        %v3869 = vunpack.c.l.b16 %v3798
        %v3870 = vunpack.c.l.b16 %v3799
        %v3871 = vunpack.c.l.b16 %v3800
        %v3872 = vunpack.c.l.b16 %v3801
        %v3873 = vunpack.c.l.b16 %v3802
        %v3874 = vunpack.c.l.b16 %v3803
        %v3875 = vunpack.c.l.b16 %v3804
        %v3876 = vunpack.c.l.b16 %v3805
        %v3877 = vunpack.c.l.b16 %v3806
        %v3878 = vunpack.c.l.b16 %v3807
        %v3879 = vunpack.c.l.b16 %v3808
        %v3880 = vunpack.c.l.b16 %v3809
        %v3881 = vunpack.c.l.b16 %v3810
        %v3882 = vunpack.c.l.b16 %v3811
        %v3883 = vunpack.c.l.b16 %v3812
        %v3884 = vunpack.c.l.b16 %v3813
        %v3885 = vunpack.c.l.b16 %v3814
        %v3886 = vunpack.c.l.b16 %v3815
        %v3887 = vunpack.c.l.b16 %v3816
        %v3888 = vunpack.c.l.b16 %v3817
        %v3889 = vunpack.c.l.b16 %v3818
        %v3890 = vunpack.c.l.b16 %v3819
        %v3891 = vunpack.c.l.b16 %v3820
        %v3892 = vunpack.c.l.b16 %v3821
        %v3893 = vunpack.c.l.b16 %v3822
        %v3894 = vunpack.c.l.b16 %v3823
        %v3895 = vunpack.c.l.b16 %v3824
        %v3896 = vunpack.c.l.b16 %v3825
        %v3897 = vunpack.c.l.b16 %v3826
        %v3898 = vunpack.c.l.b16 %v3827
        %v3899 = vpack.c.b16 %v3868, %v3867
        %v3900 = vpack.c.b16 %v3870, %v3869
        %v3901 = vpack.c.b16 %v3872, %v3871
        %v3902 = vpack.c.b16 %v3874, %v3873
        %v3903 = vpack.c.b16 %v3876, %v3875
        %v3904 = vpack.c.b16 %v3878, %v3877
        %v3905 = vpack.c.b16 %v3880, %v3879
        %v3906 = vpack.c.b16 %v3882, %v3881
        %v3907 = vpack.c.b16 %v3884, %v3883
        %v3908 = vpack.c.b16 %v3886, %v3885
        %v3909 = vpack.c.b16 %v3888, %v3887
        %v3910 = vpack.c.b16 %v3890, %v3889
        %v3911 = vpack.c.b16 %v3892, %v3891
        %v3912 = vpack.c.b16 %v3894, %v3893
        %v3913 = vpack.c.b16 %v3896, %v3895
        %v3914 = vpack.c.b16 %v3898, %v3897
        %3931 = vmatpush.bf16.msra.mxu0 %v3906
        %3932 = vmatpush.bf16.msra.mxu0 %v3905
        %3933 = vmatpush.bf16.msra.mxu0 %v3904
        %3934 = vmatpush.bf16.msra.mxu0 %v3903
        %3935 = vmatpush.bf16.msra.mxu0 %v3902
        %3936 = vmatpush.bf16.msra.mxu0 %v3901
        %3937 = vmatpush.bf16.msra.mxu0 %v3900
        %3938 = vmatpush.bf16.msra.mxu0 %v3899
        %3939 = vmatmul.bf16.gmra.mxu0 %v3830
        %v3940 = vpop.f32.mrf.mxu0
        %v3941 = vadd.f32 %v3833, %v3940
        %v3942 = vpop.f32.mrf.mxu0
        %v3943 = vadd.f32 %v3833, %v3942
        %3944 = vdwg.mxu0
        %3945 = vmatpush.bf16.msra.mxu0 %v3914
        %3946 = vmatpush.bf16.msra.mxu0 %v3913
        %3947 = vmatpush.bf16.msra.mxu0 %v3912
        %3948 = vmatpush.bf16.msra.mxu0 %v3911
        %3949 = vmatpush.bf16.msra.mxu0 %v3910
        %3950 = vmatpush.bf16.msra.mxu0 %v3909
        %3951 = vmatpush.bf16.msra.mxu0 %v3908
        %3952 = vmatpush.bf16.msra.mxu0 %v3907
        %3953 = vmatmul.bf16.gmra.mxu0 %v3831
        %v3954 = vpop.f32.mrf.mxu0
        %v3955 = vadd.f32 %v3941, %v3954
        %v3956 = vpop.f32.mrf.mxu0
        %v3957 = vadd.f32 %v3943, %v3956
        %3958 = vdwg.mxu0
        %v3959 = vadd.f32 %v3955, %v3656
        %v3960 = vadd.f32 %v3957, %v3657
        %s3961 = scalar_lea.vmem [#allocation11], 1
        %v3962 = vld [vmem:[%s3961] sm:$0x1]
        %s3963 = scalar_lea.vmem [#allocation13], 1
        %v3964 = vld [vmem:[%s3963] sm:$0x1]
        %3965 = vadd.xlane.f32.xlu0 %v3959
        %v3966 = vpop.xlane.xlu0 %3965
        %3967 = vadd.xlane.f32.xlu0 %v3960
        %v3968 = vpop.xlane.xlu0 %3967
        %v3969 = vmul.f32 %v3966, %v2451
        %v3970 = vmul.f32 %v3968, %v2451
        %v3971 = vsub.f32 %v3959, %v3969
        %v3972 = vsub.f32 %v3960, %v3970
        %v3973 = vmul.f32 %v3971, %v3971
        %v3974 = vmul.f32 %v3972, %v3972
        %3975 = vadd.xlane.f32.xlu0 %v3973
        %v3976 = vpop.xlane.xlu0 %3975
        %3977 = vadd.xlane.f32.xlu0 %v3974
        %v3978 = vpop.xlane.xlu0 %3977
        %v3979 = vmul.f32 %v3976, %v2451
        %v3980 = vmul.f32 %v3978, %v2451
        %v3981 = vadd.f32 %v3979, 1e-05
        %v3982 = vadd.f32 %v3980, 1e-05
        %v3983 = vrsqrt.pop %v3981
        %v3984 = vmul.f32 %v3983, %v3981
        %v3985 = vmul.f32 %v3984, %v3983
        %v3986 = vmul.f32 0.5, %v3985
        %v3987 = vsub.f32 1.5, %v3986
        %v3988 = vmul.f32 %v3983, %v3987
        %vm3989 = vweird.f32 %v3981
        %vm3990 = vweird.f32 %v3983
        %vm3991 = vmor %vm3989, %vm3990
        %v3992 = vsel %vm3991, %v3983, %v3988
        %v3993 = vrsqrt.pop %v3982
        %v3994 = vmul.f32 %v3993, %v3982
        %v3995 = vmul.f32 %v3994, %v3993
        %v3996 = vmul.f32 0.5, %v3995
        %v3997 = vsub.f32 1.5, %v3996
        %v3998 = vmul.f32 %v3993, %v3997
        %vm3999 = vweird.f32 %v3982
        %vm4000 = vweird.f32 %v3993
        %vm4001 = vmor %vm3999, %vm4000
        %v4002 = vsel %vm4001, %v3993, %v3998
        %v4003 = vmul.f32 %v3971, %v3992
        %v4004 = vmul.f32 %v3972, %v4002
        %v4006 = vperm.slane %v3962, 0
        %v4008 = vmul.f32 %v4003, %v4006
        %v4009 = vmul.f32 %v4004, %v4006
        %v4011 = vperm.slane %v3964, 0
        %v4013 = vadd.f32 %v4008, %v4011
        %v4014 = vadd.f32 %v4009, %v4011
        %v4015 = vld [vmem:[%s1673] sm:$0xff]
        %v4016 = vld [vmem:[%s1673 + $0x8] sm:$0xff]
        %v4017 = vld [vmem:[%s1420] sm:$0xff]
        %v4018 = vld [vmem:[%s1420 + $0x8] sm:$0xff]
        %v4019 = vld [vmem:[#allocation14] sm:$0xff]
        %v4020 = vld [vmem:[#allocation14 + $0x8] sm:$0xf]
        %v4021 = vld [vmem:[#allocation14 + $0xc] sm:$0xff]
        %v4022 = vld [vmem:[#allocation14 + $0x14] sm:$0xf]
        %v4023 = vld [vmem:[#allocation14 + $0x18] sm:$0xff]
        %v4024 = vld [vmem:[#allocation14 + $0x20] sm:$0xf]
        %v4025 = vld [vmem:[#allocation14 + $0x24] sm:$0xff]
        %v4026 = vld [vmem:[#allocation14 + $0x2c] sm:$0xf]
        %v4027 = vld [vmem:[#allocation14 + $0x30] sm:$0xff]
        %v4028 = vld [vmem:[#allocation14 + $0x38] sm:$0xf]
        %v4029 = vld [vmem:[#allocation14 + $0x3c] sm:$0xff]
        %v4030 = vld [vmem:[#allocation14 + $0x44] sm:$0xf]
        %v4031 = vld [vmem:[#allocation14 + $0x48] sm:$0xff]
        %v4032 = vld [vmem:[#allocation14 + $0x50] sm:$0xf]
        %v4033 = vld [vmem:[#allocation14 + $0x54] sm:$0xff]
        %v4034 = vld [vmem:[#allocation14 + $0x5c] sm:$0xf]
        %v4035 = vld [vmem:[#allocation14 + $0x60] sm:$0xff]
        %v4036 = vld [vmem:[#allocation14 + $0x68] sm:$0xf]
        %v4037 = vld [vmem:[#allocation14 + $0x6c] sm:$0xff]
        %v4038 = vld [vmem:[#allocation14 + $0x74] sm:$0xf]
        %v4039 = vld [vmem:[#allocation14 + $0x78] sm:$0xff]
        %v4040 = vld [vmem:[#allocation14 + $0x80] sm:$0xf]
        %v4041 = vld [vmem:[#allocation14 + $0x84] sm:$0xff]
        %v4042 = vld [vmem:[#allocation14 + $0x8c] sm:$0xf]
        %v4043 = vld [vmem:[#allocation14 + $0x90] sm:$0xff]
        %v4044 = vld [vmem:[#allocation14 + $0x98] sm:$0xf]
        %v4045 = vld [vmem:[#allocation14 + $0x9c] sm:$0xff]
        %v4046 = vld [vmem:[#allocation14 + $0xa4] sm:$0xf]
        %v4047 = vld [vmem:[#allocation14 + $0xa8] sm:$0xff]
        %v4048 = vld [vmem:[#allocation14 + $0xb0] sm:$0xf]
        %v4049 = vld [vmem:[#allocation14 + $0xb4] sm:$0xff]
        %v4050 = vld [vmem:[#allocation14 + $0xbc] sm:$0xf]
        %v4051 = vld [vmem:[#allocation16] sm:$0x7]
        %v4052 = vld [vmem:[#allocation17] sm:$0xf]
        %v4053 = vld [vmem:[#allocation17 + $0x4] sm:$0xf]
        %v4054 = vld [vmem:[#allocation17 + $0x8] sm:$0xf]
        %v4055 = vld [vmem:[#allocation17 + $0xc] sm:$0xf]
        %v4056 = vld [vmem:[#allocation17 + $0x10] sm:$0xf]
        %v4057 = vld [vmem:[#allocation17 + $0x14] sm:$0xf]
        %v4058 = vld [vmem:[#allocation17 + $0x18] sm:$0xf]
        %v4059 = vld [vmem:[#allocation17 + $0x1c] sm:$0xf]
        %v4060 = vld [vmem:[#allocation17 + $0x20] sm:$0xf]
        %v4061 = vld [vmem:[#allocation17 + $0x24] sm:$0xf]
        %v4062 = vld [vmem:[#allocation17 + $0x28] sm:$0xf]
        %v4063 = vld [vmem:[#allocation17 + $0x2c] sm:$0xf]
        %v4064 = vld [vmem:[#allocation17 + $0x30] sm:$0xf]
        %v4065 = vld [vmem:[#allocation17 + $0x34] sm:$0xf]
        %v4066 = vld [vmem:[#allocation17 + $0x38] sm:$0xf]
        %v4067 = vld [vmem:[#allocation17 + $0x3c] sm:$0xf]
        %v4068 = vld [vmem:[#allocation19] sm:$0x1]
        %v4069 = vpack.c.bf16 %v4016, %v4015
        %v4071 = vperm.slane %v4051, 0
        %v4072 = vperm.slane %v4051, 1
        %v4073 = vperm.slane %v4051, 2
        %v4109 = vunpack.c.l.b16 %v4019
        %v4110 = vunpack.c.h.b16 %v4019
        %v4111 = vunpack.c.l.b16 %v4020
        %v4112 = vunpack.c.l.b16 %v4021
        %v4113 = vunpack.c.h.b16 %v4021
        %v4114 = vunpack.c.l.b16 %v4022
        %v4115 = vunpack.c.l.b16 %v4023
        %v4116 = vunpack.c.h.b16 %v4023
        %v4117 = vunpack.c.l.b16 %v4024
        %v4118 = vunpack.c.l.b16 %v4025
        %v4119 = vunpack.c.h.b16 %v4025
        %v4120 = vunpack.c.l.b16 %v4026
        %v4121 = vunpack.c.l.b16 %v4027
        %v4122 = vunpack.c.h.b16 %v4027
        %v4123 = vunpack.c.l.b16 %v4028
        %v4124 = vunpack.c.l.b16 %v4029
        %v4125 = vunpack.c.h.b16 %v4029
        %v4126 = vunpack.c.l.b16 %v4030
        %v4127 = vunpack.c.l.b16 %v4031
        %v4128 = vunpack.c.h.b16 %v4031
        %v4129 = vunpack.c.l.b16 %v4032
        %v4130 = vunpack.c.l.b16 %v4033
        %v4131 = vunpack.c.h.b16 %v4033
        %v4132 = vunpack.c.l.b16 %v4034
        %v4133 = vunpack.c.l.b16 %v4035
        %v4134 = vunpack.c.h.b16 %v4035
        %v4135 = vunpack.c.l.b16 %v4036
        %v4136 = vunpack.c.l.b16 %v4037
        %v4137 = vunpack.c.h.b16 %v4037
        %v4138 = vunpack.c.l.b16 %v4038
        %v4139 = vunpack.c.l.b16 %v4039
        %v4140 = vunpack.c.h.b16 %v4039
        %v4141 = vunpack.c.l.b16 %v4040
        %v4142 = vunpack.c.l.b16 %v4041
        %v4143 = vunpack.c.h.b16 %v4041
        %v4144 = vunpack.c.l.b16 %v4042
        %v4145 = vunpack.c.l.b16 %v4043
        %v4146 = vunpack.c.h.b16 %v4043
        %v4147 = vunpack.c.l.b16 %v4044
        %v4148 = vunpack.c.l.b16 %v4045
        %v4149 = vunpack.c.h.b16 %v4045
        %v4150 = vunpack.c.l.b16 %v4046
        %v4151 = vunpack.c.l.b16 %v4047
        %v4152 = vunpack.c.h.b16 %v4047
        %v4153 = vunpack.c.l.b16 %v4048
        %v4154 = vunpack.c.l.b16 %v4049
        %v4155 = vunpack.c.h.b16 %v4049
        %v4156 = vunpack.c.l.b16 %v4050
        %v4157 = vpack.c.b16 %v4112, %v4109
        %v4158 = vpack.c.b16 %v4113, %v4110
        %v4159 = vpack.c.b16 %v4114, %v4111
        %v4160 = vpack.c.b16 %v4118, %v4115
        %v4161 = vpack.c.b16 %v4119, %v4116
        %v4162 = vpack.c.b16 %v4120, %v4117
        %v4163 = vpack.c.b16 %v4124, %v4121
        %v4164 = vpack.c.b16 %v4125, %v4122
        %v4165 = vpack.c.b16 %v4126, %v4123
        %v4166 = vpack.c.b16 %v4130, %v4127
        %v4167 = vpack.c.b16 %v4131, %v4128
        %v4168 = vpack.c.b16 %v4132, %v4129
        %v4169 = vpack.c.b16 %v4136, %v4133
        %v4170 = vpack.c.b16 %v4137, %v4134
        %v4171 = vpack.c.b16 %v4138, %v4135
        %v4172 = vpack.c.b16 %v4142, %v4139
        %v4173 = vpack.c.b16 %v4143, %v4140
        %v4174 = vpack.c.b16 %v4144, %v4141
        %v4175 = vpack.c.b16 %v4148, %v4145
        %v4176 = vpack.c.b16 %v4149, %v4146
        %v4177 = vpack.c.b16 %v4150, %v4147
        %v4178 = vpack.c.b16 %v4154, %v4151
        %v4179 = vpack.c.b16 %v4155, %v4152
        %v4180 = vpack.c.b16 %v4156, %v4153
        %4205 = vmatpush.bf16.msra.mxu0 %v4178
        %4206 = vmatpush.bf16.msra.mxu0 %v4175
        %4207 = vmatpush.bf16.msra.mxu0 %v4172
        %4208 = vmatpush.bf16.msra.mxu0 %v4169
        %4209 = vmatpush.bf16.msra.mxu0 %v4166
        %4210 = vmatpush.bf16.msra.mxu0 %v4163
        %4211 = vmatpush.bf16.msra.mxu0 %v4160
        %4212 = vmatpush.bf16.msra.mxu0 %v4157
        %4213 = vmatmul.bf16.gmra.mxu0 %v4069
        %v4214 = vpop.f32.mrf.mxu0
        %v4215 = vadd.f32 %v4071, %v4214
        %v4216 = vpop.f32.mrf.mxu0
        %v4217 = vadd.f32 %v4071, %v4216
        %4218 = vdwg.mxu0
        %4219 = vmatpush.bf16.msra.mxu0 %v4179
        %4220 = vmatpush.bf16.msra.mxu0 %v4176
        %4221 = vmatpush.bf16.msra.mxu0 %v4173
        %4222 = vmatpush.bf16.msra.mxu0 %v4170
        %4223 = vmatpush.bf16.msra.mxu0 %v4167
        %4224 = vmatpush.bf16.msra.mxu0 %v4164
        %4225 = vmatpush.bf16.msra.mxu0 %v4161
        %4226 = vmatpush.bf16.msra.mxu0 %v4158
        %4227 = vmatmul.bf16.gmra.mxu0 %v4069
        %v4228 = vpop.f32.mrf.mxu0
        %v4229 = vadd.f32 %v4072, %v4228
        %v4230 = vpop.f32.mrf.mxu0
        %v4231 = vadd.f32 %v4072, %v4230
        %4232 = vdwg.mxu0
        %4233 = vmatpush.bf16.msra.mxu0 %v4180
        %4234 = vmatpush.bf16.msra.mxu0 %v4177
        %4235 = vmatpush.bf16.msra.mxu0 %v4174
        %4236 = vmatpush.bf16.msra.mxu0 %v4171
        %4237 = vmatpush.bf16.msra.mxu0 %v4168
        %4238 = vmatpush.bf16.msra.mxu0 %v4165
        %4239 = vmatpush.bf16.msra.mxu0 %v4162
        %4240 = vmatpush.bf16.msra.mxu0 %v4159
        %4241 = vmatmul.bf16.gmra.mxu0 %v4069
        %v4242 = vpop.f32.mrf.mxu0
        %v4243 = vadd.f32 %v4073, %v4242
        %v4244 = vpop.f32.mrf.mxu0
        %v4245 = vadd.f32 %v4073, %v4244
        %4246 = vdwg.mxu0
        %v4247 = vpack.c.bf16 %v4217, %v4215
        %4250 = vrot.lane.b32.xlu0 %v4215, 96
        %v4251 = vpop.permute.xlu0 %4250
        %4252 = vrot.lane.b32.xlu0 %v4217, 96
        %v4253 = vpop.permute.xlu0 %4252
        %4256 = vxpose.xlu0.b32.start [1/16] %v4251, 128
        %4257 = vxpose.xlu0.b32.cont [2/16] %v4253, 128
        %4258 = vxpose.xlu0.b32.cont [3/16] 0.0, 128
        %4259 = vxpose.xlu0.b32.cont [4/16] 0.0, 128
        %4260 = vxpose.xlu0.b32.cont [5/16] 0.0, 128
        %4261 = vxpose.xlu0.b32.cont [6/16] 0.0, 128
        %4262 = vxpose.xlu0.b32.cont [7/16] 0.0, 128
        %4263 = vxpose.xlu0.b32.cont [8/16] 0.0, 128
        %4264 = vxpose.xlu0.b32.cont [9/16] 0.0, 128
        %4265 = vxpose.xlu0.b32.cont [10/16] 0.0, 128
        %4266 = vxpose.xlu0.b32.cont [11/16] 0.0, 128
        %4267 = vxpose.xlu0.b32.cont [12/16] 0.0, 128
        %4268 = vxpose.xlu0.b32.cont [13/16] 0.0, 128
        %4269 = vxpose.xlu0.b32.cont [14/16] 0.0, 128
        %4270 = vxpose.xlu0.b32.cont [15/16] 0.0, 128
        %4271 = vxpose.xlu0.b32.end [16/16] 0.0, 128
        %v4272 = vpop.trf.xlu0
        %v4273 = vpop.trf.xlu0
        %v4274 = vpop.trf.xlu0
        %v4275 = vpop.trf.xlu0
        %v4276 = vpop.trf.xlu0
        %v4277 = vpop.trf.xlu0
        %v4278 = vpop.trf.xlu0
        %v4279 = vpop.trf.xlu0
        %v4280 = vpop.trf.xlu0
        %v4281 = vpop.trf.xlu0
        %v4282 = vpop.trf.xlu0
        %v4283 = vpop.trf.xlu0
        %v4284 = vpop.trf.xlu0
        %v4285 = vpop.trf.xlu0
        %v4286 = vpop.trf.xlu0
        %v4287 = vpop.trf.xlu0
        %v4288 = vpack.c.bf16 %v4273, %v4272
        %v4289 = vpack.c.bf16 %v4275, %v4274
        %v4291 = vsel %vm1955, %v4247, 0
        %4293 = vmatpush.bf16.msra.mxu0 0
        %4294 = vmatpush.bf16.msra.mxu0 0
        %4295 = vmatpush.bf16.msra.mxu0 0
        %4296 = vmatpush.bf16.msra.mxu0 0
        %4297 = vmatpush.bf16.msra.mxu0 0
        %4298 = vmatpush.bf16.msra.mxu0 0
        %4299 = vmatpush.bf16.msra.mxu0 %v4289
        %4300 = vmatpush.bf16.msra.mxu0 %v4288
        %4301 = vmatmul.bf16.gmra.mxu0 %v4291
        %v4302 = vpop.f32.mrf.mxu0
        %v4303 = vadd.f32 0.0, %v4302
        %v4304 = vpop.f32.mrf.mxu0
        %v4305 = vadd.f32 0.0, %v4304
        %4306 = vdwg.mxu0
        %v4307 = vmul.f32 %v4303, 0.17677669
        %v4308 = vmul.f32 %v4305, 0.17677669
        %v4309 = vadd.f32 %v4307, %v4017
        %v4310 = vadd.f32 %v4308, %v4018
        %v4311 = vsel %vm1977, %v4309, -inf
        %4312 = vmax.xlane.f32.xlu0 %v4311
        %v4313 = vpop.xlane.xlu0 %4312
        %v4314 = vsel %vm1977, %v4310, -inf
        %4315 = vmax.xlane.f32.xlu0 %v4314
        %v4316 = vpop.xlane.xlu0 %4315
        %v4317 = vsub.f32 %v4309, %v4313
        %v4318 = vsub.f32 %v4310, %v4316
        %v4319 = vmul.f32 %v4317, 1.442695
        %v4320 = vpow.pop %v4319
        %v4321 = vmul.f32 %v4318, 1.442695
        %v4322 = vpow.pop %v4321
        %v4323 = vsel %vm1977, %v4320, 0.0
        %4324 = vadd.xlane.f32.xlu0 %v4323
        %v4325 = vpop.xlane.xlu0 %4324
        %v4326 = vsel %vm1977, %v4322, 0.0
        %4327 = vadd.xlane.f32.xlu0 %v4326
        %v4328 = vpop.xlane.xlu0 %4327
        %v4329 = vrcp.pop %v4325
        %v4330 = vrcp.pop %v4328
        %v4331 = vmul.f32 %v4320, %v4329
        %v4332 = vmul.f32 %v4322, %v4330
        %v4333 = vpack.c.bf16 %v4332, %v4331
        %4335 = vrot.lane.b32.xlu0 %v4247, 64
        %v4336 = vpop.permute.xlu0 %4335
        %v4339 = vsel %vm1977, %v4333, 0
        %4341 = vmatpush.bf16.msra.mxu0 0
        %4342 = vmatpush.bf16.msra.mxu0 0
        %4343 = vmatpush.bf16.msra.mxu0 0
        %4344 = vmatpush.bf16.msra.mxu0 0
        %4345 = vmatpush.bf16.msra.mxu0 0
        %4346 = vmatpush.bf16.msra.mxu0 0
        %4347 = vmatpush.bf16.msra.mxu0 0
        %4348 = vmatpush.bf16.msra.mxu0 %v4336
        %4349 = vmatmul.bf16.gmra.mxu0 %v4339
        %v4350 = vpop.f32.mrf.mxu0
        %v4351 = vadd.f32 0.0, %v4350
        %v4352 = vpop.f32.mrf.mxu0
        %v4353 = vadd.f32 0.0, %v4352
        %4354 = vdwg.mxu0
        %4355 = vxpose.xlu0.b32.start [1/16] %v4229, 128
        %4356 = vxpose.xlu0.b32.cont [2/16] %v4231, 128
        %4357 = vxpose.xlu0.b32.cont [3/16] 0.0, 128
        %4358 = vxpose.xlu0.b32.cont [4/16] 0.0, 128
        %4359 = vxpose.xlu0.b32.cont [5/16] 0.0, 128
        %4360 = vxpose.xlu0.b32.cont [6/16] 0.0, 128
        %4361 = vxpose.xlu0.b32.cont [7/16] 0.0, 128
        %4362 = vxpose.xlu0.b32.cont [8/16] 0.0, 128
        %4363 = vxpose.xlu0.b32.cont [9/16] 0.0, 128
        %4364 = vxpose.xlu0.b32.cont [10/16] 0.0, 128
        %4365 = vxpose.xlu0.b32.cont [11/16] 0.0, 128
        %4366 = vxpose.xlu0.b32.cont [12/16] 0.0, 128
        %4367 = vxpose.xlu0.b32.cont [13/16] 0.0, 128
        %4368 = vxpose.xlu0.b32.cont [14/16] 0.0, 128
        %4369 = vxpose.xlu0.b32.cont [15/16] 0.0, 128
        %4370 = vxpose.xlu0.b32.end [16/16] 0.0, 128
        %v4371 = vpop.trf.xlu0
        %v4372 = vpop.trf.xlu0
        %v4373 = vpop.trf.xlu0
        %v4374 = vpop.trf.xlu0
        %v4375 = vpop.trf.xlu0
        %v4376 = vpop.trf.xlu0
        %v4377 = vpop.trf.xlu0
        %v4378 = vpop.trf.xlu0
        %v4379 = vpop.trf.xlu0
        %v4380 = vpop.trf.xlu0
        %v4381 = vpop.trf.xlu0
        %v4382 = vpop.trf.xlu0
        %v4383 = vpop.trf.xlu0
        %v4384 = vpop.trf.xlu0
        %v4385 = vpop.trf.xlu0
        %v4386 = vpop.trf.xlu0
        %v4387 = vpack.c.bf16 %v4372, %v4371
        %v4388 = vpack.c.bf16 %v4374, %v4373
        %4389 = vrot.lane.b32.xlu0 %v4247, 32
        %v4390 = vpop.permute.xlu0 %4389
        %v4392 = vsel %vm1955, %v4390, 0
        %4394 = vmatpush.bf16.msra.mxu0 0
        %4395 = vmatpush.bf16.msra.mxu0 0
        %4396 = vmatpush.bf16.msra.mxu0 0
        %4397 = vmatpush.bf16.msra.mxu0 0
        %4398 = vmatpush.bf16.msra.mxu0 0
        %4399 = vmatpush.bf16.msra.mxu0 0
        %4400 = vmatpush.bf16.msra.mxu0 %v4388
        %4401 = vmatpush.bf16.msra.mxu0 %v4387
        %4402 = vmatmul.bf16.gmra.mxu0 %v4392
        %v4403 = vpop.f32.mrf.mxu0
        %v4404 = vadd.f32 0.0, %v4403
        %v4405 = vpop.f32.mrf.mxu0
        %v4406 = vadd.f32 0.0, %v4405
        %4407 = vdwg.mxu0
        %v4408 = vmul.f32 %v4404, 0.17677669
        %v4409 = vmul.f32 %v4406, 0.17677669
        %v4410 = vadd.f32 %v4408, %v4017
        %v4411 = vadd.f32 %v4409, %v4018
        %v4412 = vsel %vm1977, %v4410, -inf
        %4413 = vmax.xlane.f32.xlu0 %v4412
        %v4414 = vpop.xlane.xlu0 %4413
        %v4415 = vsel %vm1977, %v4411, -inf
        %4416 = vmax.xlane.f32.xlu0 %v4415
        %v4417 = vpop.xlane.xlu0 %4416
        %v4418 = vsub.f32 %v4410, %v4414
        %v4419 = vsub.f32 %v4411, %v4417
        %v4420 = vmul.f32 %v4418, 1.442695
        %v4421 = vpow.pop %v4420
        %v4422 = vmul.f32 %v4419, 1.442695
        %v4423 = vpow.pop %v4422
        %v4424 = vsel %vm1977, %v4421, 0.0
        %4425 = vadd.xlane.f32.xlu0 %v4424
        %v4426 = vpop.xlane.xlu0 %4425
        %v4427 = vsel %vm1977, %v4423, 0.0
        %4428 = vadd.xlane.f32.xlu0 %v4427
        %v4429 = vpop.xlane.xlu0 %4428
        %v4430 = vrcp.pop %v4426
        %v4431 = vrcp.pop %v4429
        %v4432 = vmul.f32 %v4421, %v4430
        %v4433 = vmul.f32 %v4423, %v4431
        %v4434 = vpack.c.bf16 %v4433, %v4432
        %v4435 = vpack.c.bf16 %v4231, %v4229
        %4437 = vrot.lane.b32.xlu0 %v4435, 96
        %v4438 = vpop.permute.xlu0 %4437
        %v4441 = vsel %vm1977, %v4434, 0
        %4443 = vmatpush.bf16.msra.mxu0 0
        %4444 = vmatpush.bf16.msra.mxu0 0
        %4445 = vmatpush.bf16.msra.mxu0 0
        %4446 = vmatpush.bf16.msra.mxu0 0
        %4447 = vmatpush.bf16.msra.mxu0 0
        %4448 = vmatpush.bf16.msra.mxu0 0
        %4449 = vmatpush.bf16.msra.mxu0 0
        %4450 = vmatpush.bf16.msra.mxu0 %v4438
        %4451 = vmatmul.bf16.gmra.mxu0 %v4441
        %v4452 = vpop.f32.mrf.mxu0
        %v4453 = vadd.f32 0.0, %v4452
        %v4454 = vpop.f32.mrf.mxu0
        %v4455 = vadd.f32 0.0, %v4454
        %4456 = vdwg.mxu0
        %4459 = vrot.lane.b32.xlu0 %v4229, 32
        %v4460 = vpop.permute.xlu0 %4459
        %4461 = vrot.lane.b32.xlu0 %v4231, 32
        %v4462 = vpop.permute.xlu0 %4461
        %4465 = vxpose.xlu0.b32.start [1/16] %v4460, 128
        %4466 = vxpose.xlu0.b32.cont [2/16] %v4462, 128
        %4467 = vxpose.xlu0.b32.cont [3/16] 0.0, 128
        %4468 = vxpose.xlu0.b32.cont [4/16] 0.0, 128
        %4469 = vxpose.xlu0.b32.cont [5/16] 0.0, 128
        %4470 = vxpose.xlu0.b32.cont [6/16] 0.0, 128
        %4471 = vxpose.xlu0.b32.cont [7/16] 0.0, 128
        %4472 = vxpose.xlu0.b32.cont [8/16] 0.0, 128
        %4473 = vxpose.xlu0.b32.cont [9/16] 0.0, 128
        %4474 = vxpose.xlu0.b32.cont [10/16] 0.0, 128
        %4475 = vxpose.xlu0.b32.cont [11/16] 0.0, 128
        %4476 = vxpose.xlu0.b32.cont [12/16] 0.0, 128
        %4477 = vxpose.xlu0.b32.cont [13/16] 0.0, 128
        %4478 = vxpose.xlu0.b32.cont [14/16] 0.0, 128
        %4479 = vxpose.xlu0.b32.cont [15/16] 0.0, 128
        %4480 = vxpose.xlu0.b32.end [16/16] 0.0, 128
        %v4481 = vpop.trf.xlu0
        %v4482 = vpop.trf.xlu0
        %v4483 = vpop.trf.xlu0
        %v4484 = vpop.trf.xlu0
        %v4485 = vpop.trf.xlu0
        %v4486 = vpop.trf.xlu0
        %v4487 = vpop.trf.xlu0
        %v4488 = vpop.trf.xlu0
        %v4489 = vpop.trf.xlu0
        %v4490 = vpop.trf.xlu0
        %v4491 = vpop.trf.xlu0
        %v4492 = vpop.trf.xlu0
        %v4493 = vpop.trf.xlu0
        %v4494 = vpop.trf.xlu0
        %v4495 = vpop.trf.xlu0
        %v4496 = vpop.trf.xlu0
        %v4497 = vpack.c.bf16 %v4482, %v4481
        %v4498 = vpack.c.bf16 %v4484, %v4483
        %4499 = vrot.lane.b32.xlu0 %v4435, 64
        %v4500 = vpop.permute.xlu0 %4499
        %v4502 = vsel %vm1955, %v4500, 0
        %4504 = vmatpush.bf16.msra.mxu0 0
        %4505 = vmatpush.bf16.msra.mxu0 0
        %4506 = vmatpush.bf16.msra.mxu0 0
        %4507 = vmatpush.bf16.msra.mxu0 0
        %4508 = vmatpush.bf16.msra.mxu0 0
        %4509 = vmatpush.bf16.msra.mxu0 0
        %4510 = vmatpush.bf16.msra.mxu0 %v4498
        %4511 = vmatpush.bf16.msra.mxu0 %v4497
        %4512 = vmatmul.bf16.gmra.mxu0 %v4502
        %v4513 = vpop.f32.mrf.mxu0
        %v4514 = vadd.f32 0.0, %v4513
        %v4515 = vpop.f32.mrf.mxu0
        %v4516 = vadd.f32 0.0, %v4515
        %4517 = vdwg.mxu0
        %v4518 = vmul.f32 %v4514, 0.17677669
        %v4519 = vmul.f32 %v4516, 0.17677669
        %v4520 = vadd.f32 %v4518, %v4017
        %v4521 = vadd.f32 %v4519, %v4018
        %v4522 = vsel %vm1977, %v4520, -inf
        %4523 = vmax.xlane.f32.xlu0 %v4522
        %v4524 = vpop.xlane.xlu0 %4523
        %v4525 = vsel %vm1977, %v4521, -inf
        %4526 = vmax.xlane.f32.xlu0 %v4525
        %v4527 = vpop.xlane.xlu0 %4526
        %v4528 = vsub.f32 %v4520, %v4524
        %v4529 = vsub.f32 %v4521, %v4527
        %v4530 = vmul.f32 %v4528, 1.442695
        %v4531 = vpow.pop %v4530
        %v4532 = vmul.f32 %v4529, 1.442695
        %v4533 = vpow.pop %v4532
        %v4534 = vsel %vm1977, %v4531, 0.0
        %4535 = vadd.xlane.f32.xlu0 %v4534
        %v4536 = vpop.xlane.xlu0 %4535
        %v4537 = vsel %vm1977, %v4533, 0.0
        %4538 = vadd.xlane.f32.xlu0 %v4537
        %v4539 = vpop.xlane.xlu0 %4538
        %v4540 = vrcp.pop %v4536
        %v4541 = vrcp.pop %v4539
        %v4542 = vmul.f32 %v4531, %v4540
        %v4543 = vmul.f32 %v4533, %v4541
        %v4544 = vpack.c.bf16 %v4543, %v4542
        %v4545 = vpack.c.bf16 %v4245, %v4243
        %v4547 = vsel %vm1977, %v4544, 0
        %4549 = vmatpush.bf16.msra.mxu0 0
        %4550 = vmatpush.bf16.msra.mxu0 0
        %4551 = vmatpush.bf16.msra.mxu0 0
        %4552 = vmatpush.bf16.msra.mxu0 0
        %4553 = vmatpush.bf16.msra.mxu0 0
        %4554 = vmatpush.bf16.msra.mxu0 0
        %4555 = vmatpush.bf16.msra.mxu0 0
        %4556 = vmatpush.bf16.msra.mxu0 %v4545
        %4557 = vmatmul.bf16.gmra.mxu0 %v4547
        %v4558 = vpop.f32.mrf.mxu0
        %v4559 = vadd.f32 0.0, %v4558
        %v4560 = vpop.f32.mrf.mxu0
        %v4561 = vadd.f32 0.0, %v4560
        %4562 = vdwg.mxu0
        %4565 = vrot.lane.b32.xlu0 %v4243, 64
        %v4566 = vpop.permute.xlu0 %4565
        %4567 = vrot.lane.b32.xlu0 %v4245, 64
        %v4568 = vpop.permute.xlu0 %4567
        %4571 = vxpose.xlu0.b32.start [1/16] %v4566, 128
        %4572 = vxpose.xlu0.b32.cont [2/16] %v4568, 128
        %4573 = vxpose.xlu0.b32.cont [3/16] 0.0, 128
        %4574 = vxpose.xlu0.b32.cont [4/16] 0.0, 128
        %4575 = vxpose.xlu0.b32.cont [5/16] 0.0, 128
        %4576 = vxpose.xlu0.b32.cont [6/16] 0.0, 128
        %4577 = vxpose.xlu0.b32.cont [7/16] 0.0, 128
        %4578 = vxpose.xlu0.b32.cont [8/16] 0.0, 128
        %4579 = vxpose.xlu0.b32.cont [9/16] 0.0, 128
        %4580 = vxpose.xlu0.b32.cont [10/16] 0.0, 128
        %4581 = vxpose.xlu0.b32.cont [11/16] 0.0, 128
        %4582 = vxpose.xlu0.b32.cont [12/16] 0.0, 128
        %4583 = vxpose.xlu0.b32.cont [13/16] 0.0, 128
        %4584 = vxpose.xlu0.b32.cont [14/16] 0.0, 128
        %4585 = vxpose.xlu0.b32.cont [15/16] 0.0, 128
        %4586 = vxpose.xlu0.b32.end [16/16] 0.0, 128
        %v4587 = vpop.trf.xlu0
        %v4588 = vpop.trf.xlu0
        %v4589 = vpop.trf.xlu0
        %v4590 = vpop.trf.xlu0
        %v4591 = vpop.trf.xlu0
        %v4592 = vpop.trf.xlu0
        %v4593 = vpop.trf.xlu0
        %v4594 = vpop.trf.xlu0
        %v4595 = vpop.trf.xlu0
        %v4596 = vpop.trf.xlu0
        %v4597 = vpop.trf.xlu0
        %v4598 = vpop.trf.xlu0
        %v4599 = vpop.trf.xlu0
        %v4600 = vpop.trf.xlu0
        %v4601 = vpop.trf.xlu0
        %v4602 = vpop.trf.xlu0
        %v4603 = vpack.c.bf16 %v4588, %v4587
        %v4604 = vpack.c.bf16 %v4590, %v4589
        %4606 = vrot.lane.b32.xlu0 %v4545, 96
        %v4607 = vpop.permute.xlu0 %4606
        %v4609 = vsel %vm1955, %v4607, 0
        %4611 = vmatpush.bf16.msra.mxu0 0
        %4612 = vmatpush.bf16.msra.mxu0 0
        %4613 = vmatpush.bf16.msra.mxu0 0
        %4614 = vmatpush.bf16.msra.mxu0 0
        %4615 = vmatpush.bf16.msra.mxu0 0
        %4616 = vmatpush.bf16.msra.mxu0 0
        %4617 = vmatpush.bf16.msra.mxu0 %v4604
        %4618 = vmatpush.bf16.msra.mxu0 %v4603
        %4619 = vmatmul.bf16.gmra.mxu0 %v4609
        %v4620 = vpop.f32.mrf.mxu0
        %v4621 = vadd.f32 0.0, %v4620
        %v4622 = vpop.f32.mrf.mxu0
        %v4623 = vadd.f32 0.0, %v4622
        %4624 = vdwg.mxu0
        %v4625 = vmul.f32 %v4621, 0.17677669
        %v4626 = vmul.f32 %v4623, 0.17677669
        %v4627 = vadd.f32 %v4625, %v4017
        %v4628 = vadd.f32 %v4626, %v4018
        %v4629 = vsel %vm1977, %v4627, -inf
        %4630 = vmax.xlane.f32.xlu0 %v4629
        %v4631 = vpop.xlane.xlu0 %4630
        %v4632 = vsel %vm1977, %v4628, -inf
        %4633 = vmax.xlane.f32.xlu0 %v4632
        %v4634 = vpop.xlane.xlu0 %4633
        %v4635 = vsub.f32 %v4627, %v4631
        %v4636 = vsub.f32 %v4628, %v4634
        %v4637 = vmul.f32 %v4635, 1.442695
        %v4638 = vpow.pop %v4637
        %v4639 = vmul.f32 %v4636, 1.442695
        %v4640 = vpow.pop %v4639
        %v4641 = vsel %vm1977, %v4638, 0.0
        %4642 = vadd.xlane.f32.xlu0 %v4641
        %v4643 = vpop.xlane.xlu0 %4642
        %v4644 = vsel %vm1977, %v4640, 0.0
        %4645 = vadd.xlane.f32.xlu0 %v4644
        %v4646 = vpop.xlane.xlu0 %4645
        %v4647 = vrcp.pop %v4643
        %v4648 = vrcp.pop %v4646
        %v4649 = vmul.f32 %v4638, %v4647
        %v4650 = vmul.f32 %v4640, %v4648
        %v4651 = vpack.c.bf16 %v4650, %v4649
        %4652 = vrot.lane.b32.xlu0 %v4545, 32
        %v4653 = vpop.permute.xlu0 %4652
        %v4656 = vsel %vm1977, %v4651, 0
        %4658 = vmatpush.bf16.msra.mxu0 0
        %4659 = vmatpush.bf16.msra.mxu0 0
        %4660 = vmatpush.bf16.msra.mxu0 0
        %4661 = vmatpush.bf16.msra.mxu0 0
        %4662 = vmatpush.bf16.msra.mxu0 0
        %4663 = vmatpush.bf16.msra.mxu0 0
        %4664 = vmatpush.bf16.msra.mxu0 0
        %4665 = vmatpush.bf16.msra.mxu0 %v4653
        %4666 = vmatmul.bf16.gmra.mxu0 %v4656
        %v4667 = vpop.f32.mrf.mxu0
        %v4668 = vadd.f32 0.0, %v4667
        %v4669 = vpop.f32.mrf.mxu0
        %v4670 = vadd.f32 0.0, %v4669
        %4671 = vdwg.mxu0
        %4674 = vrot.lane.b32.xlu0 %v4453, 32
        %v4675 = vpop.permute.xlu0 %4674
        %4676 = vrot.lane.b32.xlu0 %v4455, 32
        %v4677 = vpop.permute.xlu0 %4676
        %4682 = vrot.lane.b32.xlu0 %v4559, 64
        %v4683 = vpop.permute.xlu0 %4682
        %4684 = vrot.lane.b32.xlu0 %v4561, 64
        %v4685 = vpop.permute.xlu0 %4684
        %4690 = vrot.lane.b32.xlu0 %v4668, 96
        %v4691 = vpop.permute.xlu0 %4690
        %4692 = vrot.lane.b32.xlu0 %v4670, 96
        %v4693 = vpop.permute.xlu0 %4692
        %v4696 = vsel %vm1955, %v4351, %v4675
        %v4697 = vsel %vm1955, %v4353, %v4677
        %v4698 = vsel %vm2365, %v4696, %v4683
        %v4699 = vsel %vm2365, %v4697, %v4685
        %v4700 = vsel %vm2368, %v4698, %v4691
        %v4701 = vsel %vm2368, %v4699, %v4693
        %v4702 = vpack.c.bf16 %v4701, %v4700
        %v4704 = vperm.slane %v4068, 0
        %v4722 = vunpack.c.l.b16 %v4052
        %v4723 = vunpack.c.l.b16 %v4053
        %v4724 = vunpack.c.l.b16 %v4054
        %v4725 = vunpack.c.l.b16 %v4055
        %v4726 = vunpack.c.l.b16 %v4056
        %v4727 = vunpack.c.l.b16 %v4057
        %v4728 = vunpack.c.l.b16 %v4058
        %v4729 = vunpack.c.l.b16 %v4059
        %v4730 = vunpack.c.l.b16 %v4060
        %v4731 = vunpack.c.l.b16 %v4061
        %v4732 = vunpack.c.l.b16 %v4062
        %v4733 = vunpack.c.l.b16 %v4063
        %v4734 = vunpack.c.l.b16 %v4064
        %v4735 = vunpack.c.l.b16 %v4065
        %v4736 = vunpack.c.l.b16 %v4066
        %v4737 = vunpack.c.l.b16 %v4067
        %v4738 = vpack.c.b16 %v4723, %v4722
        %v4739 = vpack.c.b16 %v4725, %v4724
        %v4740 = vpack.c.b16 %v4727, %v4726
        %v4741 = vpack.c.b16 %v4729, %v4728
        %v4742 = vpack.c.b16 %v4731, %v4730
        %v4743 = vpack.c.b16 %v4733, %v4732
        %v4744 = vpack.c.b16 %v4735, %v4734
        %v4745 = vpack.c.b16 %v4737, %v4736
        %4754 = vmatpush.bf16.msra.mxu0 %v4745
        %4755 = vmatpush.bf16.msra.mxu0 %v4744
        %4756 = vmatpush.bf16.msra.mxu0 %v4743
        %4757 = vmatpush.bf16.msra.mxu0 %v4742
        %4758 = vmatpush.bf16.msra.mxu0 %v4741
        %4759 = vmatpush.bf16.msra.mxu0 %v4740
        %4760 = vmatpush.bf16.msra.mxu0 %v4739
        %4761 = vmatpush.bf16.msra.mxu0 %v4738
        %4762 = vmatmul.bf16.gmra.mxu0 %v4702
        %v4763 = vpop.f32.mrf.mxu0
        %v4764 = vadd.f32 %v4704, %v4763
        %v4765 = vpop.f32.mrf.mxu0
        %v4766 = vadd.f32 %v4704, %v4765
        %4767 = vdwg.mxu0
        %v4768 = vadd.f32 %v4764, %v4015
        %v4769 = vadd.f32 %v4766, %v4016
        %v4770 = vld [vmem:[#allocation20] sm:$0x1]
        %v4771 = vld [vmem:[#allocation22] sm:$0x1]
        %4772 = vadd.xlane.f32.xlu0 %v4768
        %v4773 = vpop.xlane.xlu0 %4772
        %4774 = vadd.xlane.f32.xlu0 %v4769
        %v4775 = vpop.xlane.xlu0 %4774
        %v4776 = vmul.f32 %v4773, %v2451
        %v4777 = vmul.f32 %v4775, %v2451
        %v4778 = vsub.f32 %v4768, %v4776
        %v4779 = vsub.f32 %v4769, %v4777
        %v4780 = vmul.f32 %v4778, %v4778
        %v4781 = vmul.f32 %v4779, %v4779
        %4782 = vadd.xlane.f32.xlu0 %v4780
        %v4783 = vpop.xlane.xlu0 %4782
        %4784 = vadd.xlane.f32.xlu0 %v4781
        %v4785 = vpop.xlane.xlu0 %4784
        %v4786 = vmul.f32 %v4783, %v2451
        %v4787 = vmul.f32 %v4785, %v2451
        %v4788 = vadd.f32 %v4786, 1e-05
        %v4789 = vadd.f32 %v4787, 1e-05
        %v4790 = vrsqrt.pop %v4788
        %v4791 = vmul.f32 %v4790, %v4788
        %v4792 = vmul.f32 %v4791, %v4790
        %v4793 = vmul.f32 0.5, %v4792
        %v4794 = vsub.f32 1.5, %v4793
        %v4795 = vmul.f32 %v4790, %v4794
        %vm4796 = vweird.f32 %v4788
        %vm4797 = vweird.f32 %v4790
        %vm4798 = vmor %vm4796, %vm4797
        %v4799 = vsel %vm4798, %v4790, %v4795
        %v4800 = vrsqrt.pop %v4789
        %v4801 = vmul.f32 %v4800, %v4789
        %v4802 = vmul.f32 %v4801, %v4800
        %v4803 = vmul.f32 0.5, %v4802
        %v4804 = vsub.f32 1.5, %v4803
        %v4805 = vmul.f32 %v4800, %v4804
        %vm4806 = vweird.f32 %v4789
        %vm4807 = vweird.f32 %v4800
        %vm4808 = vmor %vm4806, %vm4807
        %v4809 = vsel %vm4808, %v4800, %v4805
        %v4810 = vmul.f32 %v4778, %v4799
        %v4811 = vmul.f32 %v4779, %v4809
        %v4813 = vperm.slane %v4770, 0
        %v4815 = vmul.f32 %v4810, %v4813
        %v4816 = vmul.f32 %v4811, %v4813
        %v4818 = vperm.slane %v4771, 0
        %v4820 = vadd.f32 %v4815, %v4818
        %v4821 = vadd.f32 %v4816, %v4818
        %v4822 = vld [vmem:[#allocation26] sm:$0xf]
        %v4823 = vld [vmem:[#allocation26 + $0x4] sm:$0xf]
        %v4824 = vld [vmem:[#allocation26 + $0x8] sm:$0xf]
        %v4825 = vld [vmem:[#allocation26 + $0xc] sm:$0xf]
        %v4826 = vld [vmem:[#allocation26 + $0x10] sm:$0xf]
        %v4827 = vld [vmem:[#allocation26 + $0x14] sm:$0xf]
        %v4828 = vld [vmem:[#allocation26 + $0x18] sm:$0xf]
        %v4829 = vld [vmem:[#allocation26 + $0x1c] sm:$0xf]
        %v4830 = vld [vmem:[#allocation26 + $0x20] sm:$0xf]
        %v4831 = vld [vmem:[#allocation26 + $0x24] sm:$0xf]
        %v4832 = vld [vmem:[#allocation26 + $0x28] sm:$0xf]
        %v4833 = vld [vmem:[#allocation26 + $0x2c] sm:$0xf]
        %v4834 = vld [vmem:[#allocation26 + $0x30] sm:$0xf]
        %v4835 = vld [vmem:[#allocation26 + $0x34] sm:$0xf]
        %v4836 = vld [vmem:[#allocation26 + $0x38] sm:$0xf]
        %v4837 = vld [vmem:[#allocation26 + $0x3c] sm:$0xf]
        %v4838 = vld [vmem:[#allocation28] sm:$0x1]
        %v4839 = vld [vmem:[#allocation23] sm:$0xff]
        %v4840 = vld [vmem:[#allocation23 + $0x8] sm:$0xff]
        %v4841 = vld [vmem:[#allocation23 + $0x10] sm:$0xff]
        %v4842 = vld [vmem:[#allocation23 + $0x18] sm:$0xff]
        %v4843 = vld [vmem:[#allocation23 + $0x20] sm:$0xff]
        %v4844 = vld [vmem:[#allocation23 + $0x28] sm:$0xff]
        %v4845 = vld [vmem:[#allocation23 + $0x30] sm:$0xff]
        %v4846 = vld [vmem:[#allocation23 + $0x38] sm:$0xff]
        %v4847 = vld [vmem:[#allocation23 + $0x40] sm:$0xff]
        %v4848 = vld [vmem:[#allocation23 + $0x48] sm:$0xff]
        %v4849 = vld [vmem:[#allocation23 + $0x50] sm:$0xff]
        %v4850 = vld [vmem:[#allocation23 + $0x58] sm:$0xff]
        %v4851 = vld [vmem:[#allocation23 + $0x60] sm:$0xff]
        %v4852 = vld [vmem:[#allocation23 + $0x68] sm:$0xff]
        %v4853 = vld [vmem:[#allocation23 + $0x70] sm:$0xff]
        %v4854 = vld [vmem:[#allocation23 + $0x78] sm:$0xff]
        %v4855 = vld [vmem:[#allocation25] sm:$0x3]
        %v4856 = vld [vmem:[#allocation29] sm:$0xf]
        %v4857 = vld [vmem:[#allocation29 + $0x4] sm:$0xf]
        %v4858 = vld [vmem:[#allocation29 + $0x8] sm:$0xf]
        %v4859 = vld [vmem:[#allocation29 + $0xc] sm:$0xf]
        %v4860 = vld [vmem:[#allocation29 + $0x10] sm:$0xf]
        %v4861 = vld [vmem:[#allocation29 + $0x14] sm:$0xf]
        %v4862 = vld [vmem:[#allocation29 + $0x18] sm:$0xf]
        %v4863 = vld [vmem:[#allocation29 + $0x1c] sm:$0xf]
        %v4864 = vld [vmem:[#allocation29 + $0x20] sm:$0xf]
        %v4865 = vld [vmem:[#allocation29 + $0x24] sm:$0xf]
        %v4866 = vld [vmem:[#allocation29 + $0x28] sm:$0xf]
        %v4867 = vld [vmem:[#allocation29 + $0x2c] sm:$0xf]
        %v4868 = vld [vmem:[#allocation29 + $0x30] sm:$0xf]
        %v4869 = vld [vmem:[#allocation29 + $0x34] sm:$0xf]
        %v4870 = vld [vmem:[#allocation29 + $0x38] sm:$0xf]
        %v4871 = vld [vmem:[#allocation29 + $0x3c] sm:$0xf]
        %v4872 = vld [vmem:[#allocation31] sm:$0x1]
        %v4873 = vpack.c.bf16 %v4821, %v4820
        %v4875 = vperm.slane %v4838, 0
        %v4893 = vunpack.c.l.b16 %v4822
        %v4894 = vunpack.c.l.b16 %v4823
        %v4895 = vunpack.c.l.b16 %v4824
        %v4896 = vunpack.c.l.b16 %v4825
        %v4897 = vunpack.c.l.b16 %v4826
        %v4898 = vunpack.c.l.b16 %v4827
        %v4899 = vunpack.c.l.b16 %v4828
        %v4900 = vunpack.c.l.b16 %v4829
        %v4901 = vunpack.c.l.b16 %v4830
        %v4902 = vunpack.c.l.b16 %v4831
        %v4903 = vunpack.c.l.b16 %v4832
        %v4904 = vunpack.c.l.b16 %v4833
        %v4905 = vunpack.c.l.b16 %v4834
        %v4906 = vunpack.c.l.b16 %v4835
        %v4907 = vunpack.c.l.b16 %v4836
        %v4908 = vunpack.c.l.b16 %v4837
        %v4909 = vpack.c.b16 %v4894, %v4893
        %v4910 = vpack.c.b16 %v4896, %v4895
        %v4911 = vpack.c.b16 %v4898, %v4897
        %v4912 = vpack.c.b16 %v4900, %v4899
        %v4913 = vpack.c.b16 %v4902, %v4901
        %v4914 = vpack.c.b16 %v4904, %v4903
        %v4915 = vpack.c.b16 %v4906, %v4905
        %v4916 = vpack.c.b16 %v4908, %v4907
        %4925 = vmatpush.bf16.msra.mxu0 %v4916
        %4926 = vmatpush.bf16.msra.mxu0 %v4915
        %4927 = vmatpush.bf16.msra.mxu0 %v4914
        %4928 = vmatpush.bf16.msra.mxu0 %v4913
        %4929 = vmatpush.bf16.msra.mxu0 %v4912
        %4930 = vmatpush.bf16.msra.mxu0 %v4911
        %4931 = vmatpush.bf16.msra.mxu0 %v4910
        %4932 = vmatpush.bf16.msra.mxu0 %v4909
        %4933 = vmatmul.bf16.gmra.mxu0 %v4873
        %v4934 = vpop.f32.mrf.mxu0
        %v4935 = vadd.f32 %v4875, %v4934
        %v4936 = vpop.f32.mrf.mxu0
        %v4937 = vadd.f32 %v4875, %v4936
        %4938 = vdwg.mxu0
        %v4939 = vpack.c.bf16 %v4014, %v4013
        %v4941 = vperm.slane %v4855, 0
        %v4942 = vperm.slane %v4855, 1
        %v4961 = vunpack.c.l.b16 %v4839
        %v4962 = vunpack.c.h.b16 %v4839
        %v4963 = vunpack.c.l.b16 %v4840
        %v4964 = vunpack.c.h.b16 %v4840
        %v4965 = vunpack.c.l.b16 %v4841
        %v4966 = vunpack.c.h.b16 %v4841
        %v4967 = vunpack.c.l.b16 %v4842
        %v4968 = vunpack.c.h.b16 %v4842
        %v4969 = vunpack.c.l.b16 %v4843
        %v4970 = vunpack.c.h.b16 %v4843
        %v4971 = vunpack.c.l.b16 %v4844
        %v4972 = vunpack.c.h.b16 %v4844
        %v4973 = vunpack.c.l.b16 %v4845
        %v4974 = vunpack.c.h.b16 %v4845
        %v4975 = vunpack.c.l.b16 %v4846
        %v4976 = vunpack.c.h.b16 %v4846
        %v4977 = vunpack.c.l.b16 %v4847
        %v4978 = vunpack.c.h.b16 %v4847
        %v4979 = vunpack.c.l.b16 %v4848
        %v4980 = vunpack.c.h.b16 %v4848
        %v4981 = vunpack.c.l.b16 %v4849
        %v4982 = vunpack.c.h.b16 %v4849
        %v4983 = vunpack.c.l.b16 %v4850
        %v4984 = vunpack.c.h.b16 %v4850
        %v4985 = vunpack.c.l.b16 %v4851
        %v4986 = vunpack.c.h.b16 %v4851
        %v4987 = vunpack.c.l.b16 %v4852
        %v4988 = vunpack.c.h.b16 %v4852
        %v4989 = vunpack.c.l.b16 %v4853
        %v4990 = vunpack.c.h.b16 %v4853
        %v4991 = vunpack.c.l.b16 %v4854
        %v4992 = vunpack.c.h.b16 %v4854
        %v4993 = vpack.c.b16 %v4963, %v4961
        %v4994 = vpack.c.b16 %v4964, %v4962
        %v4995 = vpack.c.b16 %v4967, %v4965
        %v4996 = vpack.c.b16 %v4968, %v4966
        %v4997 = vpack.c.b16 %v4971, %v4969
        %v4998 = vpack.c.b16 %v4972, %v4970
        %v4999 = vpack.c.b16 %v4975, %v4973
        %v5000 = vpack.c.b16 %v4976, %v4974
        %v5001 = vpack.c.b16 %v4979, %v4977
        %v5002 = vpack.c.b16 %v4980, %v4978
        %v5003 = vpack.c.b16 %v4983, %v4981
        %v5004 = vpack.c.b16 %v4984, %v4982
        %v5005 = vpack.c.b16 %v4987, %v4985
        %v5006 = vpack.c.b16 %v4988, %v4986
        %v5007 = vpack.c.b16 %v4991, %v4989
        %v5008 = vpack.c.b16 %v4992, %v4990
        %5025 = vmatpush.bf16.msra.mxu0 %v5007
        %5026 = vmatpush.bf16.msra.mxu0 %v5005
        %5027 = vmatpush.bf16.msra.mxu0 %v5003
        %5028 = vmatpush.bf16.msra.mxu0 %v5001
        %5029 = vmatpush.bf16.msra.mxu0 %v4999
        %5030 = vmatpush.bf16.msra.mxu0 %v4997
        %5031 = vmatpush.bf16.msra.mxu0 %v4995
        %5032 = vmatpush.bf16.msra.mxu0 %v4993
        %5033 = vmatmul.bf16.gmra.mxu0 %v4939
        %v5034 = vpop.f32.mrf.mxu0
        %v5035 = vadd.f32 %v4941, %v5034
        %v5036 = vpop.f32.mrf.mxu0
        %v5037 = vadd.f32 %v4941, %v5036
        %5038 = vdwg.mxu0
        %5039 = vmatpush.bf16.msra.mxu0 %v5008
        %5040 = vmatpush.bf16.msra.mxu0 %v5006
        %5041 = vmatpush.bf16.msra.mxu0 %v5004
        %5042 = vmatpush.bf16.msra.mxu0 %v5002
        %5043 = vmatpush.bf16.msra.mxu0 %v5000
        %5044 = vmatpush.bf16.msra.mxu0 %v4998
        %5045 = vmatpush.bf16.msra.mxu0 %v4996
        %5046 = vmatpush.bf16.msra.mxu0 %v4994
        %5047 = vmatmul.bf16.gmra.mxu0 %v4939
        %v5048 = vpop.f32.mrf.mxu0
        %v5049 = vadd.f32 %v4942, %v5048
        %v5050 = vpop.f32.mrf.mxu0
        %v5051 = vadd.f32 %v4942, %v5050
        %5052 = vdwg.mxu0
        %v5053 = vpack.c.bf16 %v4937, %v4935
        %5054 = vxpose.xlu0.b32.start [1/16] %v5035, 128
        %5055 = vxpose.xlu0.b32.cont [2/16] %v5037, 128
        %5056 = vxpose.xlu0.b32.cont [3/16] 0.0, 128
        %5057 = vxpose.xlu0.b32.cont [4/16] 0.0, 128
        %5058 = vxpose.xlu0.b32.cont [5/16] 0.0, 128
        %5059 = vxpose.xlu0.b32.cont [6/16] 0.0, 128
        %5060 = vxpose.xlu0.b32.cont [7/16] 0.0, 128
        %5061 = vxpose.xlu0.b32.cont [8/16] 0.0, 128
        %5062 = vxpose.xlu0.b32.cont [9/16] 0.0, 128
        %5063 = vxpose.xlu0.b32.cont [10/16] 0.0, 128
        %5064 = vxpose.xlu0.b32.cont [11/16] 0.0, 128
        %5065 = vxpose.xlu0.b32.cont [12/16] 0.0, 128
        %5066 = vxpose.xlu0.b32.cont [13/16] 0.0, 128
        %5067 = vxpose.xlu0.b32.cont [14/16] 0.0, 128
        %5068 = vxpose.xlu0.b32.cont [15/16] 0.0, 128
        %5069 = vxpose.xlu0.b32.end [16/16] 0.0, 128
        %v5070 = vpop.trf.xlu0
        %v5071 = vpop.trf.xlu0
        %v5072 = vpop.trf.xlu0
        %v5073 = vpop.trf.xlu0
        %v5074 = vpop.trf.xlu0
        %v5075 = vpop.trf.xlu0
        %v5076 = vpop.trf.xlu0
        %v5077 = vpop.trf.xlu0
        %v5078 = vpop.trf.xlu0
        %v5079 = vpop.trf.xlu0
        %v5080 = vpop.trf.xlu0
        %v5081 = vpop.trf.xlu0
        %v5082 = vpop.trf.xlu0
        %v5083 = vpop.trf.xlu0
        %v5084 = vpop.trf.xlu0
        %v5085 = vpop.trf.xlu0
        %v5086 = vpack.c.bf16 %v5071, %v5070
        %v5087 = vpack.c.bf16 %v5073, %v5072
        %v5089 = vsel %vm1955, %v5053, 0
        %5091 = vmatpush.bf16.msra.mxu0 0
        %5092 = vmatpush.bf16.msra.mxu0 0
        %5093 = vmatpush.bf16.msra.mxu0 0
        %5094 = vmatpush.bf16.msra.mxu0 0
        %5095 = vmatpush.bf16.msra.mxu0 0
        %5096 = vmatpush.bf16.msra.mxu0 0
        %5097 = vmatpush.bf16.msra.mxu0 %v5087
        %5098 = vmatpush.bf16.msra.mxu0 %v5086
        %5099 = vmatmul.bf16.gmra.mxu0 %v5089
        %v5100 = vpop.f32.mrf.mxu0
        %v5101 = vadd.f32 0.0, %v5100
        %v5102 = vpop.f32.mrf.mxu0
        %v5103 = vadd.f32 0.0, %v5102
        %5104 = vdwg.mxu0
        %v5105 = vmul.f32 %v5101, 0.17677669
        %v5106 = vmul.f32 %v5103, 0.17677669
        %v5107 = vsel %vm1977, %v5105, -inf
        %5108 = vmax.xlane.f32.xlu0 %v5107
        %v5109 = vpop.xlane.xlu0 %5108
        %v5110 = vsel %vm1977, %v5106, -inf
        %5111 = vmax.xlane.f32.xlu0 %v5110
        %v5112 = vpop.xlane.xlu0 %5111
        %v5113 = vsub.f32 %v5105, %v5109
        %v5114 = vsub.f32 %v5106, %v5112
        %v5115 = vmul.f32 %v5113, 1.442695
        %v5116 = vpow.pop %v5115
        %v5117 = vmul.f32 %v5114, 1.442695
        %v5118 = vpow.pop %v5117
        %v5119 = vsel %vm1977, %v5116, 0.0
        %5120 = vadd.xlane.f32.xlu0 %v5119
        %v5121 = vpop.xlane.xlu0 %5120
        %v5122 = vsel %vm1977, %v5118, 0.0
        %5123 = vadd.xlane.f32.xlu0 %v5122
        %v5124 = vpop.xlane.xlu0 %5123
        %v5125 = vrcp.pop %v5121
        %v5126 = vrcp.pop %v5124
        %v5127 = vmul.f32 %v5116, %v5125
        %v5128 = vmul.f32 %v5118, %v5126
        %v5129 = vpack.c.bf16 %v5128, %v5127
        %v5130 = vpack.c.bf16 %v5037, %v5035
        %5132 = vrot.lane.b32.xlu0 %v5130, 96
        %v5133 = vpop.permute.xlu0 %5132
        %v5136 = vsel %vm1977, %v5129, 0
        %5138 = vmatpush.bf16.msra.mxu0 0
        %5139 = vmatpush.bf16.msra.mxu0 0
        %5140 = vmatpush.bf16.msra.mxu0 0
        %5141 = vmatpush.bf16.msra.mxu0 0
        %5142 = vmatpush.bf16.msra.mxu0 0
        %5143 = vmatpush.bf16.msra.mxu0 0
        %5144 = vmatpush.bf16.msra.mxu0 0
        %5145 = vmatpush.bf16.msra.mxu0 %v5133
        %5146 = vmatmul.bf16.gmra.mxu0 %v5136
        %v5147 = vpop.f32.mrf.mxu0
        %v5148 = vadd.f32 0.0, %v5147
        %v5149 = vpop.f32.mrf.mxu0
        %v5150 = vadd.f32 0.0, %v5149
        %5151 = vdwg.mxu0
        %5154 = vrot.lane.b32.xlu0 %v5035, 64
        %v5155 = vpop.permute.xlu0 %5154
        %5156 = vrot.lane.b32.xlu0 %v5037, 64
        %v5157 = vpop.permute.xlu0 %5156
        %5160 = vxpose.xlu0.b32.start [1/16] %v5155, 128
        %5161 = vxpose.xlu0.b32.cont [2/16] %v5157, 128
        %5162 = vxpose.xlu0.b32.cont [3/16] 0.0, 128
        %5163 = vxpose.xlu0.b32.cont [4/16] 0.0, 128
        %5164 = vxpose.xlu0.b32.cont [5/16] 0.0, 128
        %5165 = vxpose.xlu0.b32.cont [6/16] 0.0, 128
        %5166 = vxpose.xlu0.b32.cont [7/16] 0.0, 128
        %5167 = vxpose.xlu0.b32.cont [8/16] 0.0, 128
        %5168 = vxpose.xlu0.b32.cont [9/16] 0.0, 128
        %5169 = vxpose.xlu0.b32.cont [10/16] 0.0, 128
        %5170 = vxpose.xlu0.b32.cont [11/16] 0.0, 128
        %5171 = vxpose.xlu0.b32.cont [12/16] 0.0, 128
        %5172 = vxpose.xlu0.b32.cont [13/16] 0.0, 128
        %5173 = vxpose.xlu0.b32.cont [14/16] 0.0, 128
        %5174 = vxpose.xlu0.b32.cont [15/16] 0.0, 128
        %5175 = vxpose.xlu0.b32.end [16/16] 0.0, 128
        %v5176 = vpop.trf.xlu0
        %v5177 = vpop.trf.xlu0
        %v5178 = vpop.trf.xlu0
        %v5179 = vpop.trf.xlu0
        %v5180 = vpop.trf.xlu0
        %v5181 = vpop.trf.xlu0
        %v5182 = vpop.trf.xlu0
        %v5183 = vpop.trf.xlu0
        %v5184 = vpop.trf.xlu0
        %v5185 = vpop.trf.xlu0
        %v5186 = vpop.trf.xlu0
        %v5187 = vpop.trf.xlu0
        %v5188 = vpop.trf.xlu0
        %v5189 = vpop.trf.xlu0
        %v5190 = vpop.trf.xlu0
        %v5191 = vpop.trf.xlu0
        %v5192 = vpack.c.bf16 %v5177, %v5176
        %v5193 = vpack.c.bf16 %v5179, %v5178
        %5195 = vrot.lane.b32.xlu0 %v5053, 96
        %v5196 = vpop.permute.xlu0 %5195
        %v5198 = vsel %vm1955, %v5196, 0
        %5200 = vmatpush.bf16.msra.mxu0 0
        %5201 = vmatpush.bf16.msra.mxu0 0
        %5202 = vmatpush.bf16.msra.mxu0 0
        %5203 = vmatpush.bf16.msra.mxu0 0
        %5204 = vmatpush.bf16.msra.mxu0 0
        %5205 = vmatpush.bf16.msra.mxu0 0
        %5206 = vmatpush.bf16.msra.mxu0 %v5193
        %5207 = vmatpush.bf16.msra.mxu0 %v5192
        %5208 = vmatmul.bf16.gmra.mxu0 %v5198
        %v5209 = vpop.f32.mrf.mxu0
        %v5210 = vadd.f32 0.0, %v5209
        %v5211 = vpop.f32.mrf.mxu0
        %v5212 = vadd.f32 0.0, %v5211
        %5213 = vdwg.mxu0
        %v5214 = vmul.f32 %v5210, 0.17677669
        %v5215 = vmul.f32 %v5212, 0.17677669
        %v5216 = vsel %vm1977, %v5214, -inf
        %5217 = vmax.xlane.f32.xlu0 %v5216
        %v5218 = vpop.xlane.xlu0 %5217
        %v5219 = vsel %vm1977, %v5215, -inf
        %5220 = vmax.xlane.f32.xlu0 %v5219
        %v5221 = vpop.xlane.xlu0 %5220
        %v5222 = vsub.f32 %v5214, %v5218
        %v5223 = vsub.f32 %v5215, %v5221
        %v5224 = vmul.f32 %v5222, 1.442695
        %v5225 = vpow.pop %v5224
        %v5226 = vmul.f32 %v5223, 1.442695
        %v5227 = vpow.pop %v5226
        %v5228 = vsel %vm1977, %v5225, 0.0
        %5229 = vadd.xlane.f32.xlu0 %v5228
        %v5230 = vpop.xlane.xlu0 %5229
        %v5231 = vsel %vm1977, %v5227, 0.0
        %5232 = vadd.xlane.f32.xlu0 %v5231
        %v5233 = vpop.xlane.xlu0 %5232
        %v5234 = vrcp.pop %v5230
        %v5235 = vrcp.pop %v5233
        %v5236 = vmul.f32 %v5225, %v5234
        %v5237 = vmul.f32 %v5227, %v5235
        %v5238 = vpack.c.bf16 %v5237, %v5236
        %5239 = vrot.lane.b32.xlu0 %v5130, 32
        %v5240 = vpop.permute.xlu0 %5239
        %v5243 = vsel %vm1977, %v5238, 0
        %5245 = vmatpush.bf16.msra.mxu0 0
        %5246 = vmatpush.bf16.msra.mxu0 0
        %5247 = vmatpush.bf16.msra.mxu0 0
        %5248 = vmatpush.bf16.msra.mxu0 0
        %5249 = vmatpush.bf16.msra.mxu0 0
        %5250 = vmatpush.bf16.msra.mxu0 0
        %5251 = vmatpush.bf16.msra.mxu0 0
        %5252 = vmatpush.bf16.msra.mxu0 %v5240
        %5253 = vmatmul.bf16.gmra.mxu0 %v5243
        %v5254 = vpop.f32.mrf.mxu0
        %v5255 = vadd.f32 0.0, %v5254
        %v5256 = vpop.f32.mrf.mxu0
        %v5257 = vadd.f32 0.0, %v5256
        %5258 = vdwg.mxu0
        %5259 = vxpose.xlu0.b32.start [1/16] %v5049, 128
        %5260 = vxpose.xlu0.b32.cont [2/16] %v5051, 128
        %5261 = vxpose.xlu0.b32.cont [3/16] 0.0, 128
        %5262 = vxpose.xlu0.b32.cont [4/16] 0.0, 128
        %5263 = vxpose.xlu0.b32.cont [5/16] 0.0, 128
        %5264 = vxpose.xlu0.b32.cont [6/16] 0.0, 128
        %5265 = vxpose.xlu0.b32.cont [7/16] 0.0, 128
        %5266 = vxpose.xlu0.b32.cont [8/16] 0.0, 128
        %5267 = vxpose.xlu0.b32.cont [9/16] 0.0, 128
        %5268 = vxpose.xlu0.b32.cont [10/16] 0.0, 128
        %5269 = vxpose.xlu0.b32.cont [11/16] 0.0, 128
        %5270 = vxpose.xlu0.b32.cont [12/16] 0.0, 128
        %5271 = vxpose.xlu0.b32.cont [13/16] 0.0, 128
        %5272 = vxpose.xlu0.b32.cont [14/16] 0.0, 128
        %5273 = vxpose.xlu0.b32.cont [15/16] 0.0, 128
        %5274 = vxpose.xlu0.b32.end [16/16] 0.0, 128
        %v5275 = vpop.trf.xlu0
        %v5276 = vpop.trf.xlu0
        %v5277 = vpop.trf.xlu0
        %v5278 = vpop.trf.xlu0
        %v5279 = vpop.trf.xlu0
        %v5280 = vpop.trf.xlu0
        %v5281 = vpop.trf.xlu0
        %v5282 = vpop.trf.xlu0
        %v5283 = vpop.trf.xlu0
        %v5284 = vpop.trf.xlu0
        %v5285 = vpop.trf.xlu0
        %v5286 = vpop.trf.xlu0
        %v5287 = vpop.trf.xlu0
        %v5288 = vpop.trf.xlu0
        %v5289 = vpop.trf.xlu0
        %v5290 = vpop.trf.xlu0
        %v5291 = vpack.c.bf16 %v5276, %v5275
        %v5292 = vpack.c.bf16 %v5278, %v5277
        %5293 = vrot.lane.b32.xlu0 %v5053, 64
        %v5294 = vpop.permute.xlu0 %5293
        %v5296 = vsel %vm1955, %v5294, 0
        %5298 = vmatpush.bf16.msra.mxu0 0
        %5299 = vmatpush.bf16.msra.mxu0 0
        %5300 = vmatpush.bf16.msra.mxu0 0
        %5301 = vmatpush.bf16.msra.mxu0 0
        %5302 = vmatpush.bf16.msra.mxu0 0
        %5303 = vmatpush.bf16.msra.mxu0 0
        %5304 = vmatpush.bf16.msra.mxu0 %v5292
        %5305 = vmatpush.bf16.msra.mxu0 %v5291
        %5306 = vmatmul.bf16.gmra.mxu0 %v5296
        %v5307 = vpop.f32.mrf.mxu0
        %v5308 = vadd.f32 0.0, %v5307
        %v5309 = vpop.f32.mrf.mxu0
        %v5310 = vadd.f32 0.0, %v5309
        %5311 = vdwg.mxu0
        %v5312 = vmul.f32 %v5308, 0.17677669
        %v5313 = vmul.f32 %v5310, 0.17677669
        %v5314 = vsel %vm1977, %v5312, -inf
        %5315 = vmax.xlane.f32.xlu0 %v5314
        %v5316 = vpop.xlane.xlu0 %5315
        %v5317 = vsel %vm1977, %v5313, -inf
        %5318 = vmax.xlane.f32.xlu0 %v5317
        %v5319 = vpop.xlane.xlu0 %5318
        %v5320 = vsub.f32 %v5312, %v5316
        %v5321 = vsub.f32 %v5313, %v5319
        %v5322 = vmul.f32 %v5320, 1.442695
        %v5323 = vpow.pop %v5322
        %v5324 = vmul.f32 %v5321, 1.442695
        %v5325 = vpow.pop %v5324
        %v5326 = vsel %vm1977, %v5323, 0.0
        %5327 = vadd.xlane.f32.xlu0 %v5326
        %v5328 = vpop.xlane.xlu0 %5327
        %v5329 = vsel %vm1977, %v5325, 0.0
        %5330 = vadd.xlane.f32.xlu0 %v5329
        %v5331 = vpop.xlane.xlu0 %5330
        %v5332 = vrcp.pop %v5328
        %v5333 = vrcp.pop %v5331
        %v5334 = vmul.f32 %v5323, %v5332
        %v5335 = vmul.f32 %v5325, %v5333
        %v5336 = vpack.c.bf16 %v5335, %v5334
        %v5337 = vpack.c.bf16 %v5051, %v5049
        %5339 = vrot.lane.b32.xlu0 %v5337, 96
        %v5340 = vpop.permute.xlu0 %5339
        %v5343 = vsel %vm1977, %v5336, 0
        %5345 = vmatpush.bf16.msra.mxu0 0
        %5346 = vmatpush.bf16.msra.mxu0 0
        %5347 = vmatpush.bf16.msra.mxu0 0
        %5348 = vmatpush.bf16.msra.mxu0 0
        %5349 = vmatpush.bf16.msra.mxu0 0
        %5350 = vmatpush.bf16.msra.mxu0 0
        %5351 = vmatpush.bf16.msra.mxu0 0
        %5352 = vmatpush.bf16.msra.mxu0 %v5340
        %5353 = vmatmul.bf16.gmra.mxu0 %v5343
        %v5354 = vpop.f32.mrf.mxu0
        %v5355 = vadd.f32 0.0, %v5354
        %v5356 = vpop.f32.mrf.mxu0
        %v5357 = vadd.f32 0.0, %v5356
        %5358 = vdwg.mxu0
        %5361 = vrot.lane.b32.xlu0 %v5049, 64
        %v5362 = vpop.permute.xlu0 %5361
        %5363 = vrot.lane.b32.xlu0 %v5051, 64
        %v5364 = vpop.permute.xlu0 %5363
        %5367 = vxpose.xlu0.b32.start [1/16] %v5362, 128
        %5368 = vxpose.xlu0.b32.cont [2/16] %v5364, 128
        %5369 = vxpose.xlu0.b32.cont [3/16] 0.0, 128
        %5370 = vxpose.xlu0.b32.cont [4/16] 0.0, 128
        %5371 = vxpose.xlu0.b32.cont [5/16] 0.0, 128
        %5372 = vxpose.xlu0.b32.cont [6/16] 0.0, 128
        %5373 = vxpose.xlu0.b32.cont [7/16] 0.0, 128
        %5374 = vxpose.xlu0.b32.cont [8/16] 0.0, 128
        %5375 = vxpose.xlu0.b32.cont [9/16] 0.0, 128
        %5376 = vxpose.xlu0.b32.cont [10/16] 0.0, 128
        %5377 = vxpose.xlu0.b32.cont [11/16] 0.0, 128
        %5378 = vxpose.xlu0.b32.cont [12/16] 0.0, 128
        %5379 = vxpose.xlu0.b32.cont [13/16] 0.0, 128
        %5380 = vxpose.xlu0.b32.cont [14/16] 0.0, 128
        %5381 = vxpose.xlu0.b32.cont [15/16] 0.0, 128
        %5382 = vxpose.xlu0.b32.end [16/16] 0.0, 128
        %v5383 = vpop.trf.xlu0
        %v5384 = vpop.trf.xlu0
        %v5385 = vpop.trf.xlu0
        %v5386 = vpop.trf.xlu0
        %v5387 = vpop.trf.xlu0
        %v5388 = vpop.trf.xlu0
        %v5389 = vpop.trf.xlu0
        %v5390 = vpop.trf.xlu0
        %v5391 = vpop.trf.xlu0
        %v5392 = vpop.trf.xlu0
        %v5393 = vpop.trf.xlu0
        %v5394 = vpop.trf.xlu0
        %v5395 = vpop.trf.xlu0
        %v5396 = vpop.trf.xlu0
        %v5397 = vpop.trf.xlu0
        %v5398 = vpop.trf.xlu0
        %v5399 = vpack.c.bf16 %v5384, %v5383
        %v5400 = vpack.c.bf16 %v5386, %v5385
        %5401 = vrot.lane.b32.xlu0 %v5053, 32
        %v5402 = vpop.permute.xlu0 %5401
        %v5404 = vsel %vm1955, %v5402, 0
        %5406 = vmatpush.bf16.msra.mxu0 0
        %5407 = vmatpush.bf16.msra.mxu0 0
        %5408 = vmatpush.bf16.msra.mxu0 0
        %5409 = vmatpush.bf16.msra.mxu0 0
        %5410 = vmatpush.bf16.msra.mxu0 0
        %5411 = vmatpush.bf16.msra.mxu0 0
        %5412 = vmatpush.bf16.msra.mxu0 %v5400
        %5413 = vmatpush.bf16.msra.mxu0 %v5399
        %5414 = vmatmul.bf16.gmra.mxu0 %v5404
        %v5415 = vpop.f32.mrf.mxu0
        %v5416 = vadd.f32 0.0, %v5415
        %v5417 = vpop.f32.mrf.mxu0
        %v5418 = vadd.f32 0.0, %v5417
        %5419 = vdwg.mxu0
        %v5420 = vmul.f32 %v5416, 0.17677669
        %v5421 = vmul.f32 %v5418, 0.17677669
        %v5422 = vsel %vm1977, %v5420, -inf
        %5423 = vmax.xlane.f32.xlu0 %v5422
        %v5424 = vpop.xlane.xlu0 %5423
        %v5425 = vsel %vm1977, %v5421, -inf
        %5426 = vmax.xlane.f32.xlu0 %v5425
        %v5427 = vpop.xlane.xlu0 %5426
        %v5428 = vsub.f32 %v5420, %v5424
        %v5429 = vsub.f32 %v5421, %v5427
        %v5430 = vmul.f32 %v5428, 1.442695
        %v5431 = vpow.pop %v5430
        %v5432 = vmul.f32 %v5429, 1.442695
        %v5433 = vpow.pop %v5432
        %v5434 = vsel %vm1977, %v5431, 0.0
        %5435 = vadd.xlane.f32.xlu0 %v5434
        %v5436 = vpop.xlane.xlu0 %5435
        %v5437 = vsel %vm1977, %v5433, 0.0
        %5438 = vadd.xlane.f32.xlu0 %v5437
        %v5439 = vpop.xlane.xlu0 %5438
        %v5440 = vrcp.pop %v5436
        %v5441 = vrcp.pop %v5439
        %v5442 = vmul.f32 %v5431, %v5440
        %v5443 = vmul.f32 %v5433, %v5441
        %v5444 = vpack.c.bf16 %v5443, %v5442
        %5445 = vrot.lane.b32.xlu0 %v5337, 32
        %v5446 = vpop.permute.xlu0 %5445
        %v5449 = vsel %vm1977, %v5444, 0
        %5451 = vmatpush.bf16.msra.mxu0 0
        %5452 = vmatpush.bf16.msra.mxu0 0
        %5453 = vmatpush.bf16.msra.mxu0 0
        %5454 = vmatpush.bf16.msra.mxu0 0
        %5455 = vmatpush.bf16.msra.mxu0 0
        %5456 = vmatpush.bf16.msra.mxu0 0
        %5457 = vmatpush.bf16.msra.mxu0 0
        %5458 = vmatpush.bf16.msra.mxu0 %v5446
        %5459 = vmatmul.bf16.gmra.mxu0 %v5449
        %v5460 = vpop.f32.mrf.mxu0
        %v5461 = vadd.f32 0.0, %v5460
        %v5462 = vpop.f32.mrf.mxu0
        %v5463 = vadd.f32 0.0, %v5462
        %5464 = vdwg.mxu0
        %5467 = vrot.lane.b32.xlu0 %v5255, 32
        %v5468 = vpop.permute.xlu0 %5467
        %5469 = vrot.lane.b32.xlu0 %v5257, 32
        %v5470 = vpop.permute.xlu0 %5469
        %5475 = vrot.lane.b32.xlu0 %v5355, 64
        %v5476 = vpop.permute.xlu0 %5475
        %5477 = vrot.lane.b32.xlu0 %v5357, 64
        %v5478 = vpop.permute.xlu0 %5477
        %5483 = vrot.lane.b32.xlu0 %v5461, 96
        %v5484 = vpop.permute.xlu0 %5483
        %5485 = vrot.lane.b32.xlu0 %v5463, 96
        %v5486 = vpop.permute.xlu0 %5485
        %v5489 = vsel %vm1955, %v5148, %v5468
        %v5490 = vsel %vm1955, %v5150, %v5470
        %v5491 = vsel %vm2365, %v5489, %v5476
        %v5492 = vsel %vm2365, %v5490, %v5478
        %v5493 = vsel %vm2368, %v5491, %v5484
        %v5494 = vsel %vm2368, %v5492, %v5486
        %v5495 = vpack.c.bf16 %v5494, %v5493
        %v5497 = vperm.slane %v4872, 0
        %v5515 = vunpack.c.l.b16 %v4856
        %v5516 = vunpack.c.l.b16 %v4857
        %v5517 = vunpack.c.l.b16 %v4858
        %v5518 = vunpack.c.l.b16 %v4859
        %v5519 = vunpack.c.l.b16 %v4860
        %v5520 = vunpack.c.l.b16 %v4861
        %v5521 = vunpack.c.l.b16 %v4862
        %v5522 = vunpack.c.l.b16 %v4863
        %v5523 = vunpack.c.l.b16 %v4864
        %v5524 = vunpack.c.l.b16 %v4865
        %v5525 = vunpack.c.l.b16 %v4866
        %v5526 = vunpack.c.l.b16 %v4867
        %v5527 = vunpack.c.l.b16 %v4868
        %v5528 = vunpack.c.l.b16 %v4869
        %v5529 = vunpack.c.l.b16 %v4870
        %v5530 = vunpack.c.l.b16 %v4871
        %v5531 = vpack.c.b16 %v5516, %v5515
        %v5532 = vpack.c.b16 %v5518, %v5517
        %v5533 = vpack.c.b16 %v5520, %v5519
        %v5534 = vpack.c.b16 %v5522, %v5521
        %v5535 = vpack.c.b16 %v5524, %v5523
        %v5536 = vpack.c.b16 %v5526, %v5525
        %v5537 = vpack.c.b16 %v5528, %v5527
        %v5538 = vpack.c.b16 %v5530, %v5529
        %5547 = vmatpush.bf16.msra.mxu0 %v5538
        %5548 = vmatpush.bf16.msra.mxu0 %v5537
        %5549 = vmatpush.bf16.msra.mxu0 %v5536
        %5550 = vmatpush.bf16.msra.mxu0 %v5535
        %5551 = vmatpush.bf16.msra.mxu0 %v5534
        %5552 = vmatpush.bf16.msra.mxu0 %v5533
        %5553 = vmatpush.bf16.msra.mxu0 %v5532
        %5554 = vmatpush.bf16.msra.mxu0 %v5531
        %5555 = vmatmul.bf16.gmra.mxu0 %v5495
        %v5556 = vpop.f32.mrf.mxu0
        %v5557 = vadd.f32 %v5497, %v5556
        %v5558 = vpop.f32.mrf.mxu0
        %v5559 = vadd.f32 %v5497, %v5558
        %5560 = vdwg.mxu0
        %v5561 = vadd.f32 %v5557, %v4820
        %v5562 = vadd.f32 %v5559, %v4821
        %v5563 = vld [vmem:[#allocation32] sm:$0x1]
        %v5564 = vld [vmem:[#allocation34] sm:$0x1]
        %5565 = vadd.xlane.f32.xlu0 %v5561
        %v5566 = vpop.xlane.xlu0 %5565
        %5567 = vadd.xlane.f32.xlu0 %v5562
        %v5568 = vpop.xlane.xlu0 %5567
        %v5569 = vmul.f32 %v5566, %v2451
        %v5570 = vmul.f32 %v5568, %v2451
        %v5571 = vsub.f32 %v5561, %v5569
        %v5572 = vsub.f32 %v5562, %v5570
        %v5573 = vmul.f32 %v5571, %v5571
        %v5574 = vmul.f32 %v5572, %v5572
        %5575 = vadd.xlane.f32.xlu0 %v5573
        %v5576 = vpop.xlane.xlu0 %5575
        %5577 = vadd.xlane.f32.xlu0 %v5574
        %v5578 = vpop.xlane.xlu0 %5577
        %v5579 = vmul.f32 %v5576, %v2451
        %v5580 = vmul.f32 %v5578, %v2451
        %v5581 = vadd.f32 %v5579, 1e-05
        %v5582 = vadd.f32 %v5580, 1e-05
        %v5583 = vrsqrt.pop %v5581
        %v5584 = vmul.f32 %v5583, %v5581
        %v5585 = vmul.f32 %v5584, %v5583
        %v5586 = vmul.f32 0.5, %v5585
        %v5587 = vsub.f32 1.5, %v5586
        %v5588 = vmul.f32 %v5583, %v5587
        %vm5589 = vweird.f32 %v5581
        %vm5590 = vweird.f32 %v5583
        %vm5591 = vmor %vm5589, %vm5590
        %v5592 = vsel %vm5591, %v5583, %v5588
        %v5593 = vrsqrt.pop %v5582
        %v5594 = vmul.f32 %v5593, %v5582
        %v5595 = vmul.f32 %v5594, %v5593
        %v5596 = vmul.f32 0.5, %v5595
        %v5597 = vsub.f32 1.5, %v5596
        %v5598 = vmul.f32 %v5593, %v5597
        %vm5599 = vweird.f32 %v5582
        %vm5600 = vweird.f32 %v5593
        %vm5601 = vmor %vm5599, %vm5600
        %v5602 = vsel %vm5601, %v5593, %v5598
        %v5603 = vmul.f32 %v5571, %v5592
        %v5604 = vmul.f32 %v5572, %v5602
        %v5606 = vperm.slane %v5563, 0
        %v5608 = vmul.f32 %v5603, %v5606
        %v5609 = vmul.f32 %v5604, %v5606
        %v5611 = vperm.slane %v5564, 0
        %v5613 = vadd.f32 %v5608, %v5611
        %v5614 = vadd.f32 %v5609, %v5611
        %v5615 = vld [vmem:[#allocation35] sm:$0xff]
        %v5616 = vld [vmem:[#allocation35 + $0x8] sm:$0xff]
        %v5617 = vld [vmem:[#allocation35 + $0x10] sm:$0xff]
        %v5618 = vld [vmem:[#allocation35 + $0x18] sm:$0xff]
        %v5619 = vld [vmem:[#allocation35 + $0x20] sm:$0xff]
        %v5620 = vld [vmem:[#allocation35 + $0x28] sm:$0xff]
        %v5621 = vld [vmem:[#allocation35 + $0x30] sm:$0xff]
        %v5622 = vld [vmem:[#allocation35 + $0x38] sm:$0xff]
        %v5623 = vld [vmem:[#allocation35 + $0x40] sm:$0xff]
        %v5624 = vld [vmem:[#allocation35 + $0x48] sm:$0xff]
        %v5625 = vld [vmem:[#allocation35 + $0x50] sm:$0xff]
        %v5626 = vld [vmem:[#allocation35 + $0x58] sm:$0xff]
        %v5627 = vld [vmem:[#allocation35 + $0x60] sm:$0xff]
        %v5628 = vld [vmem:[#allocation35 + $0x68] sm:$0xff]
        %v5629 = vld [vmem:[#allocation35 + $0x70] sm:$0xff]
        %v5630 = vld [vmem:[#allocation35 + $0x78] sm:$0xff]
        %v5631 = vld [vmem:[#allocation37] sm:$0x3]
        %v5632 = vpack.c.bf16 %v5614, %v5613
        %v5634 = vperm.slane %v5631, 0
        %v5635 = vperm.slane %v5631, 1
        %v5654 = vunpack.c.l.b16 %v5615
        %v5655 = vunpack.c.h.b16 %v5615
        %v5656 = vunpack.c.l.b16 %v5616
        %v5657 = vunpack.c.h.b16 %v5616
        %v5658 = vunpack.c.l.b16 %v5617
        %v5659 = vunpack.c.h.b16 %v5617
        %v5660 = vunpack.c.l.b16 %v5618
        %v5661 = vunpack.c.h.b16 %v5618
        %v5662 = vunpack.c.l.b16 %v5619
        %v5663 = vunpack.c.h.b16 %v5619
        %v5664 = vunpack.c.l.b16 %v5620
        %v5665 = vunpack.c.h.b16 %v5620
        %v5666 = vunpack.c.l.b16 %v5621
        %v5667 = vunpack.c.h.b16 %v5621
        %v5668 = vunpack.c.l.b16 %v5622
        %v5669 = vunpack.c.h.b16 %v5622
        %v5670 = vunpack.c.l.b16 %v5623
        %v5671 = vunpack.c.h.b16 %v5623
        %v5672 = vunpack.c.l.b16 %v5624
        %v5673 = vunpack.c.h.b16 %v5624
        %v5674 = vunpack.c.l.b16 %v5625
        %v5675 = vunpack.c.h.b16 %v5625
        %v5676 = vunpack.c.l.b16 %v5626
        %v5677 = vunpack.c.h.b16 %v5626
        %v5678 = vunpack.c.l.b16 %v5627
        %v5679 = vunpack.c.h.b16 %v5627
        %v5680 = vunpack.c.l.b16 %v5628
        %v5681 = vunpack.c.h.b16 %v5628
        %v5682 = vunpack.c.l.b16 %v5629
        %v5683 = vunpack.c.h.b16 %v5629
        %v5684 = vunpack.c.l.b16 %v5630
        %v5685 = vunpack.c.h.b16 %v5630
        %v5686 = vpack.c.b16 %v5656, %v5654
        %v5687 = vpack.c.b16 %v5657, %v5655
        %v5688 = vpack.c.b16 %v5660, %v5658
        %v5689 = vpack.c.b16 %v5661, %v5659
        %v5690 = vpack.c.b16 %v5664, %v5662
        %v5691 = vpack.c.b16 %v5665, %v5663
        %v5692 = vpack.c.b16 %v5668, %v5666
        %v5693 = vpack.c.b16 %v5669, %v5667
        %v5694 = vpack.c.b16 %v5672, %v5670
        %v5695 = vpack.c.b16 %v5673, %v5671
        %v5696 = vpack.c.b16 %v5676, %v5674
        %v5697 = vpack.c.b16 %v5677, %v5675
        %v5698 = vpack.c.b16 %v5680, %v5678
        %v5699 = vpack.c.b16 %v5681, %v5679
        %v5700 = vpack.c.b16 %v5684, %v5682
        %v5701 = vpack.c.b16 %v5685, %v5683
        %5718 = vmatpush.bf16.msra.mxu0 %v5700
        %5719 = vmatpush.bf16.msra.mxu0 %v5698
        %5720 = vmatpush.bf16.msra.mxu0 %v5696
        %5721 = vmatpush.bf16.msra.mxu0 %v5694
        %5722 = vmatpush.bf16.msra.mxu0 %v5692
        %5723 = vmatpush.bf16.msra.mxu0 %v5690
        %5724 = vmatpush.bf16.msra.mxu0 %v5688
        %5725 = vmatpush.bf16.msra.mxu0 %v5686
        %5726 = vmatmul.bf16.gmra.mxu0 %v5632
        %v5727 = vpop.f32.mrf.mxu0
        %v5728 = vadd.f32 %v5634, %v5727
        %v5729 = vpop.f32.mrf.mxu0
        %v5730 = vadd.f32 %v5634, %v5729
        %5731 = vdwg.mxu0
        %5732 = vmatpush.bf16.msra.mxu0 %v5701
        %5733 = vmatpush.bf16.msra.mxu0 %v5699
        %5734 = vmatpush.bf16.msra.mxu0 %v5697
        %5735 = vmatpush.bf16.msra.mxu0 %v5695
        %5736 = vmatpush.bf16.msra.mxu0 %v5693
        %5737 = vmatpush.bf16.msra.mxu0 %v5691
        %5738 = vmatpush.bf16.msra.mxu0 %v5689
        %5739 = vmatpush.bf16.msra.mxu0 %v5687
        %5740 = vmatmul.bf16.gmra.mxu0 %v5632
        %v5741 = vpop.f32.mrf.mxu0
        %v5742 = vadd.f32 %v5635, %v5741
        %v5743 = vpop.f32.mrf.mxu0
        %v5744 = vadd.f32 %v5635, %v5743
        %5745 = vdwg.mxu0
        %v5746 = vmax.f32 %v5728, 0.0
        %v5747 = vmax.f32 %v5742, 0.0
        %v5748 = vmax.f32 %v5730, 0.0
        %v5749 = vmax.f32 %v5744, 0.0
        %v5750 = vld [vmem:[#allocation38] sm:$0xf]
        %v5751 = vld [vmem:[#allocation38 + $0x4] sm:$0xf]
        %v5752 = vld [vmem:[#allocation38 + $0x8] sm:$0xf]
        %v5753 = vld [vmem:[#allocation38 + $0xc] sm:$0xf]
        %v5754 = vld [vmem:[#allocation38 + $0x10] sm:$0xf]
        %v5755 = vld [vmem:[#allocation38 + $0x14] sm:$0xf]
        %v5756 = vld [vmem:[#allocation38 + $0x18] sm:$0xf]
        %v5757 = vld [vmem:[#allocation38 + $0x1c] sm:$0xf]
        %v5758 = vld [vmem:[#allocation38 + $0x20] sm:$0xf]
        %v5759 = vld [vmem:[#allocation38 + $0x24] sm:$0xf]
        %v5760 = vld [vmem:[#allocation38 + $0x28] sm:$0xf]
        %v5761 = vld [vmem:[#allocation38 + $0x2c] sm:$0xf]
        %v5762 = vld [vmem:[#allocation38 + $0x30] sm:$0xf]
        %v5763 = vld [vmem:[#allocation38 + $0x34] sm:$0xf]
        %v5764 = vld [vmem:[#allocation38 + $0x38] sm:$0xf]
        %v5765 = vld [vmem:[#allocation38 + $0x3c] sm:$0xf]
        %v5766 = vld [vmem:[#allocation38 + $0x40] sm:$0xf]
        %v5767 = vld [vmem:[#allocation38 + $0x44] sm:$0xf]
        %v5768 = vld [vmem:[#allocation38 + $0x48] sm:$0xf]
        %v5769 = vld [vmem:[#allocation38 + $0x4c] sm:$0xf]
        %v5770 = vld [vmem:[#allocation38 + $0x50] sm:$0xf]
        %v5771 = vld [vmem:[#allocation38 + $0x54] sm:$0xf]
        %v5772 = vld [vmem:[#allocation38 + $0x58] sm:$0xf]
        %v5773 = vld [vmem:[#allocation38 + $0x5c] sm:$0xf]
        %v5774 = vld [vmem:[#allocation38 + $0x60] sm:$0xf]
        %v5775 = vld [vmem:[#allocation38 + $0x64] sm:$0xf]
        %v5776 = vld [vmem:[#allocation38 + $0x68] sm:$0xf]
        %v5777 = vld [vmem:[#allocation38 + $0x6c] sm:$0xf]
        %v5778 = vld [vmem:[#allocation38 + $0x70] sm:$0xf]
        %v5779 = vld [vmem:[#allocation38 + $0x74] sm:$0xf]
        %v5780 = vld [vmem:[#allocation38 + $0x78] sm:$0xf]
        %v5781 = vld [vmem:[#allocation38 + $0x7c] sm:$0xf]
        %v5782 = vld [vmem:[#allocation40] sm:$0x1]
        %v5783 = vpack.c.bf16 %v5748, %v5746
        %v5784 = vpack.c.bf16 %v5749, %v5747
        %v5786 = vperm.slane %v5782, 0
        %v5820 = vunpack.c.l.b16 %v5750
        %v5821 = vunpack.c.l.b16 %v5751
        %v5822 = vunpack.c.l.b16 %v5752
        %v5823 = vunpack.c.l.b16 %v5753
        %v5824 = vunpack.c.l.b16 %v5754
        %v5825 = vunpack.c.l.b16 %v5755
        %v5826 = vunpack.c.l.b16 %v5756
        %v5827 = vunpack.c.l.b16 %v5757
        %v5828 = vunpack.c.l.b16 %v5758
        %v5829 = vunpack.c.l.b16 %v5759
        %v5830 = vunpack.c.l.b16 %v5760
        %v5831 = vunpack.c.l.b16 %v5761
        %v5832 = vunpack.c.l.b16 %v5762
        %v5833 = vunpack.c.l.b16 %v5763
        %v5834 = vunpack.c.l.b16 %v5764
        %v5835 = vunpack.c.l.b16 %v5765
        %v5836 = vunpack.c.l.b16 %v5766
        %v5837 = vunpack.c.l.b16 %v5767
        %v5838 = vunpack.c.l.b16 %v5768
        %v5839 = vunpack.c.l.b16 %v5769
        %v5840 = vunpack.c.l.b16 %v5770
        %v5841 = vunpack.c.l.b16 %v5771
        %v5842 = vunpack.c.l.b16 %v5772
        %v5843 = vunpack.c.l.b16 %v5773
        %v5844 = vunpack.c.l.b16 %v5774
        %v5845 = vunpack.c.l.b16 %v5775
        %v5846 = vunpack.c.l.b16 %v5776
        %v5847 = vunpack.c.l.b16 %v5777
        %v5848 = vunpack.c.l.b16 %v5778
        %v5849 = vunpack.c.l.b16 %v5779
        %v5850 = vunpack.c.l.b16 %v5780
        %v5851 = vunpack.c.l.b16 %v5781
        %v5852 = vpack.c.b16 %v5821, %v5820
        %v5853 = vpack.c.b16 %v5823, %v5822
        %v5854 = vpack.c.b16 %v5825, %v5824
        %v5855 = vpack.c.b16 %v5827, %v5826
        %v5856 = vpack.c.b16 %v5829, %v5828
        %v5857 = vpack.c.b16 %v5831, %v5830
        %v5858 = vpack.c.b16 %v5833, %v5832
        %v5859 = vpack.c.b16 %v5835, %v5834
        %v5860 = vpack.c.b16 %v5837, %v5836
        %v5861 = vpack.c.b16 %v5839, %v5838
        %v5862 = vpack.c.b16 %v5841, %v5840
        %v5863 = vpack.c.b16 %v5843, %v5842
        %v5864 = vpack.c.b16 %v5845, %v5844
        %v5865 = vpack.c.b16 %v5847, %v5846
        %v5866 = vpack.c.b16 %v5849, %v5848
        %v5867 = vpack.c.b16 %v5851, %v5850
        %5884 = vmatpush.bf16.msra.mxu0 %v5859
        %5885 = vmatpush.bf16.msra.mxu0 %v5858
        %5886 = vmatpush.bf16.msra.mxu0 %v5857
        %5887 = vmatpush.bf16.msra.mxu0 %v5856
        %5888 = vmatpush.bf16.msra.mxu0 %v5855
        %5889 = vmatpush.bf16.msra.mxu0 %v5854
        %5890 = vmatpush.bf16.msra.mxu0 %v5853
        %5891 = vmatpush.bf16.msra.mxu0 %v5852
        %5892 = vmatmul.bf16.gmra.mxu0 %v5783
        %v5893 = vpop.f32.mrf.mxu0
        %v5894 = vadd.f32 %v5786, %v5893
        %v5895 = vpop.f32.mrf.mxu0
        %v5896 = vadd.f32 %v5786, %v5895
        %5897 = vdwg.mxu0
        %5898 = vmatpush.bf16.msra.mxu0 %v5867
        %5899 = vmatpush.bf16.msra.mxu0 %v5866
        %5900 = vmatpush.bf16.msra.mxu0 %v5865
        %5901 = vmatpush.bf16.msra.mxu0 %v5864
        %5902 = vmatpush.bf16.msra.mxu0 %v5863
        %5903 = vmatpush.bf16.msra.mxu0 %v5862
        %5904 = vmatpush.bf16.msra.mxu0 %v5861
        %5905 = vmatpush.bf16.msra.mxu0 %v5860
        %5906 = vmatmul.bf16.gmra.mxu0 %v5784
        %v5907 = vpop.f32.mrf.mxu0
        %v5908 = vadd.f32 %v5894, %v5907
        %v5909 = vpop.f32.mrf.mxu0
        %v5910 = vadd.f32 %v5896, %v5909
        %5911 = vdwg.mxu0
        %v5912 = vadd.f32 %v5908, %v5613
        %v5913 = vadd.f32 %v5910, %v5614
        %v5914 = vld [vmem:[#allocation41] sm:$0x1]
        %v5915 = vld [vmem:[#allocation43] sm:$0x1]
        %5916 = vadd.xlane.f32.xlu0 %v5912
        %v5917 = vpop.xlane.xlu0 %5916
        %5918 = vadd.xlane.f32.xlu0 %v5913
        %v5919 = vpop.xlane.xlu0 %5918
        %v5920 = vmul.f32 %v5917, %v2451
        %v5921 = vmul.f32 %v5919, %v2451
        %v5922 = vsub.f32 %v5912, %v5920
        %v5923 = vsub.f32 %v5913, %v5921
        %v5924 = vmul.f32 %v5922, %v5922
        %v5925 = vmul.f32 %v5923, %v5923
        %5926 = vadd.xlane.f32.xlu0 %v5924
        %v5927 = vpop.xlane.xlu0 %5926
        %5928 = vadd.xlane.f32.xlu0 %v5925
        %v5929 = vpop.xlane.xlu0 %5928
        %v5930 = vmul.f32 %v5927, %v2451
        %v5931 = vmul.f32 %v5929, %v2451
        %v5932 = vadd.f32 %v5930, 1e-05
        %v5933 = vadd.f32 %v5931, 1e-05
        %v5934 = vrsqrt.pop %v5932
        %v5935 = vmul.f32 %v5934, %v5932
        %v5936 = vmul.f32 %v5935, %v5934
        %v5937 = vmul.f32 0.5, %v5936
        %v5938 = vsub.f32 1.5, %v5937
        %v5939 = vmul.f32 %v5934, %v5938
        %vm5940 = vweird.f32 %v5932
        %vm5941 = vweird.f32 %v5934
        %vm5942 = vmor %vm5940, %vm5941
        %v5943 = vsel %vm5942, %v5934, %v5939
        %v5944 = vrsqrt.pop %v5933
        %v5945 = vmul.f32 %v5944, %v5933
        %v5946 = vmul.f32 %v5945, %v5944
        %v5947 = vmul.f32 0.5, %v5946
        %v5948 = vsub.f32 1.5, %v5947
        %v5949 = vmul.f32 %v5944, %v5948
        %vm5950 = vweird.f32 %v5933
        %vm5951 = vweird.f32 %v5944
        %vm5952 = vmor %vm5950, %vm5951
        %v5953 = vsel %vm5952, %v5944, %v5949
        %v5954 = vmul.f32 %v5922, %v5943
        %v5955 = vmul.f32 %v5923, %v5953
        %v5957 = vperm.slane %v5914, 0
        %v5959 = vmul.f32 %v5954, %v5957
        %v5960 = vmul.f32 %v5955, %v5957
        %v5962 = vperm.slane %v5915, 0
        %v5964 = vadd.f32 %v5959, %v5962
        %v5965 = vadd.f32 %v5960, %v5962
        %s5966 = scalar_lea.vmem [#allocation14], 192
        %v5967 = vld [vmem:[%s5966] sm:$0xff]
        %v5968 = vld [vmem:[%s5966 + $0x8] sm:$0xf]
        %v5969 = vld [vmem:[%s5966 + $0xc] sm:$0xff]
        %v5970 = vld [vmem:[%s5966 + $0x14] sm:$0xf]
        %v5971 = vld [vmem:[%s5966 + $0x18] sm:$0xff]
        %v5972 = vld [vmem:[%s5966 + $0x20] sm:$0xf]
        %v5973 = vld [vmem:[%s5966 + $0x24] sm:$0xff]
        %v5974 = vld [vmem:[%s5966 + $0x2c] sm:$0xf]
        %v5975 = vld [vmem:[%s5966 + $0x30] sm:$0xff]
        %v5976 = vld [vmem:[%s5966 + $0x38] sm:$0xf]
        %v5977 = vld [vmem:[%s5966 + $0x3c] sm:$0xff]
        %v5978 = vld [vmem:[%s5966 + $0x44] sm:$0xf]
        %v5979 = vld [vmem:[%s5966 + $0x48] sm:$0xff]
        %v5980 = vld [vmem:[%s5966 + $0x50] sm:$0xf]
        %v5981 = vld [vmem:[%s5966 + $0x54] sm:$0xff]
        %v5982 = vld [vmem:[%s5966 + $0x5c] sm:$0xf]
        %v5983 = vld [vmem:[%s5966 + $0x60] sm:$0xff]
        %v5984 = vld [vmem:[%s5966 + $0x68] sm:$0xf]
        %v5985 = vld [vmem:[%s5966 + $0x6c] sm:$0xff]
        %v5986 = vld [vmem:[%s5966 + $0x74] sm:$0xf]
        %v5987 = vld [vmem:[%s5966 + $0x78] sm:$0xff]
        %v5988 = vld [vmem:[%s5966 + $0x80] sm:$0xf]
        %v5989 = vld [vmem:[%s5966 + $0x84] sm:$0xff]
        %v5990 = vld [vmem:[%s5966 + $0x8c] sm:$0xf]
        %v5991 = vld [vmem:[%s5966 + $0x90] sm:$0xff]
        %v5992 = vld [vmem:[%s5966 + $0x98] sm:$0xf]
        %v5993 = vld [vmem:[%s5966 + $0x9c] sm:$0xff]
        %v5994 = vld [vmem:[%s5966 + $0xa4] sm:$0xf]
        %v5995 = vld [vmem:[%s5966 + $0xa8] sm:$0xff]
        %v5996 = vld [vmem:[%s5966 + $0xb0] sm:$0xf]
        %v5997 = vld [vmem:[%s5966 + $0xb4] sm:$0xff]
        %v5998 = vld [vmem:[%s5966 + $0xbc] sm:$0xf]
        %s5999 = scalar_lea.vmem [#allocation16], 3
        %v6000 = vld [vmem:[%s5999] sm:$0x7]
        %s6001 = scalar_lea.vmem [#allocation17], 64
        %v6002 = vld [vmem:[%s6001] sm:$0xf]
        %v6003 = vld [vmem:[%s6001 + $0x4] sm:$0xf]
        %v6004 = vld [vmem:[%s6001 + $0x8] sm:$0xf]
        %v6005 = vld [vmem:[%s6001 + $0xc] sm:$0xf]
        %v6006 = vld [vmem:[%s6001 + $0x10] sm:$0xf]
        %v6007 = vld [vmem:[%s6001 + $0x14] sm:$0xf]
        %v6008 = vld [vmem:[%s6001 + $0x18] sm:$0xf]
        %v6009 = vld [vmem:[%s6001 + $0x1c] sm:$0xf]
        %v6010 = vld [vmem:[%s6001 + $0x20] sm:$0xf]
        %v6011 = vld [vmem:[%s6001 + $0x24] sm:$0xf]
        %v6012 = vld [vmem:[%s6001 + $0x28] sm:$0xf]
        %v6013 = vld [vmem:[%s6001 + $0x2c] sm:$0xf]
        %v6014 = vld [vmem:[%s6001 + $0x30] sm:$0xf]
        %v6015 = vld [vmem:[%s6001 + $0x34] sm:$0xf]
        %v6016 = vld [vmem:[%s6001 + $0x38] sm:$0xf]
        %v6017 = vld [vmem:[%s6001 + $0x3c] sm:$0xf]
        %s6018 = scalar_lea.vmem [#allocation19], 1
        %v6019 = vld [vmem:[%s6018] sm:$0x1]
        %v6020 = vpack.c.bf16 %v5965, %v5964
        %v6022 = vperm.slane %v6000, 0
        %v6023 = vperm.slane %v6000, 1
        %v6024 = vperm.slane %v6000, 2
        %v6060 = vunpack.c.l.b16 %v5967
        %v6061 = vunpack.c.h.b16 %v5967
        %v6062 = vunpack.c.l.b16 %v5968
        %v6063 = vunpack.c.l.b16 %v5969
        %v6064 = vunpack.c.h.b16 %v5969
        %v6065 = vunpack.c.l.b16 %v5970
        %v6066 = vunpack.c.l.b16 %v5971
        %v6067 = vunpack.c.h.b16 %v5971
        %v6068 = vunpack.c.l.b16 %v5972
        %v6069 = vunpack.c.l.b16 %v5973
        %v6070 = vunpack.c.h.b16 %v5973
        %v6071 = vunpack.c.l.b16 %v5974
        %v6072 = vunpack.c.l.b16 %v5975
        %v6073 = vunpack.c.h.b16 %v5975
        %v6074 = vunpack.c.l.b16 %v5976
        %v6075 = vunpack.c.l.b16 %v5977
        %v6076 = vunpack.c.h.b16 %v5977
        %v6077 = vunpack.c.l.b16 %v5978
        %v6078 = vunpack.c.l.b16 %v5979
        %v6079 = vunpack.c.h.b16 %v5979
        %v6080 = vunpack.c.l.b16 %v5980
        %v6081 = vunpack.c.l.b16 %v5981
        %v6082 = vunpack.c.h.b16 %v5981
        %v6083 = vunpack.c.l.b16 %v5982
        %v6084 = vunpack.c.l.b16 %v5983
        %v6085 = vunpack.c.h.b16 %v5983
        %v6086 = vunpack.c.l.b16 %v5984
        %v6087 = vunpack.c.l.b16 %v5985
        %v6088 = vunpack.c.h.b16 %v5985
        %v6089 = vunpack.c.l.b16 %v5986
        %v6090 = vunpack.c.l.b16 %v5987
        %v6091 = vunpack.c.h.b16 %v5987
        %v6092 = vunpack.c.l.b16 %v5988
        %v6093 = vunpack.c.l.b16 %v5989
        %v6094 = vunpack.c.h.b16 %v5989
        %v6095 = vunpack.c.l.b16 %v5990
        %v6096 = vunpack.c.l.b16 %v5991
        %v6097 = vunpack.c.h.b16 %v5991
        %v6098 = vunpack.c.l.b16 %v5992
        %v6099 = vunpack.c.l.b16 %v5993
        %v6100 = vunpack.c.h.b16 %v5993
        %v6101 = vunpack.c.l.b16 %v5994
        %v6102 = vunpack.c.l.b16 %v5995
        %v6103 = vunpack.c.h.b16 %v5995
        %v6104 = vunpack.c.l.b16 %v5996
        %v6105 = vunpack.c.l.b16 %v5997
        %v6106 = vunpack.c.h.b16 %v5997
        %v6107 = vunpack.c.l.b16 %v5998
        %v6108 = vpack.c.b16 %v6063, %v6060
        %v6109 = vpack.c.b16 %v6064, %v6061
        %v6110 = vpack.c.b16 %v6065, %v6062
        %v6111 = vpack.c.b16 %v6069, %v6066
        %v6112 = vpack.c.b16 %v6070, %v6067
        %v6113 = vpack.c.b16 %v6071, %v6068
        %v6114 = vpack.c.b16 %v6075, %v6072
        %v6115 = vpack.c.b16 %v6076, %v6073
        %v6116 = vpack.c.b16 %v6077, %v6074
        %v6117 = vpack.c.b16 %v6081, %v6078
        %v6118 = vpack.c.b16 %v6082, %v6079
        %v6119 = vpack.c.b16 %v6083, %v6080
        %v6120 = vpack.c.b16 %v6087, %v6084
        %v6121 = vpack.c.b16 %v6088, %v6085
        %v6122 = vpack.c.b16 %v6089, %v6086
        %v6123 = vpack.c.b16 %v6093, %v6090
        %v6124 = vpack.c.b16 %v6094, %v6091
        %v6125 = vpack.c.b16 %v6095, %v6092
        %v6126 = vpack.c.b16 %v6099, %v6096
        %v6127 = vpack.c.b16 %v6100, %v6097
        %v6128 = vpack.c.b16 %v6101, %v6098
        %v6129 = vpack.c.b16 %v6105, %v6102
        %v6130 = vpack.c.b16 %v6106, %v6103
        %v6131 = vpack.c.b16 %v6107, %v6104
        %6156 = vmatpush.bf16.msra.mxu0 %v6129
        %6157 = vmatpush.bf16.msra.mxu0 %v6126
        %6158 = vmatpush.bf16.msra.mxu0 %v6123
        %6159 = vmatpush.bf16.msra.mxu0 %v6120
        %6160 = vmatpush.bf16.msra.mxu0 %v6117
        %6161 = vmatpush.bf16.msra.mxu0 %v6114
        %6162 = vmatpush.bf16.msra.mxu0 %v6111
        %6163 = vmatpush.bf16.msra.mxu0 %v6108
        %6164 = vmatmul.bf16.gmra.mxu0 %v6020
        %v6165 = vpop.f32.mrf.mxu0
        %v6166 = vadd.f32 %v6022, %v6165
        %v6167 = vpop.f32.mrf.mxu0
        %v6168 = vadd.f32 %v6022, %v6167
        %6169 = vdwg.mxu0
        %6170 = vmatpush.bf16.msra.mxu0 %v6130
        %6171 = vmatpush.bf16.msra.mxu0 %v6127
        %6172 = vmatpush.bf16.msra.mxu0 %v6124
        %6173 = vmatpush.bf16.msra.mxu0 %v6121
        %6174 = vmatpush.bf16.msra.mxu0 %v6118
        %6175 = vmatpush.bf16.msra.mxu0 %v6115
        %6176 = vmatpush.bf16.msra.mxu0 %v6112
        %6177 = vmatpush.bf16.msra.mxu0 %v6109
        %6178 = vmatmul.bf16.gmra.mxu0 %v6020
        %v6179 = vpop.f32.mrf.mxu0
        %v6180 = vadd.f32 %v6023, %v6179
        %v6181 = vpop.f32.mrf.mxu0
        %v6182 = vadd.f32 %v6023, %v6181
        %6183 = vdwg.mxu0
        %6184 = vmatpush.bf16.msra.mxu0 %v6131
        %6185 = vmatpush.bf16.msra.mxu0 %v6128
        %6186 = vmatpush.bf16.msra.mxu0 %v6125
        %6187 = vmatpush.bf16.msra.mxu0 %v6122
        %6188 = vmatpush.bf16.msra.mxu0 %v6119
        %6189 = vmatpush.bf16.msra.mxu0 %v6116
        %6190 = vmatpush.bf16.msra.mxu0 %v6113
        %6191 = vmatpush.bf16.msra.mxu0 %v6110
        %6192 = vmatmul.bf16.gmra.mxu0 %v6020
        %v6193 = vpop.f32.mrf.mxu0
        %v6194 = vadd.f32 %v6024, %v6193
        %v6195 = vpop.f32.mrf.mxu0
        %v6196 = vadd.f32 %v6024, %v6195
        %6197 = vdwg.mxu0
        %v6198 = vpack.c.bf16 %v6168, %v6166
        %6201 = vrot.lane.b32.xlu0 %v6166, 96
        %v6202 = vpop.permute.xlu0 %6201
        %6203 = vrot.lane.b32.xlu0 %v6168, 96
        %v6204 = vpop.permute.xlu0 %6203
        %6207 = vxpose.xlu0.b32.start [1/16] %v6202, 128
        %6208 = vxpose.xlu0.b32.cont [2/16] %v6204, 128
        %6209 = vxpose.xlu0.b32.cont [3/16] 0.0, 128
        %6210 = vxpose.xlu0.b32.cont [4/16] 0.0, 128
        %6211 = vxpose.xlu0.b32.cont [5/16] 0.0, 128
        %6212 = vxpose.xlu0.b32.cont [6/16] 0.0, 128
        %6213 = vxpose.xlu0.b32.cont [7/16] 0.0, 128
        %6214 = vxpose.xlu0.b32.cont [8/16] 0.0, 128
        %6215 = vxpose.xlu0.b32.cont [9/16] 0.0, 128
        %6216 = vxpose.xlu0.b32.cont [10/16] 0.0, 128
        %6217 = vxpose.xlu0.b32.cont [11/16] 0.0, 128
        %6218 = vxpose.xlu0.b32.cont [12/16] 0.0, 128
        %6219 = vxpose.xlu0.b32.cont [13/16] 0.0, 128
        %6220 = vxpose.xlu0.b32.cont [14/16] 0.0, 128
        %6221 = vxpose.xlu0.b32.cont [15/16] 0.0, 128
        %6222 = vxpose.xlu0.b32.end [16/16] 0.0, 128
        %v6223 = vpop.trf.xlu0
        %v6224 = vpop.trf.xlu0
        %v6225 = vpop.trf.xlu0
        %v6226 = vpop.trf.xlu0
        %v6227 = vpop.trf.xlu0
        %v6228 = vpop.trf.xlu0
        %v6229 = vpop.trf.xlu0
        %v6230 = vpop.trf.xlu0
        %v6231 = vpop.trf.xlu0
        %v6232 = vpop.trf.xlu0
        %v6233 = vpop.trf.xlu0
        %v6234 = vpop.trf.xlu0
        %v6235 = vpop.trf.xlu0
        %v6236 = vpop.trf.xlu0
        %v6237 = vpop.trf.xlu0
        %v6238 = vpop.trf.xlu0
        %v6239 = vpack.c.bf16 %v6224, %v6223
        %v6240 = vpack.c.bf16 %v6226, %v6225
        %v6242 = vsel %vm1955, %v6198, 0
        %6244 = vmatpush.bf16.msra.mxu0 0
        %6245 = vmatpush.bf16.msra.mxu0 0
        %6246 = vmatpush.bf16.msra.mxu0 0
        %6247 = vmatpush.bf16.msra.mxu0 0
        %6248 = vmatpush.bf16.msra.mxu0 0
        %6249 = vmatpush.bf16.msra.mxu0 0
        %6250 = vmatpush.bf16.msra.mxu0 %v6240
        %6251 = vmatpush.bf16.msra.mxu0 %v6239
        %6252 = vmatmul.bf16.gmra.mxu0 %v6242
        %v6253 = vpop.f32.mrf.mxu0
        %v6254 = vadd.f32 0.0, %v6253
        %v6255 = vpop.f32.mrf.mxu0
        %v6256 = vadd.f32 0.0, %v6255
        %6257 = vdwg.mxu0
        %v6258 = vmul.f32 %v6254, 0.17677669
        %v6259 = vmul.f32 %v6256, 0.17677669
        %v6260 = vadd.f32 %v6258, %v4017
        %v6261 = vadd.f32 %v6259, %v4018
        %v6262 = vsel %vm1977, %v6260, -inf
        %6263 = vmax.xlane.f32.xlu0 %v6262
        %v6264 = vpop.xlane.xlu0 %6263
        %v6265 = vsel %vm1977, %v6261, -inf
        %6266 = vmax.xlane.f32.xlu0 %v6265
        %v6267 = vpop.xlane.xlu0 %6266
        %v6268 = vsub.f32 %v6260, %v6264
        %v6269 = vsub.f32 %v6261, %v6267
        %v6270 = vmul.f32 %v6268, 1.442695
        %v6271 = vpow.pop %v6270
        %v6272 = vmul.f32 %v6269, 1.442695
        %v6273 = vpow.pop %v6272
        %v6274 = vsel %vm1977, %v6271, 0.0
        %6275 = vadd.xlane.f32.xlu0 %v6274
        %v6276 = vpop.xlane.xlu0 %6275
        %v6277 = vsel %vm1977, %v6273, 0.0
        %6278 = vadd.xlane.f32.xlu0 %v6277
        %v6279 = vpop.xlane.xlu0 %6278
        %v6280 = vrcp.pop %v6276
        %v6281 = vrcp.pop %v6279
        %v6282 = vmul.f32 %v6271, %v6280
        %v6283 = vmul.f32 %v6273, %v6281
        %v6284 = vpack.c.bf16 %v6283, %v6282
        %6286 = vrot.lane.b32.xlu0 %v6198, 64
        %v6287 = vpop.permute.xlu0 %6286
        %v6290 = vsel %vm1977, %v6284, 0
        %6292 = vmatpush.bf16.msra.mxu0 0
        %6293 = vmatpush.bf16.msra.mxu0 0
        %6294 = vmatpush.bf16.msra.mxu0 0
        %6295 = vmatpush.bf16.msra.mxu0 0
        %6296 = vmatpush.bf16.msra.mxu0 0
        %6297 = vmatpush.bf16.msra.mxu0 0
        %6298 = vmatpush.bf16.msra.mxu0 0
        %6299 = vmatpush.bf16.msra.mxu0 %v6287
        %6300 = vmatmul.bf16.gmra.mxu0 %v6290
        %v6301 = vpop.f32.mrf.mxu0
        %v6302 = vadd.f32 0.0, %v6301
        %v6303 = vpop.f32.mrf.mxu0
        %v6304 = vadd.f32 0.0, %v6303
        %6305 = vdwg.mxu0
        %6306 = vxpose.xlu0.b32.start [1/16] %v6180, 128
        %6307 = vxpose.xlu0.b32.cont [2/16] %v6182, 128
        %6308 = vxpose.xlu0.b32.cont [3/16] 0.0, 128
        %6309 = vxpose.xlu0.b32.cont [4/16] 0.0, 128
        %6310 = vxpose.xlu0.b32.cont [5/16] 0.0, 128
        %6311 = vxpose.xlu0.b32.cont [6/16] 0.0, 128
        %6312 = vxpose.xlu0.b32.cont [7/16] 0.0, 128
        %6313 = vxpose.xlu0.b32.cont [8/16] 0.0, 128
        %6314 = vxpose.xlu0.b32.cont [9/16] 0.0, 128
        %6315 = vxpose.xlu0.b32.cont [10/16] 0.0, 128
        %6316 = vxpose.xlu0.b32.cont [11/16] 0.0, 128
        %6317 = vxpose.xlu0.b32.cont [12/16] 0.0, 128
        %6318 = vxpose.xlu0.b32.cont [13/16] 0.0, 128
        %6319 = vxpose.xlu0.b32.cont [14/16] 0.0, 128
        %6320 = vxpose.xlu0.b32.cont [15/16] 0.0, 128
        %6321 = vxpose.xlu0.b32.end [16/16] 0.0, 128
        %v6322 = vpop.trf.xlu0
        %v6323 = vpop.trf.xlu0
        %v6324 = vpop.trf.xlu0
        %v6325 = vpop.trf.xlu0
        %v6326 = vpop.trf.xlu0
        %v6327 = vpop.trf.xlu0
        %v6328 = vpop.trf.xlu0
        %v6329 = vpop.trf.xlu0
        %v6330 = vpop.trf.xlu0
        %v6331 = vpop.trf.xlu0
        %v6332 = vpop.trf.xlu0
        %v6333 = vpop.trf.xlu0
        %v6334 = vpop.trf.xlu0
        %v6335 = vpop.trf.xlu0
        %v6336 = vpop.trf.xlu0
        %v6337 = vpop.trf.xlu0
        %v6338 = vpack.c.bf16 %v6323, %v6322
        %v6339 = vpack.c.bf16 %v6325, %v6324
        %6340 = vrot.lane.b32.xlu0 %v6198, 32
        %v6341 = vpop.permute.xlu0 %6340
        %v6343 = vsel %vm1955, %v6341, 0
        %6345 = vmatpush.bf16.msra.mxu0 0
        %6346 = vmatpush.bf16.msra.mxu0 0
        %6347 = vmatpush.bf16.msra.mxu0 0
        %6348 = vmatpush.bf16.msra.mxu0 0
        %6349 = vmatpush.bf16.msra.mxu0 0
        %6350 = vmatpush.bf16.msra.mxu0 0
        %6351 = vmatpush.bf16.msra.mxu0 %v6339
        %6352 = vmatpush.bf16.msra.mxu0 %v6338
        %6353 = vmatmul.bf16.gmra.mxu0 %v6343
        %v6354 = vpop.f32.mrf.mxu0
        %v6355 = vadd.f32 0.0, %v6354
        %v6356 = vpop.f32.mrf.mxu0
        %v6357 = vadd.f32 0.0, %v6356
        %6358 = vdwg.mxu0
        %v6359 = vmul.f32 %v6355, 0.17677669
        %v6360 = vmul.f32 %v6357, 0.17677669
        %v6361 = vadd.f32 %v6359, %v4017
        %v6362 = vadd.f32 %v6360, %v4018
        %v6363 = vsel %vm1977, %v6361, -inf
        %6364 = vmax.xlane.f32.xlu0 %v6363
        %v6365 = vpop.xlane.xlu0 %6364
        %v6366 = vsel %vm1977, %v6362, -inf
        %6367 = vmax.xlane.f32.xlu0 %v6366
        %v6368 = vpop.xlane.xlu0 %6367
        %v6369 = vsub.f32 %v6361, %v6365
        %v6370 = vsub.f32 %v6362, %v6368
        %v6371 = vmul.f32 %v6369, 1.442695
        %v6372 = vpow.pop %v6371
        %v6373 = vmul.f32 %v6370, 1.442695
        %v6374 = vpow.pop %v6373
        %v6375 = vsel %vm1977, %v6372, 0.0
        %6376 = vadd.xlane.f32.xlu0 %v6375
        %v6377 = vpop.xlane.xlu0 %6376
        %v6378 = vsel %vm1977, %v6374, 0.0
        %6379 = vadd.xlane.f32.xlu0 %v6378
        %v6380 = vpop.xlane.xlu0 %6379
        %v6381 = vrcp.pop %v6377
        %v6382 = vrcp.pop %v6380
        %v6383 = vmul.f32 %v6372, %v6381
        %v6384 = vmul.f32 %v6374, %v6382
        %v6385 = vpack.c.bf16 %v6384, %v6383
        %v6386 = vpack.c.bf16 %v6182, %v6180
        %6388 = vrot.lane.b32.xlu0 %v6386, 96
        %v6389 = vpop.permute.xlu0 %6388
        %v6392 = vsel %vm1977, %v6385, 0
        %6394 = vmatpush.bf16.msra.mxu0 0
        %6395 = vmatpush.bf16.msra.mxu0 0
        %6396 = vmatpush.bf16.msra.mxu0 0
        %6397 = vmatpush.bf16.msra.mxu0 0
        %6398 = vmatpush.bf16.msra.mxu0 0
        %6399 = vmatpush.bf16.msra.mxu0 0
        %6400 = vmatpush.bf16.msra.mxu0 0
        %6401 = vmatpush.bf16.msra.mxu0 %v6389
        %6402 = vmatmul.bf16.gmra.mxu0 %v6392
        %v6403 = vpop.f32.mrf.mxu0
        %v6404 = vadd.f32 0.0, %v6403
        %v6405 = vpop.f32.mrf.mxu0
        %v6406 = vadd.f32 0.0, %v6405
        %6407 = vdwg.mxu0
        %6410 = vrot.lane.b32.xlu0 %v6180, 32
        %v6411 = vpop.permute.xlu0 %6410
        %6412 = vrot.lane.b32.xlu0 %v6182, 32
        %v6413 = vpop.permute.xlu0 %6412
        %6416 = vxpose.xlu0.b32.start [1/16] %v6411, 128
        %6417 = vxpose.xlu0.b32.cont [2/16] %v6413, 128
        %6418 = vxpose.xlu0.b32.cont [3/16] 0.0, 128
        %6419 = vxpose.xlu0.b32.cont [4/16] 0.0, 128
        %6420 = vxpose.xlu0.b32.cont [5/16] 0.0, 128
        %6421 = vxpose.xlu0.b32.cont [6/16] 0.0, 128
        %6422 = vxpose.xlu0.b32.cont [7/16] 0.0, 128
        %6423 = vxpose.xlu0.b32.cont [8/16] 0.0, 128
        %6424 = vxpose.xlu0.b32.cont [9/16] 0.0, 128
        %6425 = vxpose.xlu0.b32.cont [10/16] 0.0, 128
        %6426 = vxpose.xlu0.b32.cont [11/16] 0.0, 128
        %6427 = vxpose.xlu0.b32.cont [12/16] 0.0, 128
        %6428 = vxpose.xlu0.b32.cont [13/16] 0.0, 128
        %6429 = vxpose.xlu0.b32.cont [14/16] 0.0, 128
        %6430 = vxpose.xlu0.b32.cont [15/16] 0.0, 128
        %6431 = vxpose.xlu0.b32.end [16/16] 0.0, 128
        %v6432 = vpop.trf.xlu0
        %v6433 = vpop.trf.xlu0
        %v6434 = vpop.trf.xlu0
        %v6435 = vpop.trf.xlu0
        %v6436 = vpop.trf.xlu0
        %v6437 = vpop.trf.xlu0
        %v6438 = vpop.trf.xlu0
        %v6439 = vpop.trf.xlu0
        %v6440 = vpop.trf.xlu0
        %v6441 = vpop.trf.xlu0
        %v6442 = vpop.trf.xlu0
        %v6443 = vpop.trf.xlu0
        %v6444 = vpop.trf.xlu0
        %v6445 = vpop.trf.xlu0
        %v6446 = vpop.trf.xlu0
        %v6447 = vpop.trf.xlu0
        %v6448 = vpack.c.bf16 %v6433, %v6432
        %v6449 = vpack.c.bf16 %v6435, %v6434
        %6450 = vrot.lane.b32.xlu0 %v6386, 64
        %v6451 = vpop.permute.xlu0 %6450
        %v6453 = vsel %vm1955, %v6451, 0
        %6455 = vmatpush.bf16.msra.mxu0 0
        %6456 = vmatpush.bf16.msra.mxu0 0
        %6457 = vmatpush.bf16.msra.mxu0 0
        %6458 = vmatpush.bf16.msra.mxu0 0
        %6459 = vmatpush.bf16.msra.mxu0 0
        %6460 = vmatpush.bf16.msra.mxu0 0
        %6461 = vmatpush.bf16.msra.mxu0 %v6449
        %6462 = vmatpush.bf16.msra.mxu0 %v6448
        %6463 = vmatmul.bf16.gmra.mxu0 %v6453
        %v6464 = vpop.f32.mrf.mxu0
        %v6465 = vadd.f32 0.0, %v6464
        %v6466 = vpop.f32.mrf.mxu0
        %v6467 = vadd.f32 0.0, %v6466
        %6468 = vdwg.mxu0
        %v6469 = vmul.f32 %v6465, 0.17677669
        %v6470 = vmul.f32 %v6467, 0.17677669
        %v6471 = vadd.f32 %v6469, %v4017
        %v6472 = vadd.f32 %v6470, %v4018
        %v6473 = vsel %vm1977, %v6471, -inf
        %6474 = vmax.xlane.f32.xlu0 %v6473
        %v6475 = vpop.xlane.xlu0 %6474
        %v6476 = vsel %vm1977, %v6472, -inf
        %6477 = vmax.xlane.f32.xlu0 %v6476
        %v6478 = vpop.xlane.xlu0 %6477
        %v6479 = vsub.f32 %v6471, %v6475
        %v6480 = vsub.f32 %v6472, %v6478
        %v6481 = vmul.f32 %v6479, 1.442695
        %v6482 = vpow.pop %v6481
        %v6483 = vmul.f32 %v6480, 1.442695
        %v6484 = vpow.pop %v6483
        %v6485 = vsel %vm1977, %v6482, 0.0
        %6486 = vadd.xlane.f32.xlu0 %v6485
        %v6487 = vpop.xlane.xlu0 %6486
        %v6488 = vsel %vm1977, %v6484, 0.0
        %6489 = vadd.xlane.f32.xlu0 %v6488
        %v6490 = vpop.xlane.xlu0 %6489
        %v6491 = vrcp.pop %v6487
        %v6492 = vrcp.pop %v6490
        %v6493 = vmul.f32 %v6482, %v6491
        %v6494 = vmul.f32 %v6484, %v6492
        %v6495 = vpack.c.bf16 %v6494, %v6493
        %v6496 = vpack.c.bf16 %v6196, %v6194
        %v6498 = vsel %vm1977, %v6495, 0
        %6500 = vmatpush.bf16.msra.mxu0 0
        %6501 = vmatpush.bf16.msra.mxu0 0
        %6502 = vmatpush.bf16.msra.mxu0 0
        %6503 = vmatpush.bf16.msra.mxu0 0
        %6504 = vmatpush.bf16.msra.mxu0 0
        %6505 = vmatpush.bf16.msra.mxu0 0
        %6506 = vmatpush.bf16.msra.mxu0 0
        %6507 = vmatpush.bf16.msra.mxu0 %v6496
        %6508 = vmatmul.bf16.gmra.mxu0 %v6498
        %v6509 = vpop.f32.mrf.mxu0
        %v6510 = vadd.f32 0.0, %v6509
        %v6511 = vpop.f32.mrf.mxu0
        %v6512 = vadd.f32 0.0, %v6511
        %6513 = vdwg.mxu0
        %6516 = vrot.lane.b32.xlu0 %v6194, 64
        %v6517 = vpop.permute.xlu0 %6516
        %6518 = vrot.lane.b32.xlu0 %v6196, 64
        %v6519 = vpop.permute.xlu0 %6518
        %6522 = vxpose.xlu0.b32.start [1/16] %v6517, 128
        %6523 = vxpose.xlu0.b32.cont [2/16] %v6519, 128
        %6524 = vxpose.xlu0.b32.cont [3/16] 0.0, 128
        %6525 = vxpose.xlu0.b32.cont [4/16] 0.0, 128
        %6526 = vxpose.xlu0.b32.cont [5/16] 0.0, 128
        %6527 = vxpose.xlu0.b32.cont [6/16] 0.0, 128
        %6528 = vxpose.xlu0.b32.cont [7/16] 0.0, 128
        %6529 = vxpose.xlu0.b32.cont [8/16] 0.0, 128
        %6530 = vxpose.xlu0.b32.cont [9/16] 0.0, 128
        %6531 = vxpose.xlu0.b32.cont [10/16] 0.0, 128
        %6532 = vxpose.xlu0.b32.cont [11/16] 0.0, 128
        %6533 = vxpose.xlu0.b32.cont [12/16] 0.0, 128
        %6534 = vxpose.xlu0.b32.cont [13/16] 0.0, 128
        %6535 = vxpose.xlu0.b32.cont [14/16] 0.0, 128
        %6536 = vxpose.xlu0.b32.cont [15/16] 0.0, 128
        %6537 = vxpose.xlu0.b32.end [16/16] 0.0, 128
        %v6538 = vpop.trf.xlu0
        %v6539 = vpop.trf.xlu0
        %v6540 = vpop.trf.xlu0
        %v6541 = vpop.trf.xlu0
        %v6542 = vpop.trf.xlu0
        %v6543 = vpop.trf.xlu0
        %v6544 = vpop.trf.xlu0
        %v6545 = vpop.trf.xlu0
        %v6546 = vpop.trf.xlu0
        %v6547 = vpop.trf.xlu0
        %v6548 = vpop.trf.xlu0
        %v6549 = vpop.trf.xlu0
        %v6550 = vpop.trf.xlu0
        %v6551 = vpop.trf.xlu0
        %v6552 = vpop.trf.xlu0
        %v6553 = vpop.trf.xlu0
        %v6554 = vpack.c.bf16 %v6539, %v6538
        %v6555 = vpack.c.bf16 %v6541, %v6540
        %6557 = vrot.lane.b32.xlu0 %v6496, 96
        %v6558 = vpop.permute.xlu0 %6557
        %v6560 = vsel %vm1955, %v6558, 0
        %6562 = vmatpush.bf16.msra.mxu0 0
        %6563 = vmatpush.bf16.msra.mxu0 0
        %6564 = vmatpush.bf16.msra.mxu0 0
        %6565 = vmatpush.bf16.msra.mxu0 0
        %6566 = vmatpush.bf16.msra.mxu0 0
        %6567 = vmatpush.bf16.msra.mxu0 0
        %6568 = vmatpush.bf16.msra.mxu0 %v6555
        %6569 = vmatpush.bf16.msra.mxu0 %v6554
        %6570 = vmatmul.bf16.gmra.mxu0 %v6560
        %v6571 = vpop.f32.mrf.mxu0
        %v6572 = vadd.f32 0.0, %v6571
        %v6573 = vpop.f32.mrf.mxu0
        %v6574 = vadd.f32 0.0, %v6573
        %6575 = vdwg.mxu0
        %v6576 = vmul.f32 %v6572, 0.17677669
        %v6577 = vmul.f32 %v6574, 0.17677669
        %v6578 = vadd.f32 %v6576, %v4017
        %v6579 = vadd.f32 %v6577, %v4018
        %v6580 = vsel %vm1977, %v6578, -inf
        %6581 = vmax.xlane.f32.xlu0 %v6580
        %v6582 = vpop.xlane.xlu0 %6581
        %v6583 = vsel %vm1977, %v6579, -inf
        %6584 = vmax.xlane.f32.xlu0 %v6583
        %v6585 = vpop.xlane.xlu0 %6584
        %v6586 = vsub.f32 %v6578, %v6582
        %v6587 = vsub.f32 %v6579, %v6585
        %v6588 = vmul.f32 %v6586, 1.442695
        %v6589 = vpow.pop %v6588
        %v6590 = vmul.f32 %v6587, 1.442695
        %v6591 = vpow.pop %v6590
        %v6592 = vsel %vm1977, %v6589, 0.0
        %6593 = vadd.xlane.f32.xlu0 %v6592
        %v6594 = vpop.xlane.xlu0 %6593
        %v6595 = vsel %vm1977, %v6591, 0.0
        %6596 = vadd.xlane.f32.xlu0 %v6595
        %v6597 = vpop.xlane.xlu0 %6596
        %v6598 = vrcp.pop %v6594
        %v6599 = vrcp.pop %v6597
        %v6600 = vmul.f32 %v6589, %v6598
        %v6601 = vmul.f32 %v6591, %v6599
        %v6602 = vpack.c.bf16 %v6601, %v6600
        %6603 = vrot.lane.b32.xlu0 %v6496, 32
        %v6604 = vpop.permute.xlu0 %6603
        %v6607 = vsel %vm1977, %v6602, 0
        %6609 = vmatpush.bf16.msra.mxu0 0
        %6610 = vmatpush.bf16.msra.mxu0 0
        %6611 = vmatpush.bf16.msra.mxu0 0
        %6612 = vmatpush.bf16.msra.mxu0 0
        %6613 = vmatpush.bf16.msra.mxu0 0
        %6614 = vmatpush.bf16.msra.mxu0 0
        %6615 = vmatpush.bf16.msra.mxu0 0
        %6616 = vmatpush.bf16.msra.mxu0 %v6604
        %6617 = vmatmul.bf16.gmra.mxu0 %v6607
        %v6618 = vpop.f32.mrf.mxu0
        %v6619 = vadd.f32 0.0, %v6618
        %v6620 = vpop.f32.mrf.mxu0
        %v6621 = vadd.f32 0.0, %v6620
        %6622 = vdwg.mxu0
        %6625 = vrot.lane.b32.xlu0 %v6404, 32
        %v6626 = vpop.permute.xlu0 %6625
        %6627 = vrot.lane.b32.xlu0 %v6406, 32
        %v6628 = vpop.permute.xlu0 %6627
        %6633 = vrot.lane.b32.xlu0 %v6510, 64
        %v6634 = vpop.permute.xlu0 %6633
        %6635 = vrot.lane.b32.xlu0 %v6512, 64
        %v6636 = vpop.permute.xlu0 %6635
        %6641 = vrot.lane.b32.xlu0 %v6619, 96
        %v6642 = vpop.permute.xlu0 %6641
        %6643 = vrot.lane.b32.xlu0 %v6621, 96
        %v6644 = vpop.permute.xlu0 %6643
        %v6647 = vsel %vm1955, %v6302, %v6626
        %v6648 = vsel %vm1955, %v6304, %v6628
        %v6649 = vsel %vm2365, %v6647, %v6634
        %v6650 = vsel %vm2365, %v6648, %v6636
        %v6651 = vsel %vm2368, %v6649, %v6642
        %v6652 = vsel %vm2368, %v6650, %v6644
        %v6653 = vpack.c.bf16 %v6652, %v6651
        %v6655 = vperm.slane %v6019, 0
        %v6673 = vunpack.c.l.b16 %v6002
        %v6674 = vunpack.c.l.b16 %v6003
        %v6675 = vunpack.c.l.b16 %v6004
        %v6676 = vunpack.c.l.b16 %v6005
        %v6677 = vunpack.c.l.b16 %v6006
        %v6678 = vunpack.c.l.b16 %v6007
        %v6679 = vunpack.c.l.b16 %v6008
        %v6680 = vunpack.c.l.b16 %v6009
        %v6681 = vunpack.c.l.b16 %v6010
        %v6682 = vunpack.c.l.b16 %v6011
        %v6683 = vunpack.c.l.b16 %v6012
        %v6684 = vunpack.c.l.b16 %v6013
        %v6685 = vunpack.c.l.b16 %v6014
        %v6686 = vunpack.c.l.b16 %v6015
        %v6687 = vunpack.c.l.b16 %v6016
        %v6688 = vunpack.c.l.b16 %v6017
        %v6689 = vpack.c.b16 %v6674, %v6673
        %v6690 = vpack.c.b16 %v6676, %v6675
        %v6691 = vpack.c.b16 %v6678, %v6677
        %v6692 = vpack.c.b16 %v6680, %v6679
        %v6693 = vpack.c.b16 %v6682, %v6681
        %v6694 = vpack.c.b16 %v6684, %v6683
        %v6695 = vpack.c.b16 %v6686, %v6685
        %v6696 = vpack.c.b16 %v6688, %v6687
        %6705 = vmatpush.bf16.msra.mxu0 %v6696
        %6706 = vmatpush.bf16.msra.mxu0 %v6695
        %6707 = vmatpush.bf16.msra.mxu0 %v6694
        %6708 = vmatpush.bf16.msra.mxu0 %v6693
        %6709 = vmatpush.bf16.msra.mxu0 %v6692
        %6710 = vmatpush.bf16.msra.mxu0 %v6691
        %6711 = vmatpush.bf16.msra.mxu0 %v6690
        %6712 = vmatpush.bf16.msra.mxu0 %v6689
        %6713 = vmatmul.bf16.gmra.mxu0 %v6653
        %v6714 = vpop.f32.mrf.mxu0
        %v6715 = vadd.f32 %v6655, %v6714
        %v6716 = vpop.f32.mrf.mxu0
        %v6717 = vadd.f32 %v6655, %v6716
        %6718 = vdwg.mxu0
        %v6719 = vadd.f32 %v6715, %v5964
        %v6720 = vadd.f32 %v6717, %v5965
        %s6721 = scalar_lea.vmem [#allocation20], 1
        %v6722 = vld [vmem:[%s6721] sm:$0x1]
        %s6723 = scalar_lea.vmem [#allocation22], 1
        %v6724 = vld [vmem:[%s6723] sm:$0x1]
        %6725 = vadd.xlane.f32.xlu0 %v6719
        %v6726 = vpop.xlane.xlu0 %6725
        %6727 = vadd.xlane.f32.xlu0 %v6720
        %v6728 = vpop.xlane.xlu0 %6727
        %v6729 = vmul.f32 %v6726, %v2451
        %v6730 = vmul.f32 %v6728, %v2451
        %v6731 = vsub.f32 %v6719, %v6729
        %v6732 = vsub.f32 %v6720, %v6730
        %v6733 = vmul.f32 %v6731, %v6731
        %v6734 = vmul.f32 %v6732, %v6732
        %6735 = vadd.xlane.f32.xlu0 %v6733
        %v6736 = vpop.xlane.xlu0 %6735
        %6737 = vadd.xlane.f32.xlu0 %v6734
        %v6738 = vpop.xlane.xlu0 %6737
        %v6739 = vmul.f32 %v6736, %v2451
        %v6740 = vmul.f32 %v6738, %v2451
        %v6741 = vadd.f32 %v6739, 1e-05
        %v6742 = vadd.f32 %v6740, 1e-05
        %v6743 = vrsqrt.pop %v6741
        %v6744 = vmul.f32 %v6743, %v6741
        %v6745 = vmul.f32 %v6744, %v6743
        %v6746 = vmul.f32 0.5, %v6745
        %v6747 = vsub.f32 1.5, %v6746
        %v6748 = vmul.f32 %v6743, %v6747
        %vm6749 = vweird.f32 %v6741
        %vm6750 = vweird.f32 %v6743
        %vm6751 = vmor %vm6749, %vm6750
        %v6752 = vsel %vm6751, %v6743, %v6748
        %v6753 = vrsqrt.pop %v6742
        %v6754 = vmul.f32 %v6753, %v6742
        %v6755 = vmul.f32 %v6754, %v6753
        %v6756 = vmul.f32 0.5, %v6755
        %v6757 = vsub.f32 1.5, %v6756
        %v6758 = vmul.f32 %v6753, %v6757
        %vm6759 = vweird.f32 %v6742
        %vm6760 = vweird.f32 %v6753
        %vm6761 = vmor %vm6759, %vm6760
        %v6762 = vsel %vm6761, %v6753, %v6758
        %v6763 = vmul.f32 %v6731, %v6752
        %v6764 = vmul.f32 %v6732, %v6762
        %v6766 = vperm.slane %v6722, 0
        %v6768 = vmul.f32 %v6763, %v6766
        %v6769 = vmul.f32 %v6764, %v6766
        %v6771 = vperm.slane %v6724, 0
        %v6773 = vadd.f32 %v6768, %v6771
        %v6774 = vadd.f32 %v6769, %v6771
        %s6775 = scalar_lea.vmem [#allocation26], 64
        %v6776 = vld [vmem:[%s6775] sm:$0xf]
        %v6777 = vld [vmem:[%s6775 + $0x4] sm:$0xf]
        %v6778 = vld [vmem:[%s6775 + $0x8] sm:$0xf]
        %v6779 = vld [vmem:[%s6775 + $0xc] sm:$0xf]
        %v6780 = vld [vmem:[%s6775 + $0x10] sm:$0xf]
        %v6781 = vld [vmem:[%s6775 + $0x14] sm:$0xf]
        %v6782 = vld [vmem:[%s6775 + $0x18] sm:$0xf]
        %v6783 = vld [vmem:[%s6775 + $0x1c] sm:$0xf]
        %v6784 = vld [vmem:[%s6775 + $0x20] sm:$0xf]
        %v6785 = vld [vmem:[%s6775 + $0x24] sm:$0xf]
        %v6786 = vld [vmem:[%s6775 + $0x28] sm:$0xf]
        %v6787 = vld [vmem:[%s6775 + $0x2c] sm:$0xf]
        %v6788 = vld [vmem:[%s6775 + $0x30] sm:$0xf]
        %v6789 = vld [vmem:[%s6775 + $0x34] sm:$0xf]
        %v6790 = vld [vmem:[%s6775 + $0x38] sm:$0xf]
        %v6791 = vld [vmem:[%s6775 + $0x3c] sm:$0xf]
        %s6792 = scalar_lea.vmem [#allocation28], 1
        %v6793 = vld [vmem:[%s6792] sm:$0x1]
        %s6794 = scalar_lea.vmem [#allocation23], 128
        %v6795 = vld [vmem:[%s6794] sm:$0xff]
        %v6796 = vld [vmem:[%s6794 + $0x8] sm:$0xff]
        %v6797 = vld [vmem:[%s6794 + $0x10] sm:$0xff]
        %v6798 = vld [vmem:[%s6794 + $0x18] sm:$0xff]
        %v6799 = vld [vmem:[%s6794 + $0x20] sm:$0xff]
        %v6800 = vld [vmem:[%s6794 + $0x28] sm:$0xff]
        %v6801 = vld [vmem:[%s6794 + $0x30] sm:$0xff]
        %v6802 = vld [vmem:[%s6794 + $0x38] sm:$0xff]
        %v6803 = vld [vmem:[%s6794 + $0x40] sm:$0xff]
        %v6804 = vld [vmem:[%s6794 + $0x48] sm:$0xff]
        %v6805 = vld [vmem:[%s6794 + $0x50] sm:$0xff]
        %v6806 = vld [vmem:[%s6794 + $0x58] sm:$0xff]
        %v6807 = vld [vmem:[%s6794 + $0x60] sm:$0xff]
        %v6808 = vld [vmem:[%s6794 + $0x68] sm:$0xff]
        %v6809 = vld [vmem:[%s6794 + $0x70] sm:$0xff]
        %v6810 = vld [vmem:[%s6794 + $0x78] sm:$0xff]
        %s6811 = scalar_lea.vmem [#allocation25], 2
        %v6812 = vld [vmem:[%s6811] sm:$0x3]
        %s6813 = scalar_lea.vmem [#allocation29], 64
        %v6814 = vld [vmem:[%s6813] sm:$0xf]
        %v6815 = vld [vmem:[%s6813 + $0x4] sm:$0xf]
        %v6816 = vld [vmem:[%s6813 + $0x8] sm:$0xf]
        %v6817 = vld [vmem:[%s6813 + $0xc] sm:$0xf]
        %v6818 = vld [vmem:[%s6813 + $0x10] sm:$0xf]
        %v6819 = vld [vmem:[%s6813 + $0x14] sm:$0xf]
        %v6820 = vld [vmem:[%s6813 + $0x18] sm:$0xf]
        %v6821 = vld [vmem:[%s6813 + $0x1c] sm:$0xf]
        %v6822 = vld [vmem:[%s6813 + $0x20] sm:$0xf]
        %v6823 = vld [vmem:[%s6813 + $0x24] sm:$0xf]
        %v6824 = vld [vmem:[%s6813 + $0x28] sm:$0xf]
        %v6825 = vld [vmem:[%s6813 + $0x2c] sm:$0xf]
        %v6826 = vld [vmem:[%s6813 + $0x30] sm:$0xf]
        %v6827 = vld [vmem:[%s6813 + $0x34] sm:$0xf]
        %v6828 = vld [vmem:[%s6813 + $0x38] sm:$0xf]
        %v6829 = vld [vmem:[%s6813 + $0x3c] sm:$0xf]
        %s6830 = scalar_lea.vmem [#allocation31], 1
        %v6831 = vld [vmem:[%s6830] sm:$0x1]
        %v6832 = vpack.c.bf16 %v6774, %v6773
        %v6834 = vperm.slane %v6793, 0
        %v6852 = vunpack.c.l.b16 %v6776
        %v6853 = vunpack.c.l.b16 %v6777
        %v6854 = vunpack.c.l.b16 %v6778
        %v6855 = vunpack.c.l.b16 %v6779
        %v6856 = vunpack.c.l.b16 %v6780
        %v6857 = vunpack.c.l.b16 %v6781
        %v6858 = vunpack.c.l.b16 %v6782
        %v6859 = vunpack.c.l.b16 %v6783
        %v6860 = vunpack.c.l.b16 %v6784
        %v6861 = vunpack.c.l.b16 %v6785
        %v6862 = vunpack.c.l.b16 %v6786
        %v6863 = vunpack.c.l.b16 %v6787
        %v6864 = vunpack.c.l.b16 %v6788
        %v6865 = vunpack.c.l.b16 %v6789
        %v6866 = vunpack.c.l.b16 %v6790
        %v6867 = vunpack.c.l.b16 %v6791
        %v6868 = vpack.c.b16 %v6853, %v6852
        %v6869 = vpack.c.b16 %v6855, %v6854
        %v6870 = vpack.c.b16 %v6857, %v6856
        %v6871 = vpack.c.b16 %v6859, %v6858
        %v6872 = vpack.c.b16 %v6861, %v6860
        %v6873 = vpack.c.b16 %v6863, %v6862
        %v6874 = vpack.c.b16 %v6865, %v6864
        %v6875 = vpack.c.b16 %v6867, %v6866
        %6884 = vmatpush.bf16.msra.mxu0 %v6875
        %6885 = vmatpush.bf16.msra.mxu0 %v6874
        %6886 = vmatpush.bf16.msra.mxu0 %v6873
        %6887 = vmatpush.bf16.msra.mxu0 %v6872
        %6888 = vmatpush.bf16.msra.mxu0 %v6871
        %6889 = vmatpush.bf16.msra.mxu0 %v6870
        %6890 = vmatpush.bf16.msra.mxu0 %v6869
        %6891 = vmatpush.bf16.msra.mxu0 %v6868
        %6892 = vmatmul.bf16.gmra.mxu0 %v6832
        %v6893 = vpop.f32.mrf.mxu0
        %v6894 = vadd.f32 %v6834, %v6893
        %v6895 = vpop.f32.mrf.mxu0
        %v6896 = vadd.f32 %v6834, %v6895
        %6897 = vdwg.mxu0
        %v6899 = vperm.slane %v6812, 0
        %v6900 = vperm.slane %v6812, 1
        %v6919 = vunpack.c.l.b16 %v6795
        %v6920 = vunpack.c.h.b16 %v6795
        %v6921 = vunpack.c.l.b16 %v6796
        %v6922 = vunpack.c.h.b16 %v6796
        %v6923 = vunpack.c.l.b16 %v6797
        %v6924 = vunpack.c.h.b16 %v6797
        %v6925 = vunpack.c.l.b16 %v6798
        %v6926 = vunpack.c.h.b16 %v6798
        %v6927 = vunpack.c.l.b16 %v6799
        %v6928 = vunpack.c.h.b16 %v6799
        %v6929 = vunpack.c.l.b16 %v6800
        %v6930 = vunpack.c.h.b16 %v6800
        %v6931 = vunpack.c.l.b16 %v6801
        %v6932 = vunpack.c.h.b16 %v6801
        %v6933 = vunpack.c.l.b16 %v6802
        %v6934 = vunpack.c.h.b16 %v6802
        %v6935 = vunpack.c.l.b16 %v6803
        %v6936 = vunpack.c.h.b16 %v6803
        %v6937 = vunpack.c.l.b16 %v6804
        %v6938 = vunpack.c.h.b16 %v6804
        %v6939 = vunpack.c.l.b16 %v6805
        %v6940 = vunpack.c.h.b16 %v6805
        %v6941 = vunpack.c.l.b16 %v6806
        %v6942 = vunpack.c.h.b16 %v6806
        %v6943 = vunpack.c.l.b16 %v6807
        %v6944 = vunpack.c.h.b16 %v6807
        %v6945 = vunpack.c.l.b16 %v6808
        %v6946 = vunpack.c.h.b16 %v6808
        %v6947 = vunpack.c.l.b16 %v6809
        %v6948 = vunpack.c.h.b16 %v6809
        %v6949 = vunpack.c.l.b16 %v6810
        %v6950 = vunpack.c.h.b16 %v6810
        %v6951 = vpack.c.b16 %v6921, %v6919
        %v6952 = vpack.c.b16 %v6922, %v6920
        %v6953 = vpack.c.b16 %v6925, %v6923
        %v6954 = vpack.c.b16 %v6926, %v6924
        %v6955 = vpack.c.b16 %v6929, %v6927
        %v6956 = vpack.c.b16 %v6930, %v6928
        %v6957 = vpack.c.b16 %v6933, %v6931
        %v6958 = vpack.c.b16 %v6934, %v6932
        %v6959 = vpack.c.b16 %v6937, %v6935
        %v6960 = vpack.c.b16 %v6938, %v6936
        %v6961 = vpack.c.b16 %v6941, %v6939
        %v6962 = vpack.c.b16 %v6942, %v6940
        %v6963 = vpack.c.b16 %v6945, %v6943
        %v6964 = vpack.c.b16 %v6946, %v6944
        %v6965 = vpack.c.b16 %v6949, %v6947
        %v6966 = vpack.c.b16 %v6950, %v6948
        %6983 = vmatpush.bf16.msra.mxu0 %v6965
        %6984 = vmatpush.bf16.msra.mxu0 %v6963
        %6985 = vmatpush.bf16.msra.mxu0 %v6961
        %6986 = vmatpush.bf16.msra.mxu0 %v6959
        %6987 = vmatpush.bf16.msra.mxu0 %v6957
        %6988 = vmatpush.bf16.msra.mxu0 %v6955
        %6989 = vmatpush.bf16.msra.mxu0 %v6953
        %6990 = vmatpush.bf16.msra.mxu0 %v6951
        %6991 = vmatmul.bf16.gmra.mxu0 %v4939
        %v6992 = vpop.f32.mrf.mxu0
        %v6993 = vadd.f32 %v6899, %v6992
        %v6994 = vpop.f32.mrf.mxu0
        %v6995 = vadd.f32 %v6899, %v6994
        %6996 = vdwg.mxu0
        %6997 = vmatpush.bf16.msra.mxu0 %v6966
        %6998 = vmatpush.bf16.msra.mxu0 %v6964
        %6999 = vmatpush.bf16.msra.mxu0 %v6962
        %7000 = vmatpush.bf16.msra.mxu0 %v6960
        %7001 = vmatpush.bf16.msra.mxu0 %v6958
        %7002 = vmatpush.bf16.msra.mxu0 %v6956
        %7003 = vmatpush.bf16.msra.mxu0 %v6954
        %7004 = vmatpush.bf16.msra.mxu0 %v6952
        %7005 = vmatmul.bf16.gmra.mxu0 %v4939
        %v7006 = vpop.f32.mrf.mxu0
        %v7007 = vadd.f32 %v6900, %v7006
        %v7008 = vpop.f32.mrf.mxu0
        %v7009 = vadd.f32 %v6900, %v7008
        %7010 = vdwg.mxu0
        %v7011 = vpack.c.bf16 %v6896, %v6894
        %7012 = vxpose.xlu0.b32.start [1/16] %v6993, 128
        %7013 = vxpose.xlu0.b32.cont [2/16] %v6995, 128
        %7014 = vxpose.xlu0.b32.cont [3/16] 0.0, 128
        %7015 = vxpose.xlu0.b32.cont [4/16] 0.0, 128
        %7016 = vxpose.xlu0.b32.cont [5/16] 0.0, 128
        %7017 = vxpose.xlu0.b32.cont [6/16] 0.0, 128
        %7018 = vxpose.xlu0.b32.cont [7/16] 0.0, 128
        %7019 = vxpose.xlu0.b32.cont [8/16] 0.0, 128
        %7020 = vxpose.xlu0.b32.cont [9/16] 0.0, 128
        %7021 = vxpose.xlu0.b32.cont [10/16] 0.0, 128
        %7022 = vxpose.xlu0.b32.cont [11/16] 0.0, 128
        %7023 = vxpose.xlu0.b32.cont [12/16] 0.0, 128
        %7024 = vxpose.xlu0.b32.cont [13/16] 0.0, 128
        %7025 = vxpose.xlu0.b32.cont [14/16] 0.0, 128
        %7026 = vxpose.xlu0.b32.cont [15/16] 0.0, 128
        %7027 = vxpose.xlu0.b32.end [16/16] 0.0, 128
        %v7028 = vpop.trf.xlu0
        %v7029 = vpop.trf.xlu0
        %v7030 = vpop.trf.xlu0
        %v7031 = vpop.trf.xlu0
        %v7032 = vpop.trf.xlu0
        %v7033 = vpop.trf.xlu0
        %v7034 = vpop.trf.xlu0
        %v7035 = vpop.trf.xlu0
        %v7036 = vpop.trf.xlu0
        %v7037 = vpop.trf.xlu0
        %v7038 = vpop.trf.xlu0
        %v7039 = vpop.trf.xlu0
        %v7040 = vpop.trf.xlu0
        %v7041 = vpop.trf.xlu0
        %v7042 = vpop.trf.xlu0
        %v7043 = vpop.trf.xlu0
        %v7044 = vpack.c.bf16 %v7029, %v7028
        %v7045 = vpack.c.bf16 %v7031, %v7030
        %v7047 = vsel %vm1955, %v7011, 0
        %7049 = vmatpush.bf16.msra.mxu0 0
        %7050 = vmatpush.bf16.msra.mxu0 0
        %7051 = vmatpush.bf16.msra.mxu0 0
        %7052 = vmatpush.bf16.msra.mxu0 0
        %7053 = vmatpush.bf16.msra.mxu0 0
        %7054 = vmatpush.bf16.msra.mxu0 0
        %7055 = vmatpush.bf16.msra.mxu0 %v7045
        %7056 = vmatpush.bf16.msra.mxu0 %v7044
        %7057 = vmatmul.bf16.gmra.mxu0 %v7047
        %v7058 = vpop.f32.mrf.mxu0
        %v7059 = vadd.f32 0.0, %v7058
        %v7060 = vpop.f32.mrf.mxu0
        %v7061 = vadd.f32 0.0, %v7060
        %7062 = vdwg.mxu0
        %v7063 = vmul.f32 %v7059, 0.17677669
        %v7064 = vmul.f32 %v7061, 0.17677669
        %v7065 = vsel %vm1977, %v7063, -inf
        %7066 = vmax.xlane.f32.xlu0 %v7065
        %v7067 = vpop.xlane.xlu0 %7066
        %v7068 = vsel %vm1977, %v7064, -inf
        %7069 = vmax.xlane.f32.xlu0 %v7068
        %v7070 = vpop.xlane.xlu0 %7069
        %v7071 = vsub.f32 %v7063, %v7067
        %v7072 = vsub.f32 %v7064, %v7070
        %v7073 = vmul.f32 %v7071, 1.442695
        %v7074 = vpow.pop %v7073
        %v7075 = vmul.f32 %v7072, 1.442695
        %v7076 = vpow.pop %v7075
        %v7077 = vsel %vm1977, %v7074, 0.0
        %7078 = vadd.xlane.f32.xlu0 %v7077
        %v7079 = vpop.xlane.xlu0 %7078
        %v7080 = vsel %vm1977, %v7076, 0.0
        %7081 = vadd.xlane.f32.xlu0 %v7080
        %v7082 = vpop.xlane.xlu0 %7081
        %v7083 = vrcp.pop %v7079
        %v7084 = vrcp.pop %v7082
        %v7085 = vmul.f32 %v7074, %v7083
        %v7086 = vmul.f32 %v7076, %v7084
        %v7087 = vpack.c.bf16 %v7086, %v7085
        %v7088 = vpack.c.bf16 %v6995, %v6993
        %7090 = vrot.lane.b32.xlu0 %v7088, 96
        %v7091 = vpop.permute.xlu0 %7090
        %v7094 = vsel %vm1977, %v7087, 0
        %7096 = vmatpush.bf16.msra.mxu0 0
        %7097 = vmatpush.bf16.msra.mxu0 0
        %7098 = vmatpush.bf16.msra.mxu0 0
        %7099 = vmatpush.bf16.msra.mxu0 0
        %7100 = vmatpush.bf16.msra.mxu0 0
        %7101 = vmatpush.bf16.msra.mxu0 0
        %7102 = vmatpush.bf16.msra.mxu0 0
        %7103 = vmatpush.bf16.msra.mxu0 %v7091
        %7104 = vmatmul.bf16.gmra.mxu0 %v7094
        %v7105 = vpop.f32.mrf.mxu0
        %v7106 = vadd.f32 0.0, %v7105
        %v7107 = vpop.f32.mrf.mxu0
        %v7108 = vadd.f32 0.0, %v7107
        %7109 = vdwg.mxu0
        %7112 = vrot.lane.b32.xlu0 %v6993, 64
        %v7113 = vpop.permute.xlu0 %7112
        %7114 = vrot.lane.b32.xlu0 %v6995, 64
        %v7115 = vpop.permute.xlu0 %7114
        %7118 = vxpose.xlu0.b32.start [1/16] %v7113, 128
        %7119 = vxpose.xlu0.b32.cont [2/16] %v7115, 128
        %7120 = vxpose.xlu0.b32.cont [3/16] 0.0, 128
        %7121 = vxpose.xlu0.b32.cont [4/16] 0.0, 128
        %7122 = vxpose.xlu0.b32.cont [5/16] 0.0, 128
        %7123 = vxpose.xlu0.b32.cont [6/16] 0.0, 128
        %7124 = vxpose.xlu0.b32.cont [7/16] 0.0, 128
        %7125 = vxpose.xlu0.b32.cont [8/16] 0.0, 128
        %7126 = vxpose.xlu0.b32.cont [9/16] 0.0, 128
        %7127 = vxpose.xlu0.b32.cont [10/16] 0.0, 128
        %7128 = vxpose.xlu0.b32.cont [11/16] 0.0, 128
        %7129 = vxpose.xlu0.b32.cont [12/16] 0.0, 128
        %7130 = vxpose.xlu0.b32.cont [13/16] 0.0, 128
        %7131 = vxpose.xlu0.b32.cont [14/16] 0.0, 128
        %7132 = vxpose.xlu0.b32.cont [15/16] 0.0, 128
        %7133 = vxpose.xlu0.b32.end [16/16] 0.0, 128
        %v7134 = vpop.trf.xlu0
        %v7135 = vpop.trf.xlu0
        %v7136 = vpop.trf.xlu0
        %v7137 = vpop.trf.xlu0
        %v7138 = vpop.trf.xlu0
        %v7139 = vpop.trf.xlu0
        %v7140 = vpop.trf.xlu0
        %v7141 = vpop.trf.xlu0
        %v7142 = vpop.trf.xlu0
        %v7143 = vpop.trf.xlu0
        %v7144 = vpop.trf.xlu0
        %v7145 = vpop.trf.xlu0
        %v7146 = vpop.trf.xlu0
        %v7147 = vpop.trf.xlu0
        %v7148 = vpop.trf.xlu0
        %v7149 = vpop.trf.xlu0
        %v7150 = vpack.c.bf16 %v7135, %v7134
        %v7151 = vpack.c.bf16 %v7137, %v7136
        %7153 = vrot.lane.b32.xlu0 %v7011, 96
        %v7154 = vpop.permute.xlu0 %7153
        %v7156 = vsel %vm1955, %v7154, 0
        %7158 = vmatpush.bf16.msra.mxu0 0
        %7159 = vmatpush.bf16.msra.mxu0 0
        %7160 = vmatpush.bf16.msra.mxu0 0
        %7161 = vmatpush.bf16.msra.mxu0 0
        %7162 = vmatpush.bf16.msra.mxu0 0
        %7163 = vmatpush.bf16.msra.mxu0 0
        %7164 = vmatpush.bf16.msra.mxu0 %v7151
        %7165 = vmatpush.bf16.msra.mxu0 %v7150
        %7166 = vmatmul.bf16.gmra.mxu0 %v7156
        %v7167 = vpop.f32.mrf.mxu0
        %v7168 = vadd.f32 0.0, %v7167
        %v7169 = vpop.f32.mrf.mxu0
        %v7170 = vadd.f32 0.0, %v7169
        %7171 = vdwg.mxu0
        %v7172 = vmul.f32 %v7168, 0.17677669
        %v7173 = vmul.f32 %v7170, 0.17677669
        %v7174 = vsel %vm1977, %v7172, -inf
        %7175 = vmax.xlane.f32.xlu0 %v7174
        %v7176 = vpop.xlane.xlu0 %7175
        %v7177 = vsel %vm1977, %v7173, -inf
        %7178 = vmax.xlane.f32.xlu0 %v7177
        %v7179 = vpop.xlane.xlu0 %7178
        %v7180 = vsub.f32 %v7172, %v7176
        %v7181 = vsub.f32 %v7173, %v7179
        %v7182 = vmul.f32 %v7180, 1.442695
        %v7183 = vpow.pop %v7182
        %v7184 = vmul.f32 %v7181, 1.442695
        %v7185 = vpow.pop %v7184
        %v7186 = vsel %vm1977, %v7183, 0.0
        %7187 = vadd.xlane.f32.xlu0 %v7186
        %v7188 = vpop.xlane.xlu0 %7187
        %v7189 = vsel %vm1977, %v7185, 0.0
        %7190 = vadd.xlane.f32.xlu0 %v7189
        %v7191 = vpop.xlane.xlu0 %7190
        %v7192 = vrcp.pop %v7188
        %v7193 = vrcp.pop %v7191
        %v7194 = vmul.f32 %v7183, %v7192
        %v7195 = vmul.f32 %v7185, %v7193
        %v7196 = vpack.c.bf16 %v7195, %v7194
        %7197 = vrot.lane.b32.xlu0 %v7088, 32
        %v7198 = vpop.permute.xlu0 %7197
        %v7201 = vsel %vm1977, %v7196, 0
        %7203 = vmatpush.bf16.msra.mxu0 0
        %7204 = vmatpush.bf16.msra.mxu0 0
        %7205 = vmatpush.bf16.msra.mxu0 0
        %7206 = vmatpush.bf16.msra.mxu0 0
        %7207 = vmatpush.bf16.msra.mxu0 0
        %7208 = vmatpush.bf16.msra.mxu0 0
        %7209 = vmatpush.bf16.msra.mxu0 0
        %7210 = vmatpush.bf16.msra.mxu0 %v7198
        %7211 = vmatmul.bf16.gmra.mxu0 %v7201
        %v7212 = vpop.f32.mrf.mxu0
        %v7213 = vadd.f32 0.0, %v7212
        %v7214 = vpop.f32.mrf.mxu0
        %v7215 = vadd.f32 0.0, %v7214
        %7216 = vdwg.mxu0
        %7217 = vxpose.xlu0.b32.start [1/16] %v7007, 128
        %7218 = vxpose.xlu0.b32.cont [2/16] %v7009, 128
        %7219 = vxpose.xlu0.b32.cont [3/16] 0.0, 128
        %7220 = vxpose.xlu0.b32.cont [4/16] 0.0, 128
        %7221 = vxpose.xlu0.b32.cont [5/16] 0.0, 128
        %7222 = vxpose.xlu0.b32.cont [6/16] 0.0, 128
        %7223 = vxpose.xlu0.b32.cont [7/16] 0.0, 128
        %7224 = vxpose.xlu0.b32.cont [8/16] 0.0, 128
        %7225 = vxpose.xlu0.b32.cont [9/16] 0.0, 128
        %7226 = vxpose.xlu0.b32.cont [10/16] 0.0, 128
        %7227 = vxpose.xlu0.b32.cont [11/16] 0.0, 128
        %7228 = vxpose.xlu0.b32.cont [12/16] 0.0, 128
        %7229 = vxpose.xlu0.b32.cont [13/16] 0.0, 128
        %7230 = vxpose.xlu0.b32.cont [14/16] 0.0, 128
        %7231 = vxpose.xlu0.b32.cont [15/16] 0.0, 128
        %7232 = vxpose.xlu0.b32.end [16/16] 0.0, 128
        %v7233 = vpop.trf.xlu0
        %v7234 = vpop.trf.xlu0
        %v7235 = vpop.trf.xlu0
        %v7236 = vpop.trf.xlu0
        %v7237 = vpop.trf.xlu0
        %v7238 = vpop.trf.xlu0
        %v7239 = vpop.trf.xlu0
        %v7240 = vpop.trf.xlu0
        %v7241 = vpop.trf.xlu0
        %v7242 = vpop.trf.xlu0
        %v7243 = vpop.trf.xlu0
        %v7244 = vpop.trf.xlu0
        %v7245 = vpop.trf.xlu0
        %v7246 = vpop.trf.xlu0
        %v7247 = vpop.trf.xlu0
        %v7248 = vpop.trf.xlu0
        %v7249 = vpack.c.bf16 %v7234, %v7233
        %v7250 = vpack.c.bf16 %v7236, %v7235
        %7251 = vrot.lane.b32.xlu0 %v7011, 64
        %v7252 = vpop.permute.xlu0 %7251
        %v7254 = vsel %vm1955, %v7252, 0
        %7256 = vmatpush.bf16.msra.mxu0 0
        %7257 = vmatpush.bf16.msra.mxu0 0
        %7258 = vmatpush.bf16.msra.mxu0 0
        %7259 = vmatpush.bf16.msra.mxu0 0
        %7260 = vmatpush.bf16.msra.mxu0 0
        %7261 = vmatpush.bf16.msra.mxu0 0
        %7262 = vmatpush.bf16.msra.mxu0 %v7250
        %7263 = vmatpush.bf16.msra.mxu0 %v7249
        %7264 = vmatmul.bf16.gmra.mxu0 %v7254
        %v7265 = vpop.f32.mrf.mxu0
        %v7266 = vadd.f32 0.0, %v7265
        %v7267 = vpop.f32.mrf.mxu0
        %v7268 = vadd.f32 0.0, %v7267
        %7269 = vdwg.mxu0
        %v7270 = vmul.f32 %v7266, 0.17677669
        %v7271 = vmul.f32 %v7268, 0.17677669
        %v7272 = vsel %vm1977, %v7270, -inf
        %7273 = vmax.xlane.f32.xlu0 %v7272
        %v7274 = vpop.xlane.xlu0 %7273
        %v7275 = vsel %vm1977, %v7271, -inf
        %7276 = vmax.xlane.f32.xlu0 %v7275
        %v7277 = vpop.xlane.xlu0 %7276
        %v7278 = vsub.f32 %v7270, %v7274
        %v7279 = vsub.f32 %v7271, %v7277
        %v7280 = vmul.f32 %v7278, 1.442695
        %v7281 = vpow.pop %v7280
        %v7282 = vmul.f32 %v7279, 1.442695
        %v7283 = vpow.pop %v7282
        %v7284 = vsel %vm1977, %v7281, 0.0
        %7285 = vadd.xlane.f32.xlu0 %v7284
        %v7286 = vpop.xlane.xlu0 %7285
        %v7287 = vsel %vm1977, %v7283, 0.0
        %7288 = vadd.xlane.f32.xlu0 %v7287
        %v7289 = vpop.xlane.xlu0 %7288
        %v7290 = vrcp.pop %v7286
        %v7291 = vrcp.pop %v7289
        %v7292 = vmul.f32 %v7281, %v7290
        %v7293 = vmul.f32 %v7283, %v7291
        %v7294 = vpack.c.bf16 %v7293, %v7292
        %v7295 = vpack.c.bf16 %v7009, %v7007
        %7297 = vrot.lane.b32.xlu0 %v7295, 96
        %v7298 = vpop.permute.xlu0 %7297
        %v7301 = vsel %vm1977, %v7294, 0
        %7303 = vmatpush.bf16.msra.mxu0 0
        %7304 = vmatpush.bf16.msra.mxu0 0
        %7305 = vmatpush.bf16.msra.mxu0 0
        %7306 = vmatpush.bf16.msra.mxu0 0
        %7307 = vmatpush.bf16.msra.mxu0 0
        %7308 = vmatpush.bf16.msra.mxu0 0
        %7309 = vmatpush.bf16.msra.mxu0 0
        %7310 = vmatpush.bf16.msra.mxu0 %v7298
        %7311 = vmatmul.bf16.gmra.mxu0 %v7301
        %v7312 = vpop.f32.mrf.mxu0
        %v7313 = vadd.f32 0.0, %v7312
        %v7314 = vpop.f32.mrf.mxu0
        %v7315 = vadd.f32 0.0, %v7314
        %7316 = vdwg.mxu0
        %7319 = vrot.lane.b32.xlu0 %v7007, 64
        %v7320 = vpop.permute.xlu0 %7319
        %7321 = vrot.lane.b32.xlu0 %v7009, 64
        %v7322 = vpop.permute.xlu0 %7321
        %7325 = vxpose.xlu0.b32.start [1/16] %v7320, 128
        %7326 = vxpose.xlu0.b32.cont [2/16] %v7322, 128
        %7327 = vxpose.xlu0.b32.cont [3/16] 0.0, 128
        %7328 = vxpose.xlu0.b32.cont [4/16] 0.0, 128
        %7329 = vxpose.xlu0.b32.cont [5/16] 0.0, 128
        %7330 = vxpose.xlu0.b32.cont [6/16] 0.0, 128
        %7331 = vxpose.xlu0.b32.cont [7/16] 0.0, 128
        %7332 = vxpose.xlu0.b32.cont [8/16] 0.0, 128
        %7333 = vxpose.xlu0.b32.cont [9/16] 0.0, 128
        %7334 = vxpose.xlu0.b32.cont [10/16] 0.0, 128
        %7335 = vxpose.xlu0.b32.cont [11/16] 0.0, 128
        %7336 = vxpose.xlu0.b32.cont [12/16] 0.0, 128
        %7337 = vxpose.xlu0.b32.cont [13/16] 0.0, 128
        %7338 = vxpose.xlu0.b32.cont [14/16] 0.0, 128
        %7339 = vxpose.xlu0.b32.cont [15/16] 0.0, 128
        %7340 = vxpose.xlu0.b32.end [16/16] 0.0, 128
        %v7341 = vpop.trf.xlu0
        %v7342 = vpop.trf.xlu0
        %v7343 = vpop.trf.xlu0
        %v7344 = vpop.trf.xlu0
        %v7345 = vpop.trf.xlu0
        %v7346 = vpop.trf.xlu0
        %v7347 = vpop.trf.xlu0
        %v7348 = vpop.trf.xlu0
        %v7349 = vpop.trf.xlu0
        %v7350 = vpop.trf.xlu0
        %v7351 = vpop.trf.xlu0
        %v7352 = vpop.trf.xlu0
        %v7353 = vpop.trf.xlu0
        %v7354 = vpop.trf.xlu0
        %v7355 = vpop.trf.xlu0
        %v7356 = vpop.trf.xlu0
        %v7357 = vpack.c.bf16 %v7342, %v7341
        %v7358 = vpack.c.bf16 %v7344, %v7343
        %7359 = vrot.lane.b32.xlu0 %v7011, 32
        %v7360 = vpop.permute.xlu0 %7359
        %v7362 = vsel %vm1955, %v7360, 0
        %7364 = vmatpush.bf16.msra.mxu0 0
        %7365 = vmatpush.bf16.msra.mxu0 0
        %7366 = vmatpush.bf16.msra.mxu0 0
        %7367 = vmatpush.bf16.msra.mxu0 0
        %7368 = vmatpush.bf16.msra.mxu0 0
        %7369 = vmatpush.bf16.msra.mxu0 0
        %7370 = vmatpush.bf16.msra.mxu0 %v7358
        %7371 = vmatpush.bf16.msra.mxu0 %v7357
        %7372 = vmatmul.bf16.gmra.mxu0 %v7362
        %v7373 = vpop.f32.mrf.mxu0
        %v7374 = vadd.f32 0.0, %v7373
        %v7375 = vpop.f32.mrf.mxu0
        %v7376 = vadd.f32 0.0, %v7375
        %7377 = vdwg.mxu0
        %v7378 = vmul.f32 %v7374, 0.17677669
        %v7379 = vmul.f32 %v7376, 0.17677669
        %v7380 = vsel %vm1977, %v7378, -inf
        %7381 = vmax.xlane.f32.xlu0 %v7380
        %v7382 = vpop.xlane.xlu0 %7381
        %v7383 = vsel %vm1977, %v7379, -inf
        %7384 = vmax.xlane.f32.xlu0 %v7383
        %v7385 = vpop.xlane.xlu0 %7384
        %v7386 = vsub.f32 %v7378, %v7382
        %v7387 = vsub.f32 %v7379, %v7385
        %v7388 = vmul.f32 %v7386, 1.442695
        %v7389 = vpow.pop %v7388
        %v7390 = vmul.f32 %v7387, 1.442695
        %v7391 = vpow.pop %v7390
        %v7392 = vsel %vm1977, %v7389, 0.0
        %7393 = vadd.xlane.f32.xlu0 %v7392
        %v7394 = vpop.xlane.xlu0 %7393
        %v7395 = vsel %vm1977, %v7391, 0.0
        %7396 = vadd.xlane.f32.xlu0 %v7395
        %v7397 = vpop.xlane.xlu0 %7396
        %v7398 = vrcp.pop %v7394
        %v7399 = vrcp.pop %v7397
        %v7400 = vmul.f32 %v7389, %v7398
        %v7401 = vmul.f32 %v7391, %v7399
        %v7402 = vpack.c.bf16 %v7401, %v7400
        %7403 = vrot.lane.b32.xlu0 %v7295, 32
        %v7404 = vpop.permute.xlu0 %7403
        %v7407 = vsel %vm1977, %v7402, 0
        %7409 = vmatpush.bf16.msra.mxu0 0
        %7410 = vmatpush.bf16.msra.mxu0 0
        %7411 = vmatpush.bf16.msra.mxu0 0
        %7412 = vmatpush.bf16.msra.mxu0 0
        %7413 = vmatpush.bf16.msra.mxu0 0
        %7414 = vmatpush.bf16.msra.mxu0 0
        %7415 = vmatpush.bf16.msra.mxu0 0
        %7416 = vmatpush.bf16.msra.mxu0 %v7404
        %7417 = vmatmul.bf16.gmra.mxu0 %v7407
        %v7418 = vpop.f32.mrf.mxu0
        %v7419 = vadd.f32 0.0, %v7418
        %v7420 = vpop.f32.mrf.mxu0
        %v7421 = vadd.f32 0.0, %v7420
        %7422 = vdwg.mxu0
        %7425 = vrot.lane.b32.xlu0 %v7213, 32
        %v7426 = vpop.permute.xlu0 %7425
        %7427 = vrot.lane.b32.xlu0 %v7215, 32
        %v7428 = vpop.permute.xlu0 %7427
        %7433 = vrot.lane.b32.xlu0 %v7313, 64
        %v7434 = vpop.permute.xlu0 %7433
        %7435 = vrot.lane.b32.xlu0 %v7315, 64
        %v7436 = vpop.permute.xlu0 %7435
        %7441 = vrot.lane.b32.xlu0 %v7419, 96
        %v7442 = vpop.permute.xlu0 %7441
        %7443 = vrot.lane.b32.xlu0 %v7421, 96
        %v7444 = vpop.permute.xlu0 %7443
        %v7447 = vsel %vm1955, %v7106, %v7426
        %v7448 = vsel %vm1955, %v7108, %v7428
        %v7449 = vsel %vm2365, %v7447, %v7434
        %v7450 = vsel %vm2365, %v7448, %v7436
        %v7451 = vsel %vm2368, %v7449, %v7442
        %v7452 = vsel %vm2368, %v7450, %v7444
        %v7453 = vpack.c.bf16 %v7452, %v7451
        %v7455 = vperm.slane %v6831, 0
        %v7473 = vunpack.c.l.b16 %v6814
        %v7474 = vunpack.c.l.b16 %v6815
        %v7475 = vunpack.c.l.b16 %v6816
        %v7476 = vunpack.c.l.b16 %v6817
        %v7477 = vunpack.c.l.b16 %v6818
        %v7478 = vunpack.c.l.b16 %v6819
        %v7479 = vunpack.c.l.b16 %v6820
        %v7480 = vunpack.c.l.b16 %v6821
        %v7481 = vunpack.c.l.b16 %v6822
        %v7482 = vunpack.c.l.b16 %v6823
        %v7483 = vunpack.c.l.b16 %v6824
        %v7484 = vunpack.c.l.b16 %v6825
        %v7485 = vunpack.c.l.b16 %v6826
        %v7486 = vunpack.c.l.b16 %v6827
        %v7487 = vunpack.c.l.b16 %v6828
        %v7488 = vunpack.c.l.b16 %v6829
        %v7489 = vpack.c.b16 %v7474, %v7473
        %v7490 = vpack.c.b16 %v7476, %v7475
        %v7491 = vpack.c.b16 %v7478, %v7477
        %v7492 = vpack.c.b16 %v7480, %v7479
        %v7493 = vpack.c.b16 %v7482, %v7481
        %v7494 = vpack.c.b16 %v7484, %v7483
        %v7495 = vpack.c.b16 %v7486, %v7485
        %v7496 = vpack.c.b16 %v7488, %v7487
        %7505 = vmatpush.bf16.msra.mxu0 %v7496
        %7506 = vmatpush.bf16.msra.mxu0 %v7495
        %7507 = vmatpush.bf16.msra.mxu0 %v7494
        %7508 = vmatpush.bf16.msra.mxu0 %v7493
        %7509 = vmatpush.bf16.msra.mxu0 %v7492
        %7510 = vmatpush.bf16.msra.mxu0 %v7491
        %7511 = vmatpush.bf16.msra.mxu0 %v7490
        %7512 = vmatpush.bf16.msra.mxu0 %v7489
        %7513 = vmatmul.bf16.gmra.mxu0 %v7453
        %v7514 = vpop.f32.mrf.mxu0
        %v7515 = vadd.f32 %v7455, %v7514
        %v7516 = vpop.f32.mrf.mxu0
        %v7517 = vadd.f32 %v7455, %v7516
        %7518 = vdwg.mxu0
        %v7519 = vadd.f32 %v7515, %v6773
        %v7520 = vadd.f32 %v7517, %v6774
        %s7521 = scalar_lea.vmem [#allocation32], 1
        %v7522 = vld [vmem:[%s7521] sm:$0x1]
        %s7523 = scalar_lea.vmem [#allocation34], 1
        %v7524 = vld [vmem:[%s7523] sm:$0x1]
        %7525 = vadd.xlane.f32.xlu0 %v7519
        %v7526 = vpop.xlane.xlu0 %7525
        %7527 = vadd.xlane.f32.xlu0 %v7520
        %v7528 = vpop.xlane.xlu0 %7527
        %v7529 = vmul.f32 %v7526, %v2451
        %v7530 = vmul.f32 %v7528, %v2451
        %v7531 = vsub.f32 %v7519, %v7529
        %v7532 = vsub.f32 %v7520, %v7530
        %v7533 = vmul.f32 %v7531, %v7531
        %v7534 = vmul.f32 %v7532, %v7532
        %7535 = vadd.xlane.f32.xlu0 %v7533
        %v7536 = vpop.xlane.xlu0 %7535
        %7537 = vadd.xlane.f32.xlu0 %v7534
        %v7538 = vpop.xlane.xlu0 %7537
        %v7539 = vmul.f32 %v7536, %v2451
        %v7540 = vmul.f32 %v7538, %v2451
        %v7541 = vadd.f32 %v7539, 1e-05
        %v7542 = vadd.f32 %v7540, 1e-05
        %v7543 = vrsqrt.pop %v7541
        %v7544 = vmul.f32 %v7543, %v7541
        %v7545 = vmul.f32 %v7544, %v7543
        %v7546 = vmul.f32 0.5, %v7545
        %v7547 = vsub.f32 1.5, %v7546
        %v7548 = vmul.f32 %v7543, %v7547
        %vm7549 = vweird.f32 %v7541
        %vm7550 = vweird.f32 %v7543
        %vm7551 = vmor %vm7549, %vm7550
        %v7552 = vsel %vm7551, %v7543, %v7548
        %v7553 = vrsqrt.pop %v7542
        %v7554 = vmul.f32 %v7553, %v7542
        %v7555 = vmul.f32 %v7554, %v7553
        %v7556 = vmul.f32 0.5, %v7555
        %v7557 = vsub.f32 1.5, %v7556
        %v7558 = vmul.f32 %v7553, %v7557
        %vm7559 = vweird.f32 %v7542
        %vm7560 = vweird.f32 %v7553
        %vm7561 = vmor %vm7559, %vm7560
        %v7562 = vsel %vm7561, %v7553, %v7558
        %v7563 = vmul.f32 %v7531, %v7552
        %v7564 = vmul.f32 %v7532, %v7562
        %v7566 = vperm.slane %v7522, 0
        %v7568 = vmul.f32 %v7563, %v7566
        %v7569 = vmul.f32 %v7564, %v7566
        %v7571 = vperm.slane %v7524, 0
        %v7573 = vadd.f32 %v7568, %v7571
        %v7574 = vadd.f32 %v7569, %v7571
        %s7575 = scalar_lea.vmem [#allocation35], 128
        %v7576 = vld [vmem:[%s7575] sm:$0xff]
        %v7577 = vld [vmem:[%s7575 + $0x8] sm:$0xff]
        %v7578 = vld [vmem:[%s7575 + $0x10] sm:$0xff]
        %v7579 = vld [vmem:[%s7575 + $0x18] sm:$0xff]
        %v7580 = vld [vmem:[%s7575 + $0x20] sm:$0xff]
        %v7581 = vld [vmem:[%s7575 + $0x28] sm:$0xff]
        %v7582 = vld [vmem:[%s7575 + $0x30] sm:$0xff]
        %v7583 = vld [vmem:[%s7575 + $0x38] sm:$0xff]
        %v7584 = vld [vmem:[%s7575 + $0x40] sm:$0xff]
        %v7585 = vld [vmem:[%s7575 + $0x48] sm:$0xff]
        %v7586 = vld [vmem:[%s7575 + $0x50] sm:$0xff]
        %v7587 = vld [vmem:[%s7575 + $0x58] sm:$0xff]
        %v7588 = vld [vmem:[%s7575 + $0x60] sm:$0xff]
        %v7589 = vld [vmem:[%s7575 + $0x68] sm:$0xff]
        %v7590 = vld [vmem:[%s7575 + $0x70] sm:$0xff]
        %v7591 = vld [vmem:[%s7575 + $0x78] sm:$0xff]
        %s7592 = scalar_lea.vmem [#allocation37], 2
        %v7593 = vld [vmem:[%s7592] sm:$0x3]
        %v7594 = vpack.c.bf16 %v7574, %v7573
        %v7596 = vperm.slane %v7593, 0
        %v7597 = vperm.slane %v7593, 1
        %v7616 = vunpack.c.l.b16 %v7576
        %v7617 = vunpack.c.h.b16 %v7576
        %v7618 = vunpack.c.l.b16 %v7577
        %v7619 = vunpack.c.h.b16 %v7577
        %v7620 = vunpack.c.l.b16 %v7578
        %v7621 = vunpack.c.h.b16 %v7578
        %v7622 = vunpack.c.l.b16 %v7579
        %v7623 = vunpack.c.h.b16 %v7579
        %v7624 = vunpack.c.l.b16 %v7580
        %v7625 = vunpack.c.h.b16 %v7580
        %v7626 = vunpack.c.l.b16 %v7581
        %v7627 = vunpack.c.h.b16 %v7581
        %v7628 = vunpack.c.l.b16 %v7582
        %v7629 = vunpack.c.h.b16 %v7582
        %v7630 = vunpack.c.l.b16 %v7583
        %v7631 = vunpack.c.h.b16 %v7583
        %v7632 = vunpack.c.l.b16 %v7584
        %v7633 = vunpack.c.h.b16 %v7584
        %v7634 = vunpack.c.l.b16 %v7585
        %v7635 = vunpack.c.h.b16 %v7585
        %v7636 = vunpack.c.l.b16 %v7586
        %v7637 = vunpack.c.h.b16 %v7586
        %v7638 = vunpack.c.l.b16 %v7587
        %v7639 = vunpack.c.h.b16 %v7587
        %v7640 = vunpack.c.l.b16 %v7588
        %v7641 = vunpack.c.h.b16 %v7588
        %v7642 = vunpack.c.l.b16 %v7589
        %v7643 = vunpack.c.h.b16 %v7589
        %v7644 = vunpack.c.l.b16 %v7590
        %v7645 = vunpack.c.h.b16 %v7590
        %v7646 = vunpack.c.l.b16 %v7591
        %v7647 = vunpack.c.h.b16 %v7591
        %v7648 = vpack.c.b16 %v7618, %v7616
        %v7649 = vpack.c.b16 %v7619, %v7617
        %v7650 = vpack.c.b16 %v7622, %v7620
        %v7651 = vpack.c.b16 %v7623, %v7621
        %v7652 = vpack.c.b16 %v7626, %v7624
        %v7653 = vpack.c.b16 %v7627, %v7625
        %v7654 = vpack.c.b16 %v7630, %v7628
        %v7655 = vpack.c.b16 %v7631, %v7629
        %v7656 = vpack.c.b16 %v7634, %v7632
        %v7657 = vpack.c.b16 %v7635, %v7633
        %v7658 = vpack.c.b16 %v7638, %v7636
        %v7659 = vpack.c.b16 %v7639, %v7637
        %v7660 = vpack.c.b16 %v7642, %v7640
        %v7661 = vpack.c.b16 %v7643, %v7641
        %v7662 = vpack.c.b16 %v7646, %v7644
        %v7663 = vpack.c.b16 %v7647, %v7645
        %7680 = vmatpush.bf16.msra.mxu0 %v7662
        %7681 = vmatpush.bf16.msra.mxu0 %v7660
        %7682 = vmatpush.bf16.msra.mxu0 %v7658
        %7683 = vmatpush.bf16.msra.mxu0 %v7656
        %7684 = vmatpush.bf16.msra.mxu0 %v7654
        %7685 = vmatpush.bf16.msra.mxu0 %v7652
        %7686 = vmatpush.bf16.msra.mxu0 %v7650
        %7687 = vmatpush.bf16.msra.mxu0 %v7648
        %7688 = vmatmul.bf16.gmra.mxu0 %v7594
        %v7689 = vpop.f32.mrf.mxu0
        %v7690 = vadd.f32 %v7596, %v7689
        %v7691 = vpop.f32.mrf.mxu0
        %v7692 = vadd.f32 %v7596, %v7691
        %7693 = vdwg.mxu0
        %7694 = vmatpush.bf16.msra.mxu0 %v7663
        %7695 = vmatpush.bf16.msra.mxu0 %v7661
        %7696 = vmatpush.bf16.msra.mxu0 %v7659
        %7697 = vmatpush.bf16.msra.mxu0 %v7657
        %7698 = vmatpush.bf16.msra.mxu0 %v7655
        %7699 = vmatpush.bf16.msra.mxu0 %v7653
        %7700 = vmatpush.bf16.msra.mxu0 %v7651
        %7701 = vmatpush.bf16.msra.mxu0 %v7649
        %7702 = vmatmul.bf16.gmra.mxu0 %v7594
        %v7703 = vpop.f32.mrf.mxu0
        %v7704 = vadd.f32 %v7597, %v7703
        %v7705 = vpop.f32.mrf.mxu0
        %v7706 = vadd.f32 %v7597, %v7705
        %7707 = vdwg.mxu0
        %v7708 = vmax.f32 %v7690, 0.0
        %v7709 = vmax.f32 %v7704, 0.0
        %v7710 = vmax.f32 %v7692, 0.0
        %v7711 = vmax.f32 %v7706, 0.0
        %s7712 = scalar_lea.vmem [#allocation38], 128
        %v7713 = vld [vmem:[%s7712] sm:$0xf]
        %v7714 = vld [vmem:[%s7712 + $0x4] sm:$0xf]
        %v7715 = vld [vmem:[%s7712 + $0x8] sm:$0xf]
        %v7716 = vld [vmem:[%s7712 + $0xc] sm:$0xf]
        %v7717 = vld [vmem:[%s7712 + $0x10] sm:$0xf]
        %v7718 = vld [vmem:[%s7712 + $0x14] sm:$0xf]
        %v7719 = vld [vmem:[%s7712 + $0x18] sm:$0xf]
        %v7720 = vld [vmem:[%s7712 + $0x1c] sm:$0xf]
        %v7721 = vld [vmem:[%s7712 + $0x20] sm:$0xf]
        %v7722 = vld [vmem:[%s7712 + $0x24] sm:$0xf]
        %v7723 = vld [vmem:[%s7712 + $0x28] sm:$0xf]
        %v7724 = vld [vmem:[%s7712 + $0x2c] sm:$0xf]
        %v7725 = vld [vmem:[%s7712 + $0x30] sm:$0xf]
        %v7726 = vld [vmem:[%s7712 + $0x34] sm:$0xf]
        %v7727 = vld [vmem:[%s7712 + $0x38] sm:$0xf]
        %v7728 = vld [vmem:[%s7712 + $0x3c] sm:$0xf]
        %v7729 = vld [vmem:[%s7712 + $0x40] sm:$0xf]
        %v7730 = vld [vmem:[%s7712 + $0x44] sm:$0xf]
        %v7731 = vld [vmem:[%s7712 + $0x48] sm:$0xf]
        %v7732 = vld [vmem:[%s7712 + $0x4c] sm:$0xf]
        %v7733 = vld [vmem:[%s7712 + $0x50] sm:$0xf]
        %v7734 = vld [vmem:[%s7712 + $0x54] sm:$0xf]
        %v7735 = vld [vmem:[%s7712 + $0x58] sm:$0xf]
        %v7736 = vld [vmem:[%s7712 + $0x5c] sm:$0xf]
        %v7737 = vld [vmem:[%s7712 + $0x60] sm:$0xf]
        %v7738 = vld [vmem:[%s7712 + $0x64] sm:$0xf]
        %v7739 = vld [vmem:[%s7712 + $0x68] sm:$0xf]
        %v7740 = vld [vmem:[%s7712 + $0x6c] sm:$0xf]
        %v7741 = vld [vmem:[%s7712 + $0x70] sm:$0xf]
        %v7742 = vld [vmem:[%s7712 + $0x74] sm:$0xf]
        %v7743 = vld [vmem:[%s7712 + $0x78] sm:$0xf]
        %v7744 = vld [vmem:[%s7712 + $0x7c] sm:$0xf]
        %s7745 = scalar_lea.vmem [#allocation40], 1
        %v7746 = vld [vmem:[%s7745] sm:$0x1]
        %v7747 = vpack.c.bf16 %v7710, %v7708
        %v7748 = vpack.c.bf16 %v7711, %v7709
        %v7750 = vperm.slane %v7746, 0
        %v7784 = vunpack.c.l.b16 %v7713
        %v7785 = vunpack.c.l.b16 %v7714
        %v7786 = vunpack.c.l.b16 %v7715
        %v7787 = vunpack.c.l.b16 %v7716
        %v7788 = vunpack.c.l.b16 %v7717
        %v7789 = vunpack.c.l.b16 %v7718
        %v7790 = vunpack.c.l.b16 %v7719
        %v7791 = vunpack.c.l.b16 %v7720
        %v7792 = vunpack.c.l.b16 %v7721
        %v7793 = vunpack.c.l.b16 %v7722
        %v7794 = vunpack.c.l.b16 %v7723
        %v7795 = vunpack.c.l.b16 %v7724
        %v7796 = vunpack.c.l.b16 %v7725
        %v7797 = vunpack.c.l.b16 %v7726
        %v7798 = vunpack.c.l.b16 %v7727
        %v7799 = vunpack.c.l.b16 %v7728
        %v7800 = vunpack.c.l.b16 %v7729
        %v7801 = vunpack.c.l.b16 %v7730
        %v7802 = vunpack.c.l.b16 %v7731
        %v7803 = vunpack.c.l.b16 %v7732
        %v7804 = vunpack.c.l.b16 %v7733
        %v7805 = vunpack.c.l.b16 %v7734
        %v7806 = vunpack.c.l.b16 %v7735
        %v7807 = vunpack.c.l.b16 %v7736
        %v7808 = vunpack.c.l.b16 %v7737
        %v7809 = vunpack.c.l.b16 %v7738
        %v7810 = vunpack.c.l.b16 %v7739
        %v7811 = vunpack.c.l.b16 %v7740
        %v7812 = vunpack.c.l.b16 %v7741
        %v7813 = vunpack.c.l.b16 %v7742
        %v7814 = vunpack.c.l.b16 %v7743
        %v7815 = vunpack.c.l.b16 %v7744
        %v7816 = vpack.c.b16 %v7785, %v7784
        %v7817 = vpack.c.b16 %v7787, %v7786
        %v7818 = vpack.c.b16 %v7789, %v7788
        %v7819 = vpack.c.b16 %v7791, %v7790
        %v7820 = vpack.c.b16 %v7793, %v7792
        %v7821 = vpack.c.b16 %v7795, %v7794
        %v7822 = vpack.c.b16 %v7797, %v7796
        %v7823 = vpack.c.b16 %v7799, %v7798
        %v7824 = vpack.c.b16 %v7801, %v7800
        %v7825 = vpack.c.b16 %v7803, %v7802
        %v7826 = vpack.c.b16 %v7805, %v7804
        %v7827 = vpack.c.b16 %v7807, %v7806
        %v7828 = vpack.c.b16 %v7809, %v7808
        %v7829 = vpack.c.b16 %v7811, %v7810
        %v7830 = vpack.c.b16 %v7813, %v7812
        %v7831 = vpack.c.b16 %v7815, %v7814
        %7848 = vmatpush.bf16.msra.mxu0 %v7823
        %7849 = vmatpush.bf16.msra.mxu0 %v7822
        %7850 = vmatpush.bf16.msra.mxu0 %v7821
        %7851 = vmatpush.bf16.msra.mxu0 %v7820
        %7852 = vmatpush.bf16.msra.mxu0 %v7819
        %7853 = vmatpush.bf16.msra.mxu0 %v7818
        %7854 = vmatpush.bf16.msra.mxu0 %v7817
        %7855 = vmatpush.bf16.msra.mxu0 %v7816
        %7856 = vmatmul.bf16.gmra.mxu0 %v7747
        %v7857 = vpop.f32.mrf.mxu0
        %v7858 = vadd.f32 %v7750, %v7857
        %v7859 = vpop.f32.mrf.mxu0
        %v7860 = vadd.f32 %v7750, %v7859
        %7861 = vdwg.mxu0
        %7862 = vmatpush.bf16.msra.mxu0 %v7831
        %7863 = vmatpush.bf16.msra.mxu0 %v7830
        %7864 = vmatpush.bf16.msra.mxu0 %v7829
        %7865 = vmatpush.bf16.msra.mxu0 %v7828
        %7866 = vmatpush.bf16.msra.mxu0 %v7827
        %7867 = vmatpush.bf16.msra.mxu0 %v7826
        %7868 = vmatpush.bf16.msra.mxu0 %v7825
        %7869 = vmatpush.bf16.msra.mxu0 %v7824
        %7870 = vmatmul.bf16.gmra.mxu0 %v7748
        %v7871 = vpop.f32.mrf.mxu0
        %v7872 = vadd.f32 %v7858, %v7871
        %v7873 = vpop.f32.mrf.mxu0
        %v7874 = vadd.f32 %v7860, %v7873
        %7875 = vdwg.mxu0
        %v7876 = vadd.f32 %v7872, %v7573
        %v7877 = vadd.f32 %v7874, %v7574
        %s7878 = scalar_lea.vmem [#allocation41], 1
        %v7879 = vld [vmem:[%s7878] sm:$0x1]
        %s7880 = scalar_lea.vmem [#allocation43], 1
        %v7881 = vld [vmem:[%s7880] sm:$0x1]
        %7882 = vadd.xlane.f32.xlu0 %v7876
        %v7883 = vpop.xlane.xlu0 %7882
        %7884 = vadd.xlane.f32.xlu0 %v7877
        %v7885 = vpop.xlane.xlu0 %7884
        %v7886 = vmul.f32 %v7883, %v2451
        %v7887 = vmul.f32 %v7885, %v2451
        %v7888 = vsub.f32 %v7876, %v7886
        %v7889 = vsub.f32 %v7877, %v7887
        %v7890 = vmul.f32 %v7888, %v7888
        %v7891 = vmul.f32 %v7889, %v7889
        %7892 = vadd.xlane.f32.xlu0 %v7890
        %v7893 = vpop.xlane.xlu0 %7892
        %7894 = vadd.xlane.f32.xlu0 %v7891
        %v7895 = vpop.xlane.xlu0 %7894
        %v7896 = vmul.f32 %v7893, %v2451
        %v7897 = vmul.f32 %v7895, %v2451
        %v7898 = vadd.f32 %v7896, 1e-05
        %v7899 = vadd.f32 %v7897, 1e-05
        %v7900 = vrsqrt.pop %v7898
        %v7901 = vmul.f32 %v7900, %v7898
        %v7902 = vmul.f32 %v7901, %v7900
        %v7903 = vmul.f32 0.5, %v7902
        %v7904 = vsub.f32 1.5, %v7903
        %v7905 = vmul.f32 %v7900, %v7904
        %vm7906 = vweird.f32 %v7898
        %vm7907 = vweird.f32 %v7900
        %vm7908 = vmor %vm7906, %vm7907
        %v7909 = vsel %vm7908, %v7900, %v7905
        %v7910 = vrsqrt.pop %v7899
        %v7911 = vmul.f32 %v7910, %v7899
        %v7912 = vmul.f32 %v7911, %v7910
        %v7913 = vmul.f32 0.5, %v7912
        %v7914 = vsub.f32 1.5, %v7913
        %v7915 = vmul.f32 %v7910, %v7914
        %vm7916 = vweird.f32 %v7899
        %vm7917 = vweird.f32 %v7910
        %vm7918 = vmor %vm7916, %vm7917
        %v7919 = vsel %vm7918, %v7910, %v7915
        %v7920 = vmul.f32 %v7888, %v7909
        %v7921 = vmul.f32 %v7889, %v7919
        %v7923 = vperm.slane %v7879, 0
        %v7925 = vmul.f32 %v7920, %v7923
        %v7926 = vmul.f32 %v7921, %v7923
        %v7928 = vperm.slane %v7881, 0
        %v7930 = vadd.f32 %v7925, %v7928
        %v7931 = vadd.f32 %v7926, %v7928
        %v7932 = vpack.c.bf16 %v7931, %v7930
        %v7933 = vld [vmem:[%s73] sm:$0xf]
        %v7934 = vld [vmem:[%s73 + $0x4] sm:$0xf]
        %v7935 = vld [vmem:[%s73 + $0x8] sm:$0xf]
        %v7936 = vld [vmem:[%s73 + $0xc] sm:$0xf]
        %v7937 = vld [vmem:[%s73 + $0x10] sm:$0xf]
        %v7938 = vld [vmem:[%s73 + $0x14] sm:$0xf]
        %v7939 = vld [vmem:[%s73 + $0x18] sm:$0xf]
        %v7940 = vld [vmem:[%s73 + $0x1c] sm:$0xf]
        %v7941 = vld [vmem:[%s73 + $0x20] sm:$0xf]
        %v7942 = vld [vmem:[%s73 + $0x24] sm:$0xf]
        %v7943 = vld [vmem:[%s73 + $0x28] sm:$0xf]
        %v7944 = vld [vmem:[%s73 + $0x2c] sm:$0xf]
        %v7945 = vld [vmem:[%s73 + $0x30] sm:$0xf]
        %v7946 = vld [vmem:[%s73 + $0x34] sm:$0xf]
        %v7947 = vld [vmem:[%s73 + $0x38] sm:$0xf]
        %v7948 = vld [vmem:[%s73 + $0x3c] sm:$0xf]
        %v7949 = vld [vmem:[#allocation44] sm:$0x1]
        %v7951 = vperm.slane %v7949, 0
        %v7969 = vunpack.c.l.b16 %v7933
        %v7970 = vunpack.c.l.b16 %v7934
        %v7971 = vunpack.c.l.b16 %v7935
        %v7972 = vunpack.c.l.b16 %v7936
        %v7973 = vunpack.c.l.b16 %v7937
        %v7974 = vunpack.c.l.b16 %v7938
        %v7975 = vunpack.c.l.b16 %v7939
        %v7976 = vunpack.c.l.b16 %v7940
        %v7977 = vunpack.c.l.b16 %v7941
        %v7978 = vunpack.c.l.b16 %v7942
        %v7979 = vunpack.c.l.b16 %v7943
        %v7980 = vunpack.c.l.b16 %v7944
        %v7981 = vunpack.c.l.b16 %v7945
        %v7982 = vunpack.c.l.b16 %v7946
        %v7983 = vunpack.c.l.b16 %v7947
        %v7984 = vunpack.c.l.b16 %v7948
        %v7985 = vpack.c.b16 %v7970, %v7969
        %v7986 = vpack.c.b16 %v7972, %v7971
        %v7987 = vpack.c.b16 %v7974, %v7973
        %v7988 = vpack.c.b16 %v7976, %v7975
        %v7989 = vpack.c.b16 %v7978, %v7977
        %v7990 = vpack.c.b16 %v7980, %v7979
        %v7991 = vpack.c.b16 %v7982, %v7981
        %v7992 = vpack.c.b16 %v7984, %v7983
        %8001 = vmatpush.bf16.msra.mxu0 %v7992
        %8002 = vmatpush.bf16.msra.mxu0 %v7991
        %8003 = vmatpush.bf16.msra.mxu0 %v7990
        %8004 = vmatpush.bf16.msra.mxu0 %v7989
        %8005 = vmatpush.bf16.msra.mxu0 %v7988
        %8006 = vmatpush.bf16.msra.mxu0 %v7987
        %8007 = vmatpush.bf16.msra.mxu0 %v7986
        %8008 = vmatpush.bf16.msra.mxu0 %v7985
        %8009 = vmatmul.bf16.gmra.mxu0 %v7932
        %v8010 = vpop.f32.mrf.mxu0
        %v8011 = vadd.f32 %v7951, %v8010
        %v8012 = vpop.f32.mrf.mxu0
        %v8013 = vadd.f32 %v7951, %v8012
        %8014 = vdwg.mxu0
        %8015 = vst [vmem:[%s1663] sm:$0xff] %v8011
        %8016 = vst [vmem:[%s1663 + $0x8] sm:$0xff] %v8013
        %s8017 = sand.u32 %s934, 1
        %s8018 = scalar_lea.sflag [#allocation4], %s8017
        %s8019 = sand.u32 %s934, 1
        %s8020 = smul.addr %s8019, 16
        %s8021 = scalar_lea.vmem [#allocation46], %s8020
        // Predicated region
        $region285: #{machine_translation_forward.1} parent=171 // pred_check
          %p8022 = pneg %p944
        $region286: #{machine_translation_forward.1} parent=171 // pred_check_branch
          %8024 = sbr.rel (%p8022) target = $region288
        $region287: #{machine_translation_forward.1} parent=171 // pred_region
          %8026 = vsyncadd %s8018, 0
          %s8027 = smul.addr %s108, 2
          %s8028 = smul.addr %s8027, 8
          %s8029 = scalar_lea.hbm %s77, %s8028
          %s8030 = sshll.u32 %s8021, 4
          %s8031 = int_to_ptr.vmem [resolvable:$true] %s8030
          %s8032 = sshll.u32 %s8029, 4
          %s8033 = int_to_ptr.hbm [resolvable:$true] %s8032
          %8038 = dma.vmem_to_hbm [thread:$0]  %s8031, 256, %s8033, %s8018, 128, 128, 8
        $region288: #{machine_translation_forward.1} parent=171 // pred_fallthru
          _
      $region172: #{machine_translation_forward.1} parent=5 // pred_fallthru
        _
      %p8039 = scmp.le.s32.totalorder 2, %s103
      // Predicated region
      $region289: #{machine_translation_forward.1} parent=5 // pred_check
        %p8040 = pneg %p8039
      $region290: #{machine_translation_forward.1} parent=5 // pred_check_branch
        %8042 = sbr.rel (%p8040) target = $region292
      $region291: #{machine_translation_forward.1} parent=5 // pred_region
        %s8043 = ssub.s32 %s103, 2
        // Predicated region
        $region293: #{machine_translation_forward.1} parent=291 // pred_check
          %p8044 = pneg %p950
        $region294: #{machine_translation_forward.1} parent=291 // pred_check_branch
          %8046 = sbr.rel (%p8044) target = $region296
        $region295: #{machine_translation_forward.1} parent=291 // pred_region
          %s8047 = sand.u32 %s935, 1
          %s8048 = scalar_lea.sflag [#allocation4], %s8047
          %s8049 = sand.u32 %s935, 1
          %s8050 = smul.addr %s8049, 16
          %s8051 = scalar_lea.vmem [#allocation46], %s8050
          %8053 = dma.done %s8048, 256
        $region296: #{machine_translation_forward.1} parent=291 // pred_fallthru
          _
      $region292: #{machine_translation_forward.1} parent=5 // pred_fallthru
        _
    $region6: #{machine_translation_forward.1} parent=1 // loop_footer
      %s107 = sadd.s32 1, %s103
    $region7: #{machine_translation_forward.1} parent=1 // loop_footer_branch
      %102 = sbr.rel target = $region3
    $region8: #{machine_translation_forward.1} parent=1 // loop_exit
      _
    %8054 = vsyncpa [#allocation3], 1
    %s8055 = scalar_lea.sflag [#allocation3], 1
    %8056 = vsyncpa %s8055, 1
    %8057 = vsyncpa [#allocation6], 1
    %8058 = vsyncpa [#allocation9], 1
    %8059 = vsyncpa [#allocation12], 1
    %8060 = vsyncpa [#allocation15], 1
    %8061 = vsyncpa [#allocation18], 1
    %8062 = vsyncpa [#allocation21], 1
    %8063 = vsyncpa [#allocation24], 1
    %8064 = vsyncpa [#allocation27], 1
    %8065 = vsyncpa [#allocation30], 1
    %8066 = vsyncpa [#allocation33], 1
    %8067 = vsyncpa [#allocation36], 1
    %8068 = vsyncpa [#allocation39], 1
    %8069 = vsyncpa [#allocation42], 1
    %8070 = vsyncpa [#allocation45], 1
    %8071 = vsyncpa [#allocation4], 1
    %s8072 = scalar_lea.sflag [#allocation4], 1
    %8073 = vsyncpa %s8072, 1

</llo_original>
